<compile_context>
chip_gen: v7x
topology: tpu7x:2x2x1
jax: 0.10.0
libtpu: 0.0.40
codegen_flags: <defaults>
</compile_context>

<pallas_src>
import functools

import jax
import jax.numpy as jnp
from jax.experimental import pallas as pl
from jax.experimental.pallas import tpu as pltpu

_SUB = 8  # f32 sublane count; channel blocks are padded to multiples of this


# ------------------------------------------------------------------ kernel --

def _fused_kernel(*refs, num_layers, step, H, W, K,
                  hidden_channels, cin_pads, c_pads, eff_steps):
    HW = H * W
    KK = K * K
    pad = (K - 1) // 2

    # ---- unpack flat ref list: inputs, output, scratch ----------------------
    x_ref, mask_ref, att12a_ref, att12b_ref, att3_ref = refs[:5]
    pos = 5
    w_refs, b_refs = [], []
    for _ in range(num_layers):
        w_refs.append(refs[pos]); b_refs.append(refs[pos + 1]); pos += 2
    out_ref = refs[pos]; pos += 1
    s_refs, c_refs = [], []
    for _ in range(num_layers):
        s_refs.append(refs[pos]); c_refs.append(refs[pos + 1]); pos += 2
    pbuf0_ref, pbuf_ref = refs[pos], refs[pos + 1]

    b = pl.program_id(0)

    # Static tap table for the KxK 'same' conv.
    taps = [(kh - pad, kw - pad) for kh in range(K) for kw in range(K)]

    # Border masks precomputed on the host; loaded once per grid iteration
    # (hoisted out of the per-step path).
    mask_rows = [mask_ref[pl.ds(t, 1), :] for t in range(KK)]   # each (1, HW) f32

    # Zero recurrent state only once: the reference never resets
    # internal_state[0:num_layers], so batches > 0 carry the previous batch's
    # final (h, c) (reference bug kept) -> batch grid must stay sequential.
    @pl.when(b == 0)
    def _init():
        for i in range(num_layers):
            s_refs[i][...] = jnp.zeros(s_refs[i].shape, s_refs[i].dtype)
            c_refs[i][...] = jnp.zeros(c_refs[i].shape, c_refs[i].dtype)

    # Current batch's (channel-padded) input frame -> leading rows of the
    # layer-0 state buffer.  The same frame feeds every step of this batch.
    s_refs[0][pl.ds(0, cin_pads[0]), :] = x_ref[...]

    def fill_patches(buf_ref, v, c):
        # v: (c, HW) f32.  Writes the tap-major KxK 'same' im2col into the first
        # KK*c rows of buf_ref (bf16).  Roll + mask-mul in f32, cast at store.
        for t, (dh, dw) in enumerate(taps):
            sh = dh * W + dw
            r = v if sh == 0 else pltpu.roll(v, (-sh) % HW, axis=1)
            blk = r if (dh == 0 and dw == 0) else r * mask_rows[t]
            buf_ref[pl.ds(t * c, c), :] = blk.astype(jnp.bfloat16)

    def conv(w_ref, buf_ref, rows):
        # Full KxK 'same' conv as one MXU matmul: (Cout, KK*C) x (KK*C, HW).
        return jnp.dot(w_ref[...], buf_ref[pl.ds(0, rows), :],
                       preferred_element_type=jnp.float32)

    def lstm_cell(i, buf_ref, rows):
        hc = hidden_channels[i]
        # Fused gate conv: Wx*(x) + Wh*(h) for all four gates in one matmul.
        # Peephole terms (c*Wci etc.) are identically zero in the reference.
        g = conv(w_refs[i], buf_ref, rows) + b_refs[i][...]
        c = c_refs[i][...]
        ig = jax.nn.sigmoid(g[0:hc])
        fg = jax.nn.sigmoid(g[hc:2 * hc])
        cc = fg * c + ig * jnp.tanh(g[2 * hc:3 * hc])
        og = jax.nn.sigmoid(g[3 * hc:4 * hc])
        hn = og * jnp.tanh(cc)
        c_refs[i][...] = cc
        s_refs[i][pl.ds(cin_pads[i], hc), :] = hn        # h updated in place
        return hn

    # Step recurrence folded into the kernel (unrolled; `step` is small and
    # static).  Step 0 runs no compute in the reference forward().
    # TODO(synk): switch to a lax.fori_loop body if `step` ever gets large.
    for s in range(1, step):
        # ---------------- layer 0: attention + cell -------------------------
        c0 = c_pads[0]
        rows0 = KK * c0
        fill_patches(pbuf0_ref, s_refs[0][...], c0)          # im2col of [x | h]
        a1 = jnp.maximum(conv(att12a_ref, pbuf0_ref, rows0), 0.0)
        fill_patches(pbuf_ref, a1, c0)
        a2 = jnp.maximum(conv(att12b_ref, pbuf_ref, rows0), 0.0)
        fill_patches(pbuf_ref, a2, c0)
        alpha = jax.nn.sigmoid(conv(att3_ref, pbuf_ref, rows0))      # (1, HW)
        # Reuse the [x | h] im2col for the gate conv: patches(alpha*x) ==
        # roll(alpha, tap) * patches(x), so only the x-tap rows are rescaled.
        for t, (dh, dw) in enumerate(taps):
            sh = dh * W + dw
            ra = alpha if sh == 0 else pltpu.roll(alpha, (-sh) % HW, axis=1)
            rsl = pl.ds(t * c0, cin_pads[0])
            pbuf0_ref[rsl, :] = (pbuf0_ref[rsl, :] * ra).astype(jnp.bfloat16)
        hn = lstm_cell(0, pbuf0_ref, rows0)

        # ---------------- layers 1 .. L-1 (no attention in the reference) ----
        for i in range(1, num_layers):
            s_refs[i][pl.ds(0, cin_pads[i]), :] = hn          # x_i = h_{i-1}
            ci = c_pads[i]
            fill_patches(pbuf_ref, s_refs[i][...], ci)
            hn = lstm_cell(i, pbuf_ref, KK * ci)

        # Output HBM writeback only at effective steps.
        if s in eff_steps:
            out_ref[eff_steps.index(s)] = hn


# ------------------------------------------------------------------ params --

def _flat(w):
    # torch conv weight (Cout, Cin, K, K) -> (Cout, K*K*Cin); columns tap-major,
    # channel-within-tap, matching the im2col row order of fill_patches.
    Cout, Cin, K, _ = w.shape
    return jnp.transpose(w, (0, 2, 3, 1)).reshape(Cout, K * K * Cin)


def init_convlstm_params(key, input_channels, hidden_channels, kernel_size):
    K = kernel_size
    in_ch = [input_channels] + list(hidden_channels)
    layers = []
    for i, hc in enumerate(hidden_channels):
        assert hc % 2 == 0                  # module's own constraint
        assert hc % _SUB == 0               # kernel layout constraint
        ic = in_ch[i]
        icp = -(-ic // _SUB) * _SUB         # input channels padded to sublane multiple
        C, Cp = ic + hc, icp + hc
        ks = jax.random.split(jax.random.fold_in(key, i), 14)

        def conv_w(k, co, ci):
            return 0.1 * jax.random.normal(k, (co, ci, K, K), jnp.float32)

        # Fused gate weights for input layout [x(ic) | zero-pad(icp-ic) | h(hc)].
        gate_ws, gate_bs = [], []
        for g in range(4):                               # gate order: i, f, c, o
            wx = conv_w(ks[3 * g + 0], hc, ic)           # torch Wx* (bias=True)
            wh = conv_w(ks[3 * g + 1], hc, hc)           # torch Wh* (bias=False)
            wx = jnp.pad(wx, ((0, 0), (0, icp - ic), (0, 0), (0, 0)))
            gate_ws.append(_flat(jnp.concatenate([wx, wh], axis=1)))  # (hc, K*K*Cp)
            gate_bs.append(0.1 * jax.random.normal(ks[3 * g + 2], (hc, 1),
                                                   jnp.float32))
        layer = {
            'w_gates': jnp.concatenate(gate_ws, 0).astype(jnp.bfloat16),  # (4hc, K*K*Cp)
            'b_gates': jnp.concatenate(gate_bs, 0),                       # (4hc, 1) f32
        }

        if i == 0:
            # Attention convs (the reference only ever uses layer 0's).  att_12
            # is ONE torch conv applied twice; two padded copies of the same
            # weight serve the two applications because they see different
            # input-channel layouts ([x | pad | h] vs [att | pad]).
            att12 = conv_w(ks[12], C, C)                  # input order [x, h]
            att3 = conv_w(ks[13], 1, C)
            w_a = jnp.concatenate(
                [att12[:, :ic], jnp.zeros((C, icp - ic, K, K), jnp.float32),
                 att12[:, ic:]], axis=1)                                  # (C, Cp, K, K)
            w_b = jnp.pad(att12, ((0, 0), (0, Cp - C), (0, 0), (0, 0)))
            w_3 = jnp.pad(att3, ((0, 0), (0, Cp - C), (0, 0), (0, 0)))
            pad_rows = ((0, Cp - C), (0, 0), (0, 0), (0, 0))
            layer['att12_a'] = _flat(jnp.pad(w_a, pad_rows)).astype(jnp.bfloat16)
            layer['att12_b'] = _flat(jnp.pad(w_b, pad_rows)).astype(jnp.bfloat16)
            layer['att3'] = _flat(w_3).astype(jnp.bfloat16)               # (1, K*K*Cp)
        layers.append(layer)
    return layers


def _border_masks(H, W, K):
    # (K*K, H*W) 0/1 masks marking in-bounds taps of the KxK 'same' conv.
    pad = (K - 1) // 2
    hh = jnp.repeat(jnp.arange(H), W)
    ww = jnp.tile(jnp.arange(W), H)
    rows = []
    for kh in range(K):
        for kw in range(K):
            dh, dw = kh - pad, kw - pad
            rows.append((hh + dh >= 0) & (hh + dh < H) &
                        (ww + dw >= 0) & (ww + dw < W))
    return jnp.stack(rows, 0).astype(jnp.float32)


# ----------------------------------------------------------------- forward --

def convlstm_forward(params, x_nchw, *, hidden_channels, ksize, step,
                     effective_step):
    bz, cin, H, W = x_nchw.shape
    num_layers = len(hidden_channels)
    HW = H * W
    KK = ksize * ksize
    ch_last = hidden_channels[-1]

    eff = tuple(sorted({int(e) for e in effective_step}))
    assert eff and all(1 <= e < step for e in eff), \
        "reference forward() only defines outputs for effective steps in [1, step)"
    n_eff = len(eff)

    in_ch = [cin] + list(hidden_channels)
    cin_pads = tuple(-(-in_ch[i] // _SUB) * _SUB for i in range(num_layers))
    c_pads = tuple(cin_pads[i] + hidden_channels[i] for i in range(num_layers))
    c_max = max(c_pads)

    # Lane-dense (C, H*W) layout; input channels zero-padded to a sublane multiple.
    x_all = jnp.pad(x_nchw.reshape(bz, cin, HW),
                    ((0, 0), (0, cin_pads[0] - cin), (0, 0)))
    masks = _border_masks(H, W, ksize)

    args = [x_all, masks,
            params[0]['att12_a'], params[0]['att12_b'], params[0]['att3']]
    in_specs = [
        pl.BlockSpec((None, cin_pads[0], HW), lambda b: (b, 0, 0)),  # per-batch frame
        pl.BlockSpec(masks.shape, lambda b: (0, 0)),                 # constants: DMA'd once
        pl.BlockSpec(params[0]['att12_a'].shape, lambda b: (0, 0)),
        pl.BlockSpec(params[0]['att12_b'].shape, lambda b: (0, 0)),
        pl.BlockSpec(params[0]['att3'].shape, lambda b: (0, 0)),
    ]
    for i in range(num_layers):
        in_specs += [pl.BlockSpec(params[i]['w_gates'].shape, lambda b: (0, 0)),
                     pl.BlockSpec(params[i]['b_gates'].shape, lambda b: (0, 0))]
        args += [params[i]['w_gates'], params[i]['b_gates']]

    scratch = []
    for i in range(num_layers):
        scratch += [pltpu.VMEM((c_pads[i], HW), jnp.float32),            # [x | h] state
                    pltpu.VMEM((hidden_channels[i], HW), jnp.float32)]   # cell state c
    scratch += [pltpu.VMEM((KK * c_pads[0], HW), jnp.bfloat16),  # layer-0 im2col (reused by gates)
                pltpu.VMEM((KK * c_max, HW), jnp.bfloat16)]      # generic im2col

    kernel = functools.partial(
        _fused_kernel, num_layers=num_layers, step=step, H=H, W=W, K=ksize,
        hidden_channels=tuple(hidden_channels), cin_pads=cin_pads,
        c_pads=c_pads, eff_steps=eff)

    out_all = pl.pallas_call(
        kernel,
        out_shape=jax.ShapeDtypeStruct((bz, n_eff, ch_last, HW), jnp.float32),
        grid_spec=pltpu.PrefetchScalarGridSpec(
            num_scalar_prefetch=0,
            grid=(bz,),
            in_specs=in_specs,
            out_specs=pl.BlockSpec((None, n_eff, ch_last, HW),
                                   lambda b: (b, 0, 0, 0)),
            scratch_shapes=scratch),
        # Recurrent state carries across batches (reference quirk) -> the batch
        # grid must stay sequential; megacore "parallel" would break semantics.
        compiler_params=pltpu.CompilerParams(
            dimension_semantics=("arbitrary",)),
    )(*args)

    # Reference output-collection quirk: batch 0 OVERWRITES per effective step
    # (only the last survives); batches > 0 append one frame per effective step.
    pieces = [out_all[0, n_eff - 1:n_eff]]
    for b in range(1, bz):
        pieces.append(out_all[b])
    return jnp.concatenate(pieces, axis=0).reshape(-1, ch_last, H, W)


# ----------------------------------------------------------------------- main

if __name__ == "__main__":
    key = jax.random.PRNGKey(0)
    k_in, k_par = jax.random.split(key)

    bz, cin, H, W = 2, 4, 16, 16
    hidden_channels = (8, 8)
    ksize, step, effective_step = 3, 5, (4,)

    x = jax.random.normal(k_in, (bz, cin, H, W), jnp.float32)
    params = init_convlstm_params(k_par, cin, hidden_channels, ksize)

    fwd = jax.jit(functools.partial(
        convlstm_forward, hidden_channels=hidden_channels, ksize=ksize,
        step=step, effective_step=effective_step))
    out = jax.block_until_ready(fwd(params, x))

    # 1 frame from batch 0 (overwrite quirk) + len(effective_step) per later batch.
    assert out.shape == (1 + (bz - 1) * len(effective_step),
                         hidden_channels[-1], H, W), out.shape
    assert bool(jnp.all(jnp.isfinite(out)))
    print("KERNEL_OK")
</pallas_src>

<mosaic_0001>
module attributes {stable_mosaic.version = 11 : i64} {
  func.func @_fused_kernel(%arg0: i32, %arg1: memref<1x8x256xf32, #tpu.memory_space<vmem>>, %arg2: memref<9x256xf32, #tpu.memory_space<vmem>>, %arg3: memref<16x144xbf16, #tpu.memory_space<vmem>>, %arg4: memref<16x144xbf16, #tpu.memory_space<vmem>>, %arg5: memref<1x144xbf16, #tpu.memory_space<vmem>>, %arg6: memref<32x144xbf16, #tpu.memory_space<vmem>>, %arg7: memref<32x1xf32, #tpu.memory_space<vmem>>, %arg8: memref<32x144xbf16, #tpu.memory_space<vmem>>, %arg9: memref<32x1xf32, #tpu.memory_space<vmem>>, %arg10: memref<1x1x8x256xf32, #tpu.memory_space<vmem>>, %arg11: memref<16x256xf32, #tpu.memory_space<vmem>>, %arg12: memref<8x256xf32, #tpu.memory_space<vmem>>, %arg13: memref<16x256xf32, #tpu.memory_space<vmem>>, %arg14: memref<8x256xf32, #tpu.memory_space<vmem>>, %arg15: memref<144x256xbf16, #tpu.memory_space<vmem>>, %arg16: memref<144x256xbf16, #tpu.memory_space<vmem>>) attributes {dimension_semantics = [#tpu.dimension_semantics<arbitrary>], iteration_bounds = array<i64: 2>, scalar_prefetch = 0 : i64, scratch_operands = 6 : i64, tpu.core_type = #tpu.core_type<tc>, window_params = [{transform_indices = @transform_0, window_bounds = array<i64: 1, 8, 256>}, {pipeline_mode = #tpu.pipeline_mode<synchronous>, transform_indices = @transform_1, window_bounds = array<i64: 9, 256>}, {pipeline_mode = #tpu.pipeline_mode<synchronous>, transform_indices = @transform_2, window_bounds = array<i64: 16, 144>}, {pipeline_mode = #tpu.pipeline_mode<synchronous>, transform_indices = @transform_3, window_bounds = array<i64: 16, 144>}, {pipeline_mode = #tpu.pipeline_mode<synchronous>, transform_indices = @transform_4, window_bounds = array<i64: 1, 144>}, {pipeline_mode = #tpu.pipeline_mode<synchronous>, transform_indices = @transform_5, window_bounds = array<i64: 32, 144>}, {pipeline_mode = #tpu.pipeline_mode<synchronous>, transform_indices = @transform_6, window_bounds = array<i64: 32, 1>}, {pipeline_mode = #tpu.pipeline_mode<synchronous>, transform_indices = @transform_7, window_bounds = array<i64: 32, 144>}, {pipeline_mode = #tpu.pipeline_mode<synchronous>, transform_indices = @transform_8, window_bounds = array<i64: 32, 1>}, {transform_indices = @transform_9, window_bounds = array<i64: 1, 1, 8, 256>}]} {
    %c0 = arith.constant 0 : index
    %c0_0 = arith.constant 0 : index
    %0 = vector.load %arg2[%c0, %c0_0] : memref<9x256xf32, #tpu.memory_space<vmem>>, vector<1x256xf32>
    %c1 = arith.constant 1 : index
    %c0_1 = arith.constant 0 : index
    %1 = vector.load %arg2[%c1, %c0_1] : memref<9x256xf32, #tpu.memory_space<vmem>>, vector<1x256xf32>
    %c2 = arith.constant 2 : index
    %c0_2 = arith.constant 0 : index
    %2 = vector.load %arg2[%c2, %c0_2] : memref<9x256xf32, #tpu.memory_space<vmem>>, vector<1x256xf32>
    %c3 = arith.constant 3 : index
    %c0_3 = arith.constant 0 : index
    %3 = vector.load %arg2[%c3, %c0_3] : memref<9x256xf32, #tpu.memory_space<vmem>>, vector<1x256xf32>
    %c5 = arith.constant 5 : index
    %c0_4 = arith.constant 0 : index
    %4 = vector.load %arg2[%c5, %c0_4] : memref<9x256xf32, #tpu.memory_space<vmem>>, vector<1x256xf32>
    %c6 = arith.constant 6 : index
    %c0_5 = arith.constant 0 : index
    %5 = vector.load %arg2[%c6, %c0_5] : memref<9x256xf32, #tpu.memory_space<vmem>>, vector<1x256xf32>
    %c7 = arith.constant 7 : index
    %c0_6 = arith.constant 0 : index
    %6 = vector.load %arg2[%c7, %c0_6] : memref<9x256xf32, #tpu.memory_space<vmem>>, vector<1x256xf32>
    %c8 = arith.constant 8 : index
    %c0_7 = arith.constant 0 : index
    %7 = vector.load %arg2[%c8, %c0_7] : memref<9x256xf32, #tpu.memory_space<vmem>>, vector<1x256xf32>
    %c0_i32 = arith.constant 0 : i32
    %8 = arith.cmpi eq, %arg0, %c0_i32 : i32
    %9 = arith.extui %8 : i1 to i32
    %c0_i32_8 = arith.constant 0 : i32
    %10 = arith.cmpi ne, %9, %c0_i32_8 : i32
    scf.if %10 {
      %cst_817 = arith.constant 0.000000e+00 : f32
      %1293 = vector.broadcast %cst_817 : f32 to vector<16x256xf32>
      %c0_818 = arith.constant 0 : index
      %c0_819 = arith.constant 0 : index
      %1294 = vector.load %arg11[%c0_818, %c0_819] : memref<16x256xf32, #tpu.memory_space<vmem>>, vector<16x256xf32>
      tpu.vector_store %arg11[%c0_818, %c0_819], %1293 {strides = array<i32>} : memref<16x256xf32, #tpu.memory_space<vmem>>, vector<16x256xf32>,
      %cst_820 = arith.constant 0.000000e+00 : f32
      %1295 = vector.broadcast %cst_820 : f32 to vector<8x256xf32>
      %c0_821 = arith.constant 0 : index
      %c0_822 = arith.constant 0 : index
      %1296 = vector.load %arg12[%c0_821, %c0_822] : memref<8x256xf32, #tpu.memory_space<vmem>>, vector<8x256xf32>
      tpu.vector_store %arg12[%c0_821, %c0_822], %1295 {strides = array<i32>} : memref<8x256xf32, #tpu.memory_space<vmem>>, vector<8x256xf32>,
      %cst_823 = arith.constant 0.000000e+00 : f32
      %1297 = vector.broadcast %cst_823 : f32 to vector<16x256xf32>
      %c0_824 = arith.constant 0 : index
      %c0_825 = arith.constant 0 : index
      %1298 = vector.load %arg13[%c0_824, %c0_825] : memref<16x256xf32, #tpu.memory_space<vmem>>, vector<16x256xf32>
      tpu.vector_store %arg13[%c0_824, %c0_825], %1297 {strides = array<i32>} : memref<16x256xf32, #tpu.memory_space<vmem>>, vector<16x256xf32>,
      %cst_826 = arith.constant 0.000000e+00 : f32
      %1299 = vector.broadcast %cst_826 : f32 to vector<8x256xf32>
      %c0_827 = arith.constant 0 : index
      %c0_828 = arith.constant 0 : index
      %1300 = vector.load %arg14[%c0_827, %c0_828] : memref<8x256xf32, #tpu.memory_space<vmem>>, vector<8x256xf32>
      tpu.vector_store %arg14[%c0_827, %c0_828], %1299 {strides = array<i32>} : memref<8x256xf32, #tpu.memory_space<vmem>>, vector<8x256xf32>,
    } else {
    }
    %c0_9 = arith.constant 0 : index
    %c0_10 = arith.constant 0 : index
    %c0_11 = arith.constant 0 : index
    %11 = vector.load %arg1[%c0_9, %c0_10, %c0_11] : memref<1x8x256xf32, #tpu.memory_space<vmem>>, vector<1x8x256xf32>
    %12 = vector.shape_cast %11 : vector<1x8x256xf32> to vector<8x256xf32>
    %c0_12 = arith.constant 0 : index
    %c0_13 = arith.constant 0 : index
    %13 = vector.load %arg11[%c0_12, %c0_13] : memref<16x256xf32, #tpu.memory_space<vmem>>, vector<8x256xf32>
    tpu.vector_store %arg11[%c0_12, %c0_13], %12 {strides = array<i32>} : memref<16x256xf32, #tpu.memory_space<vmem>>, vector<8x256xf32>,
    %c0_14 = arith.constant 0 : index
    %c0_15 = arith.constant 0 : index
    %14 = vector.load %arg11[%c0_14, %c0_15] : memref<16x256xf32, #tpu.memory_space<vmem>>, vector<16x256xf32>
    %c17_i32 = arith.constant 17 : i32
    %15 = tpu.dynamic_rotate %14 by %c17_i32 dim 1 : vector<16x256xf32>, i32 -> vector<16x256xf32>
    %16 = vector.broadcast %0 : vector<1x256xf32> to vector<16x256xf32>
    %17 = arith.mulf %15, %16 : vector<16x256xf32>
    %18 = arith.truncf %17 : vector<16x256xf32> to vector<16x256xbf16>
    %c0_16 = arith.constant 0 : index
    %c0_17 = arith.constant 0 : index
    %19 = vector.load %arg15[%c0_16, %c0_17] : memref<144x256xbf16, #tpu.memory_space<vmem>>, vector<16x256xbf16>
    tpu.vector_store %arg15[%c0_16, %c0_17], %18 {strides = array<i32>} : memref<144x256xbf16, #tpu.memory_space<vmem>>, vector<16x256xbf16>,
    %c16_i32 = arith.constant 16 : i32
    %20 = tpu.dynamic_rotate %14 by %c16_i32 dim 1 : vector<16x256xf32>, i32 -> vector<16x256xf32>
    %21 = vector.broadcast %1 : vector<1x256xf32> to vector<16x256xf32>
    %22 = arith.mulf %20, %21 : vector<16x256xf32>
    %23 = arith.truncf %22 : vector<16x256xf32> to vector<16x256xbf16>
    %c16 = arith.constant 16 : index
    %c0_18 = arith.constant 0 : index
    %24 = vector.load %arg15[%c16, %c0_18] : memref<144x256xbf16, #tpu.memory_space<vmem>>, vector<16x256xbf16>
    tpu.vector_store %arg15[%c16, %c0_18], %23 {strides = array<i32>} : memref<144x256xbf16, #tpu.memory_space<vmem>>, vector<16x256xbf16>,
    %c15_i32 = arith.constant 15 : i32
    %25 = tpu.dynamic_rotate %14 by %c15_i32 dim 1 : vector<16x256xf32>, i32 -> vector<16x256xf32>
    %26 = vector.broadcast %2 : vector<1x256xf32> to vector<16x256xf32>
    %27 = arith.mulf %25, %26 : vector<16x256xf32>
    %28 = arith.truncf %27 : vector<16x256xf32> to vector<16x256xbf16>
    %c32 = arith.constant 32 : index
    %c0_19 = arith.constant 0 : index
    %29 = vector.load %arg15[%c32, %c0_19] : memref<144x256xbf16, #tpu.memory_space<vmem>>, vector<16x256xbf16>
    tpu.vector_store %arg15[%c32, %c0_19], %28 {strides = array<i32>} : memref<144x256xbf16, #tpu.memory_space<vmem>>, vector<16x256xbf16>,
    %c1_i32 = arith.constant 1 : i32
    %30 = tpu.dynamic_rotate %14 by %c1_i32 dim 1 : vector<16x256xf32>, i32 -> vector<16x256xf32>
    %31 = vector.broadcast %3 : vector<1x256xf32> to vector<16x256xf32>
    %32 = arith.mulf %30, %31 : vector<16x256xf32>
    %33 = arith.truncf %32 : vector<16x256xf32> to vector<16x256xbf16>
    %c48 = arith.constant 48 : index
    %c0_20 = arith.constant 0 : index
    %34 = vector.load %arg15[%c48, %c0_20] : memref<144x256xbf16, #tpu.memory_space<vmem>>, vector<16x256xbf16>
    tpu.vector_store %arg15[%c48, %c0_20], %33 {strides = array<i32>} : memref<144x256xbf16, #tpu.memory_space<vmem>>, vector<16x256xbf16>,
    %35 = arith.truncf %14 : vector<16x256xf32> to vector<16x256xbf16>
    %c64 = arith.constant 64 : index
    %c0_21 = arith.constant 0 : index
    %36 = vector.load %arg15[%c64, %c0_21] : memref<144x256xbf16, #tpu.memory_space<vmem>>, vector<16x256xbf16>
    tpu.vector_store %arg15[%c64, %c0_21], %35 {strides = array<i32>} : memref<144x256xbf16, #tpu.memory_space<vmem>>, vector<16x256xbf16>,
    %c255_i32 = arith.constant 255 : i32
    %37 = tpu.dynamic_rotate %14 by %c255_i32 dim 1 : vector<16x256xf32>, i32 -> vector<16x256xf32>
    %38 = vector.broadcast %4 : vector<1x256xf32> to vector<16x256xf32>
    %39 = arith.mulf %37, %38 : vector<16x256xf32>
    %40 = arith.truncf %39 : vector<16x256xf32> to vector<16x256xbf16>
    %c80 = arith.constant 80 : index
    %c0_22 = arith.constant 0 : index
    %41 = vector.load %arg15[%c80, %c0_22] : memref<144x256xbf16, #tpu.memory_space<vmem>>, vector<16x256xbf16>
    tpu.vector_store %arg15[%c80, %c0_22], %40 {strides = array<i32>} : memref<144x256xbf16, #tpu.memory_space<vmem>>, vector<16x256xbf16>,
    %c241_i32 = arith.constant 241 : i32
    %42 = tpu.dynamic_rotate %14 by %c241_i32 dim 1 : vector<16x256xf32>, i32 -> vector<16x256xf32>
    %43 = vector.broadcast %5 : vector<1x256xf32> to vector<16x256xf32>
    %44 = arith.mulf %42, %43 : vector<16x256xf32>
    %45 = arith.truncf %44 : vector<16x256xf32> to vector<16x256xbf16>
    %c96 = arith.constant 96 : index
    %c0_23 = arith.constant 0 : index
    %46 = vector.load %arg15[%c96, %c0_23] : memref<144x256xbf16, #tpu.memory_space<vmem>>, vector<16x256xbf16>
    tpu.vector_store %arg15[%c96, %c0_23], %45 {strides = array<i32>} : memref<144x256xbf16, #tpu.memory_space<vmem>>, vector<16x256xbf16>,
    %c240_i32 = arith.constant 240 : i32
    %47 = tpu.dynamic_rotate %14 by %c240_i32 dim 1 : vector<16x256xf32>, i32 -> vector<16x256xf32>
    %48 = vector.broadcast %6 : vector<1x256xf32> to vector<16x256xf32>
    %49 = arith.mulf %47, %48 : vector<16x256xf32>
    %50 = arith.truncf %49 : vector<16x256xf32> to vector<16x256xbf16>
    %c112 = arith.constant 112 : index
    %c0_24 = arith.constant 0 : index
    %51 = vector.load %arg15[%c112, %c0_24] : memref<144x256xbf16, #tpu.memory_space<vmem>>, vector<16x256xbf16>
    tpu.vector_store %arg15[%c112, %c0_24], %50 {strides = array<i32>} : memref<144x256xbf16, #tpu.memory_space<vmem>>, vector<16x256xbf16>,
    %c239_i32 = arith.constant 239 : i32
    %52 = tpu.dynamic_rotate %14 by %c239_i32 dim 1 : vector<16x256xf32>, i32 -> vector<16x256xf32>
    %53 = vector.broadcast %7 : vector<1x256xf32> to vector<16x256xf32>
    %54 = arith.mulf %52, %53 : vector<16x256xf32>
    %55 = arith.truncf %54 : vector<16x256xf32> to vector<16x256xbf16>
    %c128 = arith.constant 128 : index
    %c0_25 = arith.constant 0 : index
    %56 = vector.load %arg15[%c128, %c0_25] : memref<144x256xbf16, #tpu.memory_space<vmem>>, vector<16x256xbf16>
    tpu.vector_store %arg15[%c128, %c0_25], %55 {strides = array<i32>} : memref<144x256xbf16, #tpu.memory_space<vmem>>, vector<16x256xbf16>,
    %c0_26 = arith.constant 0 : index
    %c0_27 = arith.constant 0 : index
    %57 = vector.load %arg3[%c0_26, %c0_27] : memref<16x144xbf16, #tpu.memory_space<vmem>>, vector<16x144xbf16>
    %c0_28 = arith.constant 0 : index
    %c0_29 = arith.constant 0 : index
    %58 = vector.load %arg15[%c0_28, %c0_29] : memref<144x256xbf16, #tpu.memory_space<vmem>>, vector<144x256xbf16>
    %cst = arith.constant dense<0.000000e+00> : vector<16x256xf32>
    %59 = tpu.matmul %57, %58, %cst {dimension_numbers = #tpu.dot_dimension_numbers<[1], [0], [0], [1], [0, 0, 1, 1], [], []>} : vector<16x144xbf16>, vector<144x256xbf16>, vector<16x256xf32> -> vector<16x256xf32>
    %cst_30 = arith.constant 0.000000e+00 : f32
    %60 = vector.broadcast %cst_30 : f32 to vector<16x256xf32>
    %61 = arith.maximumf %59, %60 : vector<16x256xf32>
    %c17_i32_31 = arith.constant 17 : i32
    %62 = tpu.dynamic_rotate %61 by %c17_i32_31 dim 1 : vector<16x256xf32>, i32 -> vector<16x256xf32>
    %63 = vector.broadcast %0 : vector<1x256xf32> to vector<16x256xf32>
    %64 = arith.mulf %62, %63 : vector<16x256xf32>
    %65 = arith.truncf %64 : vector<16x256xf32> to vector<16x256xbf16>
    %c0_32 = arith.constant 0 : index
    %c0_33 = arith.constant 0 : index
    %66 = vector.load %arg16[%c0_32, %c0_33] : memref<144x256xbf16, #tpu.memory_space<vmem>>, vector<16x256xbf16>
    tpu.vector_store %arg16[%c0_32, %c0_33], %65 {strides = array<i32>} : memref<144x256xbf16, #tpu.memory_space<vmem>>, vector<16x256xbf16>,
    %c16_i32_34 = arith.constant 16 : i32
    %67 = tpu.dynamic_rotate %61 by %c16_i32_34 dim 1 : vector<16x256xf32>, i32 -> vector<16x256xf32>
    %68 = vector.broadcast %1 : vector<1x256xf32> to vector<16x256xf32>
    %69 = arith.mulf %67, %68 : vector<16x256xf32>
    %70 = arith.truncf %69 : vector<16x256xf32> to vector<16x256xbf16>
    %c16_35 = arith.constant 16 : index
    %c0_36 = arith.constant 0 : index
    %71 = vector.load %arg16[%c16_35, %c0_36] : memref<144x256xbf16, #tpu.memory_space<vmem>>, vector<16x256xbf16>
    tpu.vector_store %arg16[%c16_35, %c0_36], %70 {strides = array<i32>} : memref<144x256xbf16, #tpu.memory_space<vmem>>, vector<16x256xbf16>,
    %c15_i32_37 = arith.constant 15 : i32
    %72 = tpu.dynamic_rotate %61 by %c15_i32_37 dim 1 : vector<16x256xf32>, i32 -> vector<16x256xf32>
    %73 = vector.broadcast %2 : vector<1x256xf32> to vector<16x256xf32>
    %74 = arith.mulf %72, %73 : vector<16x256xf32>
    %75 = arith.truncf %74 : vector<16x256xf32> to vector<16x256xbf16>
    %c32_38 = arith.constant 32 : index
    %c0_39 = arith.constant 0 : index
    %76 = vector.load %arg16[%c32_38, %c0_39] : memref<144x256xbf16, #tpu.memory_space<vmem>>, vector<16x256xbf16>
    tpu.vector_store %arg16[%c32_38, %c0_39], %75 {strides = array<i32>} : memref<144x256xbf16, #tpu.memory_space<vmem>>, vector<16x256xbf16>,
    %c1_i32_40 = arith.constant 1 : i32
    %77 = tpu.dynamic_rotate %61 by %c1_i32_40 dim 1 : vector<16x256xf32>, i32 -> vector<16x256xf32>
    %78 = vector.broadcast %3 : vector<1x256xf32> to vector<16x256xf32>
    %79 = arith.mulf %77, %78 : vector<16x256xf32>
    %80 = arith.truncf %79 : vector<16x256xf32> to vector<16x256xbf16>
    %c48_41 = arith.constant 48 : index
    %c0_42 = arith.constant 0 : index
    %81 = vector.load %arg16[%c48_41, %c0_42] : memref<144x256xbf16, #tpu.memory_space<vmem>>, vector<16x256xbf16>
    tpu.vector_store %arg16[%c48_41, %c0_42], %80 {strides = array<i32>} : memref<144x256xbf16, #tpu.memory_space<vmem>>, vector<16x256xbf16>,
    %82 = arith.truncf %61 : vector<16x256xf32> to vector<16x256xbf16>
    %c64_43 = arith.constant 64 : index
    %c0_44 = arith.constant 0 : index
    %83 = vector.load %arg16[%c64_43, %c0_44] : memref<144x256xbf16, #tpu.memory_space<vmem>>, vector<16x256xbf16>
    tpu.vector_store %arg16[%c64_43, %c0_44], %82 {strides = array<i32>} : memref<144x256xbf16, #tpu.memory_space<vmem>>, vector<16x256xbf16>,
    %c255_i32_45 = arith.constant 255 : i32
    %84 = tpu.dynamic_rotate %61 by %c255_i32_45 dim 1 : vector<16x256xf32>, i32 -> vector<16x256xf32>
    %85 = vector.broadcast %4 : vector<1x256xf32> to vector<16x256xf32>
    %86 = arith.mulf %84, %85 : vector<16x256xf32>
    %87 = arith.truncf %86 : vector<16x256xf32> to vector<16x256xbf16>
    %c80_46 = arith.constant 80 : index
    %c0_47 = arith.constant 0 : index
    %88 = vector.load %arg16[%c80_46, %c0_47] : memref<144x256xbf16, #tpu.memory_space<vmem>>, vector<16x256xbf16>
    tpu.vector_store %arg16[%c80_46, %c0_47], %87 {strides = array<i32>} : memref<144x256xbf16, #tpu.memory_space<vmem>>, vector<16x256xbf16>,
    %c241_i32_48 = arith.constant 241 : i32
    %89 = tpu.dynamic_rotate %61 by %c241_i32_48 dim 1 : vector<16x256xf32>, i32 -> vector<16x256xf32>
    %90 = vector.broadcast %5 : vector<1x256xf32> to vector<16x256xf32>
    %91 = arith.mulf %89, %90 : vector<16x256xf32>
    %92 = arith.truncf %91 : vector<16x256xf32> to vector<16x256xbf16>
    %c96_49 = arith.constant 96 : index
    %c0_50 = arith.constant 0 : index
    %93 = vector.load %arg16[%c96_49, %c0_50] : memref<144x256xbf16, #tpu.memory_space<vmem>>, vector<16x256xbf16>
    tpu.vector_store %arg16[%c96_49, %c0_50], %92 {strides = array<i32>} : memref<144x256xbf16, #tpu.memory_space<vmem>>, vector<16x256xbf16>,
    %c240_i32_51 = arith.constant 240 : i32
    %94 = tpu.dynamic_rotate %61 by %c240_i32_51 dim 1 : vector<16x256xf32>, i32 -> vector<16x256xf32>
    %95 = vector.broadcast %6 : vector<1x256xf32> to vector<16x256xf32>
    %96 = arith.mulf %94, %95 : vector<16x256xf32>
    %97 = arith.truncf %96 : vector<16x256xf32> to vector<16x256xbf16>
    %c112_52 = arith.constant 112 : index
    %c0_53 = arith.constant 0 : index
    %98 = vector.load %arg16[%c112_52, %c0_53] : memref<144x256xbf16, #tpu.memory_space<vmem>>, vector<16x256xbf16>
    tpu.vector_store %arg16[%c112_52, %c0_53], %97 {strides = array<i32>} : memref<144x256xbf16, #tpu.memory_space<vmem>>, vector<16x256xbf16>,
    %c239_i32_54 = arith.constant 239 : i32
    %99 = tpu.dynamic_rotate %61 by %c239_i32_54 dim 1 : vector<16x256xf32>, i32 -> vector<16x256xf32>
    %100 = vector.broadcast %7 : vector<1x256xf32> to vector<16x256xf32>
    %101 = arith.mulf %99, %100 : vector<16x256xf32>
    %102 = arith.truncf %101 : vector<16x256xf32> to vector<16x256xbf16>
    %c128_55 = arith.constant 128 : index
    %c0_56 = arith.constant 0 : index
    %103 = vector.load %arg16[%c128_55, %c0_56] : memref<144x256xbf16, #tpu.memory_space<vmem>>, vector<16x256xbf16>
    tpu.vector_store %arg16[%c128_55, %c0_56], %102 {strides = array<i32>} : memref<144x256xbf16, #tpu.memory_space<vmem>>, vector<16x256xbf16>,
    %c0_57 = arith.constant 0 : index
    %c0_58 = arith.constant 0 : index
    %104 = vector.load %arg4[%c0_57, %c0_58] : memref<16x144xbf16, #tpu.memory_space<vmem>>, vector<16x144xbf16>
    %c0_59 = arith.constant 0 : index
    %c0_60 = arith.constant 0 : index
    %105 = vector.load %arg16[%c0_59, %c0_60] : memref<144x256xbf16, #tpu.memory_space<vmem>>, vector<144x256xbf16>
    %cst_61 = arith.constant dense<0.000000e+00> : vector<16x256xf32>
    %106 = tpu.matmul %104, %105, %cst_61 {dimension_numbers = #tpu.dot_dimension_numbers<[1], [0], [0], [1], [0, 0, 1, 1], [], []>} : vector<16x144xbf16>, vector<144x256xbf16>, vector<16x256xf32> -> vector<16x256xf32>
    %cst_62 = arith.constant 0.000000e+00 : f32
    %107 = vector.broadcast %cst_62 : f32 to vector<16x256xf32>
    %108 = arith.maximumf %106, %107 : vector<16x256xf32>
    %c17_i32_63 = arith.constant 17 : i32
    %109 = tpu.dynamic_rotate %108 by %c17_i32_63 dim 1 : vector<16x256xf32>, i32 -> vector<16x256xf32>
    %110 = vector.broadcast %0 : vector<1x256xf32> to vector<16x256xf32>
    %111 = arith.mulf %109, %110 : vector<16x256xf32>
    %112 = arith.truncf %111 : vector<16x256xf32> to vector<16x256xbf16>
    %c0_64 = arith.constant 0 : index
    %c0_65 = arith.constant 0 : index
    %113 = vector.load %arg16[%c0_64, %c0_65] : memref<144x256xbf16, #tpu.memory_space<vmem>>, vector<16x256xbf16>
    tpu.vector_store %arg16[%c0_64, %c0_65], %112 {strides = array<i32>} : memref<144x256xbf16, #tpu.memory_space<vmem>>, vector<16x256xbf16>,
    %c16_i32_66 = arith.constant 16 : i32
    %114 = tpu.dynamic_rotate %108 by %c16_i32_66 dim 1 : vector<16x256xf32>, i32 -> vector<16x256xf32>
    %115 = vector.broadcast %1 : vector<1x256xf32> to vector<16x256xf32>
    %116 = arith.mulf %114, %115 : vector<16x256xf32>
    %117 = arith.truncf %116 : vector<16x256xf32> to vector<16x256xbf16>
    %c16_67 = arith.constant 16 : index
    %c0_68 = arith.constant 0 : index
    %118 = vector.load %arg16[%c16_67, %c0_68] : memref<144x256xbf16, #tpu.memory_space<vmem>>, vector<16x256xbf16>
    tpu.vector_store %arg16[%c16_67, %c0_68], %117 {strides = array<i32>} : memref<144x256xbf16, #tpu.memory_space<vmem>>, vector<16x256xbf16>,
    %c15_i32_69 = arith.constant 15 : i32
    %119 = tpu.dynamic_rotate %108 by %c15_i32_69 dim 1 : vector<16x256xf32>, i32 -> vector<16x256xf32>
    %120 = vector.broadcast %2 : vector<1x256xf32> to vector<16x256xf32>
    %121 = arith.mulf %119, %120 : vector<16x256xf32>
    %122 = arith.truncf %121 : vector<16x256xf32> to vector<16x256xbf16>
    %c32_70 = arith.constant 32 : index
    %c0_71 = arith.constant 0 : index
    %123 = vector.load %arg16[%c32_70, %c0_71] : memref<144x256xbf16, #tpu.memory_space<vmem>>, vector<16x256xbf16>
    tpu.vector_store %arg16[%c32_70, %c0_71], %122 {strides = array<i32>} : memref<144x256xbf16, #tpu.memory_space<vmem>>, vector<16x256xbf16>,
    %c1_i32_72 = arith.constant 1 : i32
    %124 = tpu.dynamic_rotate %108 by %c1_i32_72 dim 1 : vector<16x256xf32>, i32 -> vector<16x256xf32>
    %125 = vector.broadcast %3 : vector<1x256xf32> to vector<16x256xf32>
    %126 = arith.mulf %124, %125 : vector<16x256xf32>
    %127 = arith.truncf %126 : vector<16x256xf32> to vector<16x256xbf16>
    %c48_73 = arith.constant 48 : index
    %c0_74 = arith.constant 0 : index
    %128 = vector.load %arg16[%c48_73, %c0_74] : memref<144x256xbf16, #tpu.memory_space<vmem>>, vector<16x256xbf16>
    tpu.vector_store %arg16[%c48_73, %c0_74], %127 {strides = array<i32>} : memref<144x256xbf16, #tpu.memory_space<vmem>>, vector<16x256xbf16>,
    %129 = arith.truncf %108 : vector<16x256xf32> to vector<16x256xbf16>
    %c64_75 = arith.constant 64 : index
    %c0_76 = arith.constant 0 : index
    %130 = vector.load %arg16[%c64_75, %c0_76] : memref<144x256xbf16, #tpu.memory_space<vmem>>, vector<16x256xbf16>
    tpu.vector_store %arg16[%c64_75, %c0_76], %129 {strides = array<i32>} : memref<144x256xbf16, #tpu.memory_space<vmem>>, vector<16x256xbf16>,
    %c255_i32_77 = arith.constant 255 : i32
    %131 = tpu.dynamic_rotate %108 by %c255_i32_77 dim 1 : vector<16x256xf32>, i32 -> vector<16x256xf32>
    %132 = vector.broadcast %4 : vector<1x256xf32> to vector<16x256xf32>
    %133 = arith.mulf %131, %132 : vector<16x256xf32>
    %134 = arith.truncf %133 : vector<16x256xf32> to vector<16x256xbf16>
    %c80_78 = arith.constant 80 : index
    %c0_79 = arith.constant 0 : index
    %135 = vector.load %arg16[%c80_78, %c0_79] : memref<144x256xbf16, #tpu.memory_space<vmem>>, vector<16x256xbf16>
    tpu.vector_store %arg16[%c80_78, %c0_79], %134 {strides = array<i32>} : memref<144x256xbf16, #tpu.memory_space<vmem>>, vector<16x256xbf16>,
    %c241_i32_80 = arith.constant 241 : i32
    %136 = tpu.dynamic_rotate %108 by %c241_i32_80 dim 1 : vector<16x256xf32>, i32 -> vector<16x256xf32>
    %137 = vector.broadcast %5 : vector<1x256xf32> to vector<16x256xf32>
    %138 = arith.mulf %136, %137 : vector<16x256xf32>
    %139 = arith.truncf %138 : vector<16x256xf32> to vector<16x256xbf16>
    %c96_81 = arith.constant 96 : index
    %c0_82 = arith.constant 0 : index
    %140 = vector.load %arg16[%c96_81, %c0_82] : memref<144x256xbf16, #tpu.memory_space<vmem>>, vector<16x256xbf16>
    tpu.vector_store %arg16[%c96_81, %c0_82], %139 {strides = array<i32>} : memref<144x256xbf16, #tpu.memory_space<vmem>>, vector<16x256xbf16>,
    %c240_i32_83 = arith.constant 240 : i32
    %141 = tpu.dynamic_rotate %108 by %c240_i32_83 dim 1 : vector<16x256xf32>, i32 -> vector<16x256xf32>
    %142 = vector.broadcast %6 : vector<1x256xf32> to vector<16x256xf32>
    %143 = arith.mulf %141, %142 : vector<16x256xf32>
    %144 = arith.truncf %143 : vector<16x256xf32> to vector<16x256xbf16>
    %c112_84 = arith.constant 112 : index
    %c0_85 = arith.constant 0 : index
    %145 = vector.load %arg16[%c112_84, %c0_85] : memref<144x256xbf16, #tpu.memory_space<vmem>>, vector<16x256xbf16>
    tpu.vector_store %arg16[%c112_84, %c0_85], %144 {strides = array<i32>} : memref<144x256xbf16, #tpu.memory_space<vmem>>, vector<16x256xbf16>,
    %c239_i32_86 = arith.constant 239 : i32
    %146 = tpu.dynamic_rotate %108 by %c239_i32_86 dim 1 : vector<16x256xf32>, i32 -> vector<16x256xf32>
    %147 = vector.broadcast %7 : vector<1x256xf32> to vector<16x256xf32>
    %148 = arith.mulf %146, %147 : vector<16x256xf32>
    %149 = arith.truncf %148 : vector<16x256xf32> to vector<16x256xbf16>
    %c128_87 = arith.constant 128 : index
    %c0_88 = arith.constant 0 : index
    %150 = vector.load %arg16[%c128_87, %c0_88] : memref<144x256xbf16, #tpu.memory_space<vmem>>, vector<16x256xbf16>
    tpu.vector_store %arg16[%c128_87, %c0_88], %149 {strides = array<i32>} : memref<144x256xbf16, #tpu.memory_space<vmem>>, vector<16x256xbf16>,
    %c0_89 = arith.constant 0 : index
    %c0_90 = arith.constant 0 : index
    %151 = vector.load %arg5[%c0_89, %c0_90] : memref<1x144xbf16, #tpu.memory_space<vmem>>, vector<1x144xbf16>
    %c0_91 = arith.constant 0 : index
    %c0_92 = arith.constant 0 : index
    %152 = vector.load %arg16[%c0_91, %c0_92] : memref<144x256xbf16, #tpu.memory_space<vmem>>, vector<144x256xbf16>
    %cst_93 = arith.constant dense<0.000000e+00> : vector<1x256xf32>
    %153 = tpu.matmul %151, %152, %cst_93 {dimension_numbers = #tpu.dot_dimension_numbers<[1], [0], [0], [1], [0, 0, 1, 1], [], []>} : vector<1x144xbf16>, vector<144x256xbf16>, vector<1x256xf32> -> vector<1x256xf32>
    %154 = arith.negf %153 : vector<1x256xf32>
    %155 = math.exp %154 : vector<1x256xf32>
    %cst_94 = arith.constant 1.000000e+00 : f32
    %156 = vector.broadcast %cst_94 : f32 to vector<1x256xf32>
    %157 = arith.addf %156, %155 : vector<1x256xf32>
    %158 = arith.divf %156, %157 : vector<1x256xf32>
    %c17_i32_95 = arith.constant 17 : i32
    %159 = tpu.dynamic_rotate %158 by %c17_i32_95 dim 1 : vector<1x256xf32>, i32 -> vector<1x256xf32>
    %c0_96 = arith.constant 0 : index
    %c0_97 = arith.constant 0 : index
    %160 = vector.load %arg15[%c0_96, %c0_97] : memref<144x256xbf16, #tpu.memory_space<vmem>>, vector<8x256xbf16>
    %161 = arith.extf %160 : vector<8x256xbf16> to vector<8x256xf32>
    %162 = vector.broadcast %159 : vector<1x256xf32> to vector<8x256xf32>
    %163 = arith.mulf %161, %162 : vector<8x256xf32>
    %164 = arith.truncf %163 : vector<8x256xf32> to vector<8x256xbf16>
    %c0_98 = arith.constant 0 : index
    %c0_99 = arith.constant 0 : index
    %165 = vector.load %arg15[%c0_98, %c0_99] : memref<144x256xbf16, #tpu.memory_space<vmem>>, vector<8x256xbf16>
    tpu.vector_store %arg15[%c0_98, %c0_99], %164 {strides = array<i32>} : memref<144x256xbf16, #tpu.memory_space<vmem>>, vector<8x256xbf16>,
    %c16_i32_100 = arith.constant 16 : i32
    %166 = tpu.dynamic_rotate %158 by %c16_i32_100 dim 1 : vector<1x256xf32>, i32 -> vector<1x256xf32>
    %c16_101 = arith.constant 16 : index
    %c0_102 = arith.constant 0 : index
    %167 = vector.load %arg15[%c16_101, %c0_102] : memref<144x256xbf16, #tpu.memory_space<vmem>>, vector<8x256xbf16>
    %168 = arith.extf %167 : vector<8x256xbf16> to vector<8x256xf32>
    %169 = vector.broadcast %166 : vector<1x256xf32> to vector<8x256xf32>
    %170 = arith.mulf %168, %169 : vector<8x256xf32>
    %171 = arith.truncf %170 : vector<8x256xf32> to vector<8x256xbf16>
    %c16_103 = arith.constant 16 : index
    %c0_104 = arith.constant 0 : index
    %172 = vector.load %arg15[%c16_103, %c0_104] : memref<144x256xbf16, #tpu.memory_space<vmem>>, vector<8x256xbf16>
    tpu.vector_store %arg15[%c16_103, %c0_104], %171 {strides = array<i32>} : memref<144x256xbf16, #tpu.memory_space<vmem>>, vector<8x256xbf16>,
    %c15_i32_105 = arith.constant 15 : i32
    %173 = tpu.dynamic_rotate %158 by %c15_i32_105 dim 1 : vector<1x256xf32>, i32 -> vector<1x256xf32>
    %c32_106 = arith.constant 32 : index
    %c0_107 = arith.constant 0 : index
    %174 = vector.load %arg15[%c32_106, %c0_107] : memref<144x256xbf16, #tpu.memory_space<vmem>>, vector<8x256xbf16>
    %175 = arith.extf %174 : vector<8x256xbf16> to vector<8x256xf32>
    %176 = vector.broadcast %173 : vector<1x256xf32> to vector<8x256xf32>
    %177 = arith.mulf %175, %176 : vector<8x256xf32>
    %178 = arith.truncf %177 : vector<8x256xf32> to vector<8x256xbf16>
    %c32_108 = arith.constant 32 : index
    %c0_109 = arith.constant 0 : index
    %179 = vector.load %arg15[%c32_108, %c0_109] : memref<144x256xbf16, #tpu.memory_space<vmem>>, vector<8x256xbf16>
    tpu.vector_store %arg15[%c32_108, %c0_109], %178 {strides = array<i32>} : memref<144x256xbf16, #tpu.memory_space<vmem>>, vector<8x256xbf16>,
    %c1_i32_110 = arith.constant 1 : i32
    %180 = tpu.dynamic_rotate %158 by %c1_i32_110 dim 1 : vector<1x256xf32>, i32 -> vector<1x256xf32>
    %c48_111 = arith.constant 48 : index
    %c0_112 = arith.constant 0 : index
    %181 = vector.load %arg15[%c48_111, %c0_112] : memref<144x256xbf16, #tpu.memory_space<vmem>>, vector<8x256xbf16>
    %182 = arith.extf %181 : vector<8x256xbf16> to vector<8x256xf32>
    %183 = vector.broadcast %180 : vector<1x256xf32> to vector<8x256xf32>
    %184 = arith.mulf %182, %183 : vector<8x256xf32>
    %185 = arith.truncf %184 : vector<8x256xf32> to vector<8x256xbf16>
    %c48_113 = arith.constant 48 : index
    %c0_114 = arith.constant 0 : index
    %186 = vector.load %arg15[%c48_113, %c0_114] : memref<144x256xbf16, #tpu.memory_space<vmem>>, vector<8x256xbf16>
    tpu.vector_store %arg15[%c48_113, %c0_114], %185 {strides = array<i32>} : memref<144x256xbf16, #tpu.memory_space<vmem>>, vector<8x256xbf16>,
    %c64_115 = arith.constant 64 : index
    %c0_116 = arith.constant 0 : index
    %187 = vector.load %arg15[%c64_115, %c0_116] : memref<144x256xbf16, #tpu.memory_space<vmem>>, vector<8x256xbf16>
    %188 = arith.extf %187 : vector<8x256xbf16> to vector<8x256xf32>
    %189 = vector.broadcast %158 : vector<1x256xf32> to vector<8x256xf32>
    %190 = arith.mulf %188, %189 : vector<8x256xf32>
    %191 = arith.truncf %190 : vector<8x256xf32> to vector<8x256xbf16>
    %c64_117 = arith.constant 64 : index
    %c0_118 = arith.constant 0 : index
    %192 = vector.load %arg15[%c64_117, %c0_118] : memref<144x256xbf16, #tpu.memory_space<vmem>>, vector<8x256xbf16>
    tpu.vector_store %arg15[%c64_117, %c0_118], %191 {strides = array<i32>} : memref<144x256xbf16, #tpu.memory_space<vmem>>, vector<8x256xbf16>,
    %c255_i32_119 = arith.constant 255 : i32
    %193 = tpu.dynamic_rotate %158 by %c255_i32_119 dim 1 : vector<1x256xf32>, i32 -> vector<1x256xf32>
    %c80_120 = arith.constant 80 : index
    %c0_121 = arith.constant 0 : index
    %194 = vector.load %arg15[%c80_120, %c0_121] : memref<144x256xbf16, #tpu.memory_space<vmem>>, vector<8x256xbf16>
    %195 = arith.extf %194 : vector<8x256xbf16> to vector<8x256xf32>
    %196 = vector.broadcast %193 : vector<1x256xf32> to vector<8x256xf32>
    %197 = arith.mulf %195, %196 : vector<8x256xf32>
    %198 = arith.truncf %197 : vector<8x256xf32> to vector<8x256xbf16>
    %c80_122 = arith.constant 80 : index
    %c0_123 = arith.constant 0 : index
    %199 = vector.load %arg15[%c80_122, %c0_123] : memref<144x256xbf16, #tpu.memory_space<vmem>>, vector<8x256xbf16>
    tpu.vector_store %arg15[%c80_122, %c0_123], %198 {strides = array<i32>} : memref<144x256xbf16, #tpu.memory_space<vmem>>, vector<8x256xbf16>,
    %c241_i32_124 = arith.constant 241 : i32
    %200 = tpu.dynamic_rotate %158 by %c241_i32_124 dim 1 : vector<1x256xf32>, i32 -> vector<1x256xf32>
    %c96_125 = arith.constant 96 : index
    %c0_126 = arith.constant 0 : index
    %201 = vector.load %arg15[%c96_125, %c0_126] : memref<144x256xbf16, #tpu.memory_space<vmem>>, vector<8x256xbf16>
    %202 = arith.extf %201 : vector<8x256xbf16> to vector<8x256xf32>
    %203 = vector.broadcast %200 : vector<1x256xf32> to vector<8x256xf32>
    %204 = arith.mulf %202, %203 : vector<8x256xf32>
    %205 = arith.truncf %204 : vector<8x256xf32> to vector<8x256xbf16>
    %c96_127 = arith.constant 96 : index
    %c0_128 = arith.constant 0 : index
    %206 = vector.load %arg15[%c96_127, %c0_128] : memref<144x256xbf16, #tpu.memory_space<vmem>>, vector<8x256xbf16>
    tpu.vector_store %arg15[%c96_127, %c0_128], %205 {strides = array<i32>} : memref<144x256xbf16, #tpu.memory_space<vmem>>, vector<8x256xbf16>,
    %c240_i32_129 = arith.constant 240 : i32
    %207 = tpu.dynamic_rotate %158 by %c240_i32_129 dim 1 : vector<1x256xf32>, i32 -> vector<1x256xf32>
    %c112_130 = arith.constant 112 : index
    %c0_131 = arith.constant 0 : index
    %208 = vector.load %arg15[%c112_130, %c0_131] : memref<144x256xbf16, #tpu.memory_space<vmem>>, vector<8x256xbf16>
    %209 = arith.extf %208 : vector<8x256xbf16> to vector<8x256xf32>
    %210 = vector.broadcast %207 : vector<1x256xf32> to vector<8x256xf32>
    %211 = arith.mulf %209, %210 : vector<8x256xf32>
    %212 = arith.truncf %211 : vector<8x256xf32> to vector<8x256xbf16>
    %c112_132 = arith.constant 112 : index
    %c0_133 = arith.constant 0 : index
    %213 = vector.load %arg15[%c112_132, %c0_133] : memref<144x256xbf16, #tpu.memory_space<vmem>>, vector<8x256xbf16>
    tpu.vector_store %arg15[%c112_132, %c0_133], %212 {strides = array<i32>} : memref<144x256xbf16, #tpu.memory_space<vmem>>, vector<8x256xbf16>,
    %c239_i32_134 = arith.constant 239 : i32
    %214 = tpu.dynamic_rotate %158 by %c239_i32_134 dim 1 : vector<1x256xf32>, i32 -> vector<1x256xf32>
    %c128_135 = arith.constant 128 : index
    %c0_136 = arith.constant 0 : index
    %215 = vector.load %arg15[%c128_135, %c0_136] : memref<144x256xbf16, #tpu.memory_space<vmem>>, vector<8x256xbf16>
    %216 = arith.extf %215 : vector<8x256xbf16> to vector<8x256xf32>
    %217 = vector.broadcast %214 : vector<1x256xf32> to vector<8x256xf32>
    %218 = arith.mulf %216, %217 : vector<8x256xf32>
    %219 = arith.truncf %218 : vector<8x256xf32> to vector<8x256xbf16>
    %c128_137 = arith.constant 128 : index
    %c0_138 = arith.constant 0 : index
    %220 = vector.load %arg15[%c128_137, %c0_138] : memref<144x256xbf16, #tpu.memory_space<vmem>>, vector<8x256xbf16>
    tpu.vector_store %arg15[%c128_137, %c0_138], %219 {strides = array<i32>} : memref<144x256xbf16, #tpu.memory_space<vmem>>, vector<8x256xbf16>,
    %c0_139 = arith.constant 0 : index
    %c0_140 = arith.constant 0 : index
    %221 = vector.load %arg6[%c0_139, %c0_140] : memref<32x144xbf16, #tpu.memory_space<vmem>>, vector<32x144xbf16>
    %c0_141 = arith.constant 0 : index
    %c0_142 = arith.constant 0 : index
    %222 = vector.load %arg15[%c0_141, %c0_142] : memref<144x256xbf16, #tpu.memory_space<vmem>>, vector<144x256xbf16>
    %cst_143 = arith.constant dense<0.000000e+00> : vector<32x256xf32>
    %223 = tpu.matmul %221, %222, %cst_143 {dimension_numbers = #tpu.dot_dimension_numbers<[1], [0], [0], [1], [0, 0, 1, 1], [], []>} : vector<32x144xbf16>, vector<144x256xbf16>, vector<32x256xf32> -> vector<32x256xf32>
    %c0_144 = arith.constant 0 : index
    %c0_145 = arith.constant 0 : index
    %224 = vector.load %arg7[%c0_144, %c0_145] : memref<32x1xf32, #tpu.memory_space<vmem>>, vector<32x1xf32>
    %225 = vector.broadcast %224 : vector<32x1xf32> to vector<32x256xf32>
    %226 = arith.addf %223, %225 : vector<32x256xf32>
    %c0_146 = arith.constant 0 : index
    %c0_147 = arith.constant 0 : index
    %227 = vector.load %arg12[%c0_146, %c0_147] : memref<8x256xf32, #tpu.memory_space<vmem>>, vector<8x256xf32>
    %228 = vector.extract_strided_slice %226 {offsets = [0, 0], sizes = [8, 256], strides = [1, 1]} : vector<32x256xf32> to vector<8x256xf32>
    %229 = arith.negf %228 : vector<8x256xf32>
    %230 = math.exp %229 : vector<8x256xf32>
    %cst_148 = arith.constant 1.000000e+00 : f32
    %231 = vector.broadcast %cst_148 : f32 to vector<8x256xf32>
    %232 = arith.addf %231, %230 : vector<8x256xf32>
    %233 = arith.divf %231, %232 : vector<8x256xf32>
    %234 = vector.extract_strided_slice %226 {offsets = [8, 0], sizes = [8, 256], strides = [1, 1]} : vector<32x256xf32> to vector<8x256xf32>
    %235 = arith.negf %234 : vector<8x256xf32>
    %236 = math.exp %235 : vector<8x256xf32>
    %cst_149 = arith.constant 1.000000e+00 : f32
    %237 = vector.broadcast %cst_149 : f32 to vector<8x256xf32>
    %238 = arith.addf %237, %236 : vector<8x256xf32>
    %239 = arith.divf %237, %238 : vector<8x256xf32>
    %240 = arith.mulf %239, %227 : vector<8x256xf32>
    %241 = vector.extract_strided_slice %226 {offsets = [16, 0], sizes = [8, 256], strides = [1, 1]} : vector<32x256xf32> to vector<8x256xf32>
    %242 = math.tanh %241 : vector<8x256xf32>
    %243 = arith.mulf %233, %242 : vector<8x256xf32>
    %244 = arith.addf %240, %243 : vector<8x256xf32>
    %245 = vector.extract_strided_slice %226 {offsets = [24, 0], sizes = [8, 256], strides = [1, 1]} : vector<32x256xf32> to vector<8x256xf32>
    %246 = arith.negf %245 : vector<8x256xf32>
    %247 = math.exp %246 : vector<8x256xf32>
    %cst_150 = arith.constant 1.000000e+00 : f32
    %248 = vector.broadcast %cst_150 : f32 to vector<8x256xf32>
    %249 = arith.addf %248, %247 : vector<8x256xf32>
    %250 = arith.divf %248, %249 : vector<8x256xf32>
    %251 = math.tanh %244 : vector<8x256xf32>
    %252 = arith.mulf %250, %251 : vector<8x256xf32>
    %c0_151 = arith.constant 0 : index
    %c0_152 = arith.constant 0 : index
    %253 = vector.load %arg12[%c0_151, %c0_152] : memref<8x256xf32, #tpu.memory_space<vmem>>, vector<8x256xf32>
    tpu.vector_store %arg12[%c0_151, %c0_152], %244 {strides = array<i32>} : memref<8x256xf32, #tpu.memory_space<vmem>>, vector<8x256xf32>,
    %c8_153 = arith.constant 8 : index
    %c0_154 = arith.constant 0 : index
    %254 = vector.load %arg11[%c8_153, %c0_154] : memref<16x256xf32, #tpu.memory_space<vmem>>, vector<8x256xf32>
    tpu.vector_store %arg11[%c8_153, %c0_154], %252 {strides = array<i32>} : memref<16x256xf32, #tpu.memory_space<vmem>>, vector<8x256xf32>,
    %c0_155 = arith.constant 0 : index
    %c0_156 = arith.constant 0 : index
    %255 = vector.load %arg13[%c0_155, %c0_156] : memref<16x256xf32, #tpu.memory_space<vmem>>, vector<8x256xf32>
    tpu.vector_store %arg13[%c0_155, %c0_156], %252 {strides = array<i32>} : memref<16x256xf32, #tpu.memory_space<vmem>>, vector<8x256xf32>,
    %c0_157 = arith.constant 0 : index
    %c0_158 = arith.constant 0 : index
    %256 = vector.load %arg13[%c0_157, %c0_158] : memref<16x256xf32, #tpu.memory_space<vmem>>, vector<16x256xf32>
    %c17_i32_159 = arith.constant 17 : i32
    %257 = tpu.dynamic_rotate %256 by %c17_i32_159 dim 1 : vector<16x256xf32>, i32 -> vector<16x256xf32>
    %258 = vector.broadcast %0 : vector<1x256xf32> to vector<16x256xf32>
    %259 = arith.mulf %257, %258 : vector<16x256xf32>
    %260 = arith.truncf %259 : vector<16x256xf32> to vector<16x256xbf16>
    %c0_160 = arith.constant 0 : index
    %c0_161 = arith.constant 0 : index
    %261 = vector.load %arg16[%c0_160, %c0_161] : memref<144x256xbf16, #tpu.memory_space<vmem>>, vector<16x256xbf16>
    tpu.vector_store %arg16[%c0_160, %c0_161], %260 {strides = array<i32>} : memref<144x256xbf16, #tpu.memory_space<vmem>>, vector<16x256xbf16>,
    %c16_i32_162 = arith.constant 16 : i32
    %262 = tpu.dynamic_rotate %256 by %c16_i32_162 dim 1 : vector<16x256xf32>, i32 -> vector<16x256xf32>
    %263 = vector.broadcast %1 : vector<1x256xf32> to vector<16x256xf32>
    %264 = arith.mulf %262, %263 : vector<16x256xf32>
    %265 = arith.truncf %264 : vector<16x256xf32> to vector<16x256xbf16>
    %c16_163 = arith.constant 16 : index
    %c0_164 = arith.constant 0 : index
    %266 = vector.load %arg16[%c16_163, %c0_164] : memref<144x256xbf16, #tpu.memory_space<vmem>>, vector<16x256xbf16>
    tpu.vector_store %arg16[%c16_163, %c0_164], %265 {strides = array<i32>} : memref<144x256xbf16, #tpu.memory_space<vmem>>, vector<16x256xbf16>,
    %c15_i32_165 = arith.constant 15 : i32
    %267 = tpu.dynamic_rotate %256 by %c15_i32_165 dim 1 : vector<16x256xf32>, i32 -> vector<16x256xf32>
    %268 = vector.broadcast %2 : vector<1x256xf32> to vector<16x256xf32>
    %269 = arith.mulf %267, %268 : vector<16x256xf32>
    %270 = arith.truncf %269 : vector<16x256xf32> to vector<16x256xbf16>
    %c32_166 = arith.constant 32 : index
    %c0_167 = arith.constant 0 : index
    %271 = vector.load %arg16[%c32_166, %c0_167] : memref<144x256xbf16, #tpu.memory_space<vmem>>, vector<16x256xbf16>
    tpu.vector_store %arg16[%c32_166, %c0_167], %270 {strides = array<i32>} : memref<144x256xbf16, #tpu.memory_space<vmem>>, vector<16x256xbf16>,
    %c1_i32_168 = arith.constant 1 : i32
    %272 = tpu.dynamic_rotate %256 by %c1_i32_168 dim 1 : vector<16x256xf32>, i32 -> vector<16x256xf32>
    %273 = vector.broadcast %3 : vector<1x256xf32> to vector<16x256xf32>
    %274 = arith.mulf %272, %273 : vector<16x256xf32>
    %275 = arith.truncf %274 : vector<16x256xf32> to vector<16x256xbf16>
    %c48_169 = arith.constant 48 : index
    %c0_170 = arith.constant 0 : index
    %276 = vector.load %arg16[%c48_169, %c0_170] : memref<144x256xbf16, #tpu.memory_space<vmem>>, vector<16x256xbf16>
    tpu.vector_store %arg16[%c48_169, %c0_170], %275 {strides = array<i32>} : memref<144x256xbf16, #tpu.memory_space<vmem>>, vector<16x256xbf16>,
    %277 = arith.truncf %256 : vector<16x256xf32> to vector<16x256xbf16>
    %c64_171 = arith.constant 64 : index
    %c0_172 = arith.constant 0 : index
    %278 = vector.load %arg16[%c64_171, %c0_172] : memref<144x256xbf16, #tpu.memory_space<vmem>>, vector<16x256xbf16>
    tpu.vector_store %arg16[%c64_171, %c0_172], %277 {strides = array<i32>} : memref<144x256xbf16, #tpu.memory_space<vmem>>, vector<16x256xbf16>,
    %c255_i32_173 = arith.constant 255 : i32
    %279 = tpu.dynamic_rotate %256 by %c255_i32_173 dim 1 : vector<16x256xf32>, i32 -> vector<16x256xf32>
    %280 = vector.broadcast %4 : vector<1x256xf32> to vector<16x256xf32>
    %281 = arith.mulf %279, %280 : vector<16x256xf32>
    %282 = arith.truncf %281 : vector<16x256xf32> to vector<16x256xbf16>
    %c80_174 = arith.constant 80 : index
    %c0_175 = arith.constant 0 : index
    %283 = vector.load %arg16[%c80_174, %c0_175] : memref<144x256xbf16, #tpu.memory_space<vmem>>, vector<16x256xbf16>
    tpu.vector_store %arg16[%c80_174, %c0_175], %282 {strides = array<i32>} : memref<144x256xbf16, #tpu.memory_space<vmem>>, vector<16x256xbf16>,
    %c241_i32_176 = arith.constant 241 : i32
    %284 = tpu.dynamic_rotate %256 by %c241_i32_176 dim 1 : vector<16x256xf32>, i32 -> vector<16x256xf32>
    %285 = vector.broadcast %5 : vector<1x256xf32> to vector<16x256xf32>
    %286 = arith.mulf %284, %285 : vector<16x256xf32>
    %287 = arith.truncf %286 : vector<16x256xf32> to vector<16x256xbf16>
    %c96_177 = arith.constant 96 : index
    %c0_178 = arith.constant 0 : index
    %288 = vector.load %arg16[%c96_177, %c0_178] : memref<144x256xbf16, #tpu.memory_space<vmem>>, vector<16x256xbf16>
    tpu.vector_store %arg16[%c96_177, %c0_178], %287 {strides = array<i32>} : memref<144x256xbf16, #tpu.memory_space<vmem>>, vector<16x256xbf16>,
    %c240_i32_179 = arith.constant 240 : i32
    %289 = tpu.dynamic_rotate %256 by %c240_i32_179 dim 1 : vector<16x256xf32>, i32 -> vector<16x256xf32>
    %290 = vector.broadcast %6 : vector<1x256xf32> to vector<16x256xf32>
    %291 = arith.mulf %289, %290 : vector<16x256xf32>
    %292 = arith.truncf %291 : vector<16x256xf32> to vector<16x256xbf16>
    %c112_180 = arith.constant 112 : index
    %c0_181 = arith.constant 0 : index
    %293 = vector.load %arg16[%c112_180, %c0_181] : memref<144x256xbf16, #tpu.memory_space<vmem>>, vector<16x256xbf16>
    tpu.vector_store %arg16[%c112_180, %c0_181], %292 {strides = array<i32>} : memref<144x256xbf16, #tpu.memory_space<vmem>>, vector<16x256xbf16>,
    %c239_i32_182 = arith.constant 239 : i32
    %294 = tpu.dynamic_rotate %256 by %c239_i32_182 dim 1 : vector<16x256xf32>, i32 -> vector<16x256xf32>
    %295 = vector.broadcast %7 : vector<1x256xf32> to vector<16x256xf32>
    %296 = arith.mulf %294, %295 : vector<16x256xf32>
    %297 = arith.truncf %296 : vector<16x256xf32> to vector<16x256xbf16>
    %c128_183 = arith.constant 128 : index
    %c0_184 = arith.constant 0 : index
    %298 = vector.load %arg16[%c128_183, %c0_184] : memref<144x256xbf16, #tpu.memory_space<vmem>>, vector<16x256xbf16>
    tpu.vector_store %arg16[%c128_183, %c0_184], %297 {strides = array<i32>} : memref<144x256xbf16, #tpu.memory_space<vmem>>, vector<16x256xbf16>,
    %c0_185 = arith.constant 0 : index
    %c0_186 = arith.constant 0 : index
    %299 = vector.load %arg8[%c0_185, %c0_186] : memref<32x144xbf16, #tpu.memory_space<vmem>>, vector<32x144xbf16>
    %c0_187 = arith.constant 0 : index
    %c0_188 = arith.constant 0 : index
    %300 = vector.load %arg16[%c0_187, %c0_188] : memref<144x256xbf16, #tpu.memory_space<vmem>>, vector<144x256xbf16>
    %cst_189 = arith.constant dense<0.000000e+00> : vector<32x256xf32>
    %301 = tpu.matmul %299, %300, %cst_189 {dimension_numbers = #tpu.dot_dimension_numbers<[1], [0], [0], [1], [0, 0, 1, 1], [], []>} : vector<32x144xbf16>, vector<144x256xbf16>, vector<32x256xf32> -> vector<32x256xf32>
    %c0_190 = arith.constant 0 : index
    %c0_191 = arith.constant 0 : index
    %302 = vector.load %arg9[%c0_190, %c0_191] : memref<32x1xf32, #tpu.memory_space<vmem>>, vector<32x1xf32>
    %303 = vector.broadcast %302 : vector<32x1xf32> to vector<32x256xf32>
    %304 = arith.addf %301, %303 : vector<32x256xf32>
    %c0_192 = arith.constant 0 : index
    %c0_193 = arith.constant 0 : index
    %305 = vector.load %arg14[%c0_192, %c0_193] : memref<8x256xf32, #tpu.memory_space<vmem>>, vector<8x256xf32>
    %306 = vector.extract_strided_slice %304 {offsets = [0, 0], sizes = [8, 256], strides = [1, 1]} : vector<32x256xf32> to vector<8x256xf32>
    %307 = arith.negf %306 : vector<8x256xf32>
    %308 = math.exp %307 : vector<8x256xf32>
    %cst_194 = arith.constant 1.000000e+00 : f32
    %309 = vector.broadcast %cst_194 : f32 to vector<8x256xf32>
    %310 = arith.addf %309, %308 : vector<8x256xf32>
    %311 = arith.divf %309, %310 : vector<8x256xf32>
    %312 = vector.extract_strided_slice %304 {offsets = [8, 0], sizes = [8, 256], strides = [1, 1]} : vector<32x256xf32> to vector<8x256xf32>
    %313 = arith.negf %312 : vector<8x256xf32>
    %314 = math.exp %313 : vector<8x256xf32>
    %cst_195 = arith.constant 1.000000e+00 : f32
    %315 = vector.broadcast %cst_195 : f32 to vector<8x256xf32>
    %316 = arith.addf %315, %314 : vector<8x256xf32>
    %317 = arith.divf %315, %316 : vector<8x256xf32>
    %318 = arith.mulf %317, %305 : vector<8x256xf32>
    %319 = vector.extract_strided_slice %304 {offsets = [16, 0], sizes = [8, 256], strides = [1, 1]} : vector<32x256xf32> to vector<8x256xf32>
    %320 = math.tanh %319 : vector<8x256xf32>
    %321 = arith.mulf %311, %320 : vector<8x256xf32>
    %322 = arith.addf %318, %321 : vector<8x256xf32>
    %323 = vector.extract_strided_slice %304 {offsets = [24, 0], sizes = [8, 256], strides = [1, 1]} : vector<32x256xf32> to vector<8x256xf32>
    %324 = arith.negf %323 : vector<8x256xf32>
    %325 = math.exp %324 : vector<8x256xf32>
    %cst_196 = arith.constant 1.000000e+00 : f32
    %326 = vector.broadcast %cst_196 : f32 to vector<8x256xf32>
    %327 = arith.addf %326, %325 : vector<8x256xf32>
    %328 = arith.divf %326, %327 : vector<8x256xf32>
    %329 = math.tanh %322 : vector<8x256xf32>
    %330 = arith.mulf %328, %329 : vector<8x256xf32>
    %c0_197 = arith.constant 0 : index
    %c0_198 = arith.constant 0 : index
    %331 = vector.load %arg14[%c0_197, %c0_198] : memref<8x256xf32, #tpu.memory_space<vmem>>, vector<8x256xf32>
    tpu.vector_store %arg14[%c0_197, %c0_198], %322 {strides = array<i32>} : memref<8x256xf32, #tpu.memory_space<vmem>>, vector<8x256xf32>,
    %c8_199 = arith.constant 8 : index
    %c0_200 = arith.constant 0 : index
    %332 = vector.load %arg13[%c8_199, %c0_200] : memref<16x256xf32, #tpu.memory_space<vmem>>, vector<8x256xf32>
    tpu.vector_store %arg13[%c8_199, %c0_200], %330 {strides = array<i32>} : memref<16x256xf32, #tpu.memory_space<vmem>>, vector<8x256xf32>,
    %c0_201 = arith.constant 0 : index
    %c0_202 = arith.constant 0 : index
    %333 = vector.load %arg11[%c0_201, %c0_202] : memref<16x256xf32, #tpu.memory_space<vmem>>, vector<16x256xf32>
    %c17_i32_203 = arith.constant 17 : i32
    %334 = tpu.dynamic_rotate %333 by %c17_i32_203 dim 1 : vector<16x256xf32>, i32 -> vector<16x256xf32>
    %335 = vector.broadcast %0 : vector<1x256xf32> to vector<16x256xf32>
    %336 = arith.mulf %334, %335 : vector<16x256xf32>
    %337 = arith.truncf %336 : vector<16x256xf32> to vector<16x256xbf16>
    %c0_204 = arith.constant 0 : index
    %c0_205 = arith.constant 0 : index
    %338 = vector.load %arg15[%c0_204, %c0_205] : memref<144x256xbf16, #tpu.memory_space<vmem>>, vector<16x256xbf16>
    tpu.vector_store %arg15[%c0_204, %c0_205], %337 {strides = array<i32>} : memref<144x256xbf16, #tpu.memory_space<vmem>>, vector<16x256xbf16>,
    %c16_i32_206 = arith.constant 16 : i32
    %339 = tpu.dynamic_rotate %333 by %c16_i32_206 dim 1 : vector<16x256xf32>, i32 -> vector<16x256xf32>
    %340 = vector.broadcast %1 : vector<1x256xf32> to vector<16x256xf32>
    %341 = arith.mulf %339, %340 : vector<16x256xf32>
    %342 = arith.truncf %341 : vector<16x256xf32> to vector<16x256xbf16>
    %c16_207 = arith.constant 16 : index
    %c0_208 = arith.constant 0 : index
    %343 = vector.load %arg15[%c16_207, %c0_208] : memref<144x256xbf16, #tpu.memory_space<vmem>>, vector<16x256xbf16>
    tpu.vector_store %arg15[%c16_207, %c0_208], %342 {strides = array<i32>} : memref<144x256xbf16, #tpu.memory_space<vmem>>, vector<16x256xbf16>,
    %c15_i32_209 = arith.constant 15 : i32
    %344 = tpu.dynamic_rotate %333 by %c15_i32_209 dim 1 : vector<16x256xf32>, i32 -> vector<16x256xf32>
    %345 = vector.broadcast %2 : vector<1x256xf32> to vector<16x256xf32>
    %346 = arith.mulf %344, %345 : vector<16x256xf32>
    %347 = arith.truncf %346 : vector<16x256xf32> to vector<16x256xbf16>
    %c32_210 = arith.constant 32 : index
    %c0_211 = arith.constant 0 : index
    %348 = vector.load %arg15[%c32_210, %c0_211] : memref<144x256xbf16, #tpu.memory_space<vmem>>, vector<16x256xbf16>
    tpu.vector_store %arg15[%c32_210, %c0_211], %347 {strides = array<i32>} : memref<144x256xbf16, #tpu.memory_space<vmem>>, vector<16x256xbf16>,
    %c1_i32_212 = arith.constant 1 : i32
    %349 = tpu.dynamic_rotate %333 by %c1_i32_212 dim 1 : vector<16x256xf32>, i32 -> vector<16x256xf32>
    %350 = vector.broadcast %3 : vector<1x256xf32> to vector<16x256xf32>
    %351 = arith.mulf %349, %350 : vector<16x256xf32>
    %352 = arith.truncf %351 : vector<16x256xf32> to vector<16x256xbf16>
    %c48_213 = arith.constant 48 : index
    %c0_214 = arith.constant 0 : index
    %353 = vector.load %arg15[%c48_213, %c0_214] : memref<144x256xbf16, #tpu.memory_space<vmem>>, vector<16x256xbf16>
    tpu.vector_store %arg15[%c48_213, %c0_214], %352 {strides = array<i32>} : memref<144x256xbf16, #tpu.memory_space<vmem>>, vector<16x256xbf16>,
    %354 = arith.truncf %333 : vector<16x256xf32> to vector<16x256xbf16>
    %c64_215 = arith.constant 64 : index
    %c0_216 = arith.constant 0 : index
    %355 = vector.load %arg15[%c64_215, %c0_216] : memref<144x256xbf16, #tpu.memory_space<vmem>>, vector<16x256xbf16>
    tpu.vector_store %arg15[%c64_215, %c0_216], %354 {strides = array<i32>} : memref<144x256xbf16, #tpu.memory_space<vmem>>, vector<16x256xbf16>,
    %c255_i32_217 = arith.constant 255 : i32
    %356 = tpu.dynamic_rotate %333 by %c255_i32_217 dim 1 : vector<16x256xf32>, i32 -> vector<16x256xf32>
    %357 = vector.broadcast %4 : vector<1x256xf32> to vector<16x256xf32>
    %358 = arith.mulf %356, %357 : vector<16x256xf32>
    %359 = arith.truncf %358 : vector<16x256xf32> to vector<16x256xbf16>
    %c80_218 = arith.constant 80 : index
    %c0_219 = arith.constant 0 : index
    %360 = vector.load %arg15[%c80_218, %c0_219] : memref<144x256xbf16, #tpu.memory_space<vmem>>, vector<16x256xbf16>
    tpu.vector_store %arg15[%c80_218, %c0_219], %359 {strides = array<i32>} : memref<144x256xbf16, #tpu.memory_space<vmem>>, vector<16x256xbf16>,
    %c241_i32_220 = arith.constant 241 : i32
    %361 = tpu.dynamic_rotate %333 by %c241_i32_220 dim 1 : vector<16x256xf32>, i32 -> vector<16x256xf32>
    %362 = vector.broadcast %5 : vector<1x256xf32> to vector<16x256xf32>
    %363 = arith.mulf %361, %362 : vector<16x256xf32>
    %364 = arith.truncf %363 : vector<16x256xf32> to vector<16x256xbf16>
    %c96_221 = arith.constant 96 : index
    %c0_222 = arith.constant 0 : index
    %365 = vector.load %arg15[%c96_221, %c0_222] : memref<144x256xbf16, #tpu.memory_space<vmem>>, vector<16x256xbf16>
    tpu.vector_store %arg15[%c96_221, %c0_222], %364 {strides = array<i32>} : memref<144x256xbf16, #tpu.memory_space<vmem>>, vector<16x256xbf16>,
    %c240_i32_223 = arith.constant 240 : i32
    %366 = tpu.dynamic_rotate %333 by %c240_i32_223 dim 1 : vector<16x256xf32>, i32 -> vector<16x256xf32>
    %367 = vector.broadcast %6 : vector<1x256xf32> to vector<16x256xf32>
    %368 = arith.mulf %366, %367 : vector<16x256xf32>
    %369 = arith.truncf %368 : vector<16x256xf32> to vector<16x256xbf16>
    %c112_224 = arith.constant 112 : index
    %c0_225 = arith.constant 0 : index
    %370 = vector.load %arg15[%c112_224, %c0_225] : memref<144x256xbf16, #tpu.memory_space<vmem>>, vector<16x256xbf16>
    tpu.vector_store %arg15[%c112_224, %c0_225], %369 {strides = array<i32>} : memref<144x256xbf16, #tpu.memory_space<vmem>>, vector<16x256xbf16>,
    %c239_i32_226 = arith.constant 239 : i32
    %371 = tpu.dynamic_rotate %333 by %c239_i32_226 dim 1 : vector<16x256xf32>, i32 -> vector<16x256xf32>
    %372 = vector.broadcast %7 : vector<1x256xf32> to vector<16x256xf32>
    %373 = arith.mulf %371, %372 : vector<16x256xf32>
    %374 = arith.truncf %373 : vector<16x256xf32> to vector<16x256xbf16>
    %c128_227 = arith.constant 128 : index
    %c0_228 = arith.constant 0 : index
    %375 = vector.load %arg15[%c128_227, %c0_228] : memref<144x256xbf16, #tpu.memory_space<vmem>>, vector<16x256xbf16>
    tpu.vector_store %arg15[%c128_227, %c0_228], %374 {strides = array<i32>} : memref<144x256xbf16, #tpu.memory_space<vmem>>, vector<16x256xbf16>,
    %c0_229 = arith.constant 0 : index
    %c0_230 = arith.constant 0 : index
    %376 = vector.load %arg3[%c0_229, %c0_230] : memref<16x144xbf16, #tpu.memory_space<vmem>>, vector<16x144xbf16>
    %c0_231 = arith.constant 0 : index
    %c0_232 = arith.constant 0 : index
    %377 = vector.load %arg15[%c0_231, %c0_232] : memref<144x256xbf16, #tpu.memory_space<vmem>>, vector<144x256xbf16>
    %cst_233 = arith.constant dense<0.000000e+00> : vector<16x256xf32>
    %378 = tpu.matmul %376, %377, %cst_233 {dimension_numbers = #tpu.dot_dimension_numbers<[1], [0], [0], [1], [0, 0, 1, 1], [], []>} : vector<16x144xbf16>, vector<144x256xbf16>, vector<16x256xf32> -> vector<16x256xf32>
    %cst_234 = arith.constant 0.000000e+00 : f32
    %379 = vector.broadcast %cst_234 : f32 to vector<16x256xf32>
    %380 = arith.maximumf %378, %379 : vector<16x256xf32>
    %c17_i32_235 = arith.constant 17 : i32
    %381 = tpu.dynamic_rotate %380 by %c17_i32_235 dim 1 : vector<16x256xf32>, i32 -> vector<16x256xf32>
    %382 = vector.broadcast %0 : vector<1x256xf32> to vector<16x256xf32>
    %383 = arith.mulf %381, %382 : vector<16x256xf32>
    %384 = arith.truncf %383 : vector<16x256xf32> to vector<16x256xbf16>
    %c0_236 = arith.constant 0 : index
    %c0_237 = arith.constant 0 : index
    %385 = vector.load %arg16[%c0_236, %c0_237] : memref<144x256xbf16, #tpu.memory_space<vmem>>, vector<16x256xbf16>
    tpu.vector_store %arg16[%c0_236, %c0_237], %384 {strides = array<i32>} : memref<144x256xbf16, #tpu.memory_space<vmem>>, vector<16x256xbf16>,
    %c16_i32_238 = arith.constant 16 : i32
    %386 = tpu.dynamic_rotate %380 by %c16_i32_238 dim 1 : vector<16x256xf32>, i32 -> vector<16x256xf32>
    %387 = vector.broadcast %1 : vector<1x256xf32> to vector<16x256xf32>
    %388 = arith.mulf %386, %387 : vector<16x256xf32>
    %389 = arith.truncf %388 : vector<16x256xf32> to vector<16x256xbf16>
    %c16_239 = arith.constant 16 : index
    %c0_240 = arith.constant 0 : index
    %390 = vector.load %arg16[%c16_239, %c0_240] : memref<144x256xbf16, #tpu.memory_space<vmem>>, vector<16x256xbf16>
    tpu.vector_store %arg16[%c16_239, %c0_240], %389 {strides = array<i32>} : memref<144x256xbf16, #tpu.memory_space<vmem>>, vector<16x256xbf16>,
    %c15_i32_241 = arith.constant 15 : i32
    %391 = tpu.dynamic_rotate %380 by %c15_i32_241 dim 1 : vector<16x256xf32>, i32 -> vector<16x256xf32>
    %392 = vector.broadcast %2 : vector<1x256xf32> to vector<16x256xf32>
    %393 = arith.mulf %391, %392 : vector<16x256xf32>
    %394 = arith.truncf %393 : vector<16x256xf32> to vector<16x256xbf16>
    %c32_242 = arith.constant 32 : index
    %c0_243 = arith.constant 0 : index
    %395 = vector.load %arg16[%c32_242, %c0_243] : memref<144x256xbf16, #tpu.memory_space<vmem>>, vector<16x256xbf16>
    tpu.vector_store %arg16[%c32_242, %c0_243], %394 {strides = array<i32>} : memref<144x256xbf16, #tpu.memory_space<vmem>>, vector<16x256xbf16>,
    %c1_i32_244 = arith.constant 1 : i32
    %396 = tpu.dynamic_rotate %380 by %c1_i32_244 dim 1 : vector<16x256xf32>, i32 -> vector<16x256xf32>
    %397 = vector.broadcast %3 : vector<1x256xf32> to vector<16x256xf32>
    %398 = arith.mulf %396, %397 : vector<16x256xf32>
    %399 = arith.truncf %398 : vector<16x256xf32> to vector<16x256xbf16>
    %c48_245 = arith.constant 48 : index
    %c0_246 = arith.constant 0 : index
    %400 = vector.load %arg16[%c48_245, %c0_246] : memref<144x256xbf16, #tpu.memory_space<vmem>>, vector<16x256xbf16>
    tpu.vector_store %arg16[%c48_245, %c0_246], %399 {strides = array<i32>} : memref<144x256xbf16, #tpu.memory_space<vmem>>, vector<16x256xbf16>,
    %401 = arith.truncf %380 : vector<16x256xf32> to vector<16x256xbf16>
    %c64_247 = arith.constant 64 : index
    %c0_248 = arith.constant 0 : index
    %402 = vector.load %arg16[%c64_247, %c0_248] : memref<144x256xbf16, #tpu.memory_space<vmem>>, vector<16x256xbf16>
    tpu.vector_store %arg16[%c64_247, %c0_248], %401 {strides = array<i32>} : memref<144x256xbf16, #tpu.memory_space<vmem>>, vector<16x256xbf16>,
    %c255_i32_249 = arith.constant 255 : i32
    %403 = tpu.dynamic_rotate %380 by %c255_i32_249 dim 1 : vector<16x256xf32>, i32 -> vector<16x256xf32>
    %404 = vector.broadcast %4 : vector<1x256xf32> to vector<16x256xf32>
    %405 = arith.mulf %403, %404 : vector<16x256xf32>
    %406 = arith.truncf %405 : vector<16x256xf32> to vector<16x256xbf16>
    %c80_250 = arith.constant 80 : index
    %c0_251 = arith.constant 0 : index
    %407 = vector.load %arg16[%c80_250, %c0_251] : memref<144x256xbf16, #tpu.memory_space<vmem>>, vector<16x256xbf16>
    tpu.vector_store %arg16[%c80_250, %c0_251], %406 {strides = array<i32>} : memref<144x256xbf16, #tpu.memory_space<vmem>>, vector<16x256xbf16>,
    %c241_i32_252 = arith.constant 241 : i32
    %408 = tpu.dynamic_rotate %380 by %c241_i32_252 dim 1 : vector<16x256xf32>, i32 -> vector<16x256xf32>
    %409 = vector.broadcast %5 : vector<1x256xf32> to vector<16x256xf32>
    %410 = arith.mulf %408, %409 : vector<16x256xf32>
    %411 = arith.truncf %410 : vector<16x256xf32> to vector<16x256xbf16>
    %c96_253 = arith.constant 96 : index
    %c0_254 = arith.constant 0 : index
    %412 = vector.load %arg16[%c96_253, %c0_254] : memref<144x256xbf16, #tpu.memory_space<vmem>>, vector<16x256xbf16>
    tpu.vector_store %arg16[%c96_253, %c0_254], %411 {strides = array<i32>} : memref<144x256xbf16, #tpu.memory_space<vmem>>, vector<16x256xbf16>,
    %c240_i32_255 = arith.constant 240 : i32
    %413 = tpu.dynamic_rotate %380 by %c240_i32_255 dim 1 : vector<16x256xf32>, i32 -> vector<16x256xf32>
    %414 = vector.broadcast %6 : vector<1x256xf32> to vector<16x256xf32>
    %415 = arith.mulf %413, %414 : vector<16x256xf32>
    %416 = arith.truncf %415 : vector<16x256xf32> to vector<16x256xbf16>
    %c112_256 = arith.constant 112 : index
    %c0_257 = arith.constant 0 : index
    %417 = vector.load %arg16[%c112_256, %c0_257] : memref<144x256xbf16, #tpu.memory_space<vmem>>, vector<16x256xbf16>
    tpu.vector_store %arg16[%c112_256, %c0_257], %416 {strides = array<i32>} : memref<144x256xbf16, #tpu.memory_space<vmem>>, vector<16x256xbf16>,
    %c239_i32_258 = arith.constant 239 : i32
    %418 = tpu.dynamic_rotate %380 by %c239_i32_258 dim 1 : vector<16x256xf32>, i32 -> vector<16x256xf32>
    %419 = vector.broadcast %7 : vector<1x256xf32> to vector<16x256xf32>
    %420 = arith.mulf %418, %419 : vector<16x256xf32>
    %421 = arith.truncf %420 : vector<16x256xf32> to vector<16x256xbf16>
    %c128_259 = arith.constant 128 : index
    %c0_260 = arith.constant 0 : index
    %422 = vector.load %arg16[%c128_259, %c0_260] : memref<144x256xbf16, #tpu.memory_space<vmem>>, vector<16x256xbf16>
    tpu.vector_store %arg16[%c128_259, %c0_260], %421 {strides = array<i32>} : memref<144x256xbf16, #tpu.memory_space<vmem>>, vector<16x256xbf16>,
    %c0_261 = arith.constant 0 : index
    %c0_262 = arith.constant 0 : index
    %423 = vector.load %arg4[%c0_261, %c0_262] : memref<16x144xbf16, #tpu.memory_space<vmem>>, vector<16x144xbf16>
    %c0_263 = arith.constant 0 : index
    %c0_264 = arith.constant 0 : index
    %424 = vector.load %arg16[%c0_263, %c0_264] : memref<144x256xbf16, #tpu.memory_space<vmem>>, vector<144x256xbf16>
    %cst_265 = arith.constant dense<0.000000e+00> : vector<16x256xf32>
    %425 = tpu.matmul %423, %424, %cst_265 {dimension_numbers = #tpu.dot_dimension_numbers<[1], [0], [0], [1], [0, 0, 1, 1], [], []>} : vector<16x144xbf16>, vector<144x256xbf16>, vector<16x256xf32> -> vector<16x256xf32>
    %cst_266 = arith.constant 0.000000e+00 : f32
    %426 = vector.broadcast %cst_266 : f32 to vector<16x256xf32>
    %427 = arith.maximumf %425, %426 : vector<16x256xf32>
    %c17_i32_267 = arith.constant 17 : i32
    %428 = tpu.dynamic_rotate %427 by %c17_i32_267 dim 1 : vector<16x256xf32>, i32 -> vector<16x256xf32>
    %429 = vector.broadcast %0 : vector<1x256xf32> to vector<16x256xf32>
    %430 = arith.mulf %428, %429 : vector<16x256xf32>
    %431 = arith.truncf %430 : vector<16x256xf32> to vector<16x256xbf16>
    %c0_268 = arith.constant 0 : index
    %c0_269 = arith.constant 0 : index
    %432 = vector.load %arg16[%c0_268, %c0_269] : memref<144x256xbf16, #tpu.memory_space<vmem>>, vector<16x256xbf16>
    tpu.vector_store %arg16[%c0_268, %c0_269], %431 {strides = array<i32>} : memref<144x256xbf16, #tpu.memory_space<vmem>>, vector<16x256xbf16>,
    %c16_i32_270 = arith.constant 16 : i32
    %433 = tpu.dynamic_rotate %427 by %c16_i32_270 dim 1 : vector<16x256xf32>, i32 -> vector<16x256xf32>
    %434 = vector.broadcast %1 : vector<1x256xf32> to vector<16x256xf32>
    %435 = arith.mulf %433, %434 : vector<16x256xf32>
    %436 = arith.truncf %435 : vector<16x256xf32> to vector<16x256xbf16>
    %c16_271 = arith.constant 16 : index
    %c0_272 = arith.constant 0 : index
    %437 = vector.load %arg16[%c16_271, %c0_272] : memref<144x256xbf16, #tpu.memory_space<vmem>>, vector<16x256xbf16>
    tpu.vector_store %arg16[%c16_271, %c0_272], %436 {strides = array<i32>} : memref<144x256xbf16, #tpu.memory_space<vmem>>, vector<16x256xbf16>,
    %c15_i32_273 = arith.constant 15 : i32
    %438 = tpu.dynamic_rotate %427 by %c15_i32_273 dim 1 : vector<16x256xf32>, i32 -> vector<16x256xf32>
    %439 = vector.broadcast %2 : vector<1x256xf32> to vector<16x256xf32>
    %440 = arith.mulf %438, %439 : vector<16x256xf32>
    %441 = arith.truncf %440 : vector<16x256xf32> to vector<16x256xbf16>
    %c32_274 = arith.constant 32 : index
    %c0_275 = arith.constant 0 : index
    %442 = vector.load %arg16[%c32_274, %c0_275] : memref<144x256xbf16, #tpu.memory_space<vmem>>, vector<16x256xbf16>
    tpu.vector_store %arg16[%c32_274, %c0_275], %441 {strides = array<i32>} : memref<144x256xbf16, #tpu.memory_space<vmem>>, vector<16x256xbf16>,
    %c1_i32_276 = arith.constant 1 : i32
    %443 = tpu.dynamic_rotate %427 by %c1_i32_276 dim 1 : vector<16x256xf32>, i32 -> vector<16x256xf32>
    %444 = vector.broadcast %3 : vector<1x256xf32> to vector<16x256xf32>
    %445 = arith.mulf %443, %444 : vector<16x256xf32>
    %446 = arith.truncf %445 : vector<16x256xf32> to vector<16x256xbf16>
    %c48_277 = arith.constant 48 : index
    %c0_278 = arith.constant 0 : index
    %447 = vector.load %arg16[%c48_277, %c0_278] : memref<144x256xbf16, #tpu.memory_space<vmem>>, vector<16x256xbf16>
    tpu.vector_store %arg16[%c48_277, %c0_278], %446 {strides = array<i32>} : memref<144x256xbf16, #tpu.memory_space<vmem>>, vector<16x256xbf16>,
    %448 = arith.truncf %427 : vector<16x256xf32> to vector<16x256xbf16>
    %c64_279 = arith.constant 64 : index
    %c0_280 = arith.constant 0 : index
    %449 = vector.load %arg16[%c64_279, %c0_280] : memref<144x256xbf16, #tpu.memory_space<vmem>>, vector<16x256xbf16>
    tpu.vector_store %arg16[%c64_279, %c0_280], %448 {strides = array<i32>} : memref<144x256xbf16, #tpu.memory_space<vmem>>, vector<16x256xbf16>,
    %c255_i32_281 = arith.constant 255 : i32
    %450 = tpu.dynamic_rotate %427 by %c255_i32_281 dim 1 : vector<16x256xf32>, i32 -> vector<16x256xf32>
    %451 = vector.broadcast %4 : vector<1x256xf32> to vector<16x256xf32>
    %452 = arith.mulf %450, %451 : vector<16x256xf32>
    %453 = arith.truncf %452 : vector<16x256xf32> to vector<16x256xbf16>
    %c80_282 = arith.constant 80 : index
    %c0_283 = arith.constant 0 : index
    %454 = vector.load %arg16[%c80_282, %c0_283] : memref<144x256xbf16, #tpu.memory_space<vmem>>, vector<16x256xbf16>
    tpu.vector_store %arg16[%c80_282, %c0_283], %453 {strides = array<i32>} : memref<144x256xbf16, #tpu.memory_space<vmem>>, vector<16x256xbf16>,
    %c241_i32_284 = arith.constant 241 : i32
    %455 = tpu.dynamic_rotate %427 by %c241_i32_284 dim 1 : vector<16x256xf32>, i32 -> vector<16x256xf32>
    %456 = vector.broadcast %5 : vector<1x256xf32> to vector<16x256xf32>
    %457 = arith.mulf %455, %456 : vector<16x256xf32>
    %458 = arith.truncf %457 : vector<16x256xf32> to vector<16x256xbf16>
    %c96_285 = arith.constant 96 : index
    %c0_286 = arith.constant 0 : index
    %459 = vector.load %arg16[%c96_285, %c0_286] : memref<144x256xbf16, #tpu.memory_space<vmem>>, vector<16x256xbf16>
    tpu.vector_store %arg16[%c96_285, %c0_286], %458 {strides = array<i32>} : memref<144x256xbf16, #tpu.memory_space<vmem>>, vector<16x256xbf16>,
    %c240_i32_287 = arith.constant 240 : i32
    %460 = tpu.dynamic_rotate %427 by %c240_i32_287 dim 1 : vector<16x256xf32>, i32 -> vector<16x256xf32>
    %461 = vector.broadcast %6 : vector<1x256xf32> to vector<16x256xf32>
    %462 = arith.mulf %460, %461 : vector<16x256xf32>
    %463 = arith.truncf %462 : vector<16x256xf32> to vector<16x256xbf16>
    %c112_288 = arith.constant 112 : index
    %c0_289 = arith.constant 0 : index
    %464 = vector.load %arg16[%c112_288, %c0_289] : memref<144x256xbf16, #tpu.memory_space<vmem>>, vector<16x256xbf16>
    tpu.vector_store %arg16[%c112_288, %c0_289], %463 {strides = array<i32>} : memref<144x256xbf16, #tpu.memory_space<vmem>>, vector<16x256xbf16>,
    %c239_i32_290 = arith.constant 239 : i32
    %465 = tpu.dynamic_rotate %427 by %c239_i32_290 dim 1 : vector<16x256xf32>, i32 -> vector<16x256xf32>
    %466 = vector.broadcast %7 : vector<1x256xf32> to vector<16x256xf32>
    %467 = arith.mulf %465, %466 : vector<16x256xf32>
    %468 = arith.truncf %467 : vector<16x256xf32> to vector<16x256xbf16>
    %c128_291 = arith.constant 128 : index
    %c0_292 = arith.constant 0 : index
    %469 = vector.load %arg16[%c128_291, %c0_292] : memref<144x256xbf16, #tpu.memory_space<vmem>>, vector<16x256xbf16>
    tpu.vector_store %arg16[%c128_291, %c0_292], %468 {strides = array<i32>} : memref<144x256xbf16, #tpu.memory_space<vmem>>, vector<16x256xbf16>,
    %c0_293 = arith.constant 0 : index
    %c0_294 = arith.constant 0 : index
    %470 = vector.load %arg5[%c0_293, %c0_294] : memref<1x144xbf16, #tpu.memory_space<vmem>>, vector<1x144xbf16>
    %c0_295 = arith.constant 0 : index
    %c0_296 = arith.constant 0 : index
    %471 = vector.load %arg16[%c0_295, %c0_296] : memref<144x256xbf16, #tpu.memory_space<vmem>>, vector<144x256xbf16>
    %cst_297 = arith.constant dense<0.000000e+00> : vector<1x256xf32>
    %472 = tpu.matmul %470, %471, %cst_297 {dimension_numbers = #tpu.dot_dimension_numbers<[1], [0], [0], [1], [0, 0, 1, 1], [], []>} : vector<1x144xbf16>, vector<144x256xbf16>, vector<1x256xf32> -> vector<1x256xf32>
    %473 = arith.negf %472 : vector<1x256xf32>
    %474 = math.exp %473 : vector<1x256xf32>
    %cst_298 = arith.constant 1.000000e+00 : f32
    %475 = vector.broadcast %cst_298 : f32 to vector<1x256xf32>
    %476 = arith.addf %475, %474 : vector<1x256xf32>
    %477 = arith.divf %475, %476 : vector<1x256xf32>
    %c17_i32_299 = arith.constant 17 : i32
    %478 = tpu.dynamic_rotate %477 by %c17_i32_299 dim 1 : vector<1x256xf32>, i32 -> vector<1x256xf32>
    %c0_300 = arith.constant 0 : index
    %c0_301 = arith.constant 0 : index
    %479 = vector.load %arg15[%c0_300, %c0_301] : memref<144x256xbf16, #tpu.memory_space<vmem>>, vector<8x256xbf16>
    %480 = arith.extf %479 : vector<8x256xbf16> to vector<8x256xf32>
    %481 = vector.broadcast %478 : vector<1x256xf32> to vector<8x256xf32>
    %482 = arith.mulf %480, %481 : vector<8x256xf32>
    %483 = arith.truncf %482 : vector<8x256xf32> to vector<8x256xbf16>
    %c0_302 = arith.constant 0 : index
    %c0_303 = arith.constant 0 : index
    %484 = vector.load %arg15[%c0_302, %c0_303] : memref<144x256xbf16, #tpu.memory_space<vmem>>, vector<8x256xbf16>
    tpu.vector_store %arg15[%c0_302, %c0_303], %483 {strides = array<i32>} : memref<144x256xbf16, #tpu.memory_space<vmem>>, vector<8x256xbf16>,
    %c16_i32_304 = arith.constant 16 : i32
    %485 = tpu.dynamic_rotate %477 by %c16_i32_304 dim 1 : vector<1x256xf32>, i32 -> vector<1x256xf32>
    %c16_305 = arith.constant 16 : index
    %c0_306 = arith.constant 0 : index
    %486 = vector.load %arg15[%c16_305, %c0_306] : memref<144x256xbf16, #tpu.memory_space<vmem>>, vector<8x256xbf16>
    %487 = arith.extf %486 : vector<8x256xbf16> to vector<8x256xf32>
    %488 = vector.broadcast %485 : vector<1x256xf32> to vector<8x256xf32>
    %489 = arith.mulf %487, %488 : vector<8x256xf32>
    %490 = arith.truncf %489 : vector<8x256xf32> to vector<8x256xbf16>
    %c16_307 = arith.constant 16 : index
    %c0_308 = arith.constant 0 : index
    %491 = vector.load %arg15[%c16_307, %c0_308] : memref<144x256xbf16, #tpu.memory_space<vmem>>, vector<8x256xbf16>
    tpu.vector_store %arg15[%c16_307, %c0_308], %490 {strides = array<i32>} : memref<144x256xbf16, #tpu.memory_space<vmem>>, vector<8x256xbf16>,
    %c15_i32_309 = arith.constant 15 : i32
    %492 = tpu.dynamic_rotate %477 by %c15_i32_309 dim 1 : vector<1x256xf32>, i32 -> vector<1x256xf32>
    %c32_310 = arith.constant 32 : index
    %c0_311 = arith.constant 0 : index
    %493 = vector.load %arg15[%c32_310, %c0_311] : memref<144x256xbf16, #tpu.memory_space<vmem>>, vector<8x256xbf16>
    %494 = arith.extf %493 : vector<8x256xbf16> to vector<8x256xf32>
    %495 = vector.broadcast %492 : vector<1x256xf32> to vector<8x256xf32>
    %496 = arith.mulf %494, %495 : vector<8x256xf32>
    %497 = arith.truncf %496 : vector<8x256xf32> to vector<8x256xbf16>
    %c32_312 = arith.constant 32 : index
    %c0_313 = arith.constant 0 : index
    %498 = vector.load %arg15[%c32_312, %c0_313] : memref<144x256xbf16, #tpu.memory_space<vmem>>, vector<8x256xbf16>
    tpu.vector_store %arg15[%c32_312, %c0_313], %497 {strides = array<i32>} : memref<144x256xbf16, #tpu.memory_space<vmem>>, vector<8x256xbf16>,
    %c1_i32_314 = arith.constant 1 : i32
    %499 = tpu.dynamic_rotate %477 by %c1_i32_314 dim 1 : vector<1x256xf32>, i32 -> vector<1x256xf32>
    %c48_315 = arith.constant 48 : index
    %c0_316 = arith.constant 0 : index
    %500 = vector.load %arg15[%c48_315, %c0_316] : memref<144x256xbf16, #tpu.memory_space<vmem>>, vector<8x256xbf16>
    %501 = arith.extf %500 : vector<8x256xbf16> to vector<8x256xf32>
    %502 = vector.broadcast %499 : vector<1x256xf32> to vector<8x256xf32>
    %503 = arith.mulf %501, %502 : vector<8x256xf32>
    %504 = arith.truncf %503 : vector<8x256xf32> to vector<8x256xbf16>
    %c48_317 = arith.constant 48 : index
    %c0_318 = arith.constant 0 : index
    %505 = vector.load %arg15[%c48_317, %c0_318] : memref<144x256xbf16, #tpu.memory_space<vmem>>, vector<8x256xbf16>
    tpu.vector_store %arg15[%c48_317, %c0_318], %504 {strides = array<i32>} : memref<144x256xbf16, #tpu.memory_space<vmem>>, vector<8x256xbf16>,
    %c64_319 = arith.constant 64 : index
    %c0_320 = arith.constant 0 : index
    %506 = vector.load %arg15[%c64_319, %c0_320] : memref<144x256xbf16, #tpu.memory_space<vmem>>, vector<8x256xbf16>
    %507 = arith.extf %506 : vector<8x256xbf16> to vector<8x256xf32>
    %508 = vector.broadcast %477 : vector<1x256xf32> to vector<8x256xf32>
    %509 = arith.mulf %507, %508 : vector<8x256xf32>
    %510 = arith.truncf %509 : vector<8x256xf32> to vector<8x256xbf16>
    %c64_321 = arith.constant 64 : index
    %c0_322 = arith.constant 0 : index
    %511 = vector.load %arg15[%c64_321, %c0_322] : memref<144x256xbf16, #tpu.memory_space<vmem>>, vector<8x256xbf16>
    tpu.vector_store %arg15[%c64_321, %c0_322], %510 {strides = array<i32>} : memref<144x256xbf16, #tpu.memory_space<vmem>>, vector<8x256xbf16>,
    %c255_i32_323 = arith.constant 255 : i32
    %512 = tpu.dynamic_rotate %477 by %c255_i32_323 dim 1 : vector<1x256xf32>, i32 -> vector<1x256xf32>
    %c80_324 = arith.constant 80 : index
    %c0_325 = arith.constant 0 : index
    %513 = vector.load %arg15[%c80_324, %c0_325] : memref<144x256xbf16, #tpu.memory_space<vmem>>, vector<8x256xbf16>
    %514 = arith.extf %513 : vector<8x256xbf16> to vector<8x256xf32>
    %515 = vector.broadcast %512 : vector<1x256xf32> to vector<8x256xf32>
    %516 = arith.mulf %514, %515 : vector<8x256xf32>
    %517 = arith.truncf %516 : vector<8x256xf32> to vector<8x256xbf16>
    %c80_326 = arith.constant 80 : index
    %c0_327 = arith.constant 0 : index
    %518 = vector.load %arg15[%c80_326, %c0_327] : memref<144x256xbf16, #tpu.memory_space<vmem>>, vector<8x256xbf16>
    tpu.vector_store %arg15[%c80_326, %c0_327], %517 {strides = array<i32>} : memref<144x256xbf16, #tpu.memory_space<vmem>>, vector<8x256xbf16>,
    %c241_i32_328 = arith.constant 241 : i32
    %519 = tpu.dynamic_rotate %477 by %c241_i32_328 dim 1 : vector<1x256xf32>, i32 -> vector<1x256xf32>
    %c96_329 = arith.constant 96 : index
    %c0_330 = arith.constant 0 : index
    %520 = vector.load %arg15[%c96_329, %c0_330] : memref<144x256xbf16, #tpu.memory_space<vmem>>, vector<8x256xbf16>
    %521 = arith.extf %520 : vector<8x256xbf16> to vector<8x256xf32>
    %522 = vector.broadcast %519 : vector<1x256xf32> to vector<8x256xf32>
    %523 = arith.mulf %521, %522 : vector<8x256xf32>
    %524 = arith.truncf %523 : vector<8x256xf32> to vector<8x256xbf16>
    %c96_331 = arith.constant 96 : index
    %c0_332 = arith.constant 0 : index
    %525 = vector.load %arg15[%c96_331, %c0_332] : memref<144x256xbf16, #tpu.memory_space<vmem>>, vector<8x256xbf16>
    tpu.vector_store %arg15[%c96_331, %c0_332], %524 {strides = array<i32>} : memref<144x256xbf16, #tpu.memory_space<vmem>>, vector<8x256xbf16>,
    %c240_i32_333 = arith.constant 240 : i32
    %526 = tpu.dynamic_rotate %477 by %c240_i32_333 dim 1 : vector<1x256xf32>, i32 -> vector<1x256xf32>
    %c112_334 = arith.constant 112 : index
    %c0_335 = arith.constant 0 : index
    %527 = vector.load %arg15[%c112_334, %c0_335] : memref<144x256xbf16, #tpu.memory_space<vmem>>, vector<8x256xbf16>
    %528 = arith.extf %527 : vector<8x256xbf16> to vector<8x256xf32>
    %529 = vector.broadcast %526 : vector<1x256xf32> to vector<8x256xf32>
    %530 = arith.mulf %528, %529 : vector<8x256xf32>
    %531 = arith.truncf %530 : vector<8x256xf32> to vector<8x256xbf16>
    %c112_336 = arith.constant 112 : index
    %c0_337 = arith.constant 0 : index
    %532 = vector.load %arg15[%c112_336, %c0_337] : memref<144x256xbf16, #tpu.memory_space<vmem>>, vector<8x256xbf16>
    tpu.vector_store %arg15[%c112_336, %c0_337], %531 {strides = array<i32>} : memref<144x256xbf16, #tpu.memory_space<vmem>>, vector<8x256xbf16>,
    %c239_i32_338 = arith.constant 239 : i32
    %533 = tpu.dynamic_rotate %477 by %c239_i32_338 dim 1 : vector<1x256xf32>, i32 -> vector<1x256xf32>
    %c128_339 = arith.constant 128 : index
    %c0_340 = arith.constant 0 : index
    %534 = vector.load %arg15[%c128_339, %c0_340] : memref<144x256xbf16, #tpu.memory_space<vmem>>, vector<8x256xbf16>
    %535 = arith.extf %534 : vector<8x256xbf16> to vector<8x256xf32>
    %536 = vector.broadcast %533 : vector<1x256xf32> to vector<8x256xf32>
    %537 = arith.mulf %535, %536 : vector<8x256xf32>
    %538 = arith.truncf %537 : vector<8x256xf32> to vector<8x256xbf16>
    %c128_341 = arith.constant 128 : index
    %c0_342 = arith.constant 0 : index
    %539 = vector.load %arg15[%c128_341, %c0_342] : memref<144x256xbf16, #tpu.memory_space<vmem>>, vector<8x256xbf16>
    tpu.vector_store %arg15[%c128_341, %c0_342], %538 {strides = array<i32>} : memref<144x256xbf16, #tpu.memory_space<vmem>>, vector<8x256xbf16>,
    %c0_343 = arith.constant 0 : index
    %c0_344 = arith.constant 0 : index
    %540 = vector.load %arg6[%c0_343, %c0_344] : memref<32x144xbf16, #tpu.memory_space<vmem>>, vector<32x144xbf16>
    %c0_345 = arith.constant 0 : index
    %c0_346 = arith.constant 0 : index
    %541 = vector.load %arg15[%c0_345, %c0_346] : memref<144x256xbf16, #tpu.memory_space<vmem>>, vector<144x256xbf16>
    %cst_347 = arith.constant dense<0.000000e+00> : vector<32x256xf32>
    %542 = tpu.matmul %540, %541, %cst_347 {dimension_numbers = #tpu.dot_dimension_numbers<[1], [0], [0], [1], [0, 0, 1, 1], [], []>} : vector<32x144xbf16>, vector<144x256xbf16>, vector<32x256xf32> -> vector<32x256xf32>
    %c0_348 = arith.constant 0 : index
    %c0_349 = arith.constant 0 : index
    %543 = vector.load %arg7[%c0_348, %c0_349] : memref<32x1xf32, #tpu.memory_space<vmem>>, vector<32x1xf32>
    %544 = vector.broadcast %543 : vector<32x1xf32> to vector<32x256xf32>
    %545 = arith.addf %542, %544 : vector<32x256xf32>
    %c0_350 = arith.constant 0 : index
    %c0_351 = arith.constant 0 : index
    %546 = vector.load %arg12[%c0_350, %c0_351] : memref<8x256xf32, #tpu.memory_space<vmem>>, vector<8x256xf32>
    %547 = vector.extract_strided_slice %545 {offsets = [0, 0], sizes = [8, 256], strides = [1, 1]} : vector<32x256xf32> to vector<8x256xf32>
    %548 = arith.negf %547 : vector<8x256xf32>
    %549 = math.exp %548 : vector<8x256xf32>
    %cst_352 = arith.constant 1.000000e+00 : f32
    %550 = vector.broadcast %cst_352 : f32 to vector<8x256xf32>
    %551 = arith.addf %550, %549 : vector<8x256xf32>
    %552 = arith.divf %550, %551 : vector<8x256xf32>
    %553 = vector.extract_strided_slice %545 {offsets = [8, 0], sizes = [8, 256], strides = [1, 1]} : vector<32x256xf32> to vector<8x256xf32>
    %554 = arith.negf %553 : vector<8x256xf32>
    %555 = math.exp %554 : vector<8x256xf32>
    %cst_353 = arith.constant 1.000000e+00 : f32
    %556 = vector.broadcast %cst_353 : f32 to vector<8x256xf32>
    %557 = arith.addf %556, %555 : vector<8x256xf32>
    %558 = arith.divf %556, %557 : vector<8x256xf32>
    %559 = arith.mulf %558, %546 : vector<8x256xf32>
    %560 = vector.extract_strided_slice %545 {offsets = [16, 0], sizes = [8, 256], strides = [1, 1]} : vector<32x256xf32> to vector<8x256xf32>
    %561 = math.tanh %560 : vector<8x256xf32>
    %562 = arith.mulf %552, %561 : vector<8x256xf32>
    %563 = arith.addf %559, %562 : vector<8x256xf32>
    %564 = vector.extract_strided_slice %545 {offsets = [24, 0], sizes = [8, 256], strides = [1, 1]} : vector<32x256xf32> to vector<8x256xf32>
    %565 = arith.negf %564 : vector<8x256xf32>
    %566 = math.exp %565 : vector<8x256xf32>
    %cst_354 = arith.constant 1.000000e+00 : f32
    %567 = vector.broadcast %cst_354 : f32 to vector<8x256xf32>
    %568 = arith.addf %567, %566 : vector<8x256xf32>
    %569 = arith.divf %567, %568 : vector<8x256xf32>
    %570 = math.tanh %563 : vector<8x256xf32>
    %571 = arith.mulf %569, %570 : vector<8x256xf32>
    %c0_355 = arith.constant 0 : index
    %c0_356 = arith.constant 0 : index
    %572 = vector.load %arg12[%c0_355, %c0_356] : memref<8x256xf32, #tpu.memory_space<vmem>>, vector<8x256xf32>
    tpu.vector_store %arg12[%c0_355, %c0_356], %563 {strides = array<i32>} : memref<8x256xf32, #tpu.memory_space<vmem>>, vector<8x256xf32>,
    %c8_357 = arith.constant 8 : index
    %c0_358 = arith.constant 0 : index
    %573 = vector.load %arg11[%c8_357, %c0_358] : memref<16x256xf32, #tpu.memory_space<vmem>>, vector<8x256xf32>
    tpu.vector_store %arg11[%c8_357, %c0_358], %571 {strides = array<i32>} : memref<16x256xf32, #tpu.memory_space<vmem>>, vector<8x256xf32>,
    %c0_359 = arith.constant 0 : index
    %c0_360 = arith.constant 0 : index
    %574 = vector.load %arg13[%c0_359, %c0_360] : memref<16x256xf32, #tpu.memory_space<vmem>>, vector<8x256xf32>
    tpu.vector_store %arg13[%c0_359, %c0_360], %571 {strides = array<i32>} : memref<16x256xf32, #tpu.memory_space<vmem>>, vector<8x256xf32>,
    %c0_361 = arith.constant 0 : index
    %c0_362 = arith.constant 0 : index
    %575 = vector.load %arg13[%c0_361, %c0_362] : memref<16x256xf32, #tpu.memory_space<vmem>>, vector<16x256xf32>
    %c17_i32_363 = arith.constant 17 : i32
    %576 = tpu.dynamic_rotate %575 by %c17_i32_363 dim 1 : vector<16x256xf32>, i32 -> vector<16x256xf32>
    %577 = vector.broadcast %0 : vector<1x256xf32> to vector<16x256xf32>
    %578 = arith.mulf %576, %577 : vector<16x256xf32>
    %579 = arith.truncf %578 : vector<16x256xf32> to vector<16x256xbf16>
    %c0_364 = arith.constant 0 : index
    %c0_365 = arith.constant 0 : index
    %580 = vector.load %arg16[%c0_364, %c0_365] : memref<144x256xbf16, #tpu.memory_space<vmem>>, vector<16x256xbf16>
    tpu.vector_store %arg16[%c0_364, %c0_365], %579 {strides = array<i32>} : memref<144x256xbf16, #tpu.memory_space<vmem>>, vector<16x256xbf16>,
    %c16_i32_366 = arith.constant 16 : i32
    %581 = tpu.dynamic_rotate %575 by %c16_i32_366 dim 1 : vector<16x256xf32>, i32 -> vector<16x256xf32>
    %582 = vector.broadcast %1 : vector<1x256xf32> to vector<16x256xf32>
    %583 = arith.mulf %581, %582 : vector<16x256xf32>
    %584 = arith.truncf %583 : vector<16x256xf32> to vector<16x256xbf16>
    %c16_367 = arith.constant 16 : index
    %c0_368 = arith.constant 0 : index
    %585 = vector.load %arg16[%c16_367, %c0_368] : memref<144x256xbf16, #tpu.memory_space<vmem>>, vector<16x256xbf16>
    tpu.vector_store %arg16[%c16_367, %c0_368], %584 {strides = array<i32>} : memref<144x256xbf16, #tpu.memory_space<vmem>>, vector<16x256xbf16>,
    %c15_i32_369 = arith.constant 15 : i32
    %586 = tpu.dynamic_rotate %575 by %c15_i32_369 dim 1 : vector<16x256xf32>, i32 -> vector<16x256xf32>
    %587 = vector.broadcast %2 : vector<1x256xf32> to vector<16x256xf32>
    %588 = arith.mulf %586, %587 : vector<16x256xf32>
    %589 = arith.truncf %588 : vector<16x256xf32> to vector<16x256xbf16>
    %c32_370 = arith.constant 32 : index
    %c0_371 = arith.constant 0 : index
    %590 = vector.load %arg16[%c32_370, %c0_371] : memref<144x256xbf16, #tpu.memory_space<vmem>>, vector<16x256xbf16>
    tpu.vector_store %arg16[%c32_370, %c0_371], %589 {strides = array<i32>} : memref<144x256xbf16, #tpu.memory_space<vmem>>, vector<16x256xbf16>,
    %c1_i32_372 = arith.constant 1 : i32
    %591 = tpu.dynamic_rotate %575 by %c1_i32_372 dim 1 : vector<16x256xf32>, i32 -> vector<16x256xf32>
    %592 = vector.broadcast %3 : vector<1x256xf32> to vector<16x256xf32>
    %593 = arith.mulf %591, %592 : vector<16x256xf32>
    %594 = arith.truncf %593 : vector<16x256xf32> to vector<16x256xbf16>
    %c48_373 = arith.constant 48 : index
    %c0_374 = arith.constant 0 : index
    %595 = vector.load %arg16[%c48_373, %c0_374] : memref<144x256xbf16, #tpu.memory_space<vmem>>, vector<16x256xbf16>
    tpu.vector_store %arg16[%c48_373, %c0_374], %594 {strides = array<i32>} : memref<144x256xbf16, #tpu.memory_space<vmem>>, vector<16x256xbf16>,
    %596 = arith.truncf %575 : vector<16x256xf32> to vector<16x256xbf16>
    %c64_375 = arith.constant 64 : index
    %c0_376 = arith.constant 0 : index
    %597 = vector.load %arg16[%c64_375, %c0_376] : memref<144x256xbf16, #tpu.memory_space<vmem>>, vector<16x256xbf16>
    tpu.vector_store %arg16[%c64_375, %c0_376], %596 {strides = array<i32>} : memref<144x256xbf16, #tpu.memory_space<vmem>>, vector<16x256xbf16>,
    %c255_i32_377 = arith.constant 255 : i32
    %598 = tpu.dynamic_rotate %575 by %c255_i32_377 dim 1 : vector<16x256xf32>, i32 -> vector<16x256xf32>
    %599 = vector.broadcast %4 : vector<1x256xf32> to vector<16x256xf32>
    %600 = arith.mulf %598, %599 : vector<16x256xf32>
    %601 = arith.truncf %600 : vector<16x256xf32> to vector<16x256xbf16>
    %c80_378 = arith.constant 80 : index
    %c0_379 = arith.constant 0 : index
    %602 = vector.load %arg16[%c80_378, %c0_379] : memref<144x256xbf16, #tpu.memory_space<vmem>>, vector<16x256xbf16>
    tpu.vector_store %arg16[%c80_378, %c0_379], %601 {strides = array<i32>} : memref<144x256xbf16, #tpu.memory_space<vmem>>, vector<16x256xbf16>,
    %c241_i32_380 = arith.constant 241 : i32
    %603 = tpu.dynamic_rotate %575 by %c241_i32_380 dim 1 : vector<16x256xf32>, i32 -> vector<16x256xf32>
    %604 = vector.broadcast %5 : vector<1x256xf32> to vector<16x256xf32>
    %605 = arith.mulf %603, %604 : vector<16x256xf32>
    %606 = arith.truncf %605 : vector<16x256xf32> to vector<16x256xbf16>
    %c96_381 = arith.constant 96 : index
    %c0_382 = arith.constant 0 : index
    %607 = vector.load %arg16[%c96_381, %c0_382] : memref<144x256xbf16, #tpu.memory_space<vmem>>, vector<16x256xbf16>
    tpu.vector_store %arg16[%c96_381, %c0_382], %606 {strides = array<i32>} : memref<144x256xbf16, #tpu.memory_space<vmem>>, vector<16x256xbf16>,
    %c240_i32_383 = arith.constant 240 : i32
    %608 = tpu.dynamic_rotate %575 by %c240_i32_383 dim 1 : vector<16x256xf32>, i32 -> vector<16x256xf32>
    %609 = vector.broadcast %6 : vector<1x256xf32> to vector<16x256xf32>
    %610 = arith.mulf %608, %609 : vector<16x256xf32>
    %611 = arith.truncf %610 : vector<16x256xf32> to vector<16x256xbf16>
    %c112_384 = arith.constant 112 : index
    %c0_385 = arith.constant 0 : index
    %612 = vector.load %arg16[%c112_384, %c0_385] : memref<144x256xbf16, #tpu.memory_space<vmem>>, vector<16x256xbf16>
    tpu.vector_store %arg16[%c112_384, %c0_385], %611 {strides = array<i32>} : memref<144x256xbf16, #tpu.memory_space<vmem>>, vector<16x256xbf16>,
    %c239_i32_386 = arith.constant 239 : i32
    %613 = tpu.dynamic_rotate %575 by %c239_i32_386 dim 1 : vector<16x256xf32>, i32 -> vector<16x256xf32>
    %614 = vector.broadcast %7 : vector<1x256xf32> to vector<16x256xf32>
    %615 = arith.mulf %613, %614 : vector<16x256xf32>
    %616 = arith.truncf %615 : vector<16x256xf32> to vector<16x256xbf16>
    %c128_387 = arith.constant 128 : index
    %c0_388 = arith.constant 0 : index
    %617 = vector.load %arg16[%c128_387, %c0_388] : memref<144x256xbf16, #tpu.memory_space<vmem>>, vector<16x256xbf16>
    tpu.vector_store %arg16[%c128_387, %c0_388], %616 {strides = array<i32>} : memref<144x256xbf16, #tpu.memory_space<vmem>>, vector<16x256xbf16>,
    %c0_389 = arith.constant 0 : index
    %c0_390 = arith.constant 0 : index
    %618 = vector.load %arg8[%c0_389, %c0_390] : memref<32x144xbf16, #tpu.memory_space<vmem>>, vector<32x144xbf16>
    %c0_391 = arith.constant 0 : index
    %c0_392 = arith.constant 0 : index
    %619 = vector.load %arg16[%c0_391, %c0_392] : memref<144x256xbf16, #tpu.memory_space<vmem>>, vector<144x256xbf16>
    %cst_393 = arith.constant dense<0.000000e+00> : vector<32x256xf32>
    %620 = tpu.matmul %618, %619, %cst_393 {dimension_numbers = #tpu.dot_dimension_numbers<[1], [0], [0], [1], [0, 0, 1, 1], [], []>} : vector<32x144xbf16>, vector<144x256xbf16>, vector<32x256xf32> -> vector<32x256xf32>
    %c0_394 = arith.constant 0 : index
    %c0_395 = arith.constant 0 : index
    %621 = vector.load %arg9[%c0_394, %c0_395] : memref<32x1xf32, #tpu.memory_space<vmem>>, vector<32x1xf32>
    %622 = vector.broadcast %621 : vector<32x1xf32> to vector<32x256xf32>
    %623 = arith.addf %620, %622 : vector<32x256xf32>
    %c0_396 = arith.constant 0 : index
    %c0_397 = arith.constant 0 : index
    %624 = vector.load %arg14[%c0_396, %c0_397] : memref<8x256xf32, #tpu.memory_space<vmem>>, vector<8x256xf32>
    %625 = vector.extract_strided_slice %623 {offsets = [0, 0], sizes = [8, 256], strides = [1, 1]} : vector<32x256xf32> to vector<8x256xf32>
    %626 = arith.negf %625 : vector<8x256xf32>
    %627 = math.exp %626 : vector<8x256xf32>
    %cst_398 = arith.constant 1.000000e+00 : f32
    %628 = vector.broadcast %cst_398 : f32 to vector<8x256xf32>
    %629 = arith.addf %628, %627 : vector<8x256xf32>
    %630 = arith.divf %628, %629 : vector<8x256xf32>
    %631 = vector.extract_strided_slice %623 {offsets = [8, 0], sizes = [8, 256], strides = [1, 1]} : vector<32x256xf32> to vector<8x256xf32>
    %632 = arith.negf %631 : vector<8x256xf32>
    %633 = math.exp %632 : vector<8x256xf32>
    %cst_399 = arith.constant 1.000000e+00 : f32
    %634 = vector.broadcast %cst_399 : f32 to vector<8x256xf32>
    %635 = arith.addf %634, %633 : vector<8x256xf32>
    %636 = arith.divf %634, %635 : vector<8x256xf32>
    %637 = arith.mulf %636, %624 : vector<8x256xf32>
    %638 = vector.extract_strided_slice %623 {offsets = [16, 0], sizes = [8, 256], strides = [1, 1]} : vector<32x256xf32> to vector<8x256xf32>
    %639 = math.tanh %638 : vector<8x256xf32>
    %640 = arith.mulf %630, %639 : vector<8x256xf32>
    %641 = arith.addf %637, %640 : vector<8x256xf32>
    %642 = vector.extract_strided_slice %623 {offsets = [24, 0], sizes = [8, 256], strides = [1, 1]} : vector<32x256xf32> to vector<8x256xf32>
    %643 = arith.negf %642 : vector<8x256xf32>
    %644 = math.exp %643 : vector<8x256xf32>
    %cst_400 = arith.constant 1.000000e+00 : f32
    %645 = vector.broadcast %cst_400 : f32 to vector<8x256xf32>
    %646 = arith.addf %645, %644 : vector<8x256xf32>
    %647 = arith.divf %645, %646 : vector<8x256xf32>
    %648 = math.tanh %641 : vector<8x256xf32>
    %649 = arith.mulf %647, %648 : vector<8x256xf32>
    %c0_401 = arith.constant 0 : index
    %c0_402 = arith.constant 0 : index
    %650 = vector.load %arg14[%c0_401, %c0_402] : memref<8x256xf32, #tpu.memory_space<vmem>>, vector<8x256xf32>
    tpu.vector_store %arg14[%c0_401, %c0_402], %641 {strides = array<i32>} : memref<8x256xf32, #tpu.memory_space<vmem>>, vector<8x256xf32>,
    %c8_403 = arith.constant 8 : index
    %c0_404 = arith.constant 0 : index
    %651 = vector.load %arg13[%c8_403, %c0_404] : memref<16x256xf32, #tpu.memory_space<vmem>>, vector<8x256xf32>
    tpu.vector_store %arg13[%c8_403, %c0_404], %649 {strides = array<i32>} : memref<16x256xf32, #tpu.memory_space<vmem>>, vector<8x256xf32>,
    %c0_405 = arith.constant 0 : index
    %c0_406 = arith.constant 0 : index
    %652 = vector.load %arg11[%c0_405, %c0_406] : memref<16x256xf32, #tpu.memory_space<vmem>>, vector<16x256xf32>
    %c17_i32_407 = arith.constant 17 : i32
    %653 = tpu.dynamic_rotate %652 by %c17_i32_407 dim 1 : vector<16x256xf32>, i32 -> vector<16x256xf32>
    %654 = vector.broadcast %0 : vector<1x256xf32> to vector<16x256xf32>
    %655 = arith.mulf %653, %654 : vector<16x256xf32>
    %656 = arith.truncf %655 : vector<16x256xf32> to vector<16x256xbf16>
    %c0_408 = arith.constant 0 : index
    %c0_409 = arith.constant 0 : index
    %657 = vector.load %arg15[%c0_408, %c0_409] : memref<144x256xbf16, #tpu.memory_space<vmem>>, vector<16x256xbf16>
    tpu.vector_store %arg15[%c0_408, %c0_409], %656 {strides = array<i32>} : memref<144x256xbf16, #tpu.memory_space<vmem>>, vector<16x256xbf16>,
    %c16_i32_410 = arith.constant 16 : i32
    %658 = tpu.dynamic_rotate %652 by %c16_i32_410 dim 1 : vector<16x256xf32>, i32 -> vector<16x256xf32>
    %659 = vector.broadcast %1 : vector<1x256xf32> to vector<16x256xf32>
    %660 = arith.mulf %658, %659 : vector<16x256xf32>
    %661 = arith.truncf %660 : vector<16x256xf32> to vector<16x256xbf16>
    %c16_411 = arith.constant 16 : index
    %c0_412 = arith.constant 0 : index
    %662 = vector.load %arg15[%c16_411, %c0_412] : memref<144x256xbf16, #tpu.memory_space<vmem>>, vector<16x256xbf16>
    tpu.vector_store %arg15[%c16_411, %c0_412], %661 {strides = array<i32>} : memref<144x256xbf16, #tpu.memory_space<vmem>>, vector<16x256xbf16>,
    %c15_i32_413 = arith.constant 15 : i32
    %663 = tpu.dynamic_rotate %652 by %c15_i32_413 dim 1 : vector<16x256xf32>, i32 -> vector<16x256xf32>
    %664 = vector.broadcast %2 : vector<1x256xf32> to vector<16x256xf32>
    %665 = arith.mulf %663, %664 : vector<16x256xf32>
    %666 = arith.truncf %665 : vector<16x256xf32> to vector<16x256xbf16>
    %c32_414 = arith.constant 32 : index
    %c0_415 = arith.constant 0 : index
    %667 = vector.load %arg15[%c32_414, %c0_415] : memref<144x256xbf16, #tpu.memory_space<vmem>>, vector<16x256xbf16>
    tpu.vector_store %arg15[%c32_414, %c0_415], %666 {strides = array<i32>} : memref<144x256xbf16, #tpu.memory_space<vmem>>, vector<16x256xbf16>,
    %c1_i32_416 = arith.constant 1 : i32
    %668 = tpu.dynamic_rotate %652 by %c1_i32_416 dim 1 : vector<16x256xf32>, i32 -> vector<16x256xf32>
    %669 = vector.broadcast %3 : vector<1x256xf32> to vector<16x256xf32>
    %670 = arith.mulf %668, %669 : vector<16x256xf32>
    %671 = arith.truncf %670 : vector<16x256xf32> to vector<16x256xbf16>
    %c48_417 = arith.constant 48 : index
    %c0_418 = arith.constant 0 : index
    %672 = vector.load %arg15[%c48_417, %c0_418] : memref<144x256xbf16, #tpu.memory_space<vmem>>, vector<16x256xbf16>
    tpu.vector_store %arg15[%c48_417, %c0_418], %671 {strides = array<i32>} : memref<144x256xbf16, #tpu.memory_space<vmem>>, vector<16x256xbf16>,
    %673 = arith.truncf %652 : vector<16x256xf32> to vector<16x256xbf16>
    %c64_419 = arith.constant 64 : index
    %c0_420 = arith.constant 0 : index
    %674 = vector.load %arg15[%c64_419, %c0_420] : memref<144x256xbf16, #tpu.memory_space<vmem>>, vector<16x256xbf16>
    tpu.vector_store %arg15[%c64_419, %c0_420], %673 {strides = array<i32>} : memref<144x256xbf16, #tpu.memory_space<vmem>>, vector<16x256xbf16>,
    %c255_i32_421 = arith.constant 255 : i32
    %675 = tpu.dynamic_rotate %652 by %c255_i32_421 dim 1 : vector<16x256xf32>, i32 -> vector<16x256xf32>
    %676 = vector.broadcast %4 : vector<1x256xf32> to vector<16x256xf32>
    %677 = arith.mulf %675, %676 : vector<16x256xf32>
    %678 = arith.truncf %677 : vector<16x256xf32> to vector<16x256xbf16>
    %c80_422 = arith.constant 80 : index
    %c0_423 = arith.constant 0 : index
    %679 = vector.load %arg15[%c80_422, %c0_423] : memref<144x256xbf16, #tpu.memory_space<vmem>>, vector<16x256xbf16>
    tpu.vector_store %arg15[%c80_422, %c0_423], %678 {strides = array<i32>} : memref<144x256xbf16, #tpu.memory_space<vmem>>, vector<16x256xbf16>,
    %c241_i32_424 = arith.constant 241 : i32
    %680 = tpu.dynamic_rotate %652 by %c241_i32_424 dim 1 : vector<16x256xf32>, i32 -> vector<16x256xf32>
    %681 = vector.broadcast %5 : vector<1x256xf32> to vector<16x256xf32>
    %682 = arith.mulf %680, %681 : vector<16x256xf32>
    %683 = arith.truncf %682 : vector<16x256xf32> to vector<16x256xbf16>
    %c96_425 = arith.constant 96 : index
    %c0_426 = arith.constant 0 : index
    %684 = vector.load %arg15[%c96_425, %c0_426] : memref<144x256xbf16, #tpu.memory_space<vmem>>, vector<16x256xbf16>
    tpu.vector_store %arg15[%c96_425, %c0_426], %683 {strides = array<i32>} : memref<144x256xbf16, #tpu.memory_space<vmem>>, vector<16x256xbf16>,
    %c240_i32_427 = arith.constant 240 : i32
    %685 = tpu.dynamic_rotate %652 by %c240_i32_427 dim 1 : vector<16x256xf32>, i32 -> vector<16x256xf32>
    %686 = vector.broadcast %6 : vector<1x256xf32> to vector<16x256xf32>
    %687 = arith.mulf %685, %686 : vector<16x256xf32>
    %688 = arith.truncf %687 : vector<16x256xf32> to vector<16x256xbf16>
    %c112_428 = arith.constant 112 : index
    %c0_429 = arith.constant 0 : index
    %689 = vector.load %arg15[%c112_428, %c0_429] : memref<144x256xbf16, #tpu.memory_space<vmem>>, vector<16x256xbf16>
    tpu.vector_store %arg15[%c112_428, %c0_429], %688 {strides = array<i32>} : memref<144x256xbf16, #tpu.memory_space<vmem>>, vector<16x256xbf16>,
    %c239_i32_430 = arith.constant 239 : i32
    %690 = tpu.dynamic_rotate %652 by %c239_i32_430 dim 1 : vector<16x256xf32>, i32 -> vector<16x256xf32>
    %691 = vector.broadcast %7 : vector<1x256xf32> to vector<16x256xf32>
    %692 = arith.mulf %690, %691 : vector<16x256xf32>
    %693 = arith.truncf %692 : vector<16x256xf32> to vector<16x256xbf16>
    %c128_431 = arith.constant 128 : index
    %c0_432 = arith.constant 0 : index
    %694 = vector.load %arg15[%c128_431, %c0_432] : memref<144x256xbf16, #tpu.memory_space<vmem>>, vector<16x256xbf16>
    tpu.vector_store %arg15[%c128_431, %c0_432], %693 {strides = array<i32>} : memref<144x256xbf16, #tpu.memory_space<vmem>>, vector<16x256xbf16>,
    %c0_433 = arith.constant 0 : index
    %c0_434 = arith.constant 0 : index
    %695 = vector.load %arg3[%c0_433, %c0_434] : memref<16x144xbf16, #tpu.memory_space<vmem>>, vector<16x144xbf16>
    %c0_435 = arith.constant 0 : index
    %c0_436 = arith.constant 0 : index
    %696 = vector.load %arg15[%c0_435, %c0_436] : memref<144x256xbf16, #tpu.memory_space<vmem>>, vector<144x256xbf16>
    %cst_437 = arith.constant dense<0.000000e+00> : vector<16x256xf32>
    %697 = tpu.matmul %695, %696, %cst_437 {dimension_numbers = #tpu.dot_dimension_numbers<[1], [0], [0], [1], [0, 0, 1, 1], [], []>} : vector<16x144xbf16>, vector<144x256xbf16>, vector<16x256xf32> -> vector<16x256xf32>
    %cst_438 = arith.constant 0.000000e+00 : f32
    %698 = vector.broadcast %cst_438 : f32 to vector<16x256xf32>
    %699 = arith.maximumf %697, %698 : vector<16x256xf32>
    %c17_i32_439 = arith.constant 17 : i32
    %700 = tpu.dynamic_rotate %699 by %c17_i32_439 dim 1 : vector<16x256xf32>, i32 -> vector<16x256xf32>
    %701 = vector.broadcast %0 : vector<1x256xf32> to vector<16x256xf32>
    %702 = arith.mulf %700, %701 : vector<16x256xf32>
    %703 = arith.truncf %702 : vector<16x256xf32> to vector<16x256xbf16>
    %c0_440 = arith.constant 0 : index
    %c0_441 = arith.constant 0 : index
    %704 = vector.load %arg16[%c0_440, %c0_441] : memref<144x256xbf16, #tpu.memory_space<vmem>>, vector<16x256xbf16>
    tpu.vector_store %arg16[%c0_440, %c0_441], %703 {strides = array<i32>} : memref<144x256xbf16, #tpu.memory_space<vmem>>, vector<16x256xbf16>,
    %c16_i32_442 = arith.constant 16 : i32
    %705 = tpu.dynamic_rotate %699 by %c16_i32_442 dim 1 : vector<16x256xf32>, i32 -> vector<16x256xf32>
    %706 = vector.broadcast %1 : vector<1x256xf32> to vector<16x256xf32>
    %707 = arith.mulf %705, %706 : vector<16x256xf32>
    %708 = arith.truncf %707 : vector<16x256xf32> to vector<16x256xbf16>
    %c16_443 = arith.constant 16 : index
    %c0_444 = arith.constant 0 : index
    %709 = vector.load %arg16[%c16_443, %c0_444] : memref<144x256xbf16, #tpu.memory_space<vmem>>, vector<16x256xbf16>
    tpu.vector_store %arg16[%c16_443, %c0_444], %708 {strides = array<i32>} : memref<144x256xbf16, #tpu.memory_space<vmem>>, vector<16x256xbf16>,
    %c15_i32_445 = arith.constant 15 : i32
    %710 = tpu.dynamic_rotate %699 by %c15_i32_445 dim 1 : vector<16x256xf32>, i32 -> vector<16x256xf32>
    %711 = vector.broadcast %2 : vector<1x256xf32> to vector<16x256xf32>
    %712 = arith.mulf %710, %711 : vector<16x256xf32>
    %713 = arith.truncf %712 : vector<16x256xf32> to vector<16x256xbf16>
    %c32_446 = arith.constant 32 : index
    %c0_447 = arith.constant 0 : index
    %714 = vector.load %arg16[%c32_446, %c0_447] : memref<144x256xbf16, #tpu.memory_space<vmem>>, vector<16x256xbf16>
    tpu.vector_store %arg16[%c32_446, %c0_447], %713 {strides = array<i32>} : memref<144x256xbf16, #tpu.memory_space<vmem>>, vector<16x256xbf16>,
    %c1_i32_448 = arith.constant 1 : i32
    %715 = tpu.dynamic_rotate %699 by %c1_i32_448 dim 1 : vector<16x256xf32>, i32 -> vector<16x256xf32>
    %716 = vector.broadcast %3 : vector<1x256xf32> to vector<16x256xf32>
    %717 = arith.mulf %715, %716 : vector<16x256xf32>
    %718 = arith.truncf %717 : vector<16x256xf32> to vector<16x256xbf16>
    %c48_449 = arith.constant 48 : index
    %c0_450 = arith.constant 0 : index
    %719 = vector.load %arg16[%c48_449, %c0_450] : memref<144x256xbf16, #tpu.memory_space<vmem>>, vector<16x256xbf16>
    tpu.vector_store %arg16[%c48_449, %c0_450], %718 {strides = array<i32>} : memref<144x256xbf16, #tpu.memory_space<vmem>>, vector<16x256xbf16>,
    %720 = arith.truncf %699 : vector<16x256xf32> to vector<16x256xbf16>
    %c64_451 = arith.constant 64 : index
    %c0_452 = arith.constant 0 : index
    %721 = vector.load %arg16[%c64_451, %c0_452] : memref<144x256xbf16, #tpu.memory_space<vmem>>, vector<16x256xbf16>
    tpu.vector_store %arg16[%c64_451, %c0_452], %720 {strides = array<i32>} : memref<144x256xbf16, #tpu.memory_space<vmem>>, vector<16x256xbf16>,
    %c255_i32_453 = arith.constant 255 : i32
    %722 = tpu.dynamic_rotate %699 by %c255_i32_453 dim 1 : vector<16x256xf32>, i32 -> vector<16x256xf32>
    %723 = vector.broadcast %4 : vector<1x256xf32> to vector<16x256xf32>
    %724 = arith.mulf %722, %723 : vector<16x256xf32>
    %725 = arith.truncf %724 : vector<16x256xf32> to vector<16x256xbf16>
    %c80_454 = arith.constant 80 : index
    %c0_455 = arith.constant 0 : index
    %726 = vector.load %arg16[%c80_454, %c0_455] : memref<144x256xbf16, #tpu.memory_space<vmem>>, vector<16x256xbf16>
    tpu.vector_store %arg16[%c80_454, %c0_455], %725 {strides = array<i32>} : memref<144x256xbf16, #tpu.memory_space<vmem>>, vector<16x256xbf16>,
    %c241_i32_456 = arith.constant 241 : i32
    %727 = tpu.dynamic_rotate %699 by %c241_i32_456 dim 1 : vector<16x256xf32>, i32 -> vector<16x256xf32>
    %728 = vector.broadcast %5 : vector<1x256xf32> to vector<16x256xf32>
    %729 = arith.mulf %727, %728 : vector<16x256xf32>
    %730 = arith.truncf %729 : vector<16x256xf32> to vector<16x256xbf16>
    %c96_457 = arith.constant 96 : index
    %c0_458 = arith.constant 0 : index
    %731 = vector.load %arg16[%c96_457, %c0_458] : memref<144x256xbf16, #tpu.memory_space<vmem>>, vector<16x256xbf16>
    tpu.vector_store %arg16[%c96_457, %c0_458], %730 {strides = array<i32>} : memref<144x256xbf16, #tpu.memory_space<vmem>>, vector<16x256xbf16>,
    %c240_i32_459 = arith.constant 240 : i32
    %732 = tpu.dynamic_rotate %699 by %c240_i32_459 dim 1 : vector<16x256xf32>, i32 -> vector<16x256xf32>
    %733 = vector.broadcast %6 : vector<1x256xf32> to vector<16x256xf32>
    %734 = arith.mulf %732, %733 : vector<16x256xf32>
    %735 = arith.truncf %734 : vector<16x256xf32> to vector<16x256xbf16>
    %c112_460 = arith.constant 112 : index
    %c0_461 = arith.constant 0 : index
    %736 = vector.load %arg16[%c112_460, %c0_461] : memref<144x256xbf16, #tpu.memory_space<vmem>>, vector<16x256xbf16>
    tpu.vector_store %arg16[%c112_460, %c0_461], %735 {strides = array<i32>} : memref<144x256xbf16, #tpu.memory_space<vmem>>, vector<16x256xbf16>,
    %c239_i32_462 = arith.constant 239 : i32
    %737 = tpu.dynamic_rotate %699 by %c239_i32_462 dim 1 : vector<16x256xf32>, i32 -> vector<16x256xf32>
    %738 = vector.broadcast %7 : vector<1x256xf32> to vector<16x256xf32>
    %739 = arith.mulf %737, %738 : vector<16x256xf32>
    %740 = arith.truncf %739 : vector<16x256xf32> to vector<16x256xbf16>
    %c128_463 = arith.constant 128 : index
    %c0_464 = arith.constant 0 : index
    %741 = vector.load %arg16[%c128_463, %c0_464] : memref<144x256xbf16, #tpu.memory_space<vmem>>, vector<16x256xbf16>
    tpu.vector_store %arg16[%c128_463, %c0_464], %740 {strides = array<i32>} : memref<144x256xbf16, #tpu.memory_space<vmem>>, vector<16x256xbf16>,
    %c0_465 = arith.constant 0 : index
    %c0_466 = arith.constant 0 : index
    %742 = vector.load %arg4[%c0_465, %c0_466] : memref<16x144xbf16, #tpu.memory_space<vmem>>, vector<16x144xbf16>
    %c0_467 = arith.constant 0 : index
    %c0_468 = arith.constant 0 : index
    %743 = vector.load %arg16[%c0_467, %c0_468] : memref<144x256xbf16, #tpu.memory_space<vmem>>, vector<144x256xbf16>
    %cst_469 = arith.constant dense<0.000000e+00> : vector<16x256xf32>
    %744 = tpu.matmul %742, %743, %cst_469 {dimension_numbers = #tpu.dot_dimension_numbers<[1], [0], [0], [1], [0, 0, 1, 1], [], []>} : vector<16x144xbf16>, vector<144x256xbf16>, vector<16x256xf32> -> vector<16x256xf32>
    %cst_470 = arith.constant 0.000000e+00 : f32
    %745 = vector.broadcast %cst_470 : f32 to vector<16x256xf32>
    %746 = arith.maximumf %744, %745 : vector<16x256xf32>
    %c17_i32_471 = arith.constant 17 : i32
    %747 = tpu.dynamic_rotate %746 by %c17_i32_471 dim 1 : vector<16x256xf32>, i32 -> vector<16x256xf32>
    %748 = vector.broadcast %0 : vector<1x256xf32> to vector<16x256xf32>
    %749 = arith.mulf %747, %748 : vector<16x256xf32>
    %750 = arith.truncf %749 : vector<16x256xf32> to vector<16x256xbf16>
    %c0_472 = arith.constant 0 : index
    %c0_473 = arith.constant 0 : index
    %751 = vector.load %arg16[%c0_472, %c0_473] : memref<144x256xbf16, #tpu.memory_space<vmem>>, vector<16x256xbf16>
    tpu.vector_store %arg16[%c0_472, %c0_473], %750 {strides = array<i32>} : memref<144x256xbf16, #tpu.memory_space<vmem>>, vector<16x256xbf16>,
    %c16_i32_474 = arith.constant 16 : i32
    %752 = tpu.dynamic_rotate %746 by %c16_i32_474 dim 1 : vector<16x256xf32>, i32 -> vector<16x256xf32>
    %753 = vector.broadcast %1 : vector<1x256xf32> to vector<16x256xf32>
    %754 = arith.mulf %752, %753 : vector<16x256xf32>
    %755 = arith.truncf %754 : vector<16x256xf32> to vector<16x256xbf16>
    %c16_475 = arith.constant 16 : index
    %c0_476 = arith.constant 0 : index
    %756 = vector.load %arg16[%c16_475, %c0_476] : memref<144x256xbf16, #tpu.memory_space<vmem>>, vector<16x256xbf16>
    tpu.vector_store %arg16[%c16_475, %c0_476], %755 {strides = array<i32>} : memref<144x256xbf16, #tpu.memory_space<vmem>>, vector<16x256xbf16>,
    %c15_i32_477 = arith.constant 15 : i32
    %757 = tpu.dynamic_rotate %746 by %c15_i32_477 dim 1 : vector<16x256xf32>, i32 -> vector<16x256xf32>
    %758 = vector.broadcast %2 : vector<1x256xf32> to vector<16x256xf32>
    %759 = arith.mulf %757, %758 : vector<16x256xf32>
    %760 = arith.truncf %759 : vector<16x256xf32> to vector<16x256xbf16>
    %c32_478 = arith.constant 32 : index
    %c0_479 = arith.constant 0 : index
    %761 = vector.load %arg16[%c32_478, %c0_479] : memref<144x256xbf16, #tpu.memory_space<vmem>>, vector<16x256xbf16>
    tpu.vector_store %arg16[%c32_478, %c0_479], %760 {strides = array<i32>} : memref<144x256xbf16, #tpu.memory_space<vmem>>, vector<16x256xbf16>,
    %c1_i32_480 = arith.constant 1 : i32
    %762 = tpu.dynamic_rotate %746 by %c1_i32_480 dim 1 : vector<16x256xf32>, i32 -> vector<16x256xf32>
    %763 = vector.broadcast %3 : vector<1x256xf32> to vector<16x256xf32>
    %764 = arith.mulf %762, %763 : vector<16x256xf32>
    %765 = arith.truncf %764 : vector<16x256xf32> to vector<16x256xbf16>
    %c48_481 = arith.constant 48 : index
    %c0_482 = arith.constant 0 : index
    %766 = vector.load %arg16[%c48_481, %c0_482] : memref<144x256xbf16, #tpu.memory_space<vmem>>, vector<16x256xbf16>
    tpu.vector_store %arg16[%c48_481, %c0_482], %765 {strides = array<i32>} : memref<144x256xbf16, #tpu.memory_space<vmem>>, vector<16x256xbf16>,
    %767 = arith.truncf %746 : vector<16x256xf32> to vector<16x256xbf16>
    %c64_483 = arith.constant 64 : index
    %c0_484 = arith.constant 0 : index
    %768 = vector.load %arg16[%c64_483, %c0_484] : memref<144x256xbf16, #tpu.memory_space<vmem>>, vector<16x256xbf16>
    tpu.vector_store %arg16[%c64_483, %c0_484], %767 {strides = array<i32>} : memref<144x256xbf16, #tpu.memory_space<vmem>>, vector<16x256xbf16>,
    %c255_i32_485 = arith.constant 255 : i32
    %769 = tpu.dynamic_rotate %746 by %c255_i32_485 dim 1 : vector<16x256xf32>, i32 -> vector<16x256xf32>
    %770 = vector.broadcast %4 : vector<1x256xf32> to vector<16x256xf32>
    %771 = arith.mulf %769, %770 : vector<16x256xf32>
    %772 = arith.truncf %771 : vector<16x256xf32> to vector<16x256xbf16>
    %c80_486 = arith.constant 80 : index
    %c0_487 = arith.constant 0 : index
    %773 = vector.load %arg16[%c80_486, %c0_487] : memref<144x256xbf16, #tpu.memory_space<vmem>>, vector<16x256xbf16>
    tpu.vector_store %arg16[%c80_486, %c0_487], %772 {strides = array<i32>} : memref<144x256xbf16, #tpu.memory_space<vmem>>, vector<16x256xbf16>,
    %c241_i32_488 = arith.constant 241 : i32
    %774 = tpu.dynamic_rotate %746 by %c241_i32_488 dim 1 : vector<16x256xf32>, i32 -> vector<16x256xf32>
    %775 = vector.broadcast %5 : vector<1x256xf32> to vector<16x256xf32>
    %776 = arith.mulf %774, %775 : vector<16x256xf32>
    %777 = arith.truncf %776 : vector<16x256xf32> to vector<16x256xbf16>
    %c96_489 = arith.constant 96 : index
    %c0_490 = arith.constant 0 : index
    %778 = vector.load %arg16[%c96_489, %c0_490] : memref<144x256xbf16, #tpu.memory_space<vmem>>, vector<16x256xbf16>
    tpu.vector_store %arg16[%c96_489, %c0_490], %777 {strides = array<i32>} : memref<144x256xbf16, #tpu.memory_space<vmem>>, vector<16x256xbf16>,
    %c240_i32_491 = arith.constant 240 : i32
    %779 = tpu.dynamic_rotate %746 by %c240_i32_491 dim 1 : vector<16x256xf32>, i32 -> vector<16x256xf32>
    %780 = vector.broadcast %6 : vector<1x256xf32> to vector<16x256xf32>
    %781 = arith.mulf %779, %780 : vector<16x256xf32>
    %782 = arith.truncf %781 : vector<16x256xf32> to vector<16x256xbf16>
    %c112_492 = arith.constant 112 : index
    %c0_493 = arith.constant 0 : index
    %783 = vector.load %arg16[%c112_492, %c0_493] : memref<144x256xbf16, #tpu.memory_space<vmem>>, vector<16x256xbf16>
    tpu.vector_store %arg16[%c112_492, %c0_493], %782 {strides = array<i32>} : memref<144x256xbf16, #tpu.memory_space<vmem>>, vector<16x256xbf16>,
    %c239_i32_494 = arith.constant 239 : i32
    %784 = tpu.dynamic_rotate %746 by %c239_i32_494 dim 1 : vector<16x256xf32>, i32 -> vector<16x256xf32>
    %785 = vector.broadcast %7 : vector<1x256xf32> to vector<16x256xf32>
    %786 = arith.mulf %784, %785 : vector<16x256xf32>
    %787 = arith.truncf %786 : vector<16x256xf32> to vector<16x256xbf16>
    %c128_495 = arith.constant 128 : index
    %c0_496 = arith.constant 0 : index
    %788 = vector.load %arg16[%c128_495, %c0_496] : memref<144x256xbf16, #tpu.memory_space<vmem>>, vector<16x256xbf16>
    tpu.vector_store %arg16[%c128_495, %c0_496], %787 {strides = array<i32>} : memref<144x256xbf16, #tpu.memory_space<vmem>>, vector<16x256xbf16>,
    %c0_497 = arith.constant 0 : index
    %c0_498 = arith.constant 0 : index
    %789 = vector.load %arg5[%c0_497, %c0_498] : memref<1x144xbf16, #tpu.memory_space<vmem>>, vector<1x144xbf16>
    %c0_499 = arith.constant 0 : index
    %c0_500 = arith.constant 0 : index
    %790 = vector.load %arg16[%c0_499, %c0_500] : memref<144x256xbf16, #tpu.memory_space<vmem>>, vector<144x256xbf16>
    %cst_501 = arith.constant dense<0.000000e+00> : vector<1x256xf32>
    %791 = tpu.matmul %789, %790, %cst_501 {dimension_numbers = #tpu.dot_dimension_numbers<[1], [0], [0], [1], [0, 0, 1, 1], [], []>} : vector<1x144xbf16>, vector<144x256xbf16>, vector<1x256xf32> -> vector<1x256xf32>
    %792 = arith.negf %791 : vector<1x256xf32>
    %793 = math.exp %792 : vector<1x256xf32>
    %cst_502 = arith.constant 1.000000e+00 : f32
    %794 = vector.broadcast %cst_502 : f32 to vector<1x256xf32>
    %795 = arith.addf %794, %793 : vector<1x256xf32>
    %796 = arith.divf %794, %795 : vector<1x256xf32>
    %c17_i32_503 = arith.constant 17 : i32
    %797 = tpu.dynamic_rotate %796 by %c17_i32_503 dim 1 : vector<1x256xf32>, i32 -> vector<1x256xf32>
    %c0_504 = arith.constant 0 : index
    %c0_505 = arith.constant 0 : index
    %798 = vector.load %arg15[%c0_504, %c0_505] : memref<144x256xbf16, #tpu.memory_space<vmem>>, vector<8x256xbf16>
    %799 = arith.extf %798 : vector<8x256xbf16> to vector<8x256xf32>
    %800 = vector.broadcast %797 : vector<1x256xf32> to vector<8x256xf32>
    %801 = arith.mulf %799, %800 : vector<8x256xf32>
    %802 = arith.truncf %801 : vector<8x256xf32> to vector<8x256xbf16>
    %c0_506 = arith.constant 0 : index
    %c0_507 = arith.constant 0 : index
    %803 = vector.load %arg15[%c0_506, %c0_507] : memref<144x256xbf16, #tpu.memory_space<vmem>>, vector<8x256xbf16>
    tpu.vector_store %arg15[%c0_506, %c0_507], %802 {strides = array<i32>} : memref<144x256xbf16, #tpu.memory_space<vmem>>, vector<8x256xbf16>,
    %c16_i32_508 = arith.constant 16 : i32
    %804 = tpu.dynamic_rotate %796 by %c16_i32_508 dim 1 : vector<1x256xf32>, i32 -> vector<1x256xf32>
    %c16_509 = arith.constant 16 : index
    %c0_510 = arith.constant 0 : index
    %805 = vector.load %arg15[%c16_509, %c0_510] : memref<144x256xbf16, #tpu.memory_space<vmem>>, vector<8x256xbf16>
    %806 = arith.extf %805 : vector<8x256xbf16> to vector<8x256xf32>
    %807 = vector.broadcast %804 : vector<1x256xf32> to vector<8x256xf32>
    %808 = arith.mulf %806, %807 : vector<8x256xf32>
    %809 = arith.truncf %808 : vector<8x256xf32> to vector<8x256xbf16>
    %c16_511 = arith.constant 16 : index
    %c0_512 = arith.constant 0 : index
    %810 = vector.load %arg15[%c16_511, %c0_512] : memref<144x256xbf16, #tpu.memory_space<vmem>>, vector<8x256xbf16>
    tpu.vector_store %arg15[%c16_511, %c0_512], %809 {strides = array<i32>} : memref<144x256xbf16, #tpu.memory_space<vmem>>, vector<8x256xbf16>,
    %c15_i32_513 = arith.constant 15 : i32
    %811 = tpu.dynamic_rotate %796 by %c15_i32_513 dim 1 : vector<1x256xf32>, i32 -> vector<1x256xf32>
    %c32_514 = arith.constant 32 : index
    %c0_515 = arith.constant 0 : index
    %812 = vector.load %arg15[%c32_514, %c0_515] : memref<144x256xbf16, #tpu.memory_space<vmem>>, vector<8x256xbf16>
    %813 = arith.extf %812 : vector<8x256xbf16> to vector<8x256xf32>
    %814 = vector.broadcast %811 : vector<1x256xf32> to vector<8x256xf32>
    %815 = arith.mulf %813, %814 : vector<8x256xf32>
    %816 = arith.truncf %815 : vector<8x256xf32> to vector<8x256xbf16>
    %c32_516 = arith.constant 32 : index
    %c0_517 = arith.constant 0 : index
    %817 = vector.load %arg15[%c32_516, %c0_517] : memref<144x256xbf16, #tpu.memory_space<vmem>>, vector<8x256xbf16>
    tpu.vector_store %arg15[%c32_516, %c0_517], %816 {strides = array<i32>} : memref<144x256xbf16, #tpu.memory_space<vmem>>, vector<8x256xbf16>,
    %c1_i32_518 = arith.constant 1 : i32
    %818 = tpu.dynamic_rotate %796 by %c1_i32_518 dim 1 : vector<1x256xf32>, i32 -> vector<1x256xf32>
    %c48_519 = arith.constant 48 : index
    %c0_520 = arith.constant 0 : index
    %819 = vector.load %arg15[%c48_519, %c0_520] : memref<144x256xbf16, #tpu.memory_space<vmem>>, vector<8x256xbf16>
    %820 = arith.extf %819 : vector<8x256xbf16> to vector<8x256xf32>
    %821 = vector.broadcast %818 : vector<1x256xf32> to vector<8x256xf32>
    %822 = arith.mulf %820, %821 : vector<8x256xf32>
    %823 = arith.truncf %822 : vector<8x256xf32> to vector<8x256xbf16>
    %c48_521 = arith.constant 48 : index
    %c0_522 = arith.constant 0 : index
    %824 = vector.load %arg15[%c48_521, %c0_522] : memref<144x256xbf16, #tpu.memory_space<vmem>>, vector<8x256xbf16>
    tpu.vector_store %arg15[%c48_521, %c0_522], %823 {strides = array<i32>} : memref<144x256xbf16, #tpu.memory_space<vmem>>, vector<8x256xbf16>,
    %c64_523 = arith.constant 64 : index
    %c0_524 = arith.constant 0 : index
    %825 = vector.load %arg15[%c64_523, %c0_524] : memref<144x256xbf16, #tpu.memory_space<vmem>>, vector<8x256xbf16>
    %826 = arith.extf %825 : vector<8x256xbf16> to vector<8x256xf32>
    %827 = vector.broadcast %796 : vector<1x256xf32> to vector<8x256xf32>
    %828 = arith.mulf %826, %827 : vector<8x256xf32>
    %829 = arith.truncf %828 : vector<8x256xf32> to vector<8x256xbf16>
    %c64_525 = arith.constant 64 : index
    %c0_526 = arith.constant 0 : index
    %830 = vector.load %arg15[%c64_525, %c0_526] : memref<144x256xbf16, #tpu.memory_space<vmem>>, vector<8x256xbf16>
    tpu.vector_store %arg15[%c64_525, %c0_526], %829 {strides = array<i32>} : memref<144x256xbf16, #tpu.memory_space<vmem>>, vector<8x256xbf16>,
    %c255_i32_527 = arith.constant 255 : i32
    %831 = tpu.dynamic_rotate %796 by %c255_i32_527 dim 1 : vector<1x256xf32>, i32 -> vector<1x256xf32>
    %c80_528 = arith.constant 80 : index
    %c0_529 = arith.constant 0 : index
    %832 = vector.load %arg15[%c80_528, %c0_529] : memref<144x256xbf16, #tpu.memory_space<vmem>>, vector<8x256xbf16>
    %833 = arith.extf %832 : vector<8x256xbf16> to vector<8x256xf32>
    %834 = vector.broadcast %831 : vector<1x256xf32> to vector<8x256xf32>
    %835 = arith.mulf %833, %834 : vector<8x256xf32>
    %836 = arith.truncf %835 : vector<8x256xf32> to vector<8x256xbf16>
    %c80_530 = arith.constant 80 : index
    %c0_531 = arith.constant 0 : index
    %837 = vector.load %arg15[%c80_530, %c0_531] : memref<144x256xbf16, #tpu.memory_space<vmem>>, vector<8x256xbf16>
    tpu.vector_store %arg15[%c80_530, %c0_531], %836 {strides = array<i32>} : memref<144x256xbf16, #tpu.memory_space<vmem>>, vector<8x256xbf16>,
    %c241_i32_532 = arith.constant 241 : i32
    %838 = tpu.dynamic_rotate %796 by %c241_i32_532 dim 1 : vector<1x256xf32>, i32 -> vector<1x256xf32>
    %c96_533 = arith.constant 96 : index
    %c0_534 = arith.constant 0 : index
    %839 = vector.load %arg15[%c96_533, %c0_534] : memref<144x256xbf16, #tpu.memory_space<vmem>>, vector<8x256xbf16>
    %840 = arith.extf %839 : vector<8x256xbf16> to vector<8x256xf32>
    %841 = vector.broadcast %838 : vector<1x256xf32> to vector<8x256xf32>
    %842 = arith.mulf %840, %841 : vector<8x256xf32>
    %843 = arith.truncf %842 : vector<8x256xf32> to vector<8x256xbf16>
    %c96_535 = arith.constant 96 : index
    %c0_536 = arith.constant 0 : index
    %844 = vector.load %arg15[%c96_535, %c0_536] : memref<144x256xbf16, #tpu.memory_space<vmem>>, vector<8x256xbf16>
    tpu.vector_store %arg15[%c96_535, %c0_536], %843 {strides = array<i32>} : memref<144x256xbf16, #tpu.memory_space<vmem>>, vector<8x256xbf16>,
    %c240_i32_537 = arith.constant 240 : i32
    %845 = tpu.dynamic_rotate %796 by %c240_i32_537 dim 1 : vector<1x256xf32>, i32 -> vector<1x256xf32>
    %c112_538 = arith.constant 112 : index
    %c0_539 = arith.constant 0 : index
    %846 = vector.load %arg15[%c112_538, %c0_539] : memref<144x256xbf16, #tpu.memory_space<vmem>>, vector<8x256xbf16>
    %847 = arith.extf %846 : vector<8x256xbf16> to vector<8x256xf32>
    %848 = vector.broadcast %845 : vector<1x256xf32> to vector<8x256xf32>
    %849 = arith.mulf %847, %848 : vector<8x256xf32>
    %850 = arith.truncf %849 : vector<8x256xf32> to vector<8x256xbf16>
    %c112_540 = arith.constant 112 : index
    %c0_541 = arith.constant 0 : index
    %851 = vector.load %arg15[%c112_540, %c0_541] : memref<144x256xbf16, #tpu.memory_space<vmem>>, vector<8x256xbf16>
    tpu.vector_store %arg15[%c112_540, %c0_541], %850 {strides = array<i32>} : memref<144x256xbf16, #tpu.memory_space<vmem>>, vector<8x256xbf16>,
    %c239_i32_542 = arith.constant 239 : i32
    %852 = tpu.dynamic_rotate %796 by %c239_i32_542 dim 1 : vector<1x256xf32>, i32 -> vector<1x256xf32>
    %c128_543 = arith.constant 128 : index
    %c0_544 = arith.constant 0 : index
    %853 = vector.load %arg15[%c128_543, %c0_544] : memref<144x256xbf16, #tpu.memory_space<vmem>>, vector<8x256xbf16>
    %854 = arith.extf %853 : vector<8x256xbf16> to vector<8x256xf32>
    %855 = vector.broadcast %852 : vector<1x256xf32> to vector<8x256xf32>
    %856 = arith.mulf %854, %855 : vector<8x256xf32>
    %857 = arith.truncf %856 : vector<8x256xf32> to vector<8x256xbf16>
    %c128_545 = arith.constant 128 : index
    %c0_546 = arith.constant 0 : index
    %858 = vector.load %arg15[%c128_545, %c0_546] : memref<144x256xbf16, #tpu.memory_space<vmem>>, vector<8x256xbf16>
    tpu.vector_store %arg15[%c128_545, %c0_546], %857 {strides = array<i32>} : memref<144x256xbf16, #tpu.memory_space<vmem>>, vector<8x256xbf16>,
    %c0_547 = arith.constant 0 : index
    %c0_548 = arith.constant 0 : index
    %859 = vector.load %arg6[%c0_547, %c0_548] : memref<32x144xbf16, #tpu.memory_space<vmem>>, vector<32x144xbf16>
    %c0_549 = arith.constant 0 : index
    %c0_550 = arith.constant 0 : index
    %860 = vector.load %arg15[%c0_549, %c0_550] : memref<144x256xbf16, #tpu.memory_space<vmem>>, vector<144x256xbf16>
    %cst_551 = arith.constant dense<0.000000e+00> : vector<32x256xf32>
    %861 = tpu.matmul %859, %860, %cst_551 {dimension_numbers = #tpu.dot_dimension_numbers<[1], [0], [0], [1], [0, 0, 1, 1], [], []>} : vector<32x144xbf16>, vector<144x256xbf16>, vector<32x256xf32> -> vector<32x256xf32>
    %c0_552 = arith.constant 0 : index
    %c0_553 = arith.constant 0 : index
    %862 = vector.load %arg7[%c0_552, %c0_553] : memref<32x1xf32, #tpu.memory_space<vmem>>, vector<32x1xf32>
    %863 = vector.broadcast %862 : vector<32x1xf32> to vector<32x256xf32>
    %864 = arith.addf %861, %863 : vector<32x256xf32>
    %c0_554 = arith.constant 0 : index
    %c0_555 = arith.constant 0 : index
    %865 = vector.load %arg12[%c0_554, %c0_555] : memref<8x256xf32, #tpu.memory_space<vmem>>, vector<8x256xf32>
    %866 = vector.extract_strided_slice %864 {offsets = [0, 0], sizes = [8, 256], strides = [1, 1]} : vector<32x256xf32> to vector<8x256xf32>
    %867 = arith.negf %866 : vector<8x256xf32>
    %868 = math.exp %867 : vector<8x256xf32>
    %cst_556 = arith.constant 1.000000e+00 : f32
    %869 = vector.broadcast %cst_556 : f32 to vector<8x256xf32>
    %870 = arith.addf %869, %868 : vector<8x256xf32>
    %871 = arith.divf %869, %870 : vector<8x256xf32>
    %872 = vector.extract_strided_slice %864 {offsets = [8, 0], sizes = [8, 256], strides = [1, 1]} : vector<32x256xf32> to vector<8x256xf32>
    %873 = arith.negf %872 : vector<8x256xf32>
    %874 = math.exp %873 : vector<8x256xf32>
    %cst_557 = arith.constant 1.000000e+00 : f32
    %875 = vector.broadcast %cst_557 : f32 to vector<8x256xf32>
    %876 = arith.addf %875, %874 : vector<8x256xf32>
    %877 = arith.divf %875, %876 : vector<8x256xf32>
    %878 = arith.mulf %877, %865 : vector<8x256xf32>
    %879 = vector.extract_strided_slice %864 {offsets = [16, 0], sizes = [8, 256], strides = [1, 1]} : vector<32x256xf32> to vector<8x256xf32>
    %880 = math.tanh %879 : vector<8x256xf32>
    %881 = arith.mulf %871, %880 : vector<8x256xf32>
    %882 = arith.addf %878, %881 : vector<8x256xf32>
    %883 = vector.extract_strided_slice %864 {offsets = [24, 0], sizes = [8, 256], strides = [1, 1]} : vector<32x256xf32> to vector<8x256xf32>
    %884 = arith.negf %883 : vector<8x256xf32>
    %885 = math.exp %884 : vector<8x256xf32>
    %cst_558 = arith.constant 1.000000e+00 : f32
    %886 = vector.broadcast %cst_558 : f32 to vector<8x256xf32>
    %887 = arith.addf %886, %885 : vector<8x256xf32>
    %888 = arith.divf %886, %887 : vector<8x256xf32>
    %889 = math.tanh %882 : vector<8x256xf32>
    %890 = arith.mulf %888, %889 : vector<8x256xf32>
    %c0_559 = arith.constant 0 : index
    %c0_560 = arith.constant 0 : index
    %891 = vector.load %arg12[%c0_559, %c0_560] : memref<8x256xf32, #tpu.memory_space<vmem>>, vector<8x256xf32>
    tpu.vector_store %arg12[%c0_559, %c0_560], %882 {strides = array<i32>} : memref<8x256xf32, #tpu.memory_space<vmem>>, vector<8x256xf32>,
    %c8_561 = arith.constant 8 : index
    %c0_562 = arith.constant 0 : index
    %892 = vector.load %arg11[%c8_561, %c0_562] : memref<16x256xf32, #tpu.memory_space<vmem>>, vector<8x256xf32>
    tpu.vector_store %arg11[%c8_561, %c0_562], %890 {strides = array<i32>} : memref<16x256xf32, #tpu.memory_space<vmem>>, vector<8x256xf32>,
    %c0_563 = arith.constant 0 : index
    %c0_564 = arith.constant 0 : index
    %893 = vector.load %arg13[%c0_563, %c0_564] : memref<16x256xf32, #tpu.memory_space<vmem>>, vector<8x256xf32>
    tpu.vector_store %arg13[%c0_563, %c0_564], %890 {strides = array<i32>} : memref<16x256xf32, #tpu.memory_space<vmem>>, vector<8x256xf32>,
    %c0_565 = arith.constant 0 : index
    %c0_566 = arith.constant 0 : index
    %894 = vector.load %arg13[%c0_565, %c0_566] : memref<16x256xf32, #tpu.memory_space<vmem>>, vector<16x256xf32>
    %c17_i32_567 = arith.constant 17 : i32
    %895 = tpu.dynamic_rotate %894 by %c17_i32_567 dim 1 : vector<16x256xf32>, i32 -> vector<16x256xf32>
    %896 = vector.broadcast %0 : vector<1x256xf32> to vector<16x256xf32>
    %897 = arith.mulf %895, %896 : vector<16x256xf32>
    %898 = arith.truncf %897 : vector<16x256xf32> to vector<16x256xbf16>
    %c0_568 = arith.constant 0 : index
    %c0_569 = arith.constant 0 : index
    %899 = vector.load %arg16[%c0_568, %c0_569] : memref<144x256xbf16, #tpu.memory_space<vmem>>, vector<16x256xbf16>
    tpu.vector_store %arg16[%c0_568, %c0_569], %898 {strides = array<i32>} : memref<144x256xbf16, #tpu.memory_space<vmem>>, vector<16x256xbf16>,
    %c16_i32_570 = arith.constant 16 : i32
    %900 = tpu.dynamic_rotate %894 by %c16_i32_570 dim 1 : vector<16x256xf32>, i32 -> vector<16x256xf32>
    %901 = vector.broadcast %1 : vector<1x256xf32> to vector<16x256xf32>
    %902 = arith.mulf %900, %901 : vector<16x256xf32>
    %903 = arith.truncf %902 : vector<16x256xf32> to vector<16x256xbf16>
    %c16_571 = arith.constant 16 : index
    %c0_572 = arith.constant 0 : index
    %904 = vector.load %arg16[%c16_571, %c0_572] : memref<144x256xbf16, #tpu.memory_space<vmem>>, vector<16x256xbf16>
    tpu.vector_store %arg16[%c16_571, %c0_572], %903 {strides = array<i32>} : memref<144x256xbf16, #tpu.memory_space<vmem>>, vector<16x256xbf16>,
    %c15_i32_573 = arith.constant 15 : i32
    %905 = tpu.dynamic_rotate %894 by %c15_i32_573 dim 1 : vector<16x256xf32>, i32 -> vector<16x256xf32>
    %906 = vector.broadcast %2 : vector<1x256xf32> to vector<16x256xf32>
    %907 = arith.mulf %905, %906 : vector<16x256xf32>
    %908 = arith.truncf %907 : vector<16x256xf32> to vector<16x256xbf16>
    %c32_574 = arith.constant 32 : index
    %c0_575 = arith.constant 0 : index
    %909 = vector.load %arg16[%c32_574, %c0_575] : memref<144x256xbf16, #tpu.memory_space<vmem>>, vector<16x256xbf16>
    tpu.vector_store %arg16[%c32_574, %c0_575], %908 {strides = array<i32>} : memref<144x256xbf16, #tpu.memory_space<vmem>>, vector<16x256xbf16>,
    %c1_i32_576 = arith.constant 1 : i32
    %910 = tpu.dynamic_rotate %894 by %c1_i32_576 dim 1 : vector<16x256xf32>, i32 -> vector<16x256xf32>
    %911 = vector.broadcast %3 : vector<1x256xf32> to vector<16x256xf32>
    %912 = arith.mulf %910, %911 : vector<16x256xf32>
    %913 = arith.truncf %912 : vector<16x256xf32> to vector<16x256xbf16>
    %c48_577 = arith.constant 48 : index
    %c0_578 = arith.constant 0 : index
    %914 = vector.load %arg16[%c48_577, %c0_578] : memref<144x256xbf16, #tpu.memory_space<vmem>>, vector<16x256xbf16>
    tpu.vector_store %arg16[%c48_577, %c0_578], %913 {strides = array<i32>} : memref<144x256xbf16, #tpu.memory_space<vmem>>, vector<16x256xbf16>,
    %915 = arith.truncf %894 : vector<16x256xf32> to vector<16x256xbf16>
    %c64_579 = arith.constant 64 : index
    %c0_580 = arith.constant 0 : index
    %916 = vector.load %arg16[%c64_579, %c0_580] : memref<144x256xbf16, #tpu.memory_space<vmem>>, vector<16x256xbf16>
    tpu.vector_store %arg16[%c64_579, %c0_580], %915 {strides = array<i32>} : memref<144x256xbf16, #tpu.memory_space<vmem>>, vector<16x256xbf16>,
    %c255_i32_581 = arith.constant 255 : i32
    %917 = tpu.dynamic_rotate %894 by %c255_i32_581 dim 1 : vector<16x256xf32>, i32 -> vector<16x256xf32>
    %918 = vector.broadcast %4 : vector<1x256xf32> to vector<16x256xf32>
    %919 = arith.mulf %917, %918 : vector<16x256xf32>
    %920 = arith.truncf %919 : vector<16x256xf32> to vector<16x256xbf16>
    %c80_582 = arith.constant 80 : index
    %c0_583 = arith.constant 0 : index
    %921 = vector.load %arg16[%c80_582, %c0_583] : memref<144x256xbf16, #tpu.memory_space<vmem>>, vector<16x256xbf16>
    tpu.vector_store %arg16[%c80_582, %c0_583], %920 {strides = array<i32>} : memref<144x256xbf16, #tpu.memory_space<vmem>>, vector<16x256xbf16>,
    %c241_i32_584 = arith.constant 241 : i32
    %922 = tpu.dynamic_rotate %894 by %c241_i32_584 dim 1 : vector<16x256xf32>, i32 -> vector<16x256xf32>
    %923 = vector.broadcast %5 : vector<1x256xf32> to vector<16x256xf32>
    %924 = arith.mulf %922, %923 : vector<16x256xf32>
    %925 = arith.truncf %924 : vector<16x256xf32> to vector<16x256xbf16>
    %c96_585 = arith.constant 96 : index
    %c0_586 = arith.constant 0 : index
    %926 = vector.load %arg16[%c96_585, %c0_586] : memref<144x256xbf16, #tpu.memory_space<vmem>>, vector<16x256xbf16>
    tpu.vector_store %arg16[%c96_585, %c0_586], %925 {strides = array<i32>} : memref<144x256xbf16, #tpu.memory_space<vmem>>, vector<16x256xbf16>,
    %c240_i32_587 = arith.constant 240 : i32
    %927 = tpu.dynamic_rotate %894 by %c240_i32_587 dim 1 : vector<16x256xf32>, i32 -> vector<16x256xf32>
    %928 = vector.broadcast %6 : vector<1x256xf32> to vector<16x256xf32>
    %929 = arith.mulf %927, %928 : vector<16x256xf32>
    %930 = arith.truncf %929 : vector<16x256xf32> to vector<16x256xbf16>
    %c112_588 = arith.constant 112 : index
    %c0_589 = arith.constant 0 : index
    %931 = vector.load %arg16[%c112_588, %c0_589] : memref<144x256xbf16, #tpu.memory_space<vmem>>, vector<16x256xbf16>
    tpu.vector_store %arg16[%c112_588, %c0_589], %930 {strides = array<i32>} : memref<144x256xbf16, #tpu.memory_space<vmem>>, vector<16x256xbf16>,
    %c239_i32_590 = arith.constant 239 : i32
    %932 = tpu.dynamic_rotate %894 by %c239_i32_590 dim 1 : vector<16x256xf32>, i32 -> vector<16x256xf32>
    %933 = vector.broadcast %7 : vector<1x256xf32> to vector<16x256xf32>
    %934 = arith.mulf %932, %933 : vector<16x256xf32>
    %935 = arith.truncf %934 : vector<16x256xf32> to vector<16x256xbf16>
    %c128_591 = arith.constant 128 : index
    %c0_592 = arith.constant 0 : index
    %936 = vector.load %arg16[%c128_591, %c0_592] : memref<144x256xbf16, #tpu.memory_space<vmem>>, vector<16x256xbf16>
    tpu.vector_store %arg16[%c128_591, %c0_592], %935 {strides = array<i32>} : memref<144x256xbf16, #tpu.memory_space<vmem>>, vector<16x256xbf16>,
    %c0_593 = arith.constant 0 : index
    %c0_594 = arith.constant 0 : index
    %937 = vector.load %arg8[%c0_593, %c0_594] : memref<32x144xbf16, #tpu.memory_space<vmem>>, vector<32x144xbf16>
    %c0_595 = arith.constant 0 : index
    %c0_596 = arith.constant 0 : index
    %938 = vector.load %arg16[%c0_595, %c0_596] : memref<144x256xbf16, #tpu.memory_space<vmem>>, vector<144x256xbf16>
    %cst_597 = arith.constant dense<0.000000e+00> : vector<32x256xf32>
    %939 = tpu.matmul %937, %938, %cst_597 {dimension_numbers = #tpu.dot_dimension_numbers<[1], [0], [0], [1], [0, 0, 1, 1], [], []>} : vector<32x144xbf16>, vector<144x256xbf16>, vector<32x256xf32> -> vector<32x256xf32>
    %c0_598 = arith.constant 0 : index
    %c0_599 = arith.constant 0 : index
    %940 = vector.load %arg9[%c0_598, %c0_599] : memref<32x1xf32, #tpu.memory_space<vmem>>, vector<32x1xf32>
    %941 = vector.broadcast %940 : vector<32x1xf32> to vector<32x256xf32>
    %942 = arith.addf %939, %941 : vector<32x256xf32>
    %c0_600 = arith.constant 0 : index
    %c0_601 = arith.constant 0 : index
    %943 = vector.load %arg14[%c0_600, %c0_601] : memref<8x256xf32, #tpu.memory_space<vmem>>, vector<8x256xf32>
    %944 = vector.extract_strided_slice %942 {offsets = [0, 0], sizes = [8, 256], strides = [1, 1]} : vector<32x256xf32> to vector<8x256xf32>
    %945 = arith.negf %944 : vector<8x256xf32>
    %946 = math.exp %945 : vector<8x256xf32>
    %cst_602 = arith.constant 1.000000e+00 : f32
    %947 = vector.broadcast %cst_602 : f32 to vector<8x256xf32>
    %948 = arith.addf %947, %946 : vector<8x256xf32>
    %949 = arith.divf %947, %948 : vector<8x256xf32>
    %950 = vector.extract_strided_slice %942 {offsets = [8, 0], sizes = [8, 256], strides = [1, 1]} : vector<32x256xf32> to vector<8x256xf32>
    %951 = arith.negf %950 : vector<8x256xf32>
    %952 = math.exp %951 : vector<8x256xf32>
    %cst_603 = arith.constant 1.000000e+00 : f32
    %953 = vector.broadcast %cst_603 : f32 to vector<8x256xf32>
    %954 = arith.addf %953, %952 : vector<8x256xf32>
    %955 = arith.divf %953, %954 : vector<8x256xf32>
    %956 = arith.mulf %955, %943 : vector<8x256xf32>
    %957 = vector.extract_strided_slice %942 {offsets = [16, 0], sizes = [8, 256], strides = [1, 1]} : vector<32x256xf32> to vector<8x256xf32>
    %958 = math.tanh %957 : vector<8x256xf32>
    %959 = arith.mulf %949, %958 : vector<8x256xf32>
    %960 = arith.addf %956, %959 : vector<8x256xf32>
    %961 = vector.extract_strided_slice %942 {offsets = [24, 0], sizes = [8, 256], strides = [1, 1]} : vector<32x256xf32> to vector<8x256xf32>
    %962 = arith.negf %961 : vector<8x256xf32>
    %963 = math.exp %962 : vector<8x256xf32>
    %cst_604 = arith.constant 1.000000e+00 : f32
    %964 = vector.broadcast %cst_604 : f32 to vector<8x256xf32>
    %965 = arith.addf %964, %963 : vector<8x256xf32>
    %966 = arith.divf %964, %965 : vector<8x256xf32>
    %967 = math.tanh %960 : vector<8x256xf32>
    %968 = arith.mulf %966, %967 : vector<8x256xf32>
    %c0_605 = arith.constant 0 : index
    %c0_606 = arith.constant 0 : index
    %969 = vector.load %arg14[%c0_605, %c0_606] : memref<8x256xf32, #tpu.memory_space<vmem>>, vector<8x256xf32>
    tpu.vector_store %arg14[%c0_605, %c0_606], %960 {strides = array<i32>} : memref<8x256xf32, #tpu.memory_space<vmem>>, vector<8x256xf32>,
    %c8_607 = arith.constant 8 : index
    %c0_608 = arith.constant 0 : index
    %970 = vector.load %arg13[%c8_607, %c0_608] : memref<16x256xf32, #tpu.memory_space<vmem>>, vector<8x256xf32>
    tpu.vector_store %arg13[%c8_607, %c0_608], %968 {strides = array<i32>} : memref<16x256xf32, #tpu.memory_space<vmem>>, vector<8x256xf32>,
    %c0_609 = arith.constant 0 : index
    %c0_610 = arith.constant 0 : index
    %971 = vector.load %arg11[%c0_609, %c0_610] : memref<16x256xf32, #tpu.memory_space<vmem>>, vector<16x256xf32>
    %c17_i32_611 = arith.constant 17 : i32
    %972 = tpu.dynamic_rotate %971 by %c17_i32_611 dim 1 : vector<16x256xf32>, i32 -> vector<16x256xf32>
    %973 = vector.broadcast %0 : vector<1x256xf32> to vector<16x256xf32>
    %974 = arith.mulf %972, %973 : vector<16x256xf32>
    %975 = arith.truncf %974 : vector<16x256xf32> to vector<16x256xbf16>
    %c0_612 = arith.constant 0 : index
    %c0_613 = arith.constant 0 : index
    %976 = vector.load %arg15[%c0_612, %c0_613] : memref<144x256xbf16, #tpu.memory_space<vmem>>, vector<16x256xbf16>
    tpu.vector_store %arg15[%c0_612, %c0_613], %975 {strides = array<i32>} : memref<144x256xbf16, #tpu.memory_space<vmem>>, vector<16x256xbf16>,
    %c16_i32_614 = arith.constant 16 : i32
    %977 = tpu.dynamic_rotate %971 by %c16_i32_614 dim 1 : vector<16x256xf32>, i32 -> vector<16x256xf32>
    %978 = vector.broadcast %1 : vector<1x256xf32> to vector<16x256xf32>
    %979 = arith.mulf %977, %978 : vector<16x256xf32>
    %980 = arith.truncf %979 : vector<16x256xf32> to vector<16x256xbf16>
    %c16_615 = arith.constant 16 : index
    %c0_616 = arith.constant 0 : index
    %981 = vector.load %arg15[%c16_615, %c0_616] : memref<144x256xbf16, #tpu.memory_space<vmem>>, vector<16x256xbf16>
    tpu.vector_store %arg15[%c16_615, %c0_616], %980 {strides = array<i32>} : memref<144x256xbf16, #tpu.memory_space<vmem>>, vector<16x256xbf16>,
    %c15_i32_617 = arith.constant 15 : i32
    %982 = tpu.dynamic_rotate %971 by %c15_i32_617 dim 1 : vector<16x256xf32>, i32 -> vector<16x256xf32>
    %983 = vector.broadcast %2 : vector<1x256xf32> to vector<16x256xf32>
    %984 = arith.mulf %982, %983 : vector<16x256xf32>
    %985 = arith.truncf %984 : vector<16x256xf32> to vector<16x256xbf16>
    %c32_618 = arith.constant 32 : index
    %c0_619 = arith.constant 0 : index
    %986 = vector.load %arg15[%c32_618, %c0_619] : memref<144x256xbf16, #tpu.memory_space<vmem>>, vector<16x256xbf16>
    tpu.vector_store %arg15[%c32_618, %c0_619], %985 {strides = array<i32>} : memref<144x256xbf16, #tpu.memory_space<vmem>>, vector<16x256xbf16>,
    %c1_i32_620 = arith.constant 1 : i32
    %987 = tpu.dynamic_rotate %971 by %c1_i32_620 dim 1 : vector<16x256xf32>, i32 -> vector<16x256xf32>
    %988 = vector.broadcast %3 : vector<1x256xf32> to vector<16x256xf32>
    %989 = arith.mulf %987, %988 : vector<16x256xf32>
    %990 = arith.truncf %989 : vector<16x256xf32> to vector<16x256xbf16>
    %c48_621 = arith.constant 48 : index
    %c0_622 = arith.constant 0 : index
    %991 = vector.load %arg15[%c48_621, %c0_622] : memref<144x256xbf16, #tpu.memory_space<vmem>>, vector<16x256xbf16>
    tpu.vector_store %arg15[%c48_621, %c0_622], %990 {strides = array<i32>} : memref<144x256xbf16, #tpu.memory_space<vmem>>, vector<16x256xbf16>,
    %992 = arith.truncf %971 : vector<16x256xf32> to vector<16x256xbf16>
    %c64_623 = arith.constant 64 : index
    %c0_624 = arith.constant 0 : index
    %993 = vector.load %arg15[%c64_623, %c0_624] : memref<144x256xbf16, #tpu.memory_space<vmem>>, vector<16x256xbf16>
    tpu.vector_store %arg15[%c64_623, %c0_624], %992 {strides = array<i32>} : memref<144x256xbf16, #tpu.memory_space<vmem>>, vector<16x256xbf16>,
    %c255_i32_625 = arith.constant 255 : i32
    %994 = tpu.dynamic_rotate %971 by %c255_i32_625 dim 1 : vector<16x256xf32>, i32 -> vector<16x256xf32>
    %995 = vector.broadcast %4 : vector<1x256xf32> to vector<16x256xf32>
    %996 = arith.mulf %994, %995 : vector<16x256xf32>
    %997 = arith.truncf %996 : vector<16x256xf32> to vector<16x256xbf16>
    %c80_626 = arith.constant 80 : index
    %c0_627 = arith.constant 0 : index
    %998 = vector.load %arg15[%c80_626, %c0_627] : memref<144x256xbf16, #tpu.memory_space<vmem>>, vector<16x256xbf16>
    tpu.vector_store %arg15[%c80_626, %c0_627], %997 {strides = array<i32>} : memref<144x256xbf16, #tpu.memory_space<vmem>>, vector<16x256xbf16>,
    %c241_i32_628 = arith.constant 241 : i32
    %999 = tpu.dynamic_rotate %971 by %c241_i32_628 dim 1 : vector<16x256xf32>, i32 -> vector<16x256xf32>
    %1000 = vector.broadcast %5 : vector<1x256xf32> to vector<16x256xf32>
    %1001 = arith.mulf %999, %1000 : vector<16x256xf32>
    %1002 = arith.truncf %1001 : vector<16x256xf32> to vector<16x256xbf16>
    %c96_629 = arith.constant 96 : index
    %c0_630 = arith.constant 0 : index
    %1003 = vector.load %arg15[%c96_629, %c0_630] : memref<144x256xbf16, #tpu.memory_space<vmem>>, vector<16x256xbf16>
    tpu.vector_store %arg15[%c96_629, %c0_630], %1002 {strides = array<i32>} : memref<144x256xbf16, #tpu.memory_space<vmem>>, vector<16x256xbf16>,
    %c240_i32_631 = arith.constant 240 : i32
    %1004 = tpu.dynamic_rotate %971 by %c240_i32_631 dim 1 : vector<16x256xf32>, i32 -> vector<16x256xf32>
    %1005 = vector.broadcast %6 : vector<1x256xf32> to vector<16x256xf32>
    %1006 = arith.mulf %1004, %1005 : vector<16x256xf32>
    %1007 = arith.truncf %1006 : vector<16x256xf32> to vector<16x256xbf16>
    %c112_632 = arith.constant 112 : index
    %c0_633 = arith.constant 0 : index
    %1008 = vector.load %arg15[%c112_632, %c0_633] : memref<144x256xbf16, #tpu.memory_space<vmem>>, vector<16x256xbf16>
    tpu.vector_store %arg15[%c112_632, %c0_633], %1007 {strides = array<i32>} : memref<144x256xbf16, #tpu.memory_space<vmem>>, vector<16x256xbf16>,
    %c239_i32_634 = arith.constant 239 : i32
    %1009 = tpu.dynamic_rotate %971 by %c239_i32_634 dim 1 : vector<16x256xf32>, i32 -> vector<16x256xf32>
    %1010 = vector.broadcast %7 : vector<1x256xf32> to vector<16x256xf32>
    %1011 = arith.mulf %1009, %1010 : vector<16x256xf32>
    %1012 = arith.truncf %1011 : vector<16x256xf32> to vector<16x256xbf16>
    %c128_635 = arith.constant 128 : index
    %c0_636 = arith.constant 0 : index
    %1013 = vector.load %arg15[%c128_635, %c0_636] : memref<144x256xbf16, #tpu.memory_space<vmem>>, vector<16x256xbf16>
    tpu.vector_store %arg15[%c128_635, %c0_636], %1012 {strides = array<i32>} : memref<144x256xbf16, #tpu.memory_space<vmem>>, vector<16x256xbf16>,
    %c0_637 = arith.constant 0 : index
    %c0_638 = arith.constant 0 : index
    %1014 = vector.load %arg3[%c0_637, %c0_638] : memref<16x144xbf16, #tpu.memory_space<vmem>>, vector<16x144xbf16>
    %c0_639 = arith.constant 0 : index
    %c0_640 = arith.constant 0 : index
    %1015 = vector.load %arg15[%c0_639, %c0_640] : memref<144x256xbf16, #tpu.memory_space<vmem>>, vector<144x256xbf16>
    %cst_641 = arith.constant dense<0.000000e+00> : vector<16x256xf32>
    %1016 = tpu.matmul %1014, %1015, %cst_641 {dimension_numbers = #tpu.dot_dimension_numbers<[1], [0], [0], [1], [0, 0, 1, 1], [], []>} : vector<16x144xbf16>, vector<144x256xbf16>, vector<16x256xf32> -> vector<16x256xf32>
    %cst_642 = arith.constant 0.000000e+00 : f32
    %1017 = vector.broadcast %cst_642 : f32 to vector<16x256xf32>
    %1018 = arith.maximumf %1016, %1017 : vector<16x256xf32>
    %c17_i32_643 = arith.constant 17 : i32
    %1019 = tpu.dynamic_rotate %1018 by %c17_i32_643 dim 1 : vector<16x256xf32>, i32 -> vector<16x256xf32>
    %1020 = vector.broadcast %0 : vector<1x256xf32> to vector<16x256xf32>
    %1021 = arith.mulf %1019, %1020 : vector<16x256xf32>
    %1022 = arith.truncf %1021 : vector<16x256xf32> to vector<16x256xbf16>
    %c0_644 = arith.constant 0 : index
    %c0_645 = arith.constant 0 : index
    %1023 = vector.load %arg16[%c0_644, %c0_645] : memref<144x256xbf16, #tpu.memory_space<vmem>>, vector<16x256xbf16>
    tpu.vector_store %arg16[%c0_644, %c0_645], %1022 {strides = array<i32>} : memref<144x256xbf16, #tpu.memory_space<vmem>>, vector<16x256xbf16>,
    %c16_i32_646 = arith.constant 16 : i32
    %1024 = tpu.dynamic_rotate %1018 by %c16_i32_646 dim 1 : vector<16x256xf32>, i32 -> vector<16x256xf32>
    %1025 = vector.broadcast %1 : vector<1x256xf32> to vector<16x256xf32>
    %1026 = arith.mulf %1024, %1025 : vector<16x256xf32>
    %1027 = arith.truncf %1026 : vector<16x256xf32> to vector<16x256xbf16>
    %c16_647 = arith.constant 16 : index
    %c0_648 = arith.constant 0 : index
    %1028 = vector.load %arg16[%c16_647, %c0_648] : memref<144x256xbf16, #tpu.memory_space<vmem>>, vector<16x256xbf16>
    tpu.vector_store %arg16[%c16_647, %c0_648], %1027 {strides = array<i32>} : memref<144x256xbf16, #tpu.memory_space<vmem>>, vector<16x256xbf16>,
    %c15_i32_649 = arith.constant 15 : i32
    %1029 = tpu.dynamic_rotate %1018 by %c15_i32_649 dim 1 : vector<16x256xf32>, i32 -> vector<16x256xf32>
    %1030 = vector.broadcast %2 : vector<1x256xf32> to vector<16x256xf32>
    %1031 = arith.mulf %1029, %1030 : vector<16x256xf32>
    %1032 = arith.truncf %1031 : vector<16x256xf32> to vector<16x256xbf16>
    %c32_650 = arith.constant 32 : index
    %c0_651 = arith.constant 0 : index
    %1033 = vector.load %arg16[%c32_650, %c0_651] : memref<144x256xbf16, #tpu.memory_space<vmem>>, vector<16x256xbf16>
    tpu.vector_store %arg16[%c32_650, %c0_651], %1032 {strides = array<i32>} : memref<144x256xbf16, #tpu.memory_space<vmem>>, vector<16x256xbf16>,
    %c1_i32_652 = arith.constant 1 : i32
    %1034 = tpu.dynamic_rotate %1018 by %c1_i32_652 dim 1 : vector<16x256xf32>, i32 -> vector<16x256xf32>
    %1035 = vector.broadcast %3 : vector<1x256xf32> to vector<16x256xf32>
    %1036 = arith.mulf %1034, %1035 : vector<16x256xf32>
    %1037 = arith.truncf %1036 : vector<16x256xf32> to vector<16x256xbf16>
    %c48_653 = arith.constant 48 : index
    %c0_654 = arith.constant 0 : index
    %1038 = vector.load %arg16[%c48_653, %c0_654] : memref<144x256xbf16, #tpu.memory_space<vmem>>, vector<16x256xbf16>
    tpu.vector_store %arg16[%c48_653, %c0_654], %1037 {strides = array<i32>} : memref<144x256xbf16, #tpu.memory_space<vmem>>, vector<16x256xbf16>,
    %1039 = arith.truncf %1018 : vector<16x256xf32> to vector<16x256xbf16>
    %c64_655 = arith.constant 64 : index
    %c0_656 = arith.constant 0 : index
    %1040 = vector.load %arg16[%c64_655, %c0_656] : memref<144x256xbf16, #tpu.memory_space<vmem>>, vector<16x256xbf16>
    tpu.vector_store %arg16[%c64_655, %c0_656], %1039 {strides = array<i32>} : memref<144x256xbf16, #tpu.memory_space<vmem>>, vector<16x256xbf16>,
    %c255_i32_657 = arith.constant 255 : i32
    %1041 = tpu.dynamic_rotate %1018 by %c255_i32_657 dim 1 : vector<16x256xf32>, i32 -> vector<16x256xf32>
    %1042 = vector.broadcast %4 : vector<1x256xf32> to vector<16x256xf32>
    %1043 = arith.mulf %1041, %1042 : vector<16x256xf32>
    %1044 = arith.truncf %1043 : vector<16x256xf32> to vector<16x256xbf16>
    %c80_658 = arith.constant 80 : index
    %c0_659 = arith.constant 0 : index
    %1045 = vector.load %arg16[%c80_658, %c0_659] : memref<144x256xbf16, #tpu.memory_space<vmem>>, vector<16x256xbf16>
    tpu.vector_store %arg16[%c80_658, %c0_659], %1044 {strides = array<i32>} : memref<144x256xbf16, #tpu.memory_space<vmem>>, vector<16x256xbf16>,
    %c241_i32_660 = arith.constant 241 : i32
    %1046 = tpu.dynamic_rotate %1018 by %c241_i32_660 dim 1 : vector<16x256xf32>, i32 -> vector<16x256xf32>
    %1047 = vector.broadcast %5 : vector<1x256xf32> to vector<16x256xf32>
    %1048 = arith.mulf %1046, %1047 : vector<16x256xf32>
    %1049 = arith.truncf %1048 : vector<16x256xf32> to vector<16x256xbf16>
    %c96_661 = arith.constant 96 : index
    %c0_662 = arith.constant 0 : index
    %1050 = vector.load %arg16[%c96_661, %c0_662] : memref<144x256xbf16, #tpu.memory_space<vmem>>, vector<16x256xbf16>
    tpu.vector_store %arg16[%c96_661, %c0_662], %1049 {strides = array<i32>} : memref<144x256xbf16, #tpu.memory_space<vmem>>, vector<16x256xbf16>,
    %c240_i32_663 = arith.constant 240 : i32
    %1051 = tpu.dynamic_rotate %1018 by %c240_i32_663 dim 1 : vector<16x256xf32>, i32 -> vector<16x256xf32>
    %1052 = vector.broadcast %6 : vector<1x256xf32> to vector<16x256xf32>
    %1053 = arith.mulf %1051, %1052 : vector<16x256xf32>
    %1054 = arith.truncf %1053 : vector<16x256xf32> to vector<16x256xbf16>
    %c112_664 = arith.constant 112 : index
    %c0_665 = arith.constant 0 : index
    %1055 = vector.load %arg16[%c112_664, %c0_665] : memref<144x256xbf16, #tpu.memory_space<vmem>>, vector<16x256xbf16>
    tpu.vector_store %arg16[%c112_664, %c0_665], %1054 {strides = array<i32>} : memref<144x256xbf16, #tpu.memory_space<vmem>>, vector<16x256xbf16>,
    %c239_i32_666 = arith.constant 239 : i32
    %1056 = tpu.dynamic_rotate %1018 by %c239_i32_666 dim 1 : vector<16x256xf32>, i32 -> vector<16x256xf32>
    %1057 = vector.broadcast %7 : vector<1x256xf32> to vector<16x256xf32>
    %1058 = arith.mulf %1056, %1057 : vector<16x256xf32>
    %1059 = arith.truncf %1058 : vector<16x256xf32> to vector<16x256xbf16>
    %c128_667 = arith.constant 128 : index
    %c0_668 = arith.constant 0 : index
    %1060 = vector.load %arg16[%c128_667, %c0_668] : memref<144x256xbf16, #tpu.memory_space<vmem>>, vector<16x256xbf16>
    tpu.vector_store %arg16[%c128_667, %c0_668], %1059 {strides = array<i32>} : memref<144x256xbf16, #tpu.memory_space<vmem>>, vector<16x256xbf16>,
    %c0_669 = arith.constant 0 : index
    %c0_670 = arith.constant 0 : index
    %1061 = vector.load %arg4[%c0_669, %c0_670] : memref<16x144xbf16, #tpu.memory_space<vmem>>, vector<16x144xbf16>
    %c0_671 = arith.constant 0 : index
    %c0_672 = arith.constant 0 : index
    %1062 = vector.load %arg16[%c0_671, %c0_672] : memref<144x256xbf16, #tpu.memory_space<vmem>>, vector<144x256xbf16>
    %cst_673 = arith.constant dense<0.000000e+00> : vector<16x256xf32>
    %1063 = tpu.matmul %1061, %1062, %cst_673 {dimension_numbers = #tpu.dot_dimension_numbers<[1], [0], [0], [1], [0, 0, 1, 1], [], []>} : vector<16x144xbf16>, vector<144x256xbf16>, vector<16x256xf32> -> vector<16x256xf32>
    %cst_674 = arith.constant 0.000000e+00 : f32
    %1064 = vector.broadcast %cst_674 : f32 to vector<16x256xf32>
    %1065 = arith.maximumf %1063, %1064 : vector<16x256xf32>
    %c17_i32_675 = arith.constant 17 : i32
    %1066 = tpu.dynamic_rotate %1065 by %c17_i32_675 dim 1 : vector<16x256xf32>, i32 -> vector<16x256xf32>
    %1067 = vector.broadcast %0 : vector<1x256xf32> to vector<16x256xf32>
    %1068 = arith.mulf %1066, %1067 : vector<16x256xf32>
    %1069 = arith.truncf %1068 : vector<16x256xf32> to vector<16x256xbf16>
    %c0_676 = arith.constant 0 : index
    %c0_677 = arith.constant 0 : index
    %1070 = vector.load %arg16[%c0_676, %c0_677] : memref<144x256xbf16, #tpu.memory_space<vmem>>, vector<16x256xbf16>
    tpu.vector_store %arg16[%c0_676, %c0_677], %1069 {strides = array<i32>} : memref<144x256xbf16, #tpu.memory_space<vmem>>, vector<16x256xbf16>,
    %c16_i32_678 = arith.constant 16 : i32
    %1071 = tpu.dynamic_rotate %1065 by %c16_i32_678 dim 1 : vector<16x256xf32>, i32 -> vector<16x256xf32>
    %1072 = vector.broadcast %1 : vector<1x256xf32> to vector<16x256xf32>
    %1073 = arith.mulf %1071, %1072 : vector<16x256xf32>
    %1074 = arith.truncf %1073 : vector<16x256xf32> to vector<16x256xbf16>
    %c16_679 = arith.constant 16 : index
    %c0_680 = arith.constant 0 : index
    %1075 = vector.load %arg16[%c16_679, %c0_680] : memref<144x256xbf16, #tpu.memory_space<vmem>>, vector<16x256xbf16>
    tpu.vector_store %arg16[%c16_679, %c0_680], %1074 {strides = array<i32>} : memref<144x256xbf16, #tpu.memory_space<vmem>>, vector<16x256xbf16>,
    %c15_i32_681 = arith.constant 15 : i32
    %1076 = tpu.dynamic_rotate %1065 by %c15_i32_681 dim 1 : vector<16x256xf32>, i32 -> vector<16x256xf32>
    %1077 = vector.broadcast %2 : vector<1x256xf32> to vector<16x256xf32>
    %1078 = arith.mulf %1076, %1077 : vector<16x256xf32>
    %1079 = arith.truncf %1078 : vector<16x256xf32> to vector<16x256xbf16>
    %c32_682 = arith.constant 32 : index
    %c0_683 = arith.constant 0 : index
    %1080 = vector.load %arg16[%c32_682, %c0_683] : memref<144x256xbf16, #tpu.memory_space<vmem>>, vector<16x256xbf16>
    tpu.vector_store %arg16[%c32_682, %c0_683], %1079 {strides = array<i32>} : memref<144x256xbf16, #tpu.memory_space<vmem>>, vector<16x256xbf16>,
    %c1_i32_684 = arith.constant 1 : i32
    %1081 = tpu.dynamic_rotate %1065 by %c1_i32_684 dim 1 : vector<16x256xf32>, i32 -> vector<16x256xf32>
    %1082 = vector.broadcast %3 : vector<1x256xf32> to vector<16x256xf32>
    %1083 = arith.mulf %1081, %1082 : vector<16x256xf32>
    %1084 = arith.truncf %1083 : vector<16x256xf32> to vector<16x256xbf16>
    %c48_685 = arith.constant 48 : index
    %c0_686 = arith.constant 0 : index
    %1085 = vector.load %arg16[%c48_685, %c0_686] : memref<144x256xbf16, #tpu.memory_space<vmem>>, vector<16x256xbf16>
    tpu.vector_store %arg16[%c48_685, %c0_686], %1084 {strides = array<i32>} : memref<144x256xbf16, #tpu.memory_space<vmem>>, vector<16x256xbf16>,
    %1086 = arith.truncf %1065 : vector<16x256xf32> to vector<16x256xbf16>
    %c64_687 = arith.constant 64 : index
    %c0_688 = arith.constant 0 : index
    %1087 = vector.load %arg16[%c64_687, %c0_688] : memref<144x256xbf16, #tpu.memory_space<vmem>>, vector<16x256xbf16>
    tpu.vector_store %arg16[%c64_687, %c0_688], %1086 {strides = array<i32>} : memref<144x256xbf16, #tpu.memory_space<vmem>>, vector<16x256xbf16>,
    %c255_i32_689 = arith.constant 255 : i32
    %1088 = tpu.dynamic_rotate %1065 by %c255_i32_689 dim 1 : vector<16x256xf32>, i32 -> vector<16x256xf32>
    %1089 = vector.broadcast %4 : vector<1x256xf32> to vector<16x256xf32>
    %1090 = arith.mulf %1088, %1089 : vector<16x256xf32>
    %1091 = arith.truncf %1090 : vector<16x256xf32> to vector<16x256xbf16>
    %c80_690 = arith.constant 80 : index
    %c0_691 = arith.constant 0 : index
    %1092 = vector.load %arg16[%c80_690, %c0_691] : memref<144x256xbf16, #tpu.memory_space<vmem>>, vector<16x256xbf16>
    tpu.vector_store %arg16[%c80_690, %c0_691], %1091 {strides = array<i32>} : memref<144x256xbf16, #tpu.memory_space<vmem>>, vector<16x256xbf16>,
    %c241_i32_692 = arith.constant 241 : i32
    %1093 = tpu.dynamic_rotate %1065 by %c241_i32_692 dim 1 : vector<16x256xf32>, i32 -> vector<16x256xf32>
    %1094 = vector.broadcast %5 : vector<1x256xf32> to vector<16x256xf32>
    %1095 = arith.mulf %1093, %1094 : vector<16x256xf32>
    %1096 = arith.truncf %1095 : vector<16x256xf32> to vector<16x256xbf16>
    %c96_693 = arith.constant 96 : index
    %c0_694 = arith.constant 0 : index
    %1097 = vector.load %arg16[%c96_693, %c0_694] : memref<144x256xbf16, #tpu.memory_space<vmem>>, vector<16x256xbf16>
    tpu.vector_store %arg16[%c96_693, %c0_694], %1096 {strides = array<i32>} : memref<144x256xbf16, #tpu.memory_space<vmem>>, vector<16x256xbf16>,
    %c240_i32_695 = arith.constant 240 : i32
    %1098 = tpu.dynamic_rotate %1065 by %c240_i32_695 dim 1 : vector<16x256xf32>, i32 -> vector<16x256xf32>
    %1099 = vector.broadcast %6 : vector<1x256xf32> to vector<16x256xf32>
    %1100 = arith.mulf %1098, %1099 : vector<16x256xf32>
    %1101 = arith.truncf %1100 : vector<16x256xf32> to vector<16x256xbf16>
    %c112_696 = arith.constant 112 : index
    %c0_697 = arith.constant 0 : index
    %1102 = vector.load %arg16[%c112_696, %c0_697] : memref<144x256xbf16, #tpu.memory_space<vmem>>, vector<16x256xbf16>
    tpu.vector_store %arg16[%c112_696, %c0_697], %1101 {strides = array<i32>} : memref<144x256xbf16, #tpu.memory_space<vmem>>, vector<16x256xbf16>,
    %c239_i32_698 = arith.constant 239 : i32
    %1103 = tpu.dynamic_rotate %1065 by %c239_i32_698 dim 1 : vector<16x256xf32>, i32 -> vector<16x256xf32>
    %1104 = vector.broadcast %7 : vector<1x256xf32> to vector<16x256xf32>
    %1105 = arith.mulf %1103, %1104 : vector<16x256xf32>
    %1106 = arith.truncf %1105 : vector<16x256xf32> to vector<16x256xbf16>
    %c128_699 = arith.constant 128 : index
    %c0_700 = arith.constant 0 : index
    %1107 = vector.load %arg16[%c128_699, %c0_700] : memref<144x256xbf16, #tpu.memory_space<vmem>>, vector<16x256xbf16>
    tpu.vector_store %arg16[%c128_699, %c0_700], %1106 {strides = array<i32>} : memref<144x256xbf16, #tpu.memory_space<vmem>>, vector<16x256xbf16>,
    %c0_701 = arith.constant 0 : index
    %c0_702 = arith.constant 0 : index
    %1108 = vector.load %arg5[%c0_701, %c0_702] : memref<1x144xbf16, #tpu.memory_space<vmem>>, vector<1x144xbf16>
    %c0_703 = arith.constant 0 : index
    %c0_704 = arith.constant 0 : index
    %1109 = vector.load %arg16[%c0_703, %c0_704] : memref<144x256xbf16, #tpu.memory_space<vmem>>, vector<144x256xbf16>
    %cst_705 = arith.constant dense<0.000000e+00> : vector<1x256xf32>
    %1110 = tpu.matmul %1108, %1109, %cst_705 {dimension_numbers = #tpu.dot_dimension_numbers<[1], [0], [0], [1], [0, 0, 1, 1], [], []>} : vector<1x144xbf16>, vector<144x256xbf16>, vector<1x256xf32> -> vector<1x256xf32>
    %1111 = arith.negf %1110 : vector<1x256xf32>
    %1112 = math.exp %1111 : vector<1x256xf32>
    %cst_706 = arith.constant 1.000000e+00 : f32
    %1113 = vector.broadcast %cst_706 : f32 to vector<1x256xf32>
    %1114 = arith.addf %1113, %1112 : vector<1x256xf32>
    %1115 = arith.divf %1113, %1114 : vector<1x256xf32>
    %c17_i32_707 = arith.constant 17 : i32
    %1116 = tpu.dynamic_rotate %1115 by %c17_i32_707 dim 1 : vector<1x256xf32>, i32 -> vector<1x256xf32>
    %c0_708 = arith.constant 0 : index
    %c0_709 = arith.constant 0 : index
    %1117 = vector.load %arg15[%c0_708, %c0_709] : memref<144x256xbf16, #tpu.memory_space<vmem>>, vector<8x256xbf16>
    %1118 = arith.extf %1117 : vector<8x256xbf16> to vector<8x256xf32>
    %1119 = vector.broadcast %1116 : vector<1x256xf32> to vector<8x256xf32>
    %1120 = arith.mulf %1118, %1119 : vector<8x256xf32>
    %1121 = arith.truncf %1120 : vector<8x256xf32> to vector<8x256xbf16>
    %c0_710 = arith.constant 0 : index
    %c0_711 = arith.constant 0 : index
    %1122 = vector.load %arg15[%c0_710, %c0_711] : memref<144x256xbf16, #tpu.memory_space<vmem>>, vector<8x256xbf16>
    tpu.vector_store %arg15[%c0_710, %c0_711], %1121 {strides = array<i32>} : memref<144x256xbf16, #tpu.memory_space<vmem>>, vector<8x256xbf16>,
    %c16_i32_712 = arith.constant 16 : i32
    %1123 = tpu.dynamic_rotate %1115 by %c16_i32_712 dim 1 : vector<1x256xf32>, i32 -> vector<1x256xf32>
    %c16_713 = arith.constant 16 : index
    %c0_714 = arith.constant 0 : index
    %1124 = vector.load %arg15[%c16_713, %c0_714] : memref<144x256xbf16, #tpu.memory_space<vmem>>, vector<8x256xbf16>
    %1125 = arith.extf %1124 : vector<8x256xbf16> to vector<8x256xf32>
    %1126 = vector.broadcast %1123 : vector<1x256xf32> to vector<8x256xf32>
    %1127 = arith.mulf %1125, %1126 : vector<8x256xf32>
    %1128 = arith.truncf %1127 : vector<8x256xf32> to vector<8x256xbf16>
    %c16_715 = arith.constant 16 : index
    %c0_716 = arith.constant 0 : index
    %1129 = vector.load %arg15[%c16_715, %c0_716] : memref<144x256xbf16, #tpu.memory_space<vmem>>, vector<8x256xbf16>
    tpu.vector_store %arg15[%c16_715, %c0_716], %1128 {strides = array<i32>} : memref<144x256xbf16, #tpu.memory_space<vmem>>, vector<8x256xbf16>,
    %c15_i32_717 = arith.constant 15 : i32
    %1130 = tpu.dynamic_rotate %1115 by %c15_i32_717 dim 1 : vector<1x256xf32>, i32 -> vector<1x256xf32>
    %c32_718 = arith.constant 32 : index
    %c0_719 = arith.constant 0 : index
    %1131 = vector.load %arg15[%c32_718, %c0_719] : memref<144x256xbf16, #tpu.memory_space<vmem>>, vector<8x256xbf16>
    %1132 = arith.extf %1131 : vector<8x256xbf16> to vector<8x256xf32>
    %1133 = vector.broadcast %1130 : vector<1x256xf32> to vector<8x256xf32>
    %1134 = arith.mulf %1132, %1133 : vector<8x256xf32>
    %1135 = arith.truncf %1134 : vector<8x256xf32> to vector<8x256xbf16>
    %c32_720 = arith.constant 32 : index
    %c0_721 = arith.constant 0 : index
    %1136 = vector.load %arg15[%c32_720, %c0_721] : memref<144x256xbf16, #tpu.memory_space<vmem>>, vector<8x256xbf16>
    tpu.vector_store %arg15[%c32_720, %c0_721], %1135 {strides = array<i32>} : memref<144x256xbf16, #tpu.memory_space<vmem>>, vector<8x256xbf16>,
    %c1_i32_722 = arith.constant 1 : i32
    %1137 = tpu.dynamic_rotate %1115 by %c1_i32_722 dim 1 : vector<1x256xf32>, i32 -> vector<1x256xf32>
    %c48_723 = arith.constant 48 : index
    %c0_724 = arith.constant 0 : index
    %1138 = vector.load %arg15[%c48_723, %c0_724] : memref<144x256xbf16, #tpu.memory_space<vmem>>, vector<8x256xbf16>
    %1139 = arith.extf %1138 : vector<8x256xbf16> to vector<8x256xf32>
    %1140 = vector.broadcast %1137 : vector<1x256xf32> to vector<8x256xf32>
    %1141 = arith.mulf %1139, %1140 : vector<8x256xf32>
    %1142 = arith.truncf %1141 : vector<8x256xf32> to vector<8x256xbf16>
    %c48_725 = arith.constant 48 : index
    %c0_726 = arith.constant 0 : index
    %1143 = vector.load %arg15[%c48_725, %c0_726] : memref<144x256xbf16, #tpu.memory_space<vmem>>, vector<8x256xbf16>
    tpu.vector_store %arg15[%c48_725, %c0_726], %1142 {strides = array<i32>} : memref<144x256xbf16, #tpu.memory_space<vmem>>, vector<8x256xbf16>,
    %c64_727 = arith.constant 64 : index
    %c0_728 = arith.constant 0 : index
    %1144 = vector.load %arg15[%c64_727, %c0_728] : memref<144x256xbf16, #tpu.memory_space<vmem>>, vector<8x256xbf16>
    %1145 = arith.extf %1144 : vector<8x256xbf16> to vector<8x256xf32>
    %1146 = vector.broadcast %1115 : vector<1x256xf32> to vector<8x256xf32>
    %1147 = arith.mulf %1145, %1146 : vector<8x256xf32>
    %1148 = arith.truncf %1147 : vector<8x256xf32> to vector<8x256xbf16>
    %c64_729 = arith.constant 64 : index
    %c0_730 = arith.constant 0 : index
    %1149 = vector.load %arg15[%c64_729, %c0_730] : memref<144x256xbf16, #tpu.memory_space<vmem>>, vector<8x256xbf16>
    tpu.vector_store %arg15[%c64_729, %c0_730], %1148 {strides = array<i32>} : memref<144x256xbf16, #tpu.memory_space<vmem>>, vector<8x256xbf16>,
    %c255_i32_731 = arith.constant 255 : i32
    %1150 = tpu.dynamic_rotate %1115 by %c255_i32_731 dim 1 : vector<1x256xf32>, i32 -> vector<1x256xf32>
    %c80_732 = arith.constant 80 : index
    %c0_733 = arith.constant 0 : index
    %1151 = vector.load %arg15[%c80_732, %c0_733] : memref<144x256xbf16, #tpu.memory_space<vmem>>, vector<8x256xbf16>
    %1152 = arith.extf %1151 : vector<8x256xbf16> to vector<8x256xf32>
    %1153 = vector.broadcast %1150 : vector<1x256xf32> to vector<8x256xf32>
    %1154 = arith.mulf %1152, %1153 : vector<8x256xf32>
    %1155 = arith.truncf %1154 : vector<8x256xf32> to vector<8x256xbf16>
    %c80_734 = arith.constant 80 : index
    %c0_735 = arith.constant 0 : index
    %1156 = vector.load %arg15[%c80_734, %c0_735] : memref<144x256xbf16, #tpu.memory_space<vmem>>, vector<8x256xbf16>
    tpu.vector_store %arg15[%c80_734, %c0_735], %1155 {strides = array<i32>} : memref<144x256xbf16, #tpu.memory_space<vmem>>, vector<8x256xbf16>,
    %c241_i32_736 = arith.constant 241 : i32
    %1157 = tpu.dynamic_rotate %1115 by %c241_i32_736 dim 1 : vector<1x256xf32>, i32 -> vector<1x256xf32>
    %c96_737 = arith.constant 96 : index
    %c0_738 = arith.constant 0 : index
    %1158 = vector.load %arg15[%c96_737, %c0_738] : memref<144x256xbf16, #tpu.memory_space<vmem>>, vector<8x256xbf16>
    %1159 = arith.extf %1158 : vector<8x256xbf16> to vector<8x256xf32>
    %1160 = vector.broadcast %1157 : vector<1x256xf32> to vector<8x256xf32>
    %1161 = arith.mulf %1159, %1160 : vector<8x256xf32>
    %1162 = arith.truncf %1161 : vector<8x256xf32> to vector<8x256xbf16>
    %c96_739 = arith.constant 96 : index
    %c0_740 = arith.constant 0 : index
    %1163 = vector.load %arg15[%c96_739, %c0_740] : memref<144x256xbf16, #tpu.memory_space<vmem>>, vector<8x256xbf16>
    tpu.vector_store %arg15[%c96_739, %c0_740], %1162 {strides = array<i32>} : memref<144x256xbf16, #tpu.memory_space<vmem>>, vector<8x256xbf16>,
    %c240_i32_741 = arith.constant 240 : i32
    %1164 = tpu.dynamic_rotate %1115 by %c240_i32_741 dim 1 : vector<1x256xf32>, i32 -> vector<1x256xf32>
    %c112_742 = arith.constant 112 : index
    %c0_743 = arith.constant 0 : index
    %1165 = vector.load %arg15[%c112_742, %c0_743] : memref<144x256xbf16, #tpu.memory_space<vmem>>, vector<8x256xbf16>
    %1166 = arith.extf %1165 : vector<8x256xbf16> to vector<8x256xf32>
    %1167 = vector.broadcast %1164 : vector<1x256xf32> to vector<8x256xf32>
    %1168 = arith.mulf %1166, %1167 : vector<8x256xf32>
    %1169 = arith.truncf %1168 : vector<8x256xf32> to vector<8x256xbf16>
    %c112_744 = arith.constant 112 : index
    %c0_745 = arith.constant 0 : index
    %1170 = vector.load %arg15[%c112_744, %c0_745] : memref<144x256xbf16, #tpu.memory_space<vmem>>, vector<8x256xbf16>
    tpu.vector_store %arg15[%c112_744, %c0_745], %1169 {strides = array<i32>} : memref<144x256xbf16, #tpu.memory_space<vmem>>, vector<8x256xbf16>,
    %c239_i32_746 = arith.constant 239 : i32
    %1171 = tpu.dynamic_rotate %1115 by %c239_i32_746 dim 1 : vector<1x256xf32>, i32 -> vector<1x256xf32>
    %c128_747 = arith.constant 128 : index
    %c0_748 = arith.constant 0 : index
    %1172 = vector.load %arg15[%c128_747, %c0_748] : memref<144x256xbf16, #tpu.memory_space<vmem>>, vector<8x256xbf16>
    %1173 = arith.extf %1172 : vector<8x256xbf16> to vector<8x256xf32>
    %1174 = vector.broadcast %1171 : vector<1x256xf32> to vector<8x256xf32>
    %1175 = arith.mulf %1173, %1174 : vector<8x256xf32>
    %1176 = arith.truncf %1175 : vector<8x256xf32> to vector<8x256xbf16>
    %c128_749 = arith.constant 128 : index
    %c0_750 = arith.constant 0 : index
    %1177 = vector.load %arg15[%c128_749, %c0_750] : memref<144x256xbf16, #tpu.memory_space<vmem>>, vector<8x256xbf16>
    tpu.vector_store %arg15[%c128_749, %c0_750], %1176 {strides = array<i32>} : memref<144x256xbf16, #tpu.memory_space<vmem>>, vector<8x256xbf16>,
    %c0_751 = arith.constant 0 : index
    %c0_752 = arith.constant 0 : index
    %1178 = vector.load %arg6[%c0_751, %c0_752] : memref<32x144xbf16, #tpu.memory_space<vmem>>, vector<32x144xbf16>
    %c0_753 = arith.constant 0 : index
    %c0_754 = arith.constant 0 : index
    %1179 = vector.load %arg15[%c0_753, %c0_754] : memref<144x256xbf16, #tpu.memory_space<vmem>>, vector<144x256xbf16>
    %cst_755 = arith.constant dense<0.000000e+00> : vector<32x256xf32>
    %1180 = tpu.matmul %1178, %1179, %cst_755 {dimension_numbers = #tpu.dot_dimension_numbers<[1], [0], [0], [1], [0, 0, 1, 1], [], []>} : vector<32x144xbf16>, vector<144x256xbf16>, vector<32x256xf32> -> vector<32x256xf32>
    %c0_756 = arith.constant 0 : index
    %c0_757 = arith.constant 0 : index
    %1181 = vector.load %arg7[%c0_756, %c0_757] : memref<32x1xf32, #tpu.memory_space<vmem>>, vector<32x1xf32>
    %1182 = vector.broadcast %1181 : vector<32x1xf32> to vector<32x256xf32>
    %1183 = arith.addf %1180, %1182 : vector<32x256xf32>
    %c0_758 = arith.constant 0 : index
    %c0_759 = arith.constant 0 : index
    %1184 = vector.load %arg12[%c0_758, %c0_759] : memref<8x256xf32, #tpu.memory_space<vmem>>, vector<8x256xf32>
    %1185 = vector.extract_strided_slice %1183 {offsets = [0, 0], sizes = [8, 256], strides = [1, 1]} : vector<32x256xf32> to vector<8x256xf32>
    %1186 = arith.negf %1185 : vector<8x256xf32>
    %1187 = math.exp %1186 : vector<8x256xf32>
    %cst_760 = arith.constant 1.000000e+00 : f32
    %1188 = vector.broadcast %cst_760 : f32 to vector<8x256xf32>
    %1189 = arith.addf %1188, %1187 : vector<8x256xf32>
    %1190 = arith.divf %1188, %1189 : vector<8x256xf32>
    %1191 = vector.extract_strided_slice %1183 {offsets = [8, 0], sizes = [8, 256], strides = [1, 1]} : vector<32x256xf32> to vector<8x256xf32>
    %1192 = arith.negf %1191 : vector<8x256xf32>
    %1193 = math.exp %1192 : vector<8x256xf32>
    %cst_761 = arith.constant 1.000000e+00 : f32
    %1194 = vector.broadcast %cst_761 : f32 to vector<8x256xf32>
    %1195 = arith.addf %1194, %1193 : vector<8x256xf32>
    %1196 = arith.divf %1194, %1195 : vector<8x256xf32>
    %1197 = arith.mulf %1196, %1184 : vector<8x256xf32>
    %1198 = vector.extract_strided_slice %1183 {offsets = [16, 0], sizes = [8, 256], strides = [1, 1]} : vector<32x256xf32> to vector<8x256xf32>
    %1199 = math.tanh %1198 : vector<8x256xf32>
    %1200 = arith.mulf %1190, %1199 : vector<8x256xf32>
    %1201 = arith.addf %1197, %1200 : vector<8x256xf32>
    %1202 = vector.extract_strided_slice %1183 {offsets = [24, 0], sizes = [8, 256], strides = [1, 1]} : vector<32x256xf32> to vector<8x256xf32>
    %1203 = arith.negf %1202 : vector<8x256xf32>
    %1204 = math.exp %1203 : vector<8x256xf32>
    %cst_762 = arith.constant 1.000000e+00 : f32
    %1205 = vector.broadcast %cst_762 : f32 to vector<8x256xf32>
    %1206 = arith.addf %1205, %1204 : vector<8x256xf32>
    %1207 = arith.divf %1205, %1206 : vector<8x256xf32>
    %1208 = math.tanh %1201 : vector<8x256xf32>
    %1209 = arith.mulf %1207, %1208 : vector<8x256xf32>
    %c0_763 = arith.constant 0 : index
    %c0_764 = arith.constant 0 : index
    %1210 = vector.load %arg12[%c0_763, %c0_764] : memref<8x256xf32, #tpu.memory_space<vmem>>, vector<8x256xf32>
    tpu.vector_store %arg12[%c0_763, %c0_764], %1201 {strides = array<i32>} : memref<8x256xf32, #tpu.memory_space<vmem>>, vector<8x256xf32>,
    %c8_765 = arith.constant 8 : index
    %c0_766 = arith.constant 0 : index
    %1211 = vector.load %arg11[%c8_765, %c0_766] : memref<16x256xf32, #tpu.memory_space<vmem>>, vector<8x256xf32>
    tpu.vector_store %arg11[%c8_765, %c0_766], %1209 {strides = array<i32>} : memref<16x256xf32, #tpu.memory_space<vmem>>, vector<8x256xf32>,
    %c0_767 = arith.constant 0 : index
    %c0_768 = arith.constant 0 : index
    %1212 = vector.load %arg13[%c0_767, %c0_768] : memref<16x256xf32, #tpu.memory_space<vmem>>, vector<8x256xf32>
    tpu.vector_store %arg13[%c0_767, %c0_768], %1209 {strides = array<i32>} : memref<16x256xf32, #tpu.memory_space<vmem>>, vector<8x256xf32>,
    %c0_769 = arith.constant 0 : index
    %c0_770 = arith.constant 0 : index
    %1213 = vector.load %arg13[%c0_769, %c0_770] : memref<16x256xf32, #tpu.memory_space<vmem>>, vector<16x256xf32>
    %c17_i32_771 = arith.constant 17 : i32
    %1214 = tpu.dynamic_rotate %1213 by %c17_i32_771 dim 1 : vector<16x256xf32>, i32 -> vector<16x256xf32>
    %1215 = vector.broadcast %0 : vector<1x256xf32> to vector<16x256xf32>
    %1216 = arith.mulf %1214, %1215 : vector<16x256xf32>
    %1217 = arith.truncf %1216 : vector<16x256xf32> to vector<16x256xbf16>
    %c0_772 = arith.constant 0 : index
    %c0_773 = arith.constant 0 : index
    %1218 = vector.load %arg16[%c0_772, %c0_773] : memref<144x256xbf16, #tpu.memory_space<vmem>>, vector<16x256xbf16>
    tpu.vector_store %arg16[%c0_772, %c0_773], %1217 {strides = array<i32>} : memref<144x256xbf16, #tpu.memory_space<vmem>>, vector<16x256xbf16>,
    %c16_i32_774 = arith.constant 16 : i32
    %1219 = tpu.dynamic_rotate %1213 by %c16_i32_774 dim 1 : vector<16x256xf32>, i32 -> vector<16x256xf32>
    %1220 = vector.broadcast %1 : vector<1x256xf32> to vector<16x256xf32>
    %1221 = arith.mulf %1219, %1220 : vector<16x256xf32>
    %1222 = arith.truncf %1221 : vector<16x256xf32> to vector<16x256xbf16>
    %c16_775 = arith.constant 16 : index
    %c0_776 = arith.constant 0 : index
    %1223 = vector.load %arg16[%c16_775, %c0_776] : memref<144x256xbf16, #tpu.memory_space<vmem>>, vector<16x256xbf16>
    tpu.vector_store %arg16[%c16_775, %c0_776], %1222 {strides = array<i32>} : memref<144x256xbf16, #tpu.memory_space<vmem>>, vector<16x256xbf16>,
    %c15_i32_777 = arith.constant 15 : i32
    %1224 = tpu.dynamic_rotate %1213 by %c15_i32_777 dim 1 : vector<16x256xf32>, i32 -> vector<16x256xf32>
    %1225 = vector.broadcast %2 : vector<1x256xf32> to vector<16x256xf32>
    %1226 = arith.mulf %1224, %1225 : vector<16x256xf32>
    %1227 = arith.truncf %1226 : vector<16x256xf32> to vector<16x256xbf16>
    %c32_778 = arith.constant 32 : index
    %c0_779 = arith.constant 0 : index
    %1228 = vector.load %arg16[%c32_778, %c0_779] : memref<144x256xbf16, #tpu.memory_space<vmem>>, vector<16x256xbf16>
    tpu.vector_store %arg16[%c32_778, %c0_779], %1227 {strides = array<i32>} : memref<144x256xbf16, #tpu.memory_space<vmem>>, vector<16x256xbf16>,
    %c1_i32_780 = arith.constant 1 : i32
    %1229 = tpu.dynamic_rotate %1213 by %c1_i32_780 dim 1 : vector<16x256xf32>, i32 -> vector<16x256xf32>
    %1230 = vector.broadcast %3 : vector<1x256xf32> to vector<16x256xf32>
    %1231 = arith.mulf %1229, %1230 : vector<16x256xf32>
    %1232 = arith.truncf %1231 : vector<16x256xf32> to vector<16x256xbf16>
    %c48_781 = arith.constant 48 : index
    %c0_782 = arith.constant 0 : index
    %1233 = vector.load %arg16[%c48_781, %c0_782] : memref<144x256xbf16, #tpu.memory_space<vmem>>, vector<16x256xbf16>
    tpu.vector_store %arg16[%c48_781, %c0_782], %1232 {strides = array<i32>} : memref<144x256xbf16, #tpu.memory_space<vmem>>, vector<16x256xbf16>,
    %1234 = arith.truncf %1213 : vector<16x256xf32> to vector<16x256xbf16>
    %c64_783 = arith.constant 64 : index
    %c0_784 = arith.constant 0 : index
    %1235 = vector.load %arg16[%c64_783, %c0_784] : memref<144x256xbf16, #tpu.memory_space<vmem>>, vector<16x256xbf16>
    tpu.vector_store %arg16[%c64_783, %c0_784], %1234 {strides = array<i32>} : memref<144x256xbf16, #tpu.memory_space<vmem>>, vector<16x256xbf16>,
    %c255_i32_785 = arith.constant 255 : i32
    %1236 = tpu.dynamic_rotate %1213 by %c255_i32_785 dim 1 : vector<16x256xf32>, i32 -> vector<16x256xf32>
    %1237 = vector.broadcast %4 : vector<1x256xf32> to vector<16x256xf32>
    %1238 = arith.mulf %1236, %1237 : vector<16x256xf32>
    %1239 = arith.truncf %1238 : vector<16x256xf32> to vector<16x256xbf16>
    %c80_786 = arith.constant 80 : index
    %c0_787 = arith.constant 0 : index
    %1240 = vector.load %arg16[%c80_786, %c0_787] : memref<144x256xbf16, #tpu.memory_space<vmem>>, vector<16x256xbf16>
    tpu.vector_store %arg16[%c80_786, %c0_787], %1239 {strides = array<i32>} : memref<144x256xbf16, #tpu.memory_space<vmem>>, vector<16x256xbf16>,
    %c241_i32_788 = arith.constant 241 : i32
    %1241 = tpu.dynamic_rotate %1213 by %c241_i32_788 dim 1 : vector<16x256xf32>, i32 -> vector<16x256xf32>
    %1242 = vector.broadcast %5 : vector<1x256xf32> to vector<16x256xf32>
    %1243 = arith.mulf %1241, %1242 : vector<16x256xf32>
    %1244 = arith.truncf %1243 : vector<16x256xf32> to vector<16x256xbf16>
    %c96_789 = arith.constant 96 : index
    %c0_790 = arith.constant 0 : index
    %1245 = vector.load %arg16[%c96_789, %c0_790] : memref<144x256xbf16, #tpu.memory_space<vmem>>, vector<16x256xbf16>
    tpu.vector_store %arg16[%c96_789, %c0_790], %1244 {strides = array<i32>} : memref<144x256xbf16, #tpu.memory_space<vmem>>, vector<16x256xbf16>,
    %c240_i32_791 = arith.constant 240 : i32
    %1246 = tpu.dynamic_rotate %1213 by %c240_i32_791 dim 1 : vector<16x256xf32>, i32 -> vector<16x256xf32>
    %1247 = vector.broadcast %6 : vector<1x256xf32> to vector<16x256xf32>
    %1248 = arith.mulf %1246, %1247 : vector<16x256xf32>
    %1249 = arith.truncf %1248 : vector<16x256xf32> to vector<16x256xbf16>
    %c112_792 = arith.constant 112 : index
    %c0_793 = arith.constant 0 : index
    %1250 = vector.load %arg16[%c112_792, %c0_793] : memref<144x256xbf16, #tpu.memory_space<vmem>>, vector<16x256xbf16>
    tpu.vector_store %arg16[%c112_792, %c0_793], %1249 {strides = array<i32>} : memref<144x256xbf16, #tpu.memory_space<vmem>>, vector<16x256xbf16>,
    %c239_i32_794 = arith.constant 239 : i32
    %1251 = tpu.dynamic_rotate %1213 by %c239_i32_794 dim 1 : vector<16x256xf32>, i32 -> vector<16x256xf32>
    %1252 = vector.broadcast %7 : vector<1x256xf32> to vector<16x256xf32>
    %1253 = arith.mulf %1251, %1252 : vector<16x256xf32>
    %1254 = arith.truncf %1253 : vector<16x256xf32> to vector<16x256xbf16>
    %c128_795 = arith.constant 128 : index
    %c0_796 = arith.constant 0 : index
    %1255 = vector.load %arg16[%c128_795, %c0_796] : memref<144x256xbf16, #tpu.memory_space<vmem>>, vector<16x256xbf16>
    tpu.vector_store %arg16[%c128_795, %c0_796], %1254 {strides = array<i32>} : memref<144x256xbf16, #tpu.memory_space<vmem>>, vector<16x256xbf16>,
    %c0_797 = arith.constant 0 : index
    %c0_798 = arith.constant 0 : index
    %1256 = vector.load %arg8[%c0_797, %c0_798] : memref<32x144xbf16, #tpu.memory_space<vmem>>, vector<32x144xbf16>
    %c0_799 = arith.constant 0 : index
    %c0_800 = arith.constant 0 : index
    %1257 = vector.load %arg16[%c0_799, %c0_800] : memref<144x256xbf16, #tpu.memory_space<vmem>>, vector<144x256xbf16>
    %cst_801 = arith.constant dense<0.000000e+00> : vector<32x256xf32>
    %1258 = tpu.matmul %1256, %1257, %cst_801 {dimension_numbers = #tpu.dot_dimension_numbers<[1], [0], [0], [1], [0, 0, 1, 1], [], []>} : vector<32x144xbf16>, vector<144x256xbf16>, vector<32x256xf32> -> vector<32x256xf32>
    %c0_802 = arith.constant 0 : index
    %c0_803 = arith.constant 0 : index
    %1259 = vector.load %arg9[%c0_802, %c0_803] : memref<32x1xf32, #tpu.memory_space<vmem>>, vector<32x1xf32>
    %1260 = vector.broadcast %1259 : vector<32x1xf32> to vector<32x256xf32>
    %1261 = arith.addf %1258, %1260 : vector<32x256xf32>
    %c0_804 = arith.constant 0 : index
    %c0_805 = arith.constant 0 : index
    %1262 = vector.load %arg14[%c0_804, %c0_805] : memref<8x256xf32, #tpu.memory_space<vmem>>, vector<8x256xf32>
    %1263 = vector.extract_strided_slice %1261 {offsets = [0, 0], sizes = [8, 256], strides = [1, 1]} : vector<32x256xf32> to vector<8x256xf32>
    %1264 = arith.negf %1263 : vector<8x256xf32>
    %1265 = math.exp %1264 : vector<8x256xf32>
    %cst_806 = arith.constant 1.000000e+00 : f32
    %1266 = vector.broadcast %cst_806 : f32 to vector<8x256xf32>
    %1267 = arith.addf %1266, %1265 : vector<8x256xf32>
    %1268 = arith.divf %1266, %1267 : vector<8x256xf32>
    %1269 = vector.extract_strided_slice %1261 {offsets = [8, 0], sizes = [8, 256], strides = [1, 1]} : vector<32x256xf32> to vector<8x256xf32>
    %1270 = arith.negf %1269 : vector<8x256xf32>
    %1271 = math.exp %1270 : vector<8x256xf32>
    %cst_807 = arith.constant 1.000000e+00 : f32
    %1272 = vector.broadcast %cst_807 : f32 to vector<8x256xf32>
    %1273 = arith.addf %1272, %1271 : vector<8x256xf32>
    %1274 = arith.divf %1272, %1273 : vector<8x256xf32>
    %1275 = arith.mulf %1274, %1262 : vector<8x256xf32>
    %1276 = vector.extract_strided_slice %1261 {offsets = [16, 0], sizes = [8, 256], strides = [1, 1]} : vector<32x256xf32> to vector<8x256xf32>
    %1277 = math.tanh %1276 : vector<8x256xf32>
    %1278 = arith.mulf %1268, %1277 : vector<8x256xf32>
    %1279 = arith.addf %1275, %1278 : vector<8x256xf32>
    %1280 = vector.extract_strided_slice %1261 {offsets = [24, 0], sizes = [8, 256], strides = [1, 1]} : vector<32x256xf32> to vector<8x256xf32>
    %1281 = arith.negf %1280 : vector<8x256xf32>
    %1282 = math.exp %1281 : vector<8x256xf32>
    %cst_808 = arith.constant 1.000000e+00 : f32
    %1283 = vector.broadcast %cst_808 : f32 to vector<8x256xf32>
    %1284 = arith.addf %1283, %1282 : vector<8x256xf32>
    %1285 = arith.divf %1283, %1284 : vector<8x256xf32>
    %1286 = math.tanh %1279 : vector<8x256xf32>
    %1287 = arith.mulf %1285, %1286 : vector<8x256xf32>
    %c0_809 = arith.constant 0 : index
    %c0_810 = arith.constant 0 : index
    %1288 = vector.load %arg14[%c0_809, %c0_810] : memref<8x256xf32, #tpu.memory_space<vmem>>, vector<8x256xf32>
    tpu.vector_store %arg14[%c0_809, %c0_810], %1279 {strides = array<i32>} : memref<8x256xf32, #tpu.memory_space<vmem>>, vector<8x256xf32>,
    %c8_811 = arith.constant 8 : index
    %c0_812 = arith.constant 0 : index
    %1289 = vector.load %arg13[%c8_811, %c0_812] : memref<16x256xf32, #tpu.memory_space<vmem>>, vector<8x256xf32>
    tpu.vector_store %arg13[%c8_811, %c0_812], %1287 {strides = array<i32>} : memref<16x256xf32, #tpu.memory_space<vmem>>, vector<8x256xf32>,
    %c0_813 = arith.constant 0 : index
    %c0_814 = arith.constant 0 : index
    %c0_815 = arith.constant 0 : index
    %c0_816 = arith.constant 0 : index
    %1290 = vector.load %arg10[%c0_813, %c0_814, %c0_815, %c0_816] : memref<1x1x8x256xf32, #tpu.memory_space<vmem>>, vector<1x1x8x256xf32>
    %1291 = vector.shape_cast %1290 : vector<1x1x8x256xf32> to vector<8x256xf32>
    %1292 = vector.shape_cast %1287 : vector<8x256xf32> to vector<1x1x8x256xf32>
    tpu.vector_store %arg10[%c0_813, %c0_814, %c0_815, %c0_816], %1292 {strides = array<i32>} : memref<1x1x8x256xf32, #tpu.memory_space<vmem>>, vector<1x1x8x256xf32>,
    return
  }
  func.func @transform_0(%arg0: i32) -> (i32, i32, i32) {
    %c0_i32 = arith.constant 0 : i32
    %c0_i32_0 = arith.constant 0 : i32
    %c0_i32_1 = arith.constant 0 : i32
    return %arg0, %c0_i32, %c0_i32_0 : i32, i32, i32
  }
  func.func @transform_1(%arg0: i32) -> (i32, i32) {
    %c0_i32 = arith.constant 0 : i32
    %c0_i32_0 = arith.constant 0 : i32
    %c0_i32_1 = arith.constant 0 : i32
    return %c0_i32, %c0_i32_0 : i32, i32
  }
  func.func @transform_2(%arg0: i32) -> (i32, i32) {
    %c0_i32 = arith.constant 0 : i32
    %c0_i32_0 = arith.constant 0 : i32
    %c0_i32_1 = arith.constant 0 : i32
    return %c0_i32, %c0_i32_0 : i32, i32
  }
  func.func @transform_3(%arg0: i32) -> (i32, i32) {
    %c0_i32 = arith.constant 0 : i32
    %c0_i32_0 = arith.constant 0 : i32
    %c0_i32_1 = arith.constant 0 : i32
    return %c0_i32, %c0_i32_0 : i32, i32
  }
  func.func @transform_4(%arg0: i32) -> (i32, i32) {
    %c0_i32 = arith.constant 0 : i32
    %c0_i32_0 = arith.constant 0 : i32
    %c0_i32_1 = arith.constant 0 : i32
    return %c0_i32, %c0_i32_0 : i32, i32
  }
  func.func @transform_5(%arg0: i32) -> (i32, i32) {
    %c0_i32 = arith.constant 0 : i32
    %c0_i32_0 = arith.constant 0 : i32
    %c0_i32_1 = arith.constant 0 : i32
    return %c0_i32, %c0_i32_0 : i32, i32
  }
  func.func @transform_6(%arg0: i32) -> (i32, i32) {
    %c0_i32 = arith.constant 0 : i32
    %c0_i32_0 = arith.constant 0 : i32
    %c0_i32_1 = arith.constant 0 : i32
    return %c0_i32, %c0_i32_0 : i32, i32
  }
  func.func @transform_7(%arg0: i32) -> (i32, i32) {
    %c0_i32 = arith.constant 0 : i32
    %c0_i32_0 = arith.constant 0 : i32
    %c0_i32_1 = arith.constant 0 : i32
    return %c0_i32, %c0_i32_0 : i32, i32
  }
  func.func @transform_8(%arg0: i32) -> (i32, i32) {
    %c0_i32 = arith.constant 0 : i32
    %c0_i32_0 = arith.constant 0 : i32
    %c0_i32_1 = arith.constant 0 : i32
    return %c0_i32, %c0_i32_0 : i32, i32
  }
  func.func @transform_9(%arg0: i32) -> (i32, i32, i32, i32) {
    %c0_i32 = arith.constant 0 : i32
    %c0_i32_0 = arith.constant 0 : i32
    %c0_i32_1 = arith.constant 0 : i32
    %c0_i32_2 = arith.constant 0 : i32
    return %arg0, %c0_i32, %c0_i32_0, %c0_i32_1 : i32, i32, i32, i32
  }
}

</mosaic_0001>

<llo_original>
// kernel: convlstm_forward.1
$region0: #{convlstm_forward.1}
  #allocation0 [shape = 'u32[]', space=smem, size = 0x4, offset = 0x4, fixed_abs, tag = 'smem constant byte address 0x4 - core index']
  #allocation1 [shape = 'u32[144,128]{1,0:T(1,128)}', space=vmem, size = 0x12000, scoped, tag = 'internal scratch']
  #allocation2 [shape = 'f32[16,256]{1,0:T(8,128)}', space=vmem, size = 0x4000, scoped, tag = 'scratch operand']
  #allocation3 [shape = 'f32[8,256]{1,0:T(8,128)}', space=vmem, size = 0x2000, scoped, tag = 'scratch operand']
  #allocation4 [shape = 'f32[16,256]{1,0:T(8,128)}', space=vmem, size = 0x4000, scoped, tag = 'scratch operand']
  #allocation5 [shape = 'f32[8,256]{1,0:T(8,128)}', space=vmem, size = 0x2000, scoped, tag = 'scratch operand']
  #allocation6 [shape = 'bf16[144,256]{1,0:T(16,128)(2,1)}', space=vmem, size = 0x12000, scoped, tag = 'scratch operand']
  #allocation7 [shape = 'bf16[144,256]{1,0:T(16,128)(2,1)}', space=vmem, size = 0x12000, scoped, tag = 'scratch operand']
  %s0 = inlined_call_operand.vmem [shape: f32[2,8,256], index: 0, kind: input, shape index: {}]
  %s1 = inlined_call_operand.vmem [shape: f32[9,256], index: 1, kind: input, shape index: {}]
  %s2 = inlined_call_operand.vmem [shape: bf16[16,144], index: 2, kind: input, shape index: {}]
  %s3 = inlined_call_operand.vmem [shape: bf16[16,144], index: 3, kind: input, shape index: {}]
  %s4 = inlined_call_operand.vmem [shape: bf16[1,144], index: 4, kind: input, shape index: {}]
  %s5 = inlined_call_operand.vmem [shape: bf16[32,144], index: 5, kind: input, shape index: {}]
  %s6 = inlined_call_operand.vmem [shape: f32[32,1], index: 6, kind: input, shape index: {}]
  %s7 = inlined_call_operand.vmem [shape: bf16[32,144], index: 7, kind: input, shape index: {}]
  %s8 = inlined_call_operand.vmem [shape: f32[32,1], index: 8, kind: input, shape index: {}]
  %s9 = inlined_call_operand.vmem [shape: f32[2,1,8,256], index: 9, kind: output, shape index: {}]
  %s10 = sld [smem:[#allocation0]]
  $region73: #{convlstm_forward.1} parent=0
    _
  %s12 = ssub.s32 1, %s10
  %s13 = scalar_select 0, %s12, %s10
  loop: start=0, step=1, limit=4
  $region2: #{convlstm_forward.1} parent=0 // loop_pre_header
    _
  $region3: #{convlstm_forward.1} parent=0 // loop_header
    %s15 = sphi 0, %s19
    %p16 = scmp.ge.s32.totalorder %s15, 4
    %s25 = sphi 0, %s27
    %s28 = sphi 0, %s25
    %s29 = sphi 0, %s28
    %s45 = sphi 0, %s29
    %s49 = sphi 0, %s49
    %s51 = sphi 0, %s49
    %s52 = sphi 0, %s51
    %s66 = sphi 0, %s52
    %s70 = sphi 0, %s70
    %s72 = sphi 0, %s70
    %s73 = sphi 0, %s72
    %s87 = sphi 0, %s73
    %s91 = sphi 0, %s91
    %s93 = sphi 0, %s91
    %s94 = sphi 0, %s93
    %s108 = sphi 0, %s94
    %s112 = sphi 0, %s112
    %s114 = sphi 0, %s112
    %s115 = sphi 0, %s114
    %s129 = sphi 0, %s115
    %s133 = sphi 0, %s133
    %s135 = sphi 0, %s133
    %s136 = sphi 0, %s135
    %s150 = sphi 0, %s136
    %s154 = sphi 0, %s154
    %s156 = sphi 0, %s154
    %s157 = sphi 0, %s156
    %s171 = sphi 0, %s157
    %s175 = sphi 0, %s175
    %s177 = sphi 0, %s175
    %s178 = sphi 0, %s177
    %s192 = sphi 0, %s178
    %s196 = sphi 0, %s196
    %s198 = sphi 0, %s196
    %s199 = sphi 0, %s198
    %s213 = sphi 0, %s199
    %s219 = sphi 0, %s221
    %s222 = sphi 0, %s219
    %s223 = sphi 0, %s222
    %s239 = sphi 0, %s223
  $region4: #{convlstm_forward.1} parent=0 // loop_header_branch
    %18 = sbr.rel (%p16) target = $region8
  $region5: #{convlstm_forward.1} parent=0 // loop_body
    %s20 = ssub.s32 %s15, 1
    %s21 = ssub.s32 %s15, 2
    %s22 = sadd.s32 %s15, 1
    %s23 = ssub.s32 %s15, %s22
    %p24 = scmp.eq.s32.totalorder %s23, 0
    %s26 = sadd.s32 %s25, 1
    %s27 = scalar_select %p24, %s25, %s26
    %p30 = pneg %p24
    %p31 = scmp.eq.s32.totalorder %s15, 1
    %p32 = por %p30, %p31
    %p33 = scmp.ne.s32.totalorder %s25, %s28
    %p34 = scmp.eq.s32.totalorder %s15, 0
    %p35 = por %p33, %p34
    %p36 = scmp.ne.s32.totalorder %s25, %s28
    %p37 = scmp.eq.s32.totalorder %s20, 1
    %p38 = por %p36, %p37
    %p39 = scmp.ne.s32.totalorder %s28, %s29
    %p40 = scmp.eq.s32.totalorder %s20, 0
    %p41 = por %p39, %p40
    %p42 = scmp.ne.s32.totalorder %s28, %s29
    %p43 = scmp.eq.s32.totalorder %s21, 1
    %p44 = por %p42, %p43
    %p46 = scmp.ne.s32.totalorder %s29, %s45
    %p47 = scmp.eq.s32.totalorder %s21, 0
    %p48 = por %p46, %p47
    %s50 = sadd.s32 %s49, 1
    %p53 = scmp.eq.s32.totalorder %s15, 1
    %p54 = scmp.ne.s32.totalorder %s49, %s51
    %p55 = scmp.eq.s32.totalorder %s15, 0
    %p56 = por %p54, %p55
    %p57 = scmp.ne.s32.totalorder %s49, %s51
    %p58 = scmp.eq.s32.totalorder %s20, 1
    %p59 = por %p57, %p58
    %p60 = scmp.ne.s32.totalorder %s51, %s52
    %p61 = scmp.eq.s32.totalorder %s20, 0
    %p62 = por %p60, %p61
    %p63 = scmp.ne.s32.totalorder %s51, %s52
    %p64 = scmp.eq.s32.totalorder %s21, 1
    %p65 = por %p63, %p64
    %p67 = scmp.ne.s32.totalorder %s52, %s66
    %p68 = scmp.eq.s32.totalorder %s21, 0
    %p69 = por %p67, %p68
    %s71 = sadd.s32 %s70, 1
    %p74 = scmp.eq.s32.totalorder %s15, 1
    %p75 = scmp.ne.s32.totalorder %s70, %s72
    %p76 = scmp.eq.s32.totalorder %s15, 0
    %p77 = por %p75, %p76
    %p78 = scmp.ne.s32.totalorder %s70, %s72
    %p79 = scmp.eq.s32.totalorder %s20, 1
    %p80 = por %p78, %p79
    %p81 = scmp.ne.s32.totalorder %s72, %s73
    %p82 = scmp.eq.s32.totalorder %s20, 0
    %p83 = por %p81, %p82
    %p84 = scmp.ne.s32.totalorder %s72, %s73
    %p85 = scmp.eq.s32.totalorder %s21, 1
    %p86 = por %p84, %p85
    %p88 = scmp.ne.s32.totalorder %s73, %s87
    %p89 = scmp.eq.s32.totalorder %s21, 0
    %p90 = por %p88, %p89
    %s92 = sadd.s32 %s91, 1
    %p95 = scmp.eq.s32.totalorder %s15, 1
    %p96 = scmp.ne.s32.totalorder %s91, %s93
    %p97 = scmp.eq.s32.totalorder %s15, 0
    %p98 = por %p96, %p97
    %p99 = scmp.ne.s32.totalorder %s91, %s93
    %p100 = scmp.eq.s32.totalorder %s20, 1
    %p101 = por %p99, %p100
    %p102 = scmp.ne.s32.totalorder %s93, %s94
    %p103 = scmp.eq.s32.totalorder %s20, 0
    %p104 = por %p102, %p103
    %p105 = scmp.ne.s32.totalorder %s93, %s94
    %p106 = scmp.eq.s32.totalorder %s21, 1
    %p107 = por %p105, %p106
    %p109 = scmp.ne.s32.totalorder %s94, %s108
    %p110 = scmp.eq.s32.totalorder %s21, 0
    %p111 = por %p109, %p110
    %s113 = sadd.s32 %s112, 1
    %p116 = scmp.eq.s32.totalorder %s15, 1
    %p117 = scmp.ne.s32.totalorder %s112, %s114
    %p118 = scmp.eq.s32.totalorder %s15, 0
    %p119 = por %p117, %p118
    %p120 = scmp.ne.s32.totalorder %s112, %s114
    %p121 = scmp.eq.s32.totalorder %s20, 1
    %p122 = por %p120, %p121
    %p123 = scmp.ne.s32.totalorder %s114, %s115
    %p124 = scmp.eq.s32.totalorder %s20, 0
    %p125 = por %p123, %p124
    %p126 = scmp.ne.s32.totalorder %s114, %s115
    %p127 = scmp.eq.s32.totalorder %s21, 1
    %p128 = por %p126, %p127
    %p130 = scmp.ne.s32.totalorder %s115, %s129
    %p131 = scmp.eq.s32.totalorder %s21, 0
    %p132 = por %p130, %p131
    %s134 = sadd.s32 %s133, 1
    %p137 = scmp.eq.s32.totalorder %s15, 1
    %p138 = scmp.ne.s32.totalorder %s133, %s135
    %p139 = scmp.eq.s32.totalorder %s15, 0
    %p140 = por %p138, %p139
    %p141 = scmp.ne.s32.totalorder %s133, %s135
    %p142 = scmp.eq.s32.totalorder %s20, 1
    %p143 = por %p141, %p142
    %p144 = scmp.ne.s32.totalorder %s135, %s136
    %p145 = scmp.eq.s32.totalorder %s20, 0
    %p146 = por %p144, %p145
    %p147 = scmp.ne.s32.totalorder %s135, %s136
    %p148 = scmp.eq.s32.totalorder %s21, 1
    %p149 = por %p147, %p148
    %p151 = scmp.ne.s32.totalorder %s136, %s150
    %p152 = scmp.eq.s32.totalorder %s21, 0
    %p153 = por %p151, %p152
    %s155 = sadd.s32 %s154, 1
    %p158 = scmp.eq.s32.totalorder %s15, 1
    %p159 = scmp.ne.s32.totalorder %s154, %s156
    %p160 = scmp.eq.s32.totalorder %s15, 0
    %p161 = por %p159, %p160
    %p162 = scmp.ne.s32.totalorder %s154, %s156
    %p163 = scmp.eq.s32.totalorder %s20, 1
    %p164 = por %p162, %p163
    %p165 = scmp.ne.s32.totalorder %s156, %s157
    %p166 = scmp.eq.s32.totalorder %s20, 0
    %p167 = por %p165, %p166
    %p168 = scmp.ne.s32.totalorder %s156, %s157
    %p169 = scmp.eq.s32.totalorder %s21, 1
    %p170 = por %p168, %p169
    %p172 = scmp.ne.s32.totalorder %s157, %s171
    %p173 = scmp.eq.s32.totalorder %s21, 0
    %p174 = por %p172, %p173
    %s176 = sadd.s32 %s175, 1
    %p179 = scmp.eq.s32.totalorder %s15, 1
    %p180 = scmp.ne.s32.totalorder %s175, %s177
    %p181 = scmp.eq.s32.totalorder %s15, 0
    %p182 = por %p180, %p181
    %p183 = scmp.ne.s32.totalorder %s175, %s177
    %p184 = scmp.eq.s32.totalorder %s20, 1
    %p185 = por %p183, %p184
    %p186 = scmp.ne.s32.totalorder %s177, %s178
    %p187 = scmp.eq.s32.totalorder %s20, 0
    %p188 = por %p186, %p187
    %p189 = scmp.ne.s32.totalorder %s177, %s178
    %p190 = scmp.eq.s32.totalorder %s21, 1
    %p191 = por %p189, %p190
    %p193 = scmp.ne.s32.totalorder %s178, %s192
    %p194 = scmp.eq.s32.totalorder %s21, 0
    %p195 = por %p193, %p194
    %s197 = sadd.s32 %s196, 1
    %p200 = scmp.eq.s32.totalorder %s15, 1
    %p201 = scmp.ne.s32.totalorder %s196, %s198
    %p202 = scmp.eq.s32.totalorder %s15, 0
    %p203 = por %p201, %p202
    %p204 = scmp.ne.s32.totalorder %s196, %s198
    %p205 = scmp.eq.s32.totalorder %s20, 1
    %p206 = por %p204, %p205
    %p207 = scmp.ne.s32.totalorder %s198, %s199
    %p208 = scmp.eq.s32.totalorder %s20, 0
    %p209 = por %p207, %p208
    %p210 = scmp.ne.s32.totalorder %s198, %s199
    %p211 = scmp.eq.s32.totalorder %s21, 1
    %p212 = por %p210, %p211
    %p214 = scmp.ne.s32.totalorder %s199, %s213
    %p215 = scmp.eq.s32.totalorder %s21, 0
    %p216 = por %p214, %p215
    %s217 = ssub.s32 %s15, %s22
    %p218 = scmp.eq.s32.totalorder %s217, 0
    %s220 = sadd.s32 %s219, 1
    %s221 = scalar_select %p218, %s219, %s220
    %p224 = pneg %p218
    %p225 = scmp.eq.s32.totalorder %s15, 1
    %p226 = por %p224, %p225
    %p227 = scmp.ne.s32.totalorder %s219, %s222
    %p228 = scmp.eq.s32.totalorder %s15, 0
    %p229 = por %p227, %p228
    %p230 = scmp.ne.s32.totalorder %s219, %s222
    %p231 = scmp.eq.s32.totalorder %s20, 1
    %p232 = por %p230, %p231
    %p233 = scmp.ne.s32.totalorder %s222, %s223
    %p234 = scmp.eq.s32.totalorder %s20, 0
    %p235 = por %p233, %p234
    %p236 = scmp.ne.s32.totalorder %s222, %s223
    %p237 = scmp.eq.s32.totalorder %s21, 1
    %p238 = por %p236, %p237
    %p240 = scmp.ne.s32.totalorder %s223, %s239
    %p241 = scmp.eq.s32.totalorder %s21, 0
    %p242 = por %p240, %p241
    %p243 = scmp.le.s32.totalorder 1, %s15
    %p244 = scmp.lt.s32.totalorder %s15, 3
    %p245 = pnand %p243, %p244
    %p246 = pneg %p245
    // Predicated region
    $region9: #{convlstm_forward.1} parent=5 // pred_check
      _
    $region10: #{convlstm_forward.1} parent=5 // pred_check_branch
      %248 = sbr.rel (%p245) target = $region12
    $region11: #{convlstm_forward.1} parent=5 // pred_region
      %s249 = ssub.s32 %s15, 1
      // Predicated region
      $region13: #{convlstm_forward.1} parent=11 // pred_check
        %p250 = pneg %p62
      $region14: #{convlstm_forward.1} parent=11 // pred_check_branch
        %252 = sbr.rel (%p250) target = $region16
      $region15: #{convlstm_forward.1} parent=11 // pred_region
        _
      $region16: #{convlstm_forward.1} parent=11 // pred_fallthru
        _
      // Predicated region
      $region17: #{convlstm_forward.1} parent=11 // pred_check
        %p253 = pneg %p83
      $region18: #{convlstm_forward.1} parent=11 // pred_check_branch
        %255 = sbr.rel (%p253) target = $region20
      $region19: #{convlstm_forward.1} parent=11 // pred_region
        _
      $region20: #{convlstm_forward.1} parent=11 // pred_fallthru
        _
      // Predicated region
      $region21: #{convlstm_forward.1} parent=11 // pred_check
        %p256 = pneg %p104
      $region22: #{convlstm_forward.1} parent=11 // pred_check_branch
        %258 = sbr.rel (%p256) target = $region24
      $region23: #{convlstm_forward.1} parent=11 // pred_region
        _
      $region24: #{convlstm_forward.1} parent=11 // pred_fallthru
        _
      // Predicated region
      $region25: #{convlstm_forward.1} parent=11 // pred_check
        %p259 = pneg %p125
      $region26: #{convlstm_forward.1} parent=11 // pred_check_branch
        %261 = sbr.rel (%p259) target = $region28
      $region27: #{convlstm_forward.1} parent=11 // pred_region
        _
      $region28: #{convlstm_forward.1} parent=11 // pred_fallthru
        _
      // Predicated region
      $region29: #{convlstm_forward.1} parent=11 // pred_check
        %p262 = pneg %p146
      $region30: #{convlstm_forward.1} parent=11 // pred_check_branch
        %264 = sbr.rel (%p262) target = $region32
      $region31: #{convlstm_forward.1} parent=11 // pred_region
        _
      $region32: #{convlstm_forward.1} parent=11 // pred_fallthru
        _
      // Predicated region
      $region33: #{convlstm_forward.1} parent=11 // pred_check
        %p265 = pneg %p167
      $region34: #{convlstm_forward.1} parent=11 // pred_check_branch
        %267 = sbr.rel (%p265) target = $region36
      $region35: #{convlstm_forward.1} parent=11 // pred_region
        _
      $region36: #{convlstm_forward.1} parent=11 // pred_fallthru
        _
      // Predicated region
      $region37: #{convlstm_forward.1} parent=11 // pred_check
        %p268 = pneg %p188
      $region38: #{convlstm_forward.1} parent=11 // pred_check_branch
        %270 = sbr.rel (%p268) target = $region40
      $region39: #{convlstm_forward.1} parent=11 // pred_region
        _
      $region40: #{convlstm_forward.1} parent=11 // pred_fallthru
        _
      // Predicated region
      $region41: #{convlstm_forward.1} parent=11 // pred_check
        %p271 = pneg %p209
      $region42: #{convlstm_forward.1} parent=11 // pred_check_branch
        %273 = sbr.rel (%p271) target = $region44
      $region43: #{convlstm_forward.1} parent=11 // pred_region
        _
      $region44: #{convlstm_forward.1} parent=11 // pred_fallthru
        _
    $region12: #{convlstm_forward.1} parent=5 // pred_fallthru
      _
    %p274 = scmp.lt.s32.totalorder %s15, 2
    // Predicated region
    $region45: #{convlstm_forward.1} parent=5 // pred_check
      %p275 = pneg %p274
    $region46: #{convlstm_forward.1} parent=5 // pred_check_branch
      %277 = sbr.rel (%p275) target = $region48
    $region47: #{convlstm_forward.1} parent=5 // pred_region
      // Predicated region
      $region49: #{convlstm_forward.1} parent=47 // pred_check
        %p278 = pneg %p35
      $region50: #{convlstm_forward.1} parent=47 // pred_check_branch
        %280 = sbr.rel (%p278) target = $region52
      $region51: #{convlstm_forward.1} parent=47 // pred_region
        %p281 = scmp.lt.s32.totalorder %s15, 1
        %s282 = scalar_select %p281, %s15, 1
        %s283 = smul.addr %s282, 2
        %s284 = smul.addr %s283, 8
        %s285 = scalar_lea.vmem %s0, %s284
      $region52: #{convlstm_forward.1} parent=47 // pred_fallthru
        _
    $region48: #{convlstm_forward.1} parent=5 // pred_fallthru
      _
    %p286 = scmp.le.s32.totalorder 1, %s15
    %p287 = scmp.lt.s32.totalorder %s15, 3
    %p288 = pnand %p286, %p287
    %p289 = pneg %p288
    // Predicated region
    $region53: #{convlstm_forward.1} parent=5 // pred_check
      _
    $region54: #{convlstm_forward.1} parent=5 // pred_check_branch
      %291 = sbr.rel (%p288) target = $region56
    $region55: #{convlstm_forward.1} parent=5 // pred_region
      %s292 = ssub.s32 %s15, 1
      %p293 = scmp.lt.s32.totalorder %s20, 1
      %s294 = scalar_select %p293, %s20, 1
      %s295 = smul.addr %s294, 2
      %s296 = smul.addr %s295, 8
      %s297 = scalar_lea.vmem %s0, %s296
      %p298 = pneg %p41
      %p299 = pneg %p38
      %p300 = pneg %p62
      %p301 = pneg %p59
      %p302 = pneg %p83
      %p303 = pneg %p80
      %p304 = pneg %p104
      %p305 = pneg %p101
      %p306 = pneg %p125
      %p307 = pneg %p122
      %p308 = pneg %p146
      %p309 = pneg %p143
      %p310 = pneg %p167
      %p311 = pneg %p164
      %p312 = pneg %p188
      %p313 = pneg %p185
      %p314 = pneg %p209
      %p315 = pneg %p206
      %p316 = pneg %p235
      %p317 = pneg %p232
      %p318 = scmp.lt.s32.totalorder %s20, 1
      %s319 = scalar_select %p318, %s20, 1
      %s320 = smul.addr %s319, 2
      %s321 = smul.addr %s320, 8
      %s322 = scalar_lea.vmem %s9, %s321
      %p323 = scmp.lt.s32.totalorder %s20, 1
      %s324 = scalar_select %p323, %s20, 1
      %s325 = smul.addr %s324, 2
      %s326 = smul.addr %s325, 8
      %s327 = scalar_lea.vmem %s0, %s326
      %p328 = scmp.lt.s32.totalorder %s20, 1
      %s329 = scalar_select %p328, %s20, 1
      %s330 = smul.addr %s329, 2
      %s331 = smul.addr %s330, 8
      %s332 = scalar_lea.vmem %s9, %s331
      %v334 = vld [vmem:[%s1] ss:$8 sm:$0x3]
      %s335 = scalar_lea.vmem %s1, 1
      %v336 = vld [vmem:[%s335] ss:$8 sm:$0x3]
      %s337 = scalar_lea.vmem %s1, 2
      %v338 = vld [vmem:[%s337] ss:$8 sm:$0x3]
      %s339 = scalar_lea.vmem %s1, 3
      %v340 = vld [vmem:[%s339] ss:$8 sm:$0x3]
      %s341 = scalar_lea.vmem %s1, 5
      %v342 = vld [vmem:[%s341] ss:$8 sm:$0x3]
      %s343 = scalar_lea.vmem %s1, 6
      %v344 = vld [vmem:[%s343] ss:$8 sm:$0x3]
      %s345 = scalar_lea.vmem %s1, 7
      %v346 = vld [vmem:[%s345] ss:$8 sm:$0x3]
      %s347 = scalar_lea.vmem %s1, 16
      %v348 = vld [vmem:[%s347] ss:$8 sm:$0x3]
      %p349 = scmp.eq.s32.totalorder %s20, 0
      // Predicated region
      $region57: #{convlstm_forward.1} parent=55 // pred_check
        %p350 = pneg %p349
      $region58: #{convlstm_forward.1} parent=55 // pred_check_branch
        %352 = sbr.rel (%p350) target = $region60
      $region59: #{convlstm_forward.1} parent=55 // pred_region
        %353 = vst [vmem:[#allocation2] sm:$0xff] 0.0
        %354 = vst [vmem:[#allocation2 + $0x8] sm:$0xff] 0.0
        %355 = vst [vmem:[#allocation2 + $0x10] sm:$0xff] 0.0
        %356 = vst [vmem:[#allocation2 + $0x18] sm:$0xff] 0.0
        %357 = vst [vmem:[#allocation3] sm:$0xff] 0.0
        %358 = vst [vmem:[#allocation3 + $0x8] sm:$0xff] 0.0
        %359 = vst [vmem:[#allocation4] sm:$0xff] 0.0
        %360 = vst [vmem:[#allocation4 + $0x8] sm:$0xff] 0.0
        %361 = vst [vmem:[#allocation4 + $0x10] sm:$0xff] 0.0
        %362 = vst [vmem:[#allocation4 + $0x18] sm:$0xff] 0.0
        %363 = vst [vmem:[#allocation5] sm:$0xff] 0.0
        %364 = vst [vmem:[#allocation5 + $0x8] sm:$0xff] 0.0
      $region60: #{convlstm_forward.1} parent=55 // pred_fallthru
        _
      %v365 = vld [vmem:[%s327] sm:$0xff]
      %v366 = vld [vmem:[%s327 + $0x8] sm:$0xff]
      %367 = vst [vmem:[#allocation2] sm:$0xff] %v365
      %368 = vst [vmem:[#allocation2 + $0x8] sm:$0xff] %v366
      %v369 = vld [vmem:[#allocation2] sm:$0xff]
      %v370 = vld [vmem:[#allocation2 + $0x8] sm:$0xff]
      %v371 = vld [vmem:[#allocation2 + $0x10] sm:$0xff]
      %v372 = vld [vmem:[#allocation2 + $0x18] sm:$0xff]
      %373 = vrot.lane.b32.xlu0 %v369, 17
      %v374 = vpop.permute.xlu0 %373
      %375 = vrot.lane.b32.xlu0 %v371, 17
      %v376 = vpop.permute.xlu0 %375
      %377 = vrot.lane.b32.xlu0 %v370, 17
      %v378 = vpop.permute.xlu0 %377
      %379 = vrot.lane.b32.xlu0 %v372, 17
      %v380 = vpop.permute.xlu0 %379
      %v381 = vlaneseq
      %v382 = vand.u32 %v381, 127
      %vm383 = vcmp.lt.s32.totalorder %v382, 17
      %v384 = vsel %vm383, %v374, %v378
      %v385 = vsel %vm383, %v376, %v380
      %v386 = vsel %vm383, %v378, %v374
      %v387 = vsel %vm383, %v380, %v376
      %v389 = vlaneseq
      %v390 = vshrl.u32 %v389, 7
      %v391 = vsub.s32 0, %v390
      %v392 = vrot.slane %v334, %v391
      %v393 = vlaneseq
      %v394 = vshrl.u32 %v393, 7
      %v395 = vsub.s32 1, %v394
      %v396 = vrot.slane %v334, %v395
      %v399 = vmul.f32 %v386, %v392
      %v400 = vmul.f32 %v384, %v396
      %v401 = vmul.f32 %v387, %v392
      %v402 = vmul.f32 %v385, %v396
      %v403 = vpack.c.bf16 %v401, %v399
      %v404 = vpack.c.bf16 %v402, %v400
      %405 = vst [vmem:[#allocation6] sm:$0xff] %v403
      %406 = vst [vmem:[#allocation6 + $0x8] sm:$0xff] %v404
      %407 = vrot.lane.b32.xlu0 %v369, 16
      %v408 = vpop.permute.xlu0 %407
      %409 = vrot.lane.b32.xlu0 %v371, 16
      %v410 = vpop.permute.xlu0 %409
      %411 = vrot.lane.b32.xlu0 %v370, 16
      %v412 = vpop.permute.xlu0 %411
      %413 = vrot.lane.b32.xlu0 %v372, 16
      %v414 = vpop.permute.xlu0 %413
      %vm415 = vcmp.lt.s32.totalorder %v382, 16
      %v416 = vsel %vm415, %v408, %v412
      %v417 = vsel %vm415, %v410, %v414
      %v418 = vsel %vm415, %v412, %v408
      %v419 = vsel %vm415, %v414, %v410
      %v421 = vlaneseq
      %v422 = vshrl.u32 %v421, 7
      %v423 = vsub.s32 0, %v422
      %v424 = vrot.slane %v336, %v423
      %v425 = vlaneseq
      %v426 = vshrl.u32 %v425, 7
      %v427 = vsub.s32 1, %v426
      %v428 = vrot.slane %v336, %v427
      %v431 = vmul.f32 %v418, %v424
      %v432 = vmul.f32 %v416, %v428
      %v433 = vmul.f32 %v419, %v424
      %v434 = vmul.f32 %v417, %v428
      %v435 = vpack.c.bf16 %v433, %v431
      %v436 = vpack.c.bf16 %v434, %v432
      %437 = vst [vmem:[#allocation6 + $0x10] sm:$0xff] %v435
      %438 = vst [vmem:[#allocation6 + $0x18] sm:$0xff] %v436
      %439 = vrot.lane.b32.xlu0 %v369, 15
      %v440 = vpop.permute.xlu0 %439
      %441 = vrot.lane.b32.xlu0 %v371, 15
      %v442 = vpop.permute.xlu0 %441
      %443 = vrot.lane.b32.xlu0 %v370, 15
      %v444 = vpop.permute.xlu0 %443
      %445 = vrot.lane.b32.xlu0 %v372, 15
      %v446 = vpop.permute.xlu0 %445
      %vm447 = vcmp.lt.s32.totalorder %v382, 15
      %v448 = vsel %vm447, %v440, %v444
      %v449 = vsel %vm447, %v442, %v446
      %v450 = vsel %vm447, %v444, %v440
      %v451 = vsel %vm447, %v446, %v442
      %v453 = vlaneseq
      %v454 = vshrl.u32 %v453, 7
      %v455 = vsub.s32 0, %v454
      %v456 = vrot.slane %v338, %v455
      %v457 = vlaneseq
      %v458 = vshrl.u32 %v457, 7
      %v459 = vsub.s32 1, %v458
      %v460 = vrot.slane %v338, %v459
      %v463 = vmul.f32 %v450, %v456
      %v464 = vmul.f32 %v448, %v460
      %v465 = vmul.f32 %v451, %v456
      %v466 = vmul.f32 %v449, %v460
      %v467 = vpack.c.bf16 %v465, %v463
      %v468 = vpack.c.bf16 %v466, %v464
      %469 = vst [vmem:[#allocation6 + $0x20] sm:$0xff] %v467
      %470 = vst [vmem:[#allocation6 + $0x28] sm:$0xff] %v468
      %471 = vrot.lane.b32.xlu0 %v369, 1
      %v472 = vpop.permute.xlu0 %471
      %473 = vrot.lane.b32.xlu0 %v371, 1
      %v474 = vpop.permute.xlu0 %473
      %475 = vrot.lane.b32.xlu0 %v370, 1
      %v476 = vpop.permute.xlu0 %475
      %477 = vrot.lane.b32.xlu0 %v372, 1
      %v478 = vpop.permute.xlu0 %477
      %vm479 = vcmp.lt.s32.totalorder %v382, 1
      %v480 = vsel %vm479, %v472, %v476
      %v481 = vsel %vm479, %v474, %v478
      %v482 = vsel %vm479, %v476, %v472
      %v483 = vsel %vm479, %v478, %v474
      %v485 = vlaneseq
      %v486 = vshrl.u32 %v485, 7
      %v487 = vsub.s32 0, %v486
      %v488 = vrot.slane %v340, %v487
      %v489 = vlaneseq
      %v490 = vshrl.u32 %v489, 7
      %v491 = vsub.s32 1, %v490
      %v492 = vrot.slane %v340, %v491
      %v495 = vmul.f32 %v482, %v488
      %v496 = vmul.f32 %v480, %v492
      %v497 = vmul.f32 %v483, %v488
      %v498 = vmul.f32 %v481, %v492
      %v499 = vpack.c.bf16 %v497, %v495
      %v500 = vpack.c.bf16 %v498, %v496
      %501 = vst [vmem:[#allocation6 + $0x30] sm:$0xff] %v499
      %502 = vst [vmem:[#allocation6 + $0x38] sm:$0xff] %v500
      %v503 = vpack.c.bf16 %v371, %v369
      %v504 = vpack.c.bf16 %v372, %v370
      %505 = vst [vmem:[#allocation6 + $0x40] sm:$0xff] %v503
      %506 = vst [vmem:[#allocation6 + $0x48] sm:$0xff] %v504
      %507 = vrot.lane.b32.xlu0 %v369, 127
      %v508 = vpop.permute.xlu0 %507
      %509 = vrot.lane.b32.xlu0 %v371, 127
      %v510 = vpop.permute.xlu0 %509
      %511 = vrot.lane.b32.xlu0 %v370, 127
      %v512 = vpop.permute.xlu0 %511
      %513 = vrot.lane.b32.xlu0 %v372, 127
      %v514 = vpop.permute.xlu0 %513
      %vm515 = vcmp.lt.s32.totalorder %v382, 127
      %v516 = vsel %vm515, %v508, %v512
      %v517 = vsel %vm515, %v510, %v514
      %v518 = vsel %vm515, %v512, %v508
      %v519 = vsel %vm515, %v514, %v510
      %v521 = vlaneseq
      %v522 = vshrl.u32 %v521, 7
      %v523 = vsub.s32 0, %v522
      %v524 = vrot.slane %v342, %v523
      %v525 = vlaneseq
      %v526 = vshrl.u32 %v525, 7
      %v527 = vsub.s32 1, %v526
      %v528 = vrot.slane %v342, %v527
      %v531 = vmul.f32 %v516, %v524
      %v532 = vmul.f32 %v518, %v528
      %v533 = vmul.f32 %v517, %v524
      %v534 = vmul.f32 %v519, %v528
      %v535 = vpack.c.bf16 %v533, %v531
      %v536 = vpack.c.bf16 %v534, %v532
      %537 = vst [vmem:[#allocation6 + $0x50] sm:$0xff] %v535
      %538 = vst [vmem:[#allocation6 + $0x58] sm:$0xff] %v536
      %539 = vrot.lane.b32.xlu0 %v369, 113
      %v540 = vpop.permute.xlu0 %539
      %541 = vrot.lane.b32.xlu0 %v371, 113
      %v542 = vpop.permute.xlu0 %541
      %543 = vrot.lane.b32.xlu0 %v370, 113
      %v544 = vpop.permute.xlu0 %543
      %545 = vrot.lane.b32.xlu0 %v372, 113
      %v546 = vpop.permute.xlu0 %545
      %vm547 = vcmp.lt.s32.totalorder %v382, 113
      %v548 = vsel %vm547, %v540, %v544
      %v549 = vsel %vm547, %v542, %v546
      %v550 = vsel %vm547, %v544, %v540
      %v551 = vsel %vm547, %v546, %v542
      %v553 = vlaneseq
      %v554 = vshrl.u32 %v553, 7
      %v555 = vsub.s32 0, %v554
      %v556 = vrot.slane %v344, %v555
      %v557 = vlaneseq
      %v558 = vshrl.u32 %v557, 7
      %v559 = vsub.s32 1, %v558
      %v560 = vrot.slane %v344, %v559
      %v563 = vmul.f32 %v548, %v556
      %v564 = vmul.f32 %v550, %v560
      %v565 = vmul.f32 %v549, %v556
      %v566 = vmul.f32 %v551, %v560
      %v567 = vpack.c.bf16 %v565, %v563
      %v568 = vpack.c.bf16 %v566, %v564
      %569 = vst [vmem:[#allocation6 + $0x60] sm:$0xff] %v567
      %570 = vst [vmem:[#allocation6 + $0x68] sm:$0xff] %v568
      %571 = vrot.lane.b32.xlu0 %v369, 112
      %v572 = vpop.permute.xlu0 %571
      %573 = vrot.lane.b32.xlu0 %v371, 112
      %v574 = vpop.permute.xlu0 %573
      %575 = vrot.lane.b32.xlu0 %v370, 112
      %v576 = vpop.permute.xlu0 %575
      %577 = vrot.lane.b32.xlu0 %v372, 112
      %v578 = vpop.permute.xlu0 %577
      %vm579 = vcmp.lt.s32.totalorder %v382, 112
      %v580 = vsel %vm579, %v572, %v576
      %v581 = vsel %vm579, %v574, %v578
      %v582 = vsel %vm579, %v576, %v572
      %v583 = vsel %vm579, %v578, %v574
      %v585 = vlaneseq
      %v586 = vshrl.u32 %v585, 7
      %v587 = vsub.s32 0, %v586
      %v588 = vrot.slane %v346, %v587
      %v589 = vlaneseq
      %v590 = vshrl.u32 %v589, 7
      %v591 = vsub.s32 1, %v590
      %v592 = vrot.slane %v346, %v591
      %v595 = vmul.f32 %v580, %v588
      %v596 = vmul.f32 %v582, %v592
      %v597 = vmul.f32 %v581, %v588
      %v598 = vmul.f32 %v583, %v592
      %v599 = vpack.c.bf16 %v597, %v595
      %v600 = vpack.c.bf16 %v598, %v596
      %601 = vst [vmem:[#allocation6 + $0x70] sm:$0xff] %v599
      %602 = vst [vmem:[#allocation6 + $0x78] sm:$0xff] %v600
      %603 = vrot.lane.b32.xlu0 %v369, 111
      %v604 = vpop.permute.xlu0 %603
      %605 = vrot.lane.b32.xlu0 %v371, 111
      %v606 = vpop.permute.xlu0 %605
      %607 = vrot.lane.b32.xlu0 %v370, 111
      %v608 = vpop.permute.xlu0 %607
      %609 = vrot.lane.b32.xlu0 %v372, 111
      %v610 = vpop.permute.xlu0 %609
      %vm611 = vcmp.lt.s32.totalorder %v382, 111
      %v612 = vsel %vm611, %v604, %v608
      %v613 = vsel %vm611, %v606, %v610
      %v614 = vsel %vm611, %v608, %v604
      %v615 = vsel %vm611, %v610, %v606
      %v617 = vlaneseq
      %v618 = vshrl.u32 %v617, 7
      %v619 = vsub.s32 0, %v618
      %v620 = vrot.slane %v348, %v619
      %v621 = vlaneseq
      %v622 = vshrl.u32 %v621, 7
      %v623 = vsub.s32 1, %v622
      %v624 = vrot.slane %v348, %v623
      %v627 = vmul.f32 %v612, %v620
      %v628 = vmul.f32 %v614, %v624
      %v629 = vmul.f32 %v613, %v620
      %v630 = vmul.f32 %v615, %v624
      %v631 = vpack.c.bf16 %v629, %v627
      %v632 = vpack.c.bf16 %v630, %v628
      %633 = vst [vmem:[#allocation6 + $0x80] sm:$0xff] %v631
      %634 = vst [vmem:[#allocation6 + $0x88] sm:$0xff] %v632
      %v635 = vld [vmem:[%s2] sm:$0xff]
      %v636 = vld [vmem:[%s2 + $0x8] sm:$0xff]
      %v637 = vld [vmem:[#allocation6] sm:$0xff]
      %v638 = vld [vmem:[#allocation6 + $0x8] sm:$0xff]
      %v639 = vld [vmem:[#allocation6 + $0x10] sm:$0xff]
      %v640 = vld [vmem:[#allocation6 + $0x18] sm:$0xff]
      %v641 = vld [vmem:[#allocation6 + $0x20] sm:$0xff]
      %v642 = vld [vmem:[#allocation6 + $0x28] sm:$0xff]
      %v643 = vld [vmem:[#allocation6 + $0x30] sm:$0xff]
      %v644 = vld [vmem:[#allocation6 + $0x38] sm:$0xff]
      %v645 = vld [vmem:[#allocation6 + $0x40] sm:$0xff]
      %v646 = vld [vmem:[#allocation6 + $0x48] sm:$0xff]
      %v647 = vld [vmem:[#allocation6 + $0x50] sm:$0xff]
      %v648 = vld [vmem:[#allocation6 + $0x58] sm:$0xff]
      %v649 = vld [vmem:[#allocation6 + $0x60] sm:$0xff]
      %v650 = vld [vmem:[#allocation6 + $0x68] sm:$0xff]
      %v651 = vld [vmem:[#allocation6 + $0x70] sm:$0xff]
      %v652 = vld [vmem:[#allocation6 + $0x78] sm:$0xff]
      %v653 = vld [vmem:[#allocation6 + $0x80] sm:$0xff]
      %v654 = vld [vmem:[#allocation6 + $0x88] sm:$0xff]
      %v657 = vunpack.c.l.b16 %v635
      %v658 = vunpack.c.h.b16 %v635
      %v659 = vunpack.c.l.b16 %v636
      %v660 = vunpack.c.h.b16 %v636
      %v661 = vpack.c.b16 %v659, %v657
      %v662 = vpack.c.b16 %v660, %v658
      %vm664 = vcmask 130048
      %v666 = vsel %vm664, %v662, 0
      %668 = vmatprep.subr.bf16.mxu0 %v638
      %669 = vmatpush1.bf16.msra.mxu0 %v637
      %670 = vmatprep.subr.bf16.mxu0 %v640
      %671 = vmatpush1.bf16.msra.mxu0 %v639
      %672 = vmatprep.subr.bf16.mxu0 %v642
      %673 = vmatpush1.bf16.msra.mxu0 %v641
      %674 = vmatprep.subr.bf16.mxu0 %v644
      %675 = vmatpush1.bf16.msra.mxu0 %v643
      %676 = vmatprep.subr.bf16.mxu0 %v646
      %677 = vmatpush1.bf16.msra.mxu0 %v645
      %678 = vmatprep.subr.bf16.mxu0 %v648
      %679 = vmatpush1.bf16.msra.mxu0 %v647
      %680 = vmatprep.subr.bf16.mxu0 %v650
      %681 = vmatpush1.bf16.msra.mxu0 %v649
      %682 = vmatprep.subr.bf16.mxu0 %v652
      %683 = vmatpush1.bf16.msra.mxu0 %v651
      %684 = vmatprep.subr.bf16.mxu0 %v654
      %685 = vmatpush1.bf16.msra.mxu0 %v653
      %686 = vmatprep.subr.bf16.mxu0 0
      %687 = vmatpush1.bf16.msra.mxu0 0
      %688 = vmatprep.subr.bf16.mxu0 0
      %689 = vmatpush1.bf16.msra.mxu0 0
      %690 = vmatprep.subr.bf16.mxu0 0
      %691 = vmatpush1.bf16.msra.mxu0 0
      %692 = vmatprep.subr.bf16.mxu0 0
      %693 = vmatpush1.bf16.msra.mxu0 0
      %694 = vmatprep.subr.bf16.mxu0 0
      %695 = vmatpush1.bf16.msra.mxu0 0
      %696 = vmatprep.subr.bf16.mxu0 0
      %697 = vmatpush1.bf16.msra.mxu0 0
      %698 = vmatprep.subr.bf16.mxu0 0
      %699 = vmatpush1.bf16.msra.mxu0 0
      %700 = vmatprep.mubr.bf16.mxu0 %v666
      %701 = vmatmul.mubr.bf16.gmra.mrb[0].mxu0 %v661
      %v702 = vpop.f32.mrb[0].mxu0
      %v703 = vadd.f32 0.0, %v702
      %v704 = vpop.f32.mrb[0].mxu0
      %v705 = vadd.f32 0.0, %v704
      %v706 = vpop.f32.mrb[0].mxu0
      %v707 = vadd.f32 0.0, %v706
      %v708 = vpop.f32.mrb[0].mxu0
      %v709 = vadd.f32 0.0, %v708
      %710 = vdwg.mxu0
      %v711 = vmax.f32 %v703, 0.0
      %v712 = vmax.f32 %v705, 0.0
      %v713 = vmax.f32 %v707, 0.0
      %v714 = vmax.f32 %v709, 0.0
      %715 = vrot.lane.b32.xlu0 %v711, 17
      %v716 = vpop.permute.xlu0 %715
      %717 = vrot.lane.b32.xlu0 %v713, 17
      %v718 = vpop.permute.xlu0 %717
      %719 = vrot.lane.b32.xlu0 %v712, 17
      %v720 = vpop.permute.xlu0 %719
      %721 = vrot.lane.b32.xlu0 %v714, 17
      %v722 = vpop.permute.xlu0 %721
      %v723 = vsel %vm383, %v716, %v720
      %v724 = vsel %vm383, %v718, %v722
      %v725 = vsel %vm383, %v720, %v716
      %v726 = vsel %vm383, %v722, %v718
      %v727 = vmul.f32 %v725, %v392
      %v728 = vmul.f32 %v723, %v396
      %v729 = vmul.f32 %v726, %v392
      %v730 = vmul.f32 %v724, %v396
      %v731 = vpack.c.bf16 %v729, %v727
      %v732 = vpack.c.bf16 %v730, %v728
      %733 = vst [vmem:[#allocation7] sm:$0xff] %v731
      %734 = vst [vmem:[#allocation7 + $0x8] sm:$0xff] %v732
      %735 = vrot.lane.b32.xlu0 %v711, 16
      %v736 = vpop.permute.xlu0 %735
      %737 = vrot.lane.b32.xlu0 %v713, 16
      %v738 = vpop.permute.xlu0 %737
      %739 = vrot.lane.b32.xlu0 %v712, 16
      %v740 = vpop.permute.xlu0 %739
      %741 = vrot.lane.b32.xlu0 %v714, 16
      %v742 = vpop.permute.xlu0 %741
      %v743 = vsel %vm415, %v736, %v740
      %v744 = vsel %vm415, %v738, %v742
      %v745 = vsel %vm415, %v740, %v736
      %v746 = vsel %vm415, %v742, %v738
      %v747 = vmul.f32 %v745, %v424
      %v748 = vmul.f32 %v743, %v428
      %v749 = vmul.f32 %v746, %v424
      %v750 = vmul.f32 %v744, %v428
      %v751 = vpack.c.bf16 %v749, %v747
      %v752 = vpack.c.bf16 %v750, %v748
      %753 = vst [vmem:[#allocation7 + $0x10] sm:$0xff] %v751
      %754 = vst [vmem:[#allocation7 + $0x18] sm:$0xff] %v752
      %755 = vrot.lane.b32.xlu0 %v711, 15
      %v756 = vpop.permute.xlu0 %755
      %757 = vrot.lane.b32.xlu0 %v713, 15
      %v758 = vpop.permute.xlu0 %757
      %759 = vrot.lane.b32.xlu0 %v712, 15
      %v760 = vpop.permute.xlu0 %759
      %761 = vrot.lane.b32.xlu0 %v714, 15
      %v762 = vpop.permute.xlu0 %761
      %v763 = vsel %vm447, %v756, %v760
      %v764 = vsel %vm447, %v758, %v762
      %v765 = vsel %vm447, %v760, %v756
      %v766 = vsel %vm447, %v762, %v758
      %v767 = vmul.f32 %v765, %v456
      %v768 = vmul.f32 %v763, %v460
      %v769 = vmul.f32 %v766, %v456
      %v770 = vmul.f32 %v764, %v460
      %v771 = vpack.c.bf16 %v769, %v767
      %v772 = vpack.c.bf16 %v770, %v768
      %773 = vst [vmem:[#allocation7 + $0x20] sm:$0xff] %v771
      %774 = vst [vmem:[#allocation7 + $0x28] sm:$0xff] %v772
      %775 = vrot.lane.b32.xlu0 %v711, 1
      %v776 = vpop.permute.xlu0 %775
      %777 = vrot.lane.b32.xlu0 %v713, 1
      %v778 = vpop.permute.xlu0 %777
      %779 = vrot.lane.b32.xlu0 %v712, 1
      %v780 = vpop.permute.xlu0 %779
      %781 = vrot.lane.b32.xlu0 %v714, 1
      %v782 = vpop.permute.xlu0 %781
      %v783 = vsel %vm479, %v776, %v780
      %v784 = vsel %vm479, %v778, %v782
      %v785 = vsel %vm479, %v780, %v776
      %v786 = vsel %vm479, %v782, %v778
      %v787 = vmul.f32 %v785, %v488
      %v788 = vmul.f32 %v783, %v492
      %v789 = vmul.f32 %v786, %v488
      %v790 = vmul.f32 %v784, %v492
      %v791 = vpack.c.bf16 %v789, %v787
      %v792 = vpack.c.bf16 %v790, %v788
      %793 = vst [vmem:[#allocation7 + $0x30] sm:$0xff] %v791
      %794 = vst [vmem:[#allocation7 + $0x38] sm:$0xff] %v792
      %v795 = vpack.c.bf16 %v713, %v711
      %v796 = vpack.c.bf16 %v714, %v712
      %797 = vst [vmem:[#allocation7 + $0x40] sm:$0xff] %v795
      %798 = vst [vmem:[#allocation7 + $0x48] sm:$0xff] %v796
      %799 = vrot.lane.b32.xlu0 %v711, 127
      %v800 = vpop.permute.xlu0 %799
      %801 = vrot.lane.b32.xlu0 %v713, 127
      %v802 = vpop.permute.xlu0 %801
      %803 = vrot.lane.b32.xlu0 %v712, 127
      %v804 = vpop.permute.xlu0 %803
      %805 = vrot.lane.b32.xlu0 %v714, 127
      %v806 = vpop.permute.xlu0 %805
      %v807 = vsel %vm515, %v800, %v804
      %v808 = vsel %vm515, %v802, %v806
      %v809 = vsel %vm515, %v804, %v800
      %v810 = vsel %vm515, %v806, %v802
      %v811 = vmul.f32 %v807, %v524
      %v812 = vmul.f32 %v809, %v528
      %v813 = vmul.f32 %v808, %v524
      %v814 = vmul.f32 %v810, %v528
      %v815 = vpack.c.bf16 %v813, %v811
      %v816 = vpack.c.bf16 %v814, %v812
      %817 = vst [vmem:[#allocation7 + $0x50] sm:$0xff] %v815
      %818 = vst [vmem:[#allocation7 + $0x58] sm:$0xff] %v816
      %819 = vrot.lane.b32.xlu0 %v711, 113
      %v820 = vpop.permute.xlu0 %819
      %821 = vrot.lane.b32.xlu0 %v713, 113
      %v822 = vpop.permute.xlu0 %821
      %823 = vrot.lane.b32.xlu0 %v712, 113
      %v824 = vpop.permute.xlu0 %823
      %825 = vrot.lane.b32.xlu0 %v714, 113
      %v826 = vpop.permute.xlu0 %825
      %v827 = vsel %vm547, %v820, %v824
      %v828 = vsel %vm547, %v822, %v826
      %v829 = vsel %vm547, %v824, %v820
      %v830 = vsel %vm547, %v826, %v822
      %v831 = vmul.f32 %v827, %v556
      %v832 = vmul.f32 %v829, %v560
      %v833 = vmul.f32 %v828, %v556
      %v834 = vmul.f32 %v830, %v560
      %v835 = vpack.c.bf16 %v833, %v831
      %v836 = vpack.c.bf16 %v834, %v832
      %837 = vst [vmem:[#allocation7 + $0x60] sm:$0xff] %v835
      %838 = vst [vmem:[#allocation7 + $0x68] sm:$0xff] %v836
      %839 = vrot.lane.b32.xlu0 %v711, 112
      %v840 = vpop.permute.xlu0 %839
      %841 = vrot.lane.b32.xlu0 %v713, 112
      %v842 = vpop.permute.xlu0 %841
      %843 = vrot.lane.b32.xlu0 %v712, 112
      %v844 = vpop.permute.xlu0 %843
      %845 = vrot.lane.b32.xlu0 %v714, 112
      %v846 = vpop.permute.xlu0 %845
      %v847 = vsel %vm579, %v840, %v844
      %v848 = vsel %vm579, %v842, %v846
      %v849 = vsel %vm579, %v844, %v840
      %v850 = vsel %vm579, %v846, %v842
      %v851 = vmul.f32 %v847, %v588
      %v852 = vmul.f32 %v849, %v592
      %v853 = vmul.f32 %v848, %v588
      %v854 = vmul.f32 %v850, %v592
      %v855 = vpack.c.bf16 %v853, %v851
      %v856 = vpack.c.bf16 %v854, %v852
      %857 = vst [vmem:[#allocation7 + $0x70] sm:$0xff] %v855
      %858 = vst [vmem:[#allocation7 + $0x78] sm:$0xff] %v856
      %859 = vrot.lane.b32.xlu0 %v711, 111
      %v860 = vpop.permute.xlu0 %859
      %861 = vrot.lane.b32.xlu0 %v713, 111
      %v862 = vpop.permute.xlu0 %861
      %863 = vrot.lane.b32.xlu0 %v712, 111
      %v864 = vpop.permute.xlu0 %863
      %865 = vrot.lane.b32.xlu0 %v714, 111
      %v866 = vpop.permute.xlu0 %865
      %v867 = vsel %vm611, %v860, %v864
      %v868 = vsel %vm611, %v862, %v866
      %v869 = vsel %vm611, %v864, %v860
      %v870 = vsel %vm611, %v866, %v862
      %v871 = vmul.f32 %v867, %v620
      %v872 = vmul.f32 %v869, %v624
      %v873 = vmul.f32 %v868, %v620
      %v874 = vmul.f32 %v870, %v624
      %v875 = vpack.c.bf16 %v873, %v871
      %v876 = vpack.c.bf16 %v874, %v872
      %877 = vst [vmem:[#allocation7 + $0x80] sm:$0xff] %v875
      %878 = vst [vmem:[#allocation7 + $0x88] sm:$0xff] %v876
      %v879 = vld [vmem:[%s3] sm:$0xff]
      %v880 = vld [vmem:[%s3 + $0x8] sm:$0xff]
      %v881 = vld [vmem:[#allocation7] sm:$0xff]
      %v882 = vld [vmem:[#allocation7 + $0x8] sm:$0xff]
      %v883 = vld [vmem:[#allocation7 + $0x10] sm:$0xff]
      %v884 = vld [vmem:[#allocation7 + $0x18] sm:$0xff]
      %v885 = vld [vmem:[#allocation7 + $0x20] sm:$0xff]
      %v886 = vld [vmem:[#allocation7 + $0x28] sm:$0xff]
      %v887 = vld [vmem:[#allocation7 + $0x30] sm:$0xff]
      %v888 = vld [vmem:[#allocation7 + $0x38] sm:$0xff]
      %v889 = vld [vmem:[#allocation7 + $0x40] sm:$0xff]
      %v890 = vld [vmem:[#allocation7 + $0x48] sm:$0xff]
      %v891 = vld [vmem:[#allocation7 + $0x50] sm:$0xff]
      %v892 = vld [vmem:[#allocation7 + $0x58] sm:$0xff]
      %v893 = vld [vmem:[#allocation7 + $0x60] sm:$0xff]
      %v894 = vld [vmem:[#allocation7 + $0x68] sm:$0xff]
      %v895 = vld [vmem:[#allocation7 + $0x70] sm:$0xff]
      %v896 = vld [vmem:[#allocation7 + $0x78] sm:$0xff]
      %v897 = vld [vmem:[#allocation7 + $0x80] sm:$0xff]
      %v898 = vld [vmem:[#allocation7 + $0x88] sm:$0xff]
      %v901 = vunpack.c.l.b16 %v879
      %v902 = vunpack.c.h.b16 %v879
      %v903 = vunpack.c.l.b16 %v880
      %v904 = vunpack.c.h.b16 %v880
      %v905 = vpack.c.b16 %v903, %v901
      %v906 = vpack.c.b16 %v904, %v902
      %v909 = vsel %vm664, %v906, 0
      %911 = vmatprep.subr.bf16.mxu0 %v882
      %912 = vmatpush1.bf16.msra.mxu0 %v881
      %913 = vmatprep.subr.bf16.mxu0 %v884
      %914 = vmatpush1.bf16.msra.mxu0 %v883
      %915 = vmatprep.subr.bf16.mxu0 %v886
      %916 = vmatpush1.bf16.msra.mxu0 %v885
      %917 = vmatprep.subr.bf16.mxu0 %v888
      %918 = vmatpush1.bf16.msra.mxu0 %v887
      %919 = vmatprep.subr.bf16.mxu0 %v890
      %920 = vmatpush1.bf16.msra.mxu0 %v889
      %921 = vmatprep.subr.bf16.mxu0 %v892
      %922 = vmatpush1.bf16.msra.mxu0 %v891
      %923 = vmatprep.subr.bf16.mxu0 %v894
      %924 = vmatpush1.bf16.msra.mxu0 %v893
      %925 = vmatprep.subr.bf16.mxu0 %v896
      %926 = vmatpush1.bf16.msra.mxu0 %v895
      %927 = vmatprep.subr.bf16.mxu0 %v898
      %928 = vmatpush1.bf16.msra.mxu0 %v897
      %929 = vmatprep.subr.bf16.mxu0 0
      %930 = vmatpush1.bf16.msra.mxu0 0
      %931 = vmatprep.subr.bf16.mxu0 0
      %932 = vmatpush1.bf16.msra.mxu0 0
      %933 = vmatprep.subr.bf16.mxu0 0
      %934 = vmatpush1.bf16.msra.mxu0 0
      %935 = vmatprep.subr.bf16.mxu0 0
      %936 = vmatpush1.bf16.msra.mxu0 0
      %937 = vmatprep.subr.bf16.mxu0 0
      %938 = vmatpush1.bf16.msra.mxu0 0
      %939 = vmatprep.subr.bf16.mxu0 0
      %940 = vmatpush1.bf16.msra.mxu0 0
      %941 = vmatprep.subr.bf16.mxu0 0
      %942 = vmatpush1.bf16.msra.mxu0 0
      %943 = vmatprep.mubr.bf16.mxu0 %v909
      %944 = vmatmul.mubr.bf16.gmra.mrb[0].mxu0 %v905
      %v945 = vpop.f32.mrb[0].mxu0
      %v946 = vadd.f32 0.0, %v945
      %v947 = vpop.f32.mrb[0].mxu0
      %v948 = vadd.f32 0.0, %v947
      %v949 = vpop.f32.mrb[0].mxu0
      %v950 = vadd.f32 0.0, %v949
      %v951 = vpop.f32.mrb[0].mxu0
      %v952 = vadd.f32 0.0, %v951
      %953 = vdwg.mxu0
      %v954 = vmax.f32 %v946, 0.0
      %v955 = vmax.f32 %v948, 0.0
      %v956 = vmax.f32 %v950, 0.0
      %v957 = vmax.f32 %v952, 0.0
      %958 = vrot.lane.b32.xlu0 %v954, 17
      %v959 = vpop.permute.xlu0 %958
      %960 = vrot.lane.b32.xlu0 %v956, 17
      %v961 = vpop.permute.xlu0 %960
      %962 = vrot.lane.b32.xlu0 %v955, 17
      %v963 = vpop.permute.xlu0 %962
      %964 = vrot.lane.b32.xlu0 %v957, 17
      %v965 = vpop.permute.xlu0 %964
      %v966 = vsel %vm383, %v959, %v963
      %v967 = vsel %vm383, %v961, %v965
      %v968 = vsel %vm383, %v963, %v959
      %v969 = vsel %vm383, %v965, %v961
      %v970 = vmul.f32 %v968, %v392
      %v971 = vmul.f32 %v966, %v396
      %v972 = vmul.f32 %v969, %v392
      %v973 = vmul.f32 %v967, %v396
      %v974 = vpack.c.bf16 %v972, %v970
      %v975 = vpack.c.bf16 %v973, %v971
      %976 = vst [vmem:[#allocation7] sm:$0xff] %v974
      %977 = vst [vmem:[#allocation7 + $0x8] sm:$0xff] %v975
      %978 = vrot.lane.b32.xlu0 %v954, 16
      %v979 = vpop.permute.xlu0 %978
      %980 = vrot.lane.b32.xlu0 %v956, 16
      %v981 = vpop.permute.xlu0 %980
      %982 = vrot.lane.b32.xlu0 %v955, 16
      %v983 = vpop.permute.xlu0 %982
      %984 = vrot.lane.b32.xlu0 %v957, 16
      %v985 = vpop.permute.xlu0 %984
      %v986 = vsel %vm415, %v979, %v983
      %v987 = vsel %vm415, %v981, %v985
      %v988 = vsel %vm415, %v983, %v979
      %v989 = vsel %vm415, %v985, %v981
      %v990 = vmul.f32 %v988, %v424
      %v991 = vmul.f32 %v986, %v428
      %v992 = vmul.f32 %v989, %v424
      %v993 = vmul.f32 %v987, %v428
      %v994 = vpack.c.bf16 %v992, %v990
      %v995 = vpack.c.bf16 %v993, %v991
      %996 = vst [vmem:[#allocation7 + $0x10] sm:$0xff] %v994
      %997 = vst [vmem:[#allocation7 + $0x18] sm:$0xff] %v995
      %998 = vrot.lane.b32.xlu0 %v954, 15
      %v999 = vpop.permute.xlu0 %998
      %1000 = vrot.lane.b32.xlu0 %v956, 15
      %v1001 = vpop.permute.xlu0 %1000
      %1002 = vrot.lane.b32.xlu0 %v955, 15
      %v1003 = vpop.permute.xlu0 %1002
      %1004 = vrot.lane.b32.xlu0 %v957, 15
      %v1005 = vpop.permute.xlu0 %1004
      %v1006 = vsel %vm447, %v999, %v1003
      %v1007 = vsel %vm447, %v1001, %v1005
      %v1008 = vsel %vm447, %v1003, %v999
      %v1009 = vsel %vm447, %v1005, %v1001
      %v1010 = vmul.f32 %v1008, %v456
      %v1011 = vmul.f32 %v1006, %v460
      %v1012 = vmul.f32 %v1009, %v456
      %v1013 = vmul.f32 %v1007, %v460
      %v1014 = vpack.c.bf16 %v1012, %v1010
      %v1015 = vpack.c.bf16 %v1013, %v1011
      %1016 = vst [vmem:[#allocation7 + $0x20] sm:$0xff] %v1014
      %1017 = vst [vmem:[#allocation7 + $0x28] sm:$0xff] %v1015
      %1018 = vrot.lane.b32.xlu0 %v954, 1
      %v1019 = vpop.permute.xlu0 %1018
      %1020 = vrot.lane.b32.xlu0 %v956, 1
      %v1021 = vpop.permute.xlu0 %1020
      %1022 = vrot.lane.b32.xlu0 %v955, 1
      %v1023 = vpop.permute.xlu0 %1022
      %1024 = vrot.lane.b32.xlu0 %v957, 1
      %v1025 = vpop.permute.xlu0 %1024
      %v1026 = vsel %vm479, %v1019, %v1023
      %v1027 = vsel %vm479, %v1021, %v1025
      %v1028 = vsel %vm479, %v1023, %v1019
      %v1029 = vsel %vm479, %v1025, %v1021
      %v1030 = vmul.f32 %v1028, %v488
      %v1031 = vmul.f32 %v1026, %v492
      %v1032 = vmul.f32 %v1029, %v488
      %v1033 = vmul.f32 %v1027, %v492
      %v1034 = vpack.c.bf16 %v1032, %v1030
      %v1035 = vpack.c.bf16 %v1033, %v1031
      %1036 = vst [vmem:[#allocation7 + $0x30] sm:$0xff] %v1034
      %1037 = vst [vmem:[#allocation7 + $0x38] sm:$0xff] %v1035
      %v1038 = vpack.c.bf16 %v956, %v954
      %v1039 = vpack.c.bf16 %v957, %v955
      %1040 = vst [vmem:[#allocation7 + $0x40] sm:$0xff] %v1038
      %1041 = vst [vmem:[#allocation7 + $0x48] sm:$0xff] %v1039
      %1042 = vrot.lane.b32.xlu0 %v954, 127
      %v1043 = vpop.permute.xlu0 %1042
      %1044 = vrot.lane.b32.xlu0 %v956, 127
      %v1045 = vpop.permute.xlu0 %1044
      %1046 = vrot.lane.b32.xlu0 %v955, 127
      %v1047 = vpop.permute.xlu0 %1046
      %1048 = vrot.lane.b32.xlu0 %v957, 127
      %v1049 = vpop.permute.xlu0 %1048
      %v1050 = vsel %vm515, %v1043, %v1047
      %v1051 = vsel %vm515, %v1045, %v1049
      %v1052 = vsel %vm515, %v1047, %v1043
      %v1053 = vsel %vm515, %v1049, %v1045
      %v1054 = vmul.f32 %v1050, %v524
      %v1055 = vmul.f32 %v1052, %v528
      %v1056 = vmul.f32 %v1051, %v524
      %v1057 = vmul.f32 %v1053, %v528
      %v1058 = vpack.c.bf16 %v1056, %v1054
      %v1059 = vpack.c.bf16 %v1057, %v1055
      %1060 = vst [vmem:[#allocation7 + $0x50] sm:$0xff] %v1058
      %1061 = vst [vmem:[#allocation7 + $0x58] sm:$0xff] %v1059
      %1062 = vrot.lane.b32.xlu0 %v954, 113
      %v1063 = vpop.permute.xlu0 %1062
      %1064 = vrot.lane.b32.xlu0 %v956, 113
      %v1065 = vpop.permute.xlu0 %1064
      %1066 = vrot.lane.b32.xlu0 %v955, 113
      %v1067 = vpop.permute.xlu0 %1066
      %1068 = vrot.lane.b32.xlu0 %v957, 113
      %v1069 = vpop.permute.xlu0 %1068
      %v1070 = vsel %vm547, %v1063, %v1067
      %v1071 = vsel %vm547, %v1065, %v1069
      %v1072 = vsel %vm547, %v1067, %v1063
      %v1073 = vsel %vm547, %v1069, %v1065
      %v1074 = vmul.f32 %v1070, %v556
      %v1075 = vmul.f32 %v1072, %v560
      %v1076 = vmul.f32 %v1071, %v556
      %v1077 = vmul.f32 %v1073, %v560
      %v1078 = vpack.c.bf16 %v1076, %v1074
      %v1079 = vpack.c.bf16 %v1077, %v1075
      %1080 = vst [vmem:[#allocation7 + $0x60] sm:$0xff] %v1078
      %1081 = vst [vmem:[#allocation7 + $0x68] sm:$0xff] %v1079
      %1082 = vrot.lane.b32.xlu0 %v954, 112
      %v1083 = vpop.permute.xlu0 %1082
      %1084 = vrot.lane.b32.xlu0 %v956, 112
      %v1085 = vpop.permute.xlu0 %1084
      %1086 = vrot.lane.b32.xlu0 %v955, 112
      %v1087 = vpop.permute.xlu0 %1086
      %1088 = vrot.lane.b32.xlu0 %v957, 112
      %v1089 = vpop.permute.xlu0 %1088
      %v1090 = vsel %vm579, %v1083, %v1087
      %v1091 = vsel %vm579, %v1085, %v1089
      %v1092 = vsel %vm579, %v1087, %v1083
      %v1093 = vsel %vm579, %v1089, %v1085
      %v1094 = vmul.f32 %v1090, %v588
      %v1095 = vmul.f32 %v1092, %v592
      %v1096 = vmul.f32 %v1091, %v588
      %v1097 = vmul.f32 %v1093, %v592
      %v1098 = vpack.c.bf16 %v1096, %v1094
      %v1099 = vpack.c.bf16 %v1097, %v1095
      %1100 = vst [vmem:[#allocation7 + $0x70] sm:$0xff] %v1098
      %1101 = vst [vmem:[#allocation7 + $0x78] sm:$0xff] %v1099
      %1102 = vrot.lane.b32.xlu0 %v954, 111
      %v1103 = vpop.permute.xlu0 %1102
      %1104 = vrot.lane.b32.xlu0 %v956, 111
      %v1105 = vpop.permute.xlu0 %1104
      %1106 = vrot.lane.b32.xlu0 %v955, 111
      %v1107 = vpop.permute.xlu0 %1106
      %1108 = vrot.lane.b32.xlu0 %v957, 111
      %v1109 = vpop.permute.xlu0 %1108
      %v1110 = vsel %vm611, %v1103, %v1107
      %v1111 = vsel %vm611, %v1105, %v1109
      %v1112 = vsel %vm611, %v1107, %v1103
      %v1113 = vsel %vm611, %v1109, %v1105
      %v1114 = vmul.f32 %v1110, %v620
      %v1115 = vmul.f32 %v1112, %v624
      %v1116 = vmul.f32 %v1111, %v620
      %v1117 = vmul.f32 %v1113, %v624
      %v1118 = vpack.c.bf16 %v1116, %v1114
      %v1119 = vpack.c.bf16 %v1117, %v1115
      %1120 = vst [vmem:[#allocation7 + $0x80] sm:$0xff] %v1118
      %1121 = vst [vmem:[#allocation7 + $0x88] sm:$0xff] %v1119
      %v1122 = vld [vmem:[%s4] sm:$0x3]
      %v1123 = vld [vmem:[#allocation7] sm:$0xff]
      %v1124 = vld [vmem:[#allocation7 + $0x8] sm:$0xff]
      %v1125 = vld [vmem:[#allocation7 + $0x10] sm:$0xff]
      %v1126 = vld [vmem:[#allocation7 + $0x18] sm:$0xff]
      %v1127 = vld [vmem:[#allocation7 + $0x20] sm:$0xff]
      %v1128 = vld [vmem:[#allocation7 + $0x28] sm:$0xff]
      %v1129 = vld [vmem:[#allocation7 + $0x30] sm:$0xff]
      %v1130 = vld [vmem:[#allocation7 + $0x38] sm:$0xff]
      %v1131 = vld [vmem:[#allocation7 + $0x40] sm:$0xff]
      %v1132 = vld [vmem:[#allocation7 + $0x48] sm:$0xff]
      %v1133 = vld [vmem:[#allocation7 + $0x50] sm:$0xff]
      %v1134 = vld [vmem:[#allocation7 + $0x58] sm:$0xff]
      %v1135 = vld [vmem:[#allocation7 + $0x60] sm:$0xff]
      %v1136 = vld [vmem:[#allocation7 + $0x68] sm:$0xff]
      %v1137 = vld [vmem:[#allocation7 + $0x70] sm:$0xff]
      %v1138 = vld [vmem:[#allocation7 + $0x78] sm:$0xff]
      %v1139 = vld [vmem:[#allocation7 + $0x80] sm:$0xff]
      %v1140 = vld [vmem:[#allocation7 + $0x88] sm:$0xff]
      %v1143 = vunpack.c.l.s4 1966171168
      %v1144 = vunpack.c.0.s8 %v1143
      %v1145 = vlaneseq
      %v1146 = vshrl.u32 %v1145, 7
      %v1147 = vsub.s32 %v1144, %v1146
      %v1148 = vrot.slane %v1122, %v1147
      %v1149 = vcombine.high %v1148, %v1148
      %v1151 = vunpack.c.l.s4 1966171168
      %v1152 = vunpack.c.0.s8 %v1151
      %v1153 = vlaneseq
      %v1154 = vshrl.u32 %v1153, 7
      %v1155 = vsub.s32 %v1152, %v1154
      %v1156 = vrot.slane %v1148, %v1155
      %v1158 = vunpack.c.l.s4 1966171168
      %v1159 = vunpack.c.0.s8 %v1158
      %v1160 = vlaneseq
      %v1161 = vshrl.u32 %v1160, 7
      %v1162 = vsub.s32 %v1159, %v1161
      %v1163 = vrot.slane %v1149, %v1162
      %v1166 = vsel %vm664, %v1163, 0
      %1168 = vmatprep.subr.bf16.mxu0 %v1124
      %1169 = vmatpush1.bf16.msra.mxu0 %v1123
      %1170 = vmatprep.subr.bf16.mxu0 %v1126
      %1171 = vmatpush1.bf16.msra.mxu0 %v1125
      %1172 = vmatprep.subr.bf16.mxu0 %v1128
      %1173 = vmatpush1.bf16.msra.mxu0 %v1127
      %1174 = vmatprep.subr.bf16.mxu0 %v1130
      %1175 = vmatpush1.bf16.msra.mxu0 %v1129
      %1176 = vmatprep.subr.bf16.mxu0 %v1132
      %1177 = vmatpush1.bf16.msra.mxu0 %v1131
      %1178 = vmatprep.subr.bf16.mxu0 %v1134
      %1179 = vmatpush1.bf16.msra.mxu0 %v1133
      %1180 = vmatprep.subr.bf16.mxu0 %v1136
      %1181 = vmatpush1.bf16.msra.mxu0 %v1135
      %1182 = vmatprep.subr.bf16.mxu0 %v1138
      %1183 = vmatpush1.bf16.msra.mxu0 %v1137
      %1184 = vmatprep.subr.bf16.mxu0 %v1140
      %1185 = vmatpush1.bf16.msra.mxu0 %v1139
      %1186 = vmatprep.subr.bf16.mxu0 0
      %1187 = vmatpush1.bf16.msra.mxu0 0
      %1188 = vmatprep.subr.bf16.mxu0 0
      %1189 = vmatpush1.bf16.msra.mxu0 0
      %1190 = vmatprep.subr.bf16.mxu0 0
      %1191 = vmatpush1.bf16.msra.mxu0 0
      %1192 = vmatprep.subr.bf16.mxu0 0
      %1193 = vmatpush1.bf16.msra.mxu0 0
      %1194 = vmatprep.subr.bf16.mxu0 0
      %1195 = vmatpush1.bf16.msra.mxu0 0
      %1196 = vmatprep.subr.bf16.mxu0 0
      %1197 = vmatpush1.bf16.msra.mxu0 0
      %1198 = vmatprep.subr.bf16.mxu0 0
      %1199 = vmatpush1.bf16.msra.mxu0 0
      %1200 = vmatprep.mubr.bf16.mxu0 %v1166
      %1201 = vmatmul.mubr.bf16.gmra.mrb[0].mxu0 %v1156
      %v1202 = vpop.f32.mrb[0].mxu0
      %v1203 = vadd.f32 0.0, %v1202
      %v1204 = vpop.f32.mrb[0].mxu0
      %v1205 = vadd.f32 0.0, %v1204
      %v1206 = vpop.f32.mrb[0].mxu0
      %v1207 = vpop.f32.mrb[0].mxu0
      %1208 = vdwg.mxu0
      %v1209 = vxor.u32 %v1203, 2147483648
      %v1210 = vxor.u32 %v1205, 2147483648
      %v1211 = vmul.f32 %v1209, 1.442695
      %v1212 = vpow.pop %v1211
      %v1213 = vmul.f32 %v1210, 1.442695
      %v1214 = vpow.pop %v1213
      %v1215 = vadd.f32 %v1212, 1.0
      %v1216 = vadd.f32 %v1214, 1.0
      %v1217 = vrcp.pop %v1215
      %v1218 = vmul.f32 1.0, %v1217
      %v1219 = vrcp.pop %v1216
      %v1220 = vmul.f32 1.0, %v1219
      %1221 = vrot.lane.b32.xlu0 %v1218, 17
      %v1222 = vpop.permute.xlu0 %1221
      %1223 = vrot.lane.b32.xlu0 %v1220, 17
      %v1224 = vpop.permute.xlu0 %1223
      %v1225 = vsel %vm383, %v1222, %v1224
      %v1226 = vsel %vm383, %v1224, %v1222
      %v1227 = vld [vmem:[#allocation6] sm:$0xf]
      %v1228 = vld [vmem:[#allocation6 + $0x8] sm:$0xf]
      %v1229 = vunpack.c.l.bf16 %v1227
      %v1230 = vunpack.c.l.bf16 %v1228
      %v1231 = vlaneseq
      %v1232 = vshrl.u32 %v1231, 7
      %v1233 = vsub.s32 0, %v1232
      %v1234 = vrot.slane %v1226, %v1233
      %v1235 = vlaneseq
      %v1236 = vshrl.u32 %v1235, 7
      %v1237 = vsub.s32 0, %v1236
      %v1238 = vrot.slane %v1225, %v1237
      %v1239 = vmul.f32 %v1229, %v1234
      %v1240 = vmul.f32 %v1230, %v1238
      %v1241 = vpack.c.bf16 %v1239, %v1239
      %v1242 = vpack.c.bf16 %v1240, %v1240
      %1243 = vst [vmem:[#allocation6] sm:$0xf] %v1241
      %1244 = vst [vmem:[#allocation6 + $0x8] sm:$0xf] %v1242
      %1245 = vrot.lane.b32.xlu0 %v1218, 16
      %v1246 = vpop.permute.xlu0 %1245
      %1247 = vrot.lane.b32.xlu0 %v1220, 16
      %v1248 = vpop.permute.xlu0 %1247
      %v1249 = vsel %vm415, %v1246, %v1248
      %v1250 = vsel %vm415, %v1248, %v1246
      %v1251 = vld [vmem:[#allocation6 + $0x10] sm:$0xf]
      %v1252 = vld [vmem:[#allocation6 + $0x18] sm:$0xf]
      %v1253 = vunpack.c.l.bf16 %v1251
      %v1254 = vunpack.c.l.bf16 %v1252
      %v1255 = vlaneseq
      %v1256 = vshrl.u32 %v1255, 7
      %v1257 = vsub.s32 0, %v1256
      %v1258 = vrot.slane %v1250, %v1257
      %v1259 = vlaneseq
      %v1260 = vshrl.u32 %v1259, 7
      %v1261 = vsub.s32 0, %v1260
      %v1262 = vrot.slane %v1249, %v1261
      %v1263 = vmul.f32 %v1253, %v1258
      %v1264 = vmul.f32 %v1254, %v1262
      %v1265 = vpack.c.bf16 %v1263, %v1263
      %v1266 = vpack.c.bf16 %v1264, %v1264
      %1267 = vst [vmem:[#allocation6 + $0x10] sm:$0xf] %v1265
      %1268 = vst [vmem:[#allocation6 + $0x18] sm:$0xf] %v1266
      %1269 = vrot.lane.b32.xlu0 %v1218, 15
      %v1270 = vpop.permute.xlu0 %1269
      %1271 = vrot.lane.b32.xlu0 %v1220, 15
      %v1272 = vpop.permute.xlu0 %1271
      %v1273 = vsel %vm447, %v1270, %v1272
      %v1274 = vsel %vm447, %v1272, %v1270
      %v1275 = vld [vmem:[#allocation6 + $0x20] sm:$0xf]
      %v1276 = vld [vmem:[#allocation6 + $0x28] sm:$0xf]
      %v1277 = vunpack.c.l.bf16 %v1275
      %v1278 = vunpack.c.l.bf16 %v1276
      %v1279 = vlaneseq
      %v1280 = vshrl.u32 %v1279, 7
      %v1281 = vsub.s32 0, %v1280
      %v1282 = vrot.slane %v1274, %v1281
      %v1283 = vlaneseq
      %v1284 = vshrl.u32 %v1283, 7
      %v1285 = vsub.s32 0, %v1284
      %v1286 = vrot.slane %v1273, %v1285
      %v1287 = vmul.f32 %v1277, %v1282
      %v1288 = vmul.f32 %v1278, %v1286
      %v1289 = vpack.c.bf16 %v1287, %v1287
      %v1290 = vpack.c.bf16 %v1288, %v1288
      %1291 = vst [vmem:[#allocation6 + $0x20] sm:$0xf] %v1289
      %1292 = vst [vmem:[#allocation6 + $0x28] sm:$0xf] %v1290
      %1293 = vrot.lane.b32.xlu0 %v1218, 1
      %v1294 = vpop.permute.xlu0 %1293
      %1295 = vrot.lane.b32.xlu0 %v1220, 1
      %v1296 = vpop.permute.xlu0 %1295
      %v1297 = vsel %vm479, %v1294, %v1296
      %v1298 = vsel %vm479, %v1296, %v1294
      %v1299 = vld [vmem:[#allocation6 + $0x30] sm:$0xf]
      %v1300 = vld [vmem:[#allocation6 + $0x38] sm:$0xf]
      %v1301 = vunpack.c.l.bf16 %v1299
      %v1302 = vunpack.c.l.bf16 %v1300
      %v1303 = vlaneseq
      %v1304 = vshrl.u32 %v1303, 7
      %v1305 = vsub.s32 0, %v1304
      %v1306 = vrot.slane %v1298, %v1305
      %v1307 = vlaneseq
      %v1308 = vshrl.u32 %v1307, 7
      %v1309 = vsub.s32 0, %v1308
      %v1310 = vrot.slane %v1297, %v1309
      %v1311 = vmul.f32 %v1301, %v1306
      %v1312 = vmul.f32 %v1302, %v1310
      %v1313 = vpack.c.bf16 %v1311, %v1311
      %v1314 = vpack.c.bf16 %v1312, %v1312
      %1315 = vst [vmem:[#allocation6 + $0x30] sm:$0xf] %v1313
      %1316 = vst [vmem:[#allocation6 + $0x38] sm:$0xf] %v1314
      %v1317 = vld [vmem:[#allocation6 + $0x40] sm:$0xf]
      %v1318 = vld [vmem:[#allocation6 + $0x48] sm:$0xf]
      %v1319 = vunpack.c.l.bf16 %v1317
      %v1320 = vunpack.c.l.bf16 %v1318
      %v1321 = vlaneseq
      %v1322 = vshrl.u32 %v1321, 7
      %v1323 = vsub.s32 0, %v1322
      %v1324 = vrot.slane %v1218, %v1323
      %v1325 = vlaneseq
      %v1326 = vshrl.u32 %v1325, 7
      %v1327 = vsub.s32 0, %v1326
      %v1328 = vrot.slane %v1220, %v1327
      %v1329 = vmul.f32 %v1319, %v1324
      %v1330 = vmul.f32 %v1320, %v1328
      %v1331 = vpack.c.bf16 %v1329, %v1329
      %v1332 = vpack.c.bf16 %v1330, %v1330
      %1333 = vst [vmem:[#allocation6 + $0x40] sm:$0xf] %v1331
      %1334 = vst [vmem:[#allocation6 + $0x48] sm:$0xf] %v1332
      %1335 = vrot.lane.b32.xlu0 %v1218, 127
      %v1336 = vpop.permute.xlu0 %1335
      %1337 = vrot.lane.b32.xlu0 %v1220, 127
      %v1338 = vpop.permute.xlu0 %1337
      %v1339 = vsel %vm515, %v1336, %v1338
      %v1340 = vsel %vm515, %v1338, %v1336
      %v1341 = vld [vmem:[#allocation6 + $0x50] sm:$0xf]
      %v1342 = vld [vmem:[#allocation6 + $0x58] sm:$0xf]
      %v1343 = vunpack.c.l.bf16 %v1341
      %v1344 = vunpack.c.l.bf16 %v1342
      %v1345 = vlaneseq
      %v1346 = vshrl.u32 %v1345, 7
      %v1347 = vsub.s32 0, %v1346
      %v1348 = vrot.slane %v1339, %v1347
      %v1349 = vlaneseq
      %v1350 = vshrl.u32 %v1349, 7
      %v1351 = vsub.s32 0, %v1350
      %v1352 = vrot.slane %v1340, %v1351
      %v1353 = vmul.f32 %v1343, %v1348
      %v1354 = vmul.f32 %v1344, %v1352
      %v1355 = vpack.c.bf16 %v1353, %v1353
      %v1356 = vpack.c.bf16 %v1354, %v1354
      %1357 = vst [vmem:[#allocation6 + $0x50] sm:$0xf] %v1355
      %1358 = vst [vmem:[#allocation6 + $0x58] sm:$0xf] %v1356
      %1359 = vrot.lane.b32.xlu0 %v1218, 113
      %v1360 = vpop.permute.xlu0 %1359
      %1361 = vrot.lane.b32.xlu0 %v1220, 113
      %v1362 = vpop.permute.xlu0 %1361
      %v1363 = vsel %vm547, %v1360, %v1362
      %v1364 = vsel %vm547, %v1362, %v1360
      %v1365 = vld [vmem:[#allocation6 + $0x60] sm:$0xf]
      %v1366 = vld [vmem:[#allocation6 + $0x68] sm:$0xf]
      %v1367 = vunpack.c.l.bf16 %v1365
      %v1368 = vunpack.c.l.bf16 %v1366
      %v1369 = vlaneseq
      %v1370 = vshrl.u32 %v1369, 7
      %v1371 = vsub.s32 0, %v1370
      %v1372 = vrot.slane %v1363, %v1371
      %v1373 = vlaneseq
      %v1374 = vshrl.u32 %v1373, 7
      %v1375 = vsub.s32 0, %v1374
      %v1376 = vrot.slane %v1364, %v1375
      %v1377 = vmul.f32 %v1367, %v1372
      %v1378 = vmul.f32 %v1368, %v1376
      %v1379 = vpack.c.bf16 %v1377, %v1377
      %v1380 = vpack.c.bf16 %v1378, %v1378
      %1381 = vst [vmem:[#allocation6 + $0x60] sm:$0xf] %v1379
      %1382 = vst [vmem:[#allocation6 + $0x68] sm:$0xf] %v1380
      %1383 = vrot.lane.b32.xlu0 %v1218, 112
      %v1384 = vpop.permute.xlu0 %1383
      %1385 = vrot.lane.b32.xlu0 %v1220, 112
      %v1386 = vpop.permute.xlu0 %1385
      %v1387 = vsel %vm579, %v1384, %v1386
      %v1388 = vsel %vm579, %v1386, %v1384
      %v1389 = vld [vmem:[#allocation6 + $0x70] sm:$0xf]
      %v1390 = vld [vmem:[#allocation6 + $0x78] sm:$0xf]
      %v1391 = vunpack.c.l.bf16 %v1389
      %v1392 = vunpack.c.l.bf16 %v1390
      %v1393 = vlaneseq
      %v1394 = vshrl.u32 %v1393, 7
      %v1395 = vsub.s32 0, %v1394
      %v1396 = vrot.slane %v1387, %v1395
      %v1397 = vlaneseq
      %v1398 = vshrl.u32 %v1397, 7
      %v1399 = vsub.s32 0, %v1398
      %v1400 = vrot.slane %v1388, %v1399
      %v1401 = vmul.f32 %v1391, %v1396
      %v1402 = vmul.f32 %v1392, %v1400
      %v1403 = vpack.c.bf16 %v1401, %v1401
      %v1404 = vpack.c.bf16 %v1402, %v1402
      %1405 = vst [vmem:[#allocation6 + $0x70] sm:$0xf] %v1403
      %1406 = vst [vmem:[#allocation6 + $0x78] sm:$0xf] %v1404
      %1407 = vrot.lane.b32.xlu0 %v1218, 111
      %v1408 = vpop.permute.xlu0 %1407
      %1409 = vrot.lane.b32.xlu0 %v1220, 111
      %v1410 = vpop.permute.xlu0 %1409
      %v1411 = vsel %vm611, %v1408, %v1410
      %v1412 = vsel %vm611, %v1410, %v1408
      %v1413 = vld [vmem:[#allocation6 + $0x80] sm:$0xf]
      %v1414 = vld [vmem:[#allocation6 + $0x88] sm:$0xf]
      %v1415 = vunpack.c.l.bf16 %v1413
      %v1416 = vunpack.c.l.bf16 %v1414
      %v1417 = vlaneseq
      %v1418 = vshrl.u32 %v1417, 7
      %v1419 = vsub.s32 0, %v1418
      %v1420 = vrot.slane %v1411, %v1419
      %v1421 = vlaneseq
      %v1422 = vshrl.u32 %v1421, 7
      %v1423 = vsub.s32 0, %v1422
      %v1424 = vrot.slane %v1412, %v1423
      %v1425 = vmul.f32 %v1415, %v1420
      %v1426 = vmul.f32 %v1416, %v1424
      %v1427 = vpack.c.bf16 %v1425, %v1425
      %v1428 = vpack.c.bf16 %v1426, %v1426
      %1429 = vst [vmem:[#allocation6 + $0x80] sm:$0xf] %v1427
      %1430 = vst [vmem:[#allocation6 + $0x88] sm:$0xf] %v1428
      %v1431 = vld [vmem:[%s5] sm:$0xff]
      %v1432 = vld [vmem:[%s5 + $0x8] sm:$0xff]
      %v1433 = vld [vmem:[%s5 + $0x10] sm:$0xff]
      %v1434 = vld [vmem:[%s5 + $0x18] sm:$0xff]
      %v1435 = vld [vmem:[#allocation6] sm:$0xff]
      %v1436 = vld [vmem:[#allocation6 + $0x8] sm:$0xff]
      %v1437 = vld [vmem:[#allocation6 + $0x10] sm:$0xff]
      %v1438 = vld [vmem:[#allocation6 + $0x18] sm:$0xff]
      %v1439 = vld [vmem:[#allocation6 + $0x20] sm:$0xff]
      %v1440 = vld [vmem:[#allocation6 + $0x28] sm:$0xff]
      %v1441 = vld [vmem:[#allocation6 + $0x30] sm:$0xff]
      %v1442 = vld [vmem:[#allocation6 + $0x38] sm:$0xff]
      %v1443 = vld [vmem:[#allocation6 + $0x40] sm:$0xff]
      %v1444 = vld [vmem:[#allocation6 + $0x48] sm:$0xff]
      %v1445 = vld [vmem:[#allocation6 + $0x50] sm:$0xff]
      %v1446 = vld [vmem:[#allocation6 + $0x58] sm:$0xff]
      %v1447 = vld [vmem:[#allocation6 + $0x60] sm:$0xff]
      %v1448 = vld [vmem:[#allocation6 + $0x68] sm:$0xff]
      %v1449 = vld [vmem:[#allocation6 + $0x70] sm:$0xff]
      %v1450 = vld [vmem:[#allocation6 + $0x78] sm:$0xff]
      %v1451 = vld [vmem:[#allocation6 + $0x80] sm:$0xff]
      %v1452 = vld [vmem:[#allocation6 + $0x88] sm:$0xff]
      %v1453 = vld [vmem:[%s6] sm:$0xff]
      %v1454 = vld [vmem:[%s6 + $0x8] sm:$0xff]
      %v1455 = vld [vmem:[%s6 + $0x10] sm:$0xff]
      %v1456 = vld [vmem:[%s6 + $0x18] sm:$0xff]
      %1458 = vset.pattern.permute.xlu0 0
      %1459 = vperm.xlu0 %1458, %v1453
      %v1460 = vpop.permute.xlu0 %1459
      %1463 = vset.pattern.permute.xlu0 0
      %1464 = vperm.xlu0 %1463, %v1454
      %v1465 = vpop.permute.xlu0 %1464
      %1468 = vset.pattern.permute.xlu0 0
      %1469 = vperm.xlu0 %1468, %v1455
      %v1470 = vpop.permute.xlu0 %1469
      %1473 = vset.pattern.permute.xlu0 0
      %1474 = vperm.xlu0 %1473, %v1456
      %v1475 = vpop.permute.xlu0 %1474
      %v1481 = vunpack.c.l.b16 %v1431
      %v1482 = vunpack.c.h.b16 %v1431
      %v1483 = vunpack.c.l.b16 %v1432
      %v1484 = vunpack.c.h.b16 %v1432
      %v1485 = vunpack.c.l.b16 %v1433
      %v1486 = vunpack.c.h.b16 %v1433
      %v1487 = vunpack.c.l.b16 %v1434
      %v1488 = vunpack.c.h.b16 %v1434
      %v1489 = vpack.c.b16 %v1483, %v1481
      %v1490 = vpack.c.b16 %v1484, %v1482
      %v1491 = vpack.c.b16 %v1487, %v1485
      %v1492 = vpack.c.b16 %v1488, %v1486
      %v1496 = vsel %vm664, %v1490, 0
      %v1499 = vsel %vm664, %v1492, 0
      %1501 = vmatprep.subr.bf16.mxu0 %v1436
      %1502 = vmatpush1.bf16.msra.mxu0 %v1435
      %1503 = vmatprep.subr.bf16.mxu0 %v1438
      %1504 = vmatpush1.bf16.msra.mxu0 %v1437
      %1505 = vmatprep.subr.bf16.mxu0 %v1440
      %1506 = vmatpush1.bf16.msra.mxu0 %v1439
      %1507 = vmatprep.subr.bf16.mxu0 %v1442
      %1508 = vmatpush1.bf16.msra.mxu0 %v1441
      %1509 = vmatprep.subr.bf16.mxu0 %v1444
      %1510 = vmatpush1.bf16.msra.mxu0 %v1443
      %1511 = vmatprep.subr.bf16.mxu0 %v1446
      %1512 = vmatpush1.bf16.msra.mxu0 %v1445
      %1513 = vmatprep.subr.bf16.mxu0 %v1448
      %1514 = vmatpush1.bf16.msra.mxu0 %v1447
      %1515 = vmatprep.subr.bf16.mxu0 %v1450
      %1516 = vmatpush1.bf16.msra.mxu0 %v1449
      %1517 = vmatprep.subr.bf16.mxu0 %v1452
      %1518 = vmatpush1.bf16.msra.mxu0 %v1451
      %1519 = vmatprep.subr.bf16.mxu0 0
      %1520 = vmatpush1.bf16.msra.mxu0 0
      %1521 = vmatprep.subr.bf16.mxu0 0
      %1522 = vmatpush1.bf16.msra.mxu0 0
      %1523 = vmatprep.subr.bf16.mxu0 0
      %1524 = vmatpush1.bf16.msra.mxu0 0
      %1525 = vmatprep.subr.bf16.mxu0 0
      %1526 = vmatpush1.bf16.msra.mxu0 0
      %1527 = vmatprep.subr.bf16.mxu0 0
      %1528 = vmatpush1.bf16.msra.mxu0 0
      %1529 = vmatprep.subr.bf16.mxu0 0
      %1530 = vmatpush1.bf16.msra.mxu0 0
      %1531 = vmatprep.subr.bf16.mxu0 0
      %1532 = vmatpush1.bf16.msra.mxu0 0
      %1533 = vmatprep.mubr.bf16.mxu0 %v1496
      %1534 = vmatmul.mubr.bf16.gmra.mrb[0].mxu0 %v1489
      %v1535 = vpop.f32.mrb[0].mxu0
      %v1536 = vadd.f32 %v1460, %v1535
      %v1537 = vpop.f32.mrb[0].mxu0
      %v1538 = vadd.f32 %v1460, %v1537
      %v1539 = vpop.f32.mrb[0].mxu0
      %v1540 = vadd.f32 %v1465, %v1539
      %v1541 = vpop.f32.mrb[0].mxu0
      %v1542 = vadd.f32 %v1465, %v1541
      %1543 = vmatprep.mubr.bf16.mxu0 %v1499
      %1544 = vmatmul.mubr.bf16.gmra.mrb[0].mxu0 %v1491
      %v1545 = vpop.f32.mrb[0].mxu0
      %v1546 = vadd.f32 %v1470, %v1545
      %v1547 = vpop.f32.mrb[0].mxu0
      %v1548 = vadd.f32 %v1470, %v1547
      %v1549 = vpop.f32.mrb[0].mxu0
      %v1550 = vadd.f32 %v1475, %v1549
      %v1551 = vpop.f32.mrb[0].mxu0
      %v1552 = vadd.f32 %v1475, %v1551
      %1553 = vdwg.mxu0
      %v1554 = vld [vmem:[#allocation3] sm:$0xff]
      %v1555 = vld [vmem:[#allocation3 + $0x8] sm:$0xff]
      %v1556 = vxor.u32 %v1536, 2147483648
      %v1557 = vxor.u32 %v1538, 2147483648
      %v1558 = vmul.f32 %v1556, 1.442695
      %v1559 = vpow.pop %v1558
      %v1560 = vmul.f32 %v1557, 1.442695
      %v1561 = vpow.pop %v1560
      %v1562 = vadd.f32 %v1559, 1.0
      %v1563 = vadd.f32 %v1561, 1.0
      %v1564 = vrcp.pop %v1562
      %v1565 = vmul.f32 1.0, %v1564
      %v1566 = vrcp.pop %v1563
      %v1567 = vmul.f32 1.0, %v1566
      %v1568 = vxor.u32 %v1540, 2147483648
      %v1569 = vxor.u32 %v1542, 2147483648
      %v1570 = vmul.f32 %v1568, 1.442695
      %v1571 = vpow.pop %v1570
      %v1572 = vmul.f32 %v1569, 1.442695
      %v1573 = vpow.pop %v1572
      %v1574 = vadd.f32 %v1571, 1.0
      %v1575 = vadd.f32 %v1573, 1.0
      %v1576 = vrcp.pop %v1574
      %v1577 = vmul.f32 1.0, %v1576
      %v1578 = vrcp.pop %v1575
      %v1579 = vmul.f32 1.0, %v1578
      %v1580 = vmul.f32 %v1577, %v1554
      %v1581 = vmul.f32 %v1579, %v1555
      %v1582 = vtanh.pop %v1546
      %v1583 = vtanh.pop %v1548
      %v1584 = vmul.f32 %v1565, %v1582
      %v1585 = vmul.f32 %v1567, %v1583
      %v1586 = vadd.f32 %v1580, %v1584
      %v1587 = vadd.f32 %v1581, %v1585
      %v1588 = vxor.u32 %v1550, 2147483648
      %v1589 = vxor.u32 %v1552, 2147483648
      %v1590 = vmul.f32 %v1588, 1.442695
      %v1591 = vpow.pop %v1590
      %v1592 = vmul.f32 %v1589, 1.442695
      %v1593 = vpow.pop %v1592
      %v1594 = vadd.f32 %v1591, 1.0
      %v1595 = vadd.f32 %v1593, 1.0
      %v1596 = vrcp.pop %v1594
      %v1597 = vmul.f32 1.0, %v1596
      %v1598 = vrcp.pop %v1595
      %v1599 = vmul.f32 1.0, %v1598
      %v1600 = vtanh.pop %v1586
      %v1601 = vtanh.pop %v1587
      %v1602 = vmul.f32 %v1597, %v1600
      %v1603 = vmul.f32 %v1599, %v1601
      %1604 = vst [vmem:[#allocation3] sm:$0xff] %v1586
      %1605 = vst [vmem:[#allocation3 + $0x8] sm:$0xff] %v1587
      %1606 = vst [vmem:[#allocation2 + $0x10] sm:$0xff] %v1602
      %1607 = vst [vmem:[#allocation2 + $0x18] sm:$0xff] %v1603
      %1608 = vst [vmem:[#allocation4] sm:$0xff] %v1602
      %1609 = vst [vmem:[#allocation4 + $0x8] sm:$0xff] %v1603
      %v1610 = vld [vmem:[#allocation4] sm:$0xff]
      %v1611 = vld [vmem:[#allocation4 + $0x8] sm:$0xff]
      %v1612 = vld [vmem:[#allocation4 + $0x10] sm:$0xff]
      %v1613 = vld [vmem:[#allocation4 + $0x18] sm:$0xff]
      %1614 = vrot.lane.b32.xlu0 %v1610, 17
      %v1615 = vpop.permute.xlu0 %1614
      %1616 = vrot.lane.b32.xlu0 %v1612, 17
      %v1617 = vpop.permute.xlu0 %1616
      %1618 = vrot.lane.b32.xlu0 %v1611, 17
      %v1619 = vpop.permute.xlu0 %1618
      %1620 = vrot.lane.b32.xlu0 %v1613, 17
      %v1621 = vpop.permute.xlu0 %1620
      %v1622 = vsel %vm383, %v1615, %v1619
      %v1623 = vsel %vm383, %v1617, %v1621
      %v1624 = vsel %vm383, %v1619, %v1615
      %v1625 = vsel %vm383, %v1621, %v1617
      %v1626 = vmul.f32 %v1624, %v392
      %v1627 = vmul.f32 %v1622, %v396
      %v1628 = vmul.f32 %v1625, %v392
      %v1629 = vmul.f32 %v1623, %v396
      %v1630 = vpack.c.bf16 %v1628, %v1626
      %v1631 = vpack.c.bf16 %v1629, %v1627
      %1632 = vst [vmem:[#allocation7] sm:$0xff] %v1630
      %1633 = vst [vmem:[#allocation7 + $0x8] sm:$0xff] %v1631
      %1634 = vrot.lane.b32.xlu0 %v1610, 16
      %v1635 = vpop.permute.xlu0 %1634
      %1636 = vrot.lane.b32.xlu0 %v1612, 16
      %v1637 = vpop.permute.xlu0 %1636
      %1638 = vrot.lane.b32.xlu0 %v1611, 16
      %v1639 = vpop.permute.xlu0 %1638
      %1640 = vrot.lane.b32.xlu0 %v1613, 16
      %v1641 = vpop.permute.xlu0 %1640
      %v1642 = vsel %vm415, %v1635, %v1639
      %v1643 = vsel %vm415, %v1637, %v1641
      %v1644 = vsel %vm415, %v1639, %v1635
      %v1645 = vsel %vm415, %v1641, %v1637
      %v1646 = vmul.f32 %v1644, %v424
      %v1647 = vmul.f32 %v1642, %v428
      %v1648 = vmul.f32 %v1645, %v424
      %v1649 = vmul.f32 %v1643, %v428
      %v1650 = vpack.c.bf16 %v1648, %v1646
      %v1651 = vpack.c.bf16 %v1649, %v1647
      %1652 = vst [vmem:[#allocation7 + $0x10] sm:$0xff] %v1650
      %1653 = vst [vmem:[#allocation7 + $0x18] sm:$0xff] %v1651
      %1654 = vrot.lane.b32.xlu0 %v1610, 15
      %v1655 = vpop.permute.xlu0 %1654
      %1656 = vrot.lane.b32.xlu0 %v1612, 15
      %v1657 = vpop.permute.xlu0 %1656
      %1658 = vrot.lane.b32.xlu0 %v1611, 15
      %v1659 = vpop.permute.xlu0 %1658
      %1660 = vrot.lane.b32.xlu0 %v1613, 15
      %v1661 = vpop.permute.xlu0 %1660
      %v1662 = vsel %vm447, %v1655, %v1659
      %v1663 = vsel %vm447, %v1657, %v1661
      %v1664 = vsel %vm447, %v1659, %v1655
      %v1665 = vsel %vm447, %v1661, %v1657
      %v1666 = vmul.f32 %v1664, %v456
      %v1667 = vmul.f32 %v1662, %v460
      %v1668 = vmul.f32 %v1665, %v456
      %v1669 = vmul.f32 %v1663, %v460
      %v1670 = vpack.c.bf16 %v1668, %v1666
      %v1671 = vpack.c.bf16 %v1669, %v1667
      %1672 = vst [vmem:[#allocation7 + $0x20] sm:$0xff] %v1670
      %1673 = vst [vmem:[#allocation7 + $0x28] sm:$0xff] %v1671
      %1674 = vrot.lane.b32.xlu0 %v1610, 1
      %v1675 = vpop.permute.xlu0 %1674
      %1676 = vrot.lane.b32.xlu0 %v1612, 1
      %v1677 = vpop.permute.xlu0 %1676
      %1678 = vrot.lane.b32.xlu0 %v1611, 1
      %v1679 = vpop.permute.xlu0 %1678
      %1680 = vrot.lane.b32.xlu0 %v1613, 1
      %v1681 = vpop.permute.xlu0 %1680
      %v1682 = vsel %vm479, %v1675, %v1679
      %v1683 = vsel %vm479, %v1677, %v1681
      %v1684 = vsel %vm479, %v1679, %v1675
      %v1685 = vsel %vm479, %v1681, %v1677
      %v1686 = vmul.f32 %v1684, %v488
      %v1687 = vmul.f32 %v1682, %v492
      %v1688 = vmul.f32 %v1685, %v488
      %v1689 = vmul.f32 %v1683, %v492
      %v1690 = vpack.c.bf16 %v1688, %v1686
      %v1691 = vpack.c.bf16 %v1689, %v1687
      %1692 = vst [vmem:[#allocation7 + $0x30] sm:$0xff] %v1690
      %1693 = vst [vmem:[#allocation7 + $0x38] sm:$0xff] %v1691
      %v1694 = vpack.c.bf16 %v1612, %v1610
      %v1695 = vpack.c.bf16 %v1613, %v1611
      %1696 = vst [vmem:[#allocation7 + $0x40] sm:$0xff] %v1694
      %1697 = vst [vmem:[#allocation7 + $0x48] sm:$0xff] %v1695
      %1698 = vrot.lane.b32.xlu0 %v1610, 127
      %v1699 = vpop.permute.xlu0 %1698
      %1700 = vrot.lane.b32.xlu0 %v1612, 127
      %v1701 = vpop.permute.xlu0 %1700
      %1702 = vrot.lane.b32.xlu0 %v1611, 127
      %v1703 = vpop.permute.xlu0 %1702
      %1704 = vrot.lane.b32.xlu0 %v1613, 127
      %v1705 = vpop.permute.xlu0 %1704
      %v1706 = vsel %vm515, %v1699, %v1703
      %v1707 = vsel %vm515, %v1701, %v1705
      %v1708 = vsel %vm515, %v1703, %v1699
      %v1709 = vsel %vm515, %v1705, %v1701
      %v1710 = vmul.f32 %v1706, %v524
      %v1711 = vmul.f32 %v1708, %v528
      %v1712 = vmul.f32 %v1707, %v524
      %v1713 = vmul.f32 %v1709, %v528
      %v1714 = vpack.c.bf16 %v1712, %v1710
      %v1715 = vpack.c.bf16 %v1713, %v1711
      %1716 = vst [vmem:[#allocation7 + $0x50] sm:$0xff] %v1714
      %1717 = vst [vmem:[#allocation7 + $0x58] sm:$0xff] %v1715
      %1718 = vrot.lane.b32.xlu0 %v1610, 113
      %v1719 = vpop.permute.xlu0 %1718
      %1720 = vrot.lane.b32.xlu0 %v1612, 113
      %v1721 = vpop.permute.xlu0 %1720
      %1722 = vrot.lane.b32.xlu0 %v1611, 113
      %v1723 = vpop.permute.xlu0 %1722
      %1724 = vrot.lane.b32.xlu0 %v1613, 113
      %v1725 = vpop.permute.xlu0 %1724
      %v1726 = vsel %vm547, %v1719, %v1723
      %v1727 = vsel %vm547, %v1721, %v1725
      %v1728 = vsel %vm547, %v1723, %v1719
      %v1729 = vsel %vm547, %v1725, %v1721
      %v1730 = vmul.f32 %v1726, %v556
      %v1731 = vmul.f32 %v1728, %v560
      %v1732 = vmul.f32 %v1727, %v556
      %v1733 = vmul.f32 %v1729, %v560
      %v1734 = vpack.c.bf16 %v1732, %v1730
      %v1735 = vpack.c.bf16 %v1733, %v1731
      %1736 = vst [vmem:[#allocation7 + $0x60] sm:$0xff] %v1734
      %1737 = vst [vmem:[#allocation7 + $0x68] sm:$0xff] %v1735
      %1738 = vrot.lane.b32.xlu0 %v1610, 112
      %v1739 = vpop.permute.xlu0 %1738
      %1740 = vrot.lane.b32.xlu0 %v1612, 112
      %v1741 = vpop.permute.xlu0 %1740
      %1742 = vrot.lane.b32.xlu0 %v1611, 112
      %v1743 = vpop.permute.xlu0 %1742
      %1744 = vrot.lane.b32.xlu0 %v1613, 112
      %v1745 = vpop.permute.xlu0 %1744
      %v1746 = vsel %vm579, %v1739, %v1743
      %v1747 = vsel %vm579, %v1741, %v1745
      %v1748 = vsel %vm579, %v1743, %v1739
      %v1749 = vsel %vm579, %v1745, %v1741
      %v1750 = vmul.f32 %v1746, %v588
      %v1751 = vmul.f32 %v1748, %v592
      %v1752 = vmul.f32 %v1747, %v588
      %v1753 = vmul.f32 %v1749, %v592
      %v1754 = vpack.c.bf16 %v1752, %v1750
      %v1755 = vpack.c.bf16 %v1753, %v1751
      %1756 = vst [vmem:[#allocation7 + $0x70] sm:$0xff] %v1754
      %1757 = vst [vmem:[#allocation7 + $0x78] sm:$0xff] %v1755
      %1758 = vrot.lane.b32.xlu0 %v1610, 111
      %v1759 = vpop.permute.xlu0 %1758
      %1760 = vrot.lane.b32.xlu0 %v1612, 111
      %v1761 = vpop.permute.xlu0 %1760
      %1762 = vrot.lane.b32.xlu0 %v1611, 111
      %v1763 = vpop.permute.xlu0 %1762
      %1764 = vrot.lane.b32.xlu0 %v1613, 111
      %v1765 = vpop.permute.xlu0 %1764
      %v1766 = vsel %vm611, %v1759, %v1763
      %v1767 = vsel %vm611, %v1761, %v1765
      %v1768 = vsel %vm611, %v1763, %v1759
      %v1769 = vsel %vm611, %v1765, %v1761
      %v1770 = vmul.f32 %v1766, %v620
      %v1771 = vmul.f32 %v1768, %v624
      %v1772 = vmul.f32 %v1767, %v620
      %v1773 = vmul.f32 %v1769, %v624
      %v1774 = vpack.c.bf16 %v1772, %v1770
      %v1775 = vpack.c.bf16 %v1773, %v1771
      %1776 = vst [vmem:[#allocation7 + $0x80] sm:$0xff] %v1774
      %1777 = vst [vmem:[#allocation7 + $0x88] sm:$0xff] %v1775
      %v1778 = vld [vmem:[%s7] sm:$0xff]
      %v1779 = vld [vmem:[%s7 + $0x8] sm:$0xff]
      %v1780 = vld [vmem:[%s7 + $0x10] sm:$0xff]
      %v1781 = vld [vmem:[%s7 + $0x18] sm:$0xff]
      %v1782 = vld [vmem:[#allocation7] sm:$0xff]
      %v1783 = vld [vmem:[#allocation7 + $0x8] sm:$0xff]
      %v1784 = vld [vmem:[#allocation7 + $0x10] sm:$0xff]
      %v1785 = vld [vmem:[#allocation7 + $0x18] sm:$0xff]
      %v1786 = vld [vmem:[#allocation7 + $0x20] sm:$0xff]
      %v1787 = vld [vmem:[#allocation7 + $0x28] sm:$0xff]
      %v1788 = vld [vmem:[#allocation7 + $0x30] sm:$0xff]
      %v1789 = vld [vmem:[#allocation7 + $0x38] sm:$0xff]
      %v1790 = vld [vmem:[#allocation7 + $0x40] sm:$0xff]
      %v1791 = vld [vmem:[#allocation7 + $0x48] sm:$0xff]
      %v1792 = vld [vmem:[#allocation7 + $0x50] sm:$0xff]
      %v1793 = vld [vmem:[#allocation7 + $0x58] sm:$0xff]
      %v1794 = vld [vmem:[#allocation7 + $0x60] sm:$0xff]
      %v1795 = vld [vmem:[#allocation7 + $0x68] sm:$0xff]
      %v1796 = vld [vmem:[#allocation7 + $0x70] sm:$0xff]
      %v1797 = vld [vmem:[#allocation7 + $0x78] sm:$0xff]
      %v1798 = vld [vmem:[#allocation7 + $0x80] sm:$0xff]
      %v1799 = vld [vmem:[#allocation7 + $0x88] sm:$0xff]
      %v1800 = vld [vmem:[%s8] sm:$0xff]
      %v1801 = vld [vmem:[%s8 + $0x8] sm:$0xff]
      %v1802 = vld [vmem:[%s8 + $0x10] sm:$0xff]
      %v1803 = vld [vmem:[%s8 + $0x18] sm:$0xff]
      %1805 = vset.pattern.permute.xlu0 0
      %1806 = vperm.xlu0 %1805, %v1800
      %v1807 = vpop.permute.xlu0 %1806
      %1810 = vset.pattern.permute.xlu0 0
      %1811 = vperm.xlu0 %1810, %v1801
      %v1812 = vpop.permute.xlu0 %1811
      %1815 = vset.pattern.permute.xlu0 0
      %1816 = vperm.xlu0 %1815, %v1802
      %v1817 = vpop.permute.xlu0 %1816
      %1820 = vset.pattern.permute.xlu0 0
      %1821 = vperm.xlu0 %1820, %v1803
      %v1822 = vpop.permute.xlu0 %1821
      %v1828 = vunpack.c.l.b16 %v1778
      %v1829 = vunpack.c.h.b16 %v1778
      %v1830 = vunpack.c.l.b16 %v1779
      %v1831 = vunpack.c.h.b16 %v1779
      %v1832 = vunpack.c.l.b16 %v1780
      %v1833 = vunpack.c.h.b16 %v1780
      %v1834 = vunpack.c.l.b16 %v1781
      %v1835 = vunpack.c.h.b16 %v1781
      %v1836 = vpack.c.b16 %v1830, %v1828
      %v1837 = vpack.c.b16 %v1831, %v1829
      %v1838 = vpack.c.b16 %v1834, %v1832
      %v1839 = vpack.c.b16 %v1835, %v1833
      %v1843 = vsel %vm664, %v1837, 0
      %v1846 = vsel %vm664, %v1839, 0
      %1848 = vmatprep.subr.bf16.mxu0 %v1783
      %1849 = vmatpush1.bf16.msra.mxu0 %v1782
      %1850 = vmatprep.subr.bf16.mxu0 %v1785
      %1851 = vmatpush1.bf16.msra.mxu0 %v1784
      %1852 = vmatprep.subr.bf16.mxu0 %v1787
      %1853 = vmatpush1.bf16.msra.mxu0 %v1786
      %1854 = vmatprep.subr.bf16.mxu0 %v1789
      %1855 = vmatpush1.bf16.msra.mxu0 %v1788
      %1856 = vmatprep.subr.bf16.mxu0 %v1791
      %1857 = vmatpush1.bf16.msra.mxu0 %v1790
      %1858 = vmatprep.subr.bf16.mxu0 %v1793
      %1859 = vmatpush1.bf16.msra.mxu0 %v1792
      %1860 = vmatprep.subr.bf16.mxu0 %v1795
      %1861 = vmatpush1.bf16.msra.mxu0 %v1794
      %1862 = vmatprep.subr.bf16.mxu0 %v1797
      %1863 = vmatpush1.bf16.msra.mxu0 %v1796
      %1864 = vmatprep.subr.bf16.mxu0 %v1799
      %1865 = vmatpush1.bf16.msra.mxu0 %v1798
      %1866 = vmatprep.subr.bf16.mxu0 0
      %1867 = vmatpush1.bf16.msra.mxu0 0
      %1868 = vmatprep.subr.bf16.mxu0 0
      %1869 = vmatpush1.bf16.msra.mxu0 0
      %1870 = vmatprep.subr.bf16.mxu0 0
      %1871 = vmatpush1.bf16.msra.mxu0 0
      %1872 = vmatprep.subr.bf16.mxu0 0
      %1873 = vmatpush1.bf16.msra.mxu0 0
      %1874 = vmatprep.subr.bf16.mxu0 0
      %1875 = vmatpush1.bf16.msra.mxu0 0
      %1876 = vmatprep.subr.bf16.mxu0 0
      %1877 = vmatpush1.bf16.msra.mxu0 0
      %1878 = vmatprep.subr.bf16.mxu0 0
      %1879 = vmatpush1.bf16.msra.mxu0 0
      %1880 = vmatprep.mubr.bf16.mxu0 %v1843
      %1881 = vmatmul.mubr.bf16.gmra.mrb[0].mxu0 %v1836
      %v1882 = vpop.f32.mrb[0].mxu0
      %v1883 = vadd.f32 %v1807, %v1882
      %v1884 = vpop.f32.mrb[0].mxu0
      %v1885 = vadd.f32 %v1807, %v1884
      %v1886 = vpop.f32.mrb[0].mxu0
      %v1887 = vadd.f32 %v1812, %v1886
      %v1888 = vpop.f32.mrb[0].mxu0
      %v1889 = vadd.f32 %v1812, %v1888
      %1890 = vmatprep.mubr.bf16.mxu0 %v1846
      %1891 = vmatmul.mubr.bf16.gmra.mrb[0].mxu0 %v1838
      %v1892 = vpop.f32.mrb[0].mxu0
      %v1893 = vadd.f32 %v1817, %v1892
      %v1894 = vpop.f32.mrb[0].mxu0
      %v1895 = vadd.f32 %v1817, %v1894
      %v1896 = vpop.f32.mrb[0].mxu0
      %v1897 = vadd.f32 %v1822, %v1896
      %v1898 = vpop.f32.mrb[0].mxu0
      %v1899 = vadd.f32 %v1822, %v1898
      %1900 = vdwg.mxu0
      %v1901 = vld [vmem:[#allocation5] sm:$0xff]
      %v1902 = vld [vmem:[#allocation5 + $0x8] sm:$0xff]
      %v1903 = vxor.u32 %v1883, 2147483648
      %v1904 = vxor.u32 %v1885, 2147483648
      %v1905 = vmul.f32 %v1903, 1.442695
      %v1906 = vpow.pop %v1905
      %v1907 = vmul.f32 %v1904, 1.442695
      %v1908 = vpow.pop %v1907
      %v1909 = vadd.f32 %v1906, 1.0
      %v1910 = vadd.f32 %v1908, 1.0
      %v1911 = vrcp.pop %v1909
      %v1912 = vmul.f32 1.0, %v1911
      %v1913 = vrcp.pop %v1910
      %v1914 = vmul.f32 1.0, %v1913
      %v1915 = vxor.u32 %v1887, 2147483648
      %v1916 = vxor.u32 %v1889, 2147483648
      %v1917 = vmul.f32 %v1915, 1.442695
      %v1918 = vpow.pop %v1917
      %v1919 = vmul.f32 %v1916, 1.442695
      %v1920 = vpow.pop %v1919
      %v1921 = vadd.f32 %v1918, 1.0
      %v1922 = vadd.f32 %v1920, 1.0
      %v1923 = vrcp.pop %v1921
      %v1924 = vmul.f32 1.0, %v1923
      %v1925 = vrcp.pop %v1922
      %v1926 = vmul.f32 1.0, %v1925
      %v1927 = vmul.f32 %v1924, %v1901
      %v1928 = vmul.f32 %v1926, %v1902
      %v1929 = vtanh.pop %v1893
      %v1930 = vtanh.pop %v1895
      %v1931 = vmul.f32 %v1912, %v1929
      %v1932 = vmul.f32 %v1914, %v1930
      %v1933 = vadd.f32 %v1927, %v1931
      %v1934 = vadd.f32 %v1928, %v1932
      %v1935 = vxor.u32 %v1897, 2147483648
      %v1936 = vxor.u32 %v1899, 2147483648
      %v1937 = vmul.f32 %v1935, 1.442695
      %v1938 = vpow.pop %v1937
      %v1939 = vmul.f32 %v1936, 1.442695
      %v1940 = vpow.pop %v1939
      %v1941 = vadd.f32 %v1938, 1.0
      %v1942 = vadd.f32 %v1940, 1.0
      %v1943 = vrcp.pop %v1941
      %v1944 = vmul.f32 1.0, %v1943
      %v1945 = vrcp.pop %v1942
      %v1946 = vmul.f32 1.0, %v1945
      %v1947 = vtanh.pop %v1933
      %v1948 = vtanh.pop %v1934
      %v1949 = vmul.f32 %v1944, %v1947
      %v1950 = vmul.f32 %v1946, %v1948
      %1951 = vst [vmem:[#allocation5] sm:$0xff] %v1933
      %1952 = vst [vmem:[#allocation5 + $0x8] sm:$0xff] %v1934
      %1953 = vst [vmem:[#allocation4 + $0x10] sm:$0xff] %v1949
      %1954 = vst [vmem:[#allocation4 + $0x18] sm:$0xff] %v1950
      %v1955 = vld [vmem:[#allocation2] sm:$0xff]
      %v1956 = vld [vmem:[#allocation2 + $0x8] sm:$0xff]
      %v1957 = vld [vmem:[#allocation2 + $0x10] sm:$0xff]
      %v1958 = vld [vmem:[#allocation2 + $0x18] sm:$0xff]
      %1959 = vrot.lane.b32.xlu0 %v1955, 17
      %v1960 = vpop.permute.xlu0 %1959
      %1961 = vrot.lane.b32.xlu0 %v1957, 17
      %v1962 = vpop.permute.xlu0 %1961
      %1963 = vrot.lane.b32.xlu0 %v1956, 17
      %v1964 = vpop.permute.xlu0 %1963
      %1965 = vrot.lane.b32.xlu0 %v1958, 17
      %v1966 = vpop.permute.xlu0 %1965
      %v1967 = vsel %vm383, %v1960, %v1964
      %v1968 = vsel %vm383, %v1962, %v1966
      %v1969 = vsel %vm383, %v1964, %v1960
      %v1970 = vsel %vm383, %v1966, %v1962
      %v1971 = vmul.f32 %v1969, %v392
      %v1972 = vmul.f32 %v1967, %v396
      %v1973 = vmul.f32 %v1970, %v392
      %v1974 = vmul.f32 %v1968, %v396
      %v1975 = vpack.c.bf16 %v1973, %v1971
      %v1976 = vpack.c.bf16 %v1974, %v1972
      %1977 = vst [vmem:[#allocation6] sm:$0xff] %v1975
      %1978 = vst [vmem:[#allocation6 + $0x8] sm:$0xff] %v1976
      %1979 = vrot.lane.b32.xlu0 %v1955, 16
      %v1980 = vpop.permute.xlu0 %1979
      %1981 = vrot.lane.b32.xlu0 %v1957, 16
      %v1982 = vpop.permute.xlu0 %1981
      %1983 = vrot.lane.b32.xlu0 %v1956, 16
      %v1984 = vpop.permute.xlu0 %1983
      %1985 = vrot.lane.b32.xlu0 %v1958, 16
      %v1986 = vpop.permute.xlu0 %1985
      %v1987 = vsel %vm415, %v1980, %v1984
      %v1988 = vsel %vm415, %v1982, %v1986
      %v1989 = vsel %vm415, %v1984, %v1980
      %v1990 = vsel %vm415, %v1986, %v1982
      %v1991 = vmul.f32 %v1989, %v424
      %v1992 = vmul.f32 %v1987, %v428
      %v1993 = vmul.f32 %v1990, %v424
      %v1994 = vmul.f32 %v1988, %v428
      %v1995 = vpack.c.bf16 %v1993, %v1991
      %v1996 = vpack.c.bf16 %v1994, %v1992
      %1997 = vst [vmem:[#allocation6 + $0x10] sm:$0xff] %v1995
      %1998 = vst [vmem:[#allocation6 + $0x18] sm:$0xff] %v1996
      %1999 = vrot.lane.b32.xlu0 %v1955, 15
      %v2000 = vpop.permute.xlu0 %1999
      %2001 = vrot.lane.b32.xlu0 %v1957, 15
      %v2002 = vpop.permute.xlu0 %2001
      %2003 = vrot.lane.b32.xlu0 %v1956, 15
      %v2004 = vpop.permute.xlu0 %2003
      %2005 = vrot.lane.b32.xlu0 %v1958, 15
      %v2006 = vpop.permute.xlu0 %2005
      %v2007 = vsel %vm447, %v2000, %v2004
      %v2008 = vsel %vm447, %v2002, %v2006
      %v2009 = vsel %vm447, %v2004, %v2000
      %v2010 = vsel %vm447, %v2006, %v2002
      %v2011 = vmul.f32 %v2009, %v456
      %v2012 = vmul.f32 %v2007, %v460
      %v2013 = vmul.f32 %v2010, %v456
      %v2014 = vmul.f32 %v2008, %v460
      %v2015 = vpack.c.bf16 %v2013, %v2011
      %v2016 = vpack.c.bf16 %v2014, %v2012
      %2017 = vst [vmem:[#allocation6 + $0x20] sm:$0xff] %v2015
      %2018 = vst [vmem:[#allocation6 + $0x28] sm:$0xff] %v2016
      %2019 = vrot.lane.b32.xlu0 %v1955, 1
      %v2020 = vpop.permute.xlu0 %2019
      %2021 = vrot.lane.b32.xlu0 %v1957, 1
      %v2022 = vpop.permute.xlu0 %2021
      %2023 = vrot.lane.b32.xlu0 %v1956, 1
      %v2024 = vpop.permute.xlu0 %2023
      %2025 = vrot.lane.b32.xlu0 %v1958, 1
      %v2026 = vpop.permute.xlu0 %2025
      %v2027 = vsel %vm479, %v2020, %v2024
      %v2028 = vsel %vm479, %v2022, %v2026
      %v2029 = vsel %vm479, %v2024, %v2020
      %v2030 = vsel %vm479, %v2026, %v2022
      %v2031 = vmul.f32 %v2029, %v488
      %v2032 = vmul.f32 %v2027, %v492
      %v2033 = vmul.f32 %v2030, %v488
      %v2034 = vmul.f32 %v2028, %v492
      %v2035 = vpack.c.bf16 %v2033, %v2031
      %v2036 = vpack.c.bf16 %v2034, %v2032
      %2037 = vst [vmem:[#allocation6 + $0x30] sm:$0xff] %v2035
      %2038 = vst [vmem:[#allocation6 + $0x38] sm:$0xff] %v2036
      %v2039 = vpack.c.bf16 %v1957, %v1955
      %v2040 = vpack.c.bf16 %v1958, %v1956
      %2041 = vst [vmem:[#allocation6 + $0x40] sm:$0xff] %v2039
      %2042 = vst [vmem:[#allocation6 + $0x48] sm:$0xff] %v2040
      %2043 = vrot.lane.b32.xlu0 %v1955, 127
      %v2044 = vpop.permute.xlu0 %2043
      %2045 = vrot.lane.b32.xlu0 %v1957, 127
      %v2046 = vpop.permute.xlu0 %2045
      %2047 = vrot.lane.b32.xlu0 %v1956, 127
      %v2048 = vpop.permute.xlu0 %2047
      %2049 = vrot.lane.b32.xlu0 %v1958, 127
      %v2050 = vpop.permute.xlu0 %2049
      %v2051 = vsel %vm515, %v2044, %v2048
      %v2052 = vsel %vm515, %v2046, %v2050
      %v2053 = vsel %vm515, %v2048, %v2044
      %v2054 = vsel %vm515, %v2050, %v2046
      %v2055 = vmul.f32 %v2051, %v524
      %v2056 = vmul.f32 %v2053, %v528
      %v2057 = vmul.f32 %v2052, %v524
      %v2058 = vmul.f32 %v2054, %v528
      %v2059 = vpack.c.bf16 %v2057, %v2055
      %v2060 = vpack.c.bf16 %v2058, %v2056
      %2061 = vst [vmem:[#allocation6 + $0x50] sm:$0xff] %v2059
      %2062 = vst [vmem:[#allocation6 + $0x58] sm:$0xff] %v2060
      %2063 = vrot.lane.b32.xlu0 %v1955, 113
      %v2064 = vpop.permute.xlu0 %2063
      %2065 = vrot.lane.b32.xlu0 %v1957, 113
      %v2066 = vpop.permute.xlu0 %2065
      %2067 = vrot.lane.b32.xlu0 %v1956, 113
      %v2068 = vpop.permute.xlu0 %2067
      %2069 = vrot.lane.b32.xlu0 %v1958, 113
      %v2070 = vpop.permute.xlu0 %2069
      %v2071 = vsel %vm547, %v2064, %v2068
      %v2072 = vsel %vm547, %v2066, %v2070
      %v2073 = vsel %vm547, %v2068, %v2064
      %v2074 = vsel %vm547, %v2070, %v2066
      %v2075 = vmul.f32 %v2071, %v556
      %v2076 = vmul.f32 %v2073, %v560
      %v2077 = vmul.f32 %v2072, %v556
      %v2078 = vmul.f32 %v2074, %v560
      %v2079 = vpack.c.bf16 %v2077, %v2075
      %v2080 = vpack.c.bf16 %v2078, %v2076
      %2081 = vst [vmem:[#allocation6 + $0x60] sm:$0xff] %v2079
      %2082 = vst [vmem:[#allocation6 + $0x68] sm:$0xff] %v2080
      %2083 = vrot.lane.b32.xlu0 %v1955, 112
      %v2084 = vpop.permute.xlu0 %2083
      %2085 = vrot.lane.b32.xlu0 %v1957, 112
      %v2086 = vpop.permute.xlu0 %2085
      %2087 = vrot.lane.b32.xlu0 %v1956, 112
      %v2088 = vpop.permute.xlu0 %2087
      %2089 = vrot.lane.b32.xlu0 %v1958, 112
      %v2090 = vpop.permute.xlu0 %2089
      %v2091 = vsel %vm579, %v2084, %v2088
      %v2092 = vsel %vm579, %v2086, %v2090
      %v2093 = vsel %vm579, %v2088, %v2084
      %v2094 = vsel %vm579, %v2090, %v2086
      %v2095 = vmul.f32 %v2091, %v588
      %v2096 = vmul.f32 %v2093, %v592
      %v2097 = vmul.f32 %v2092, %v588
      %v2098 = vmul.f32 %v2094, %v592
      %v2099 = vpack.c.bf16 %v2097, %v2095
      %v2100 = vpack.c.bf16 %v2098, %v2096
      %2101 = vst [vmem:[#allocation6 + $0x70] sm:$0xff] %v2099
      %2102 = vst [vmem:[#allocation6 + $0x78] sm:$0xff] %v2100
      %2103 = vrot.lane.b32.xlu0 %v1955, 111
      %v2104 = vpop.permute.xlu0 %2103
      %2105 = vrot.lane.b32.xlu0 %v1957, 111
      %v2106 = vpop.permute.xlu0 %2105
      %2107 = vrot.lane.b32.xlu0 %v1956, 111
      %v2108 = vpop.permute.xlu0 %2107
      %2109 = vrot.lane.b32.xlu0 %v1958, 111
      %v2110 = vpop.permute.xlu0 %2109
      %v2111 = vsel %vm611, %v2104, %v2108
      %v2112 = vsel %vm611, %v2106, %v2110
      %v2113 = vsel %vm611, %v2108, %v2104
      %v2114 = vsel %vm611, %v2110, %v2106
      %v2115 = vmul.f32 %v2111, %v620
      %v2116 = vmul.f32 %v2113, %v624
      %v2117 = vmul.f32 %v2112, %v620
      %v2118 = vmul.f32 %v2114, %v624
      %v2119 = vpack.c.bf16 %v2117, %v2115
      %v2120 = vpack.c.bf16 %v2118, %v2116
      %2121 = vst [vmem:[#allocation6 + $0x80] sm:$0xff] %v2119
      %2122 = vst [vmem:[#allocation6 + $0x88] sm:$0xff] %v2120
      %v2123 = vld [vmem:[%s2] sm:$0xff]
      %v2124 = vld [vmem:[%s2 + $0x8] sm:$0xff]
      %v2125 = vld [vmem:[#allocation6] sm:$0xff]
      %v2126 = vld [vmem:[#allocation6 + $0x8] sm:$0xff]
      %v2127 = vld [vmem:[#allocation6 + $0x10] sm:$0xff]
      %v2128 = vld [vmem:[#allocation6 + $0x18] sm:$0xff]
      %v2129 = vld [vmem:[#allocation6 + $0x20] sm:$0xff]
      %v2130 = vld [vmem:[#allocation6 + $0x28] sm:$0xff]
      %v2131 = vld [vmem:[#allocation6 + $0x30] sm:$0xff]
      %v2132 = vld [vmem:[#allocation6 + $0x38] sm:$0xff]
      %v2133 = vld [vmem:[#allocation6 + $0x40] sm:$0xff]
      %v2134 = vld [vmem:[#allocation6 + $0x48] sm:$0xff]
      %v2135 = vld [vmem:[#allocation6 + $0x50] sm:$0xff]
      %v2136 = vld [vmem:[#allocation6 + $0x58] sm:$0xff]
      %v2137 = vld [vmem:[#allocation6 + $0x60] sm:$0xff]
      %v2138 = vld [vmem:[#allocation6 + $0x68] sm:$0xff]
      %v2139 = vld [vmem:[#allocation6 + $0x70] sm:$0xff]
      %v2140 = vld [vmem:[#allocation6 + $0x78] sm:$0xff]
      %v2141 = vld [vmem:[#allocation6 + $0x80] sm:$0xff]
      %v2142 = vld [vmem:[#allocation6 + $0x88] sm:$0xff]
      %v2145 = vunpack.c.l.b16 %v2123
      %v2146 = vunpack.c.h.b16 %v2123
      %v2147 = vunpack.c.l.b16 %v2124
      %v2148 = vunpack.c.h.b16 %v2124
      %v2149 = vpack.c.b16 %v2147, %v2145
      %v2150 = vpack.c.b16 %v2148, %v2146
      %v2153 = vsel %vm664, %v2150, 0
      %2155 = vmatprep.subr.bf16.mxu0 %v2126
      %2156 = vmatpush1.bf16.msra.mxu0 %v2125
      %2157 = vmatprep.subr.bf16.mxu0 %v2128
      %2158 = vmatpush1.bf16.msra.mxu0 %v2127
      %2159 = vmatprep.subr.bf16.mxu0 %v2130
      %2160 = vmatpush1.bf16.msra.mxu0 %v2129
      %2161 = vmatprep.subr.bf16.mxu0 %v2132
      %2162 = vmatpush1.bf16.msra.mxu0 %v2131
      %2163 = vmatprep.subr.bf16.mxu0 %v2134
      %2164 = vmatpush1.bf16.msra.mxu0 %v2133
      %2165 = vmatprep.subr.bf16.mxu0 %v2136
      %2166 = vmatpush1.bf16.msra.mxu0 %v2135
      %2167 = vmatprep.subr.bf16.mxu0 %v2138
      %2168 = vmatpush1.bf16.msra.mxu0 %v2137
      %2169 = vmatprep.subr.bf16.mxu0 %v2140
      %2170 = vmatpush1.bf16.msra.mxu0 %v2139
      %2171 = vmatprep.subr.bf16.mxu0 %v2142
      %2172 = vmatpush1.bf16.msra.mxu0 %v2141
      %2173 = vmatprep.subr.bf16.mxu0 0
      %2174 = vmatpush1.bf16.msra.mxu0 0
      %2175 = vmatprep.subr.bf16.mxu0 0
      %2176 = vmatpush1.bf16.msra.mxu0 0
      %2177 = vmatprep.subr.bf16.mxu0 0
      %2178 = vmatpush1.bf16.msra.mxu0 0
      %2179 = vmatprep.subr.bf16.mxu0 0
      %2180 = vmatpush1.bf16.msra.mxu0 0
      %2181 = vmatprep.subr.bf16.mxu0 0
      %2182 = vmatpush1.bf16.msra.mxu0 0
      %2183 = vmatprep.subr.bf16.mxu0 0
      %2184 = vmatpush1.bf16.msra.mxu0 0
      %2185 = vmatprep.subr.bf16.mxu0 0
      %2186 = vmatpush1.bf16.msra.mxu0 0
      %2187 = vmatprep.mubr.bf16.mxu0 %v2153
      %2188 = vmatmul.mubr.bf16.gmra.mrb[0].mxu0 %v2149
      %v2189 = vpop.f32.mrb[0].mxu0
      %v2190 = vadd.f32 0.0, %v2189
      %v2191 = vpop.f32.mrb[0].mxu0
      %v2192 = vadd.f32 0.0, %v2191
      %v2193 = vpop.f32.mrb[0].mxu0
      %v2194 = vadd.f32 0.0, %v2193
      %v2195 = vpop.f32.mrb[0].mxu0
      %v2196 = vadd.f32 0.0, %v2195
      %2197 = vdwg.mxu0
      %v2198 = vmax.f32 %v2190, 0.0
      %v2199 = vmax.f32 %v2192, 0.0
      %v2200 = vmax.f32 %v2194, 0.0
      %v2201 = vmax.f32 %v2196, 0.0
      %2202 = vrot.lane.b32.xlu0 %v2198, 17
      %v2203 = vpop.permute.xlu0 %2202
      %2204 = vrot.lane.b32.xlu0 %v2200, 17
      %v2205 = vpop.permute.xlu0 %2204
      %2206 = vrot.lane.b32.xlu0 %v2199, 17
      %v2207 = vpop.permute.xlu0 %2206
      %2208 = vrot.lane.b32.xlu0 %v2201, 17
      %v2209 = vpop.permute.xlu0 %2208
      %v2210 = vsel %vm383, %v2203, %v2207
      %v2211 = vsel %vm383, %v2205, %v2209
      %v2212 = vsel %vm383, %v2207, %v2203
      %v2213 = vsel %vm383, %v2209, %v2205
      %v2214 = vmul.f32 %v2212, %v392
      %v2215 = vmul.f32 %v2210, %v396
      %v2216 = vmul.f32 %v2213, %v392
      %v2217 = vmul.f32 %v2211, %v396
      %v2218 = vpack.c.bf16 %v2216, %v2214
      %v2219 = vpack.c.bf16 %v2217, %v2215
      %2220 = vst [vmem:[#allocation7] sm:$0xff] %v2218
      %2221 = vst [vmem:[#allocation7 + $0x8] sm:$0xff] %v2219
      %2222 = vrot.lane.b32.xlu0 %v2198, 16
      %v2223 = vpop.permute.xlu0 %2222
      %2224 = vrot.lane.b32.xlu0 %v2200, 16
      %v2225 = vpop.permute.xlu0 %2224
      %2226 = vrot.lane.b32.xlu0 %v2199, 16
      %v2227 = vpop.permute.xlu0 %2226
      %2228 = vrot.lane.b32.xlu0 %v2201, 16
      %v2229 = vpop.permute.xlu0 %2228
      %v2230 = vsel %vm415, %v2223, %v2227
      %v2231 = vsel %vm415, %v2225, %v2229
      %v2232 = vsel %vm415, %v2227, %v2223
      %v2233 = vsel %vm415, %v2229, %v2225
      %v2234 = vmul.f32 %v2232, %v424
      %v2235 = vmul.f32 %v2230, %v428
      %v2236 = vmul.f32 %v2233, %v424
      %v2237 = vmul.f32 %v2231, %v428
      %v2238 = vpack.c.bf16 %v2236, %v2234
      %v2239 = vpack.c.bf16 %v2237, %v2235
      %2240 = vst [vmem:[#allocation7 + $0x10] sm:$0xff] %v2238
      %2241 = vst [vmem:[#allocation7 + $0x18] sm:$0xff] %v2239
      %2242 = vrot.lane.b32.xlu0 %v2198, 15
      %v2243 = vpop.permute.xlu0 %2242
      %2244 = vrot.lane.b32.xlu0 %v2200, 15
      %v2245 = vpop.permute.xlu0 %2244
      %2246 = vrot.lane.b32.xlu0 %v2199, 15
      %v2247 = vpop.permute.xlu0 %2246
      %2248 = vrot.lane.b32.xlu0 %v2201, 15
      %v2249 = vpop.permute.xlu0 %2248
      %v2250 = vsel %vm447, %v2243, %v2247
      %v2251 = vsel %vm447, %v2245, %v2249
      %v2252 = vsel %vm447, %v2247, %v2243
      %v2253 = vsel %vm447, %v2249, %v2245
      %v2254 = vmul.f32 %v2252, %v456
      %v2255 = vmul.f32 %v2250, %v460
      %v2256 = vmul.f32 %v2253, %v456
      %v2257 = vmul.f32 %v2251, %v460
      %v2258 = vpack.c.bf16 %v2256, %v2254
      %v2259 = vpack.c.bf16 %v2257, %v2255
      %2260 = vst [vmem:[#allocation7 + $0x20] sm:$0xff] %v2258
      %2261 = vst [vmem:[#allocation7 + $0x28] sm:$0xff] %v2259
      %2262 = vrot.lane.b32.xlu0 %v2198, 1
      %v2263 = vpop.permute.xlu0 %2262
      %2264 = vrot.lane.b32.xlu0 %v2200, 1
      %v2265 = vpop.permute.xlu0 %2264
      %2266 = vrot.lane.b32.xlu0 %v2199, 1
      %v2267 = vpop.permute.xlu0 %2266
      %2268 = vrot.lane.b32.xlu0 %v2201, 1
      %v2269 = vpop.permute.xlu0 %2268
      %v2270 = vsel %vm479, %v2263, %v2267
      %v2271 = vsel %vm479, %v2265, %v2269
      %v2272 = vsel %vm479, %v2267, %v2263
      %v2273 = vsel %vm479, %v2269, %v2265
      %v2274 = vmul.f32 %v2272, %v488
      %v2275 = vmul.f32 %v2270, %v492
      %v2276 = vmul.f32 %v2273, %v488
      %v2277 = vmul.f32 %v2271, %v492
      %v2278 = vpack.c.bf16 %v2276, %v2274
      %v2279 = vpack.c.bf16 %v2277, %v2275
      %2280 = vst [vmem:[#allocation7 + $0x30] sm:$0xff] %v2278
      %2281 = vst [vmem:[#allocation7 + $0x38] sm:$0xff] %v2279
      %v2282 = vpack.c.bf16 %v2200, %v2198
      %v2283 = vpack.c.bf16 %v2201, %v2199
      %2284 = vst [vmem:[#allocation7 + $0x40] sm:$0xff] %v2282
      %2285 = vst [vmem:[#allocation7 + $0x48] sm:$0xff] %v2283
      %2286 = vrot.lane.b32.xlu0 %v2198, 127
      %v2287 = vpop.permute.xlu0 %2286
      %2288 = vrot.lane.b32.xlu0 %v2200, 127
      %v2289 = vpop.permute.xlu0 %2288
      %2290 = vrot.lane.b32.xlu0 %v2199, 127
      %v2291 = vpop.permute.xlu0 %2290
      %2292 = vrot.lane.b32.xlu0 %v2201, 127
      %v2293 = vpop.permute.xlu0 %2292
      %v2294 = vsel %vm515, %v2287, %v2291
      %v2295 = vsel %vm515, %v2289, %v2293
      %v2296 = vsel %vm515, %v2291, %v2287
      %v2297 = vsel %vm515, %v2293, %v2289
      %v2298 = vmul.f32 %v2294, %v524
      %v2299 = vmul.f32 %v2296, %v528
      %v2300 = vmul.f32 %v2295, %v524
      %v2301 = vmul.f32 %v2297, %v528
      %v2302 = vpack.c.bf16 %v2300, %v2298
      %v2303 = vpack.c.bf16 %v2301, %v2299
      %2304 = vst [vmem:[#allocation7 + $0x50] sm:$0xff] %v2302
      %2305 = vst [vmem:[#allocation7 + $0x58] sm:$0xff] %v2303
      %2306 = vrot.lane.b32.xlu0 %v2198, 113
      %v2307 = vpop.permute.xlu0 %2306
      %2308 = vrot.lane.b32.xlu0 %v2200, 113
      %v2309 = vpop.permute.xlu0 %2308
      %2310 = vrot.lane.b32.xlu0 %v2199, 113
      %v2311 = vpop.permute.xlu0 %2310
      %2312 = vrot.lane.b32.xlu0 %v2201, 113
      %v2313 = vpop.permute.xlu0 %2312
      %v2314 = vsel %vm547, %v2307, %v2311
      %v2315 = vsel %vm547, %v2309, %v2313
      %v2316 = vsel %vm547, %v2311, %v2307
      %v2317 = vsel %vm547, %v2313, %v2309
      %v2318 = vmul.f32 %v2314, %v556
      %v2319 = vmul.f32 %v2316, %v560
      %v2320 = vmul.f32 %v2315, %v556
      %v2321 = vmul.f32 %v2317, %v560
      %v2322 = vpack.c.bf16 %v2320, %v2318
      %v2323 = vpack.c.bf16 %v2321, %v2319
      %2324 = vst [vmem:[#allocation7 + $0x60] sm:$0xff] %v2322
      %2325 = vst [vmem:[#allocation7 + $0x68] sm:$0xff] %v2323
      %2326 = vrot.lane.b32.xlu0 %v2198, 112
      %v2327 = vpop.permute.xlu0 %2326
      %2328 = vrot.lane.b32.xlu0 %v2200, 112
      %v2329 = vpop.permute.xlu0 %2328
      %2330 = vrot.lane.b32.xlu0 %v2199, 112
      %v2331 = vpop.permute.xlu0 %2330
      %2332 = vrot.lane.b32.xlu0 %v2201, 112
      %v2333 = vpop.permute.xlu0 %2332
      %v2334 = vsel %vm579, %v2327, %v2331
      %v2335 = vsel %vm579, %v2329, %v2333
      %v2336 = vsel %vm579, %v2331, %v2327
      %v2337 = vsel %vm579, %v2333, %v2329
      %v2338 = vmul.f32 %v2334, %v588
      %v2339 = vmul.f32 %v2336, %v592
      %v2340 = vmul.f32 %v2335, %v588
      %v2341 = vmul.f32 %v2337, %v592
      %v2342 = vpack.c.bf16 %v2340, %v2338
      %v2343 = vpack.c.bf16 %v2341, %v2339
      %2344 = vst [vmem:[#allocation7 + $0x70] sm:$0xff] %v2342
      %2345 = vst [vmem:[#allocation7 + $0x78] sm:$0xff] %v2343
      %2346 = vrot.lane.b32.xlu0 %v2198, 111
      %v2347 = vpop.permute.xlu0 %2346
      %2348 = vrot.lane.b32.xlu0 %v2200, 111
      %v2349 = vpop.permute.xlu0 %2348
      %2350 = vrot.lane.b32.xlu0 %v2199, 111
      %v2351 = vpop.permute.xlu0 %2350
      %2352 = vrot.lane.b32.xlu0 %v2201, 111
      %v2353 = vpop.permute.xlu0 %2352
      %v2354 = vsel %vm611, %v2347, %v2351
      %v2355 = vsel %vm611, %v2349, %v2353
      %v2356 = vsel %vm611, %v2351, %v2347
      %v2357 = vsel %vm611, %v2353, %v2349
      %v2358 = vmul.f32 %v2354, %v620
      %v2359 = vmul.f32 %v2356, %v624
      %v2360 = vmul.f32 %v2355, %v620
      %v2361 = vmul.f32 %v2357, %v624
      %v2362 = vpack.c.bf16 %v2360, %v2358
      %v2363 = vpack.c.bf16 %v2361, %v2359
      %2364 = vst [vmem:[#allocation7 + $0x80] sm:$0xff] %v2362
      %2365 = vst [vmem:[#allocation7 + $0x88] sm:$0xff] %v2363
      %v2366 = vld [vmem:[%s3] sm:$0xff]
      %v2367 = vld [vmem:[%s3 + $0x8] sm:$0xff]
      %v2368 = vld [vmem:[#allocation7] sm:$0xff]
      %v2369 = vld [vmem:[#allocation7 + $0x8] sm:$0xff]
      %v2370 = vld [vmem:[#allocation7 + $0x10] sm:$0xff]
      %v2371 = vld [vmem:[#allocation7 + $0x18] sm:$0xff]
      %v2372 = vld [vmem:[#allocation7 + $0x20] sm:$0xff]
      %v2373 = vld [vmem:[#allocation7 + $0x28] sm:$0xff]
      %v2374 = vld [vmem:[#allocation7 + $0x30] sm:$0xff]
      %v2375 = vld [vmem:[#allocation7 + $0x38] sm:$0xff]
      %v2376 = vld [vmem:[#allocation7 + $0x40] sm:$0xff]
      %v2377 = vld [vmem:[#allocation7 + $0x48] sm:$0xff]
      %v2378 = vld [vmem:[#allocation7 + $0x50] sm:$0xff]
      %v2379 = vld [vmem:[#allocation7 + $0x58] sm:$0xff]
      %v2380 = vld [vmem:[#allocation7 + $0x60] sm:$0xff]
      %v2381 = vld [vmem:[#allocation7 + $0x68] sm:$0xff]
      %v2382 = vld [vmem:[#allocation7 + $0x70] sm:$0xff]
      %v2383 = vld [vmem:[#allocation7 + $0x78] sm:$0xff]
      %v2384 = vld [vmem:[#allocation7 + $0x80] sm:$0xff]
      %v2385 = vld [vmem:[#allocation7 + $0x88] sm:$0xff]
      %v2388 = vunpack.c.l.b16 %v2366
      %v2389 = vunpack.c.h.b16 %v2366
      %v2390 = vunpack.c.l.b16 %v2367
      %v2391 = vunpack.c.h.b16 %v2367
      %v2392 = vpack.c.b16 %v2390, %v2388
      %v2393 = vpack.c.b16 %v2391, %v2389
      %v2396 = vsel %vm664, %v2393, 0
      %2398 = vmatprep.subr.bf16.mxu0 %v2369
      %2399 = vmatpush1.bf16.msra.mxu0 %v2368
      %2400 = vmatprep.subr.bf16.mxu0 %v2371
      %2401 = vmatpush1.bf16.msra.mxu0 %v2370
      %2402 = vmatprep.subr.bf16.mxu0 %v2373
      %2403 = vmatpush1.bf16.msra.mxu0 %v2372
      %2404 = vmatprep.subr.bf16.mxu0 %v2375
      %2405 = vmatpush1.bf16.msra.mxu0 %v2374
      %2406 = vmatprep.subr.bf16.mxu0 %v2377
      %2407 = vmatpush1.bf16.msra.mxu0 %v2376
      %2408 = vmatprep.subr.bf16.mxu0 %v2379
      %2409 = vmatpush1.bf16.msra.mxu0 %v2378
      %2410 = vmatprep.subr.bf16.mxu0 %v2381
      %2411 = vmatpush1.bf16.msra.mxu0 %v2380
      %2412 = vmatprep.subr.bf16.mxu0 %v2383
      %2413 = vmatpush1.bf16.msra.mxu0 %v2382
      %2414 = vmatprep.subr.bf16.mxu0 %v2385
      %2415 = vmatpush1.bf16.msra.mxu0 %v2384
      %2416 = vmatprep.subr.bf16.mxu0 0
      %2417 = vmatpush1.bf16.msra.mxu0 0
      %2418 = vmatprep.subr.bf16.mxu0 0
      %2419 = vmatpush1.bf16.msra.mxu0 0
      %2420 = vmatprep.subr.bf16.mxu0 0
      %2421 = vmatpush1.bf16.msra.mxu0 0
      %2422 = vmatprep.subr.bf16.mxu0 0
      %2423 = vmatpush1.bf16.msra.mxu0 0
      %2424 = vmatprep.subr.bf16.mxu0 0
      %2425 = vmatpush1.bf16.msra.mxu0 0
      %2426 = vmatprep.subr.bf16.mxu0 0
      %2427 = vmatpush1.bf16.msra.mxu0 0
      %2428 = vmatprep.subr.bf16.mxu0 0
      %2429 = vmatpush1.bf16.msra.mxu0 0
      %2430 = vmatprep.mubr.bf16.mxu0 %v2396
      %2431 = vmatmul.mubr.bf16.gmra.mrb[0].mxu0 %v2392
      %v2432 = vpop.f32.mrb[0].mxu0
      %v2433 = vadd.f32 0.0, %v2432
      %v2434 = vpop.f32.mrb[0].mxu0
      %v2435 = vadd.f32 0.0, %v2434
      %v2436 = vpop.f32.mrb[0].mxu0
      %v2437 = vadd.f32 0.0, %v2436
      %v2438 = vpop.f32.mrb[0].mxu0
      %v2439 = vadd.f32 0.0, %v2438
      %2440 = vdwg.mxu0
      %v2441 = vmax.f32 %v2433, 0.0
      %v2442 = vmax.f32 %v2435, 0.0
      %v2443 = vmax.f32 %v2437, 0.0
      %v2444 = vmax.f32 %v2439, 0.0
      %2445 = vrot.lane.b32.xlu0 %v2441, 17
      %v2446 = vpop.permute.xlu0 %2445
      %2447 = vrot.lane.b32.xlu0 %v2443, 17
      %v2448 = vpop.permute.xlu0 %2447
      %2449 = vrot.lane.b32.xlu0 %v2442, 17
      %v2450 = vpop.permute.xlu0 %2449
      %2451 = vrot.lane.b32.xlu0 %v2444, 17
      %v2452 = vpop.permute.xlu0 %2451
      %v2453 = vsel %vm383, %v2446, %v2450
      %v2454 = vsel %vm383, %v2448, %v2452
      %v2455 = vsel %vm383, %v2450, %v2446
      %v2456 = vsel %vm383, %v2452, %v2448
      %v2457 = vmul.f32 %v2455, %v392
      %v2458 = vmul.f32 %v2453, %v396
      %v2459 = vmul.f32 %v2456, %v392
      %v2460 = vmul.f32 %v2454, %v396
      %v2461 = vpack.c.bf16 %v2459, %v2457
      %v2462 = vpack.c.bf16 %v2460, %v2458
      %2463 = vst [vmem:[#allocation7] sm:$0xff] %v2461
      %2464 = vst [vmem:[#allocation7 + $0x8] sm:$0xff] %v2462
      %2465 = vrot.lane.b32.xlu0 %v2441, 16
      %v2466 = vpop.permute.xlu0 %2465
      %2467 = vrot.lane.b32.xlu0 %v2443, 16
      %v2468 = vpop.permute.xlu0 %2467
      %2469 = vrot.lane.b32.xlu0 %v2442, 16
      %v2470 = vpop.permute.xlu0 %2469
      %2471 = vrot.lane.b32.xlu0 %v2444, 16
      %v2472 = vpop.permute.xlu0 %2471
      %v2473 = vsel %vm415, %v2466, %v2470
      %v2474 = vsel %vm415, %v2468, %v2472
      %v2475 = vsel %vm415, %v2470, %v2466
      %v2476 = vsel %vm415, %v2472, %v2468
      %v2477 = vmul.f32 %v2475, %v424
      %v2478 = vmul.f32 %v2473, %v428
      %v2479 = vmul.f32 %v2476, %v424
      %v2480 = vmul.f32 %v2474, %v428
      %v2481 = vpack.c.bf16 %v2479, %v2477
      %v2482 = vpack.c.bf16 %v2480, %v2478
      %2483 = vst [vmem:[#allocation7 + $0x10] sm:$0xff] %v2481
      %2484 = vst [vmem:[#allocation7 + $0x18] sm:$0xff] %v2482
      %2485 = vrot.lane.b32.xlu0 %v2441, 15
      %v2486 = vpop.permute.xlu0 %2485
      %2487 = vrot.lane.b32.xlu0 %v2443, 15
      %v2488 = vpop.permute.xlu0 %2487
      %2489 = vrot.lane.b32.xlu0 %v2442, 15
      %v2490 = vpop.permute.xlu0 %2489
      %2491 = vrot.lane.b32.xlu0 %v2444, 15
      %v2492 = vpop.permute.xlu0 %2491
      %v2493 = vsel %vm447, %v2486, %v2490
      %v2494 = vsel %vm447, %v2488, %v2492
      %v2495 = vsel %vm447, %v2490, %v2486
      %v2496 = vsel %vm447, %v2492, %v2488
      %v2497 = vmul.f32 %v2495, %v456
      %v2498 = vmul.f32 %v2493, %v460
      %v2499 = vmul.f32 %v2496, %v456
      %v2500 = vmul.f32 %v2494, %v460
      %v2501 = vpack.c.bf16 %v2499, %v2497
      %v2502 = vpack.c.bf16 %v2500, %v2498
      %2503 = vst [vmem:[#allocation7 + $0x20] sm:$0xff] %v2501
      %2504 = vst [vmem:[#allocation7 + $0x28] sm:$0xff] %v2502
      %2505 = vrot.lane.b32.xlu0 %v2441, 1
      %v2506 = vpop.permute.xlu0 %2505
      %2507 = vrot.lane.b32.xlu0 %v2443, 1
      %v2508 = vpop.permute.xlu0 %2507
      %2509 = vrot.lane.b32.xlu0 %v2442, 1
      %v2510 = vpop.permute.xlu0 %2509
      %2511 = vrot.lane.b32.xlu0 %v2444, 1
      %v2512 = vpop.permute.xlu0 %2511
      %v2513 = vsel %vm479, %v2506, %v2510
      %v2514 = vsel %vm479, %v2508, %v2512
      %v2515 = vsel %vm479, %v2510, %v2506
      %v2516 = vsel %vm479, %v2512, %v2508
      %v2517 = vmul.f32 %v2515, %v488
      %v2518 = vmul.f32 %v2513, %v492
      %v2519 = vmul.f32 %v2516, %v488
      %v2520 = vmul.f32 %v2514, %v492
      %v2521 = vpack.c.bf16 %v2519, %v2517
      %v2522 = vpack.c.bf16 %v2520, %v2518
      %2523 = vst [vmem:[#allocation7 + $0x30] sm:$0xff] %v2521
      %2524 = vst [vmem:[#allocation7 + $0x38] sm:$0xff] %v2522
      %v2525 = vpack.c.bf16 %v2443, %v2441
      %v2526 = vpack.c.bf16 %v2444, %v2442
      %2527 = vst [vmem:[#allocation7 + $0x40] sm:$0xff] %v2525
      %2528 = vst [vmem:[#allocation7 + $0x48] sm:$0xff] %v2526
      %2529 = vrot.lane.b32.xlu0 %v2441, 127
      %v2530 = vpop.permute.xlu0 %2529
      %2531 = vrot.lane.b32.xlu0 %v2443, 127
      %v2532 = vpop.permute.xlu0 %2531
      %2533 = vrot.lane.b32.xlu0 %v2442, 127
      %v2534 = vpop.permute.xlu0 %2533
      %2535 = vrot.lane.b32.xlu0 %v2444, 127
      %v2536 = vpop.permute.xlu0 %2535
      %v2537 = vsel %vm515, %v2530, %v2534
      %v2538 = vsel %vm515, %v2532, %v2536
      %v2539 = vsel %vm515, %v2534, %v2530
      %v2540 = vsel %vm515, %v2536, %v2532
      %v2541 = vmul.f32 %v2537, %v524
      %v2542 = vmul.f32 %v2539, %v528
      %v2543 = vmul.f32 %v2538, %v524
      %v2544 = vmul.f32 %v2540, %v528
      %v2545 = vpack.c.bf16 %v2543, %v2541
      %v2546 = vpack.c.bf16 %v2544, %v2542
      %2547 = vst [vmem:[#allocation7 + $0x50] sm:$0xff] %v2545
      %2548 = vst [vmem:[#allocation7 + $0x58] sm:$0xff] %v2546
      %2549 = vrot.lane.b32.xlu0 %v2441, 113
      %v2550 = vpop.permute.xlu0 %2549
      %2551 = vrot.lane.b32.xlu0 %v2443, 113
      %v2552 = vpop.permute.xlu0 %2551
      %2553 = vrot.lane.b32.xlu0 %v2442, 113
      %v2554 = vpop.permute.xlu0 %2553
      %2555 = vrot.lane.b32.xlu0 %v2444, 113
      %v2556 = vpop.permute.xlu0 %2555
      %v2557 = vsel %vm547, %v2550, %v2554
      %v2558 = vsel %vm547, %v2552, %v2556
      %v2559 = vsel %vm547, %v2554, %v2550
      %v2560 = vsel %vm547, %v2556, %v2552
      %v2561 = vmul.f32 %v2557, %v556
      %v2562 = vmul.f32 %v2559, %v560
      %v2563 = vmul.f32 %v2558, %v556
      %v2564 = vmul.f32 %v2560, %v560
      %v2565 = vpack.c.bf16 %v2563, %v2561
      %v2566 = vpack.c.bf16 %v2564, %v2562
      %2567 = vst [vmem:[#allocation7 + $0x60] sm:$0xff] %v2565
      %2568 = vst [vmem:[#allocation7 + $0x68] sm:$0xff] %v2566
      %2569 = vrot.lane.b32.xlu0 %v2441, 112
      %v2570 = vpop.permute.xlu0 %2569
      %2571 = vrot.lane.b32.xlu0 %v2443, 112
      %v2572 = vpop.permute.xlu0 %2571
      %2573 = vrot.lane.b32.xlu0 %v2442, 112
      %v2574 = vpop.permute.xlu0 %2573
      %2575 = vrot.lane.b32.xlu0 %v2444, 112
      %v2576 = vpop.permute.xlu0 %2575
      %v2577 = vsel %vm579, %v2570, %v2574
      %v2578 = vsel %vm579, %v2572, %v2576
      %v2579 = vsel %vm579, %v2574, %v2570
      %v2580 = vsel %vm579, %v2576, %v2572
      %v2581 = vmul.f32 %v2577, %v588
      %v2582 = vmul.f32 %v2579, %v592
      %v2583 = vmul.f32 %v2578, %v588
      %v2584 = vmul.f32 %v2580, %v592
      %v2585 = vpack.c.bf16 %v2583, %v2581
      %v2586 = vpack.c.bf16 %v2584, %v2582
      %2587 = vst [vmem:[#allocation7 + $0x70] sm:$0xff] %v2585
      %2588 = vst [vmem:[#allocation7 + $0x78] sm:$0xff] %v2586
      %2589 = vrot.lane.b32.xlu0 %v2441, 111
      %v2590 = vpop.permute.xlu0 %2589
      %2591 = vrot.lane.b32.xlu0 %v2443, 111
      %v2592 = vpop.permute.xlu0 %2591
      %2593 = vrot.lane.b32.xlu0 %v2442, 111
      %v2594 = vpop.permute.xlu0 %2593
      %2595 = vrot.lane.b32.xlu0 %v2444, 111
      %v2596 = vpop.permute.xlu0 %2595
      %v2597 = vsel %vm611, %v2590, %v2594
      %v2598 = vsel %vm611, %v2592, %v2596
      %v2599 = vsel %vm611, %v2594, %v2590
      %v2600 = vsel %vm611, %v2596, %v2592
      %v2601 = vmul.f32 %v2597, %v620
      %v2602 = vmul.f32 %v2599, %v624
      %v2603 = vmul.f32 %v2598, %v620
      %v2604 = vmul.f32 %v2600, %v624
      %v2605 = vpack.c.bf16 %v2603, %v2601
      %v2606 = vpack.c.bf16 %v2604, %v2602
      %2607 = vst [vmem:[#allocation7 + $0x80] sm:$0xff] %v2605
      %2608 = vst [vmem:[#allocation7 + $0x88] sm:$0xff] %v2606
      %v2609 = vld [vmem:[%s4] sm:$0x3]
      %v2610 = vld [vmem:[#allocation7] sm:$0xff]
      %v2611 = vld [vmem:[#allocation7 + $0x8] sm:$0xff]
      %v2612 = vld [vmem:[#allocation7 + $0x10] sm:$0xff]
      %v2613 = vld [vmem:[#allocation7 + $0x18] sm:$0xff]
      %v2614 = vld [vmem:[#allocation7 + $0x20] sm:$0xff]
      %v2615 = vld [vmem:[#allocation7 + $0x28] sm:$0xff]
      %v2616 = vld [vmem:[#allocation7 + $0x30] sm:$0xff]
      %v2617 = vld [vmem:[#allocation7 + $0x38] sm:$0xff]
      %v2618 = vld [vmem:[#allocation7 + $0x40] sm:$0xff]
      %v2619 = vld [vmem:[#allocation7 + $0x48] sm:$0xff]
      %v2620 = vld [vmem:[#allocation7 + $0x50] sm:$0xff]
      %v2621 = vld [vmem:[#allocation7 + $0x58] sm:$0xff]
      %v2622 = vld [vmem:[#allocation7 + $0x60] sm:$0xff]
      %v2623 = vld [vmem:[#allocation7 + $0x68] sm:$0xff]
      %v2624 = vld [vmem:[#allocation7 + $0x70] sm:$0xff]
      %v2625 = vld [vmem:[#allocation7 + $0x78] sm:$0xff]
      %v2626 = vld [vmem:[#allocation7 + $0x80] sm:$0xff]
      %v2627 = vld [vmem:[#allocation7 + $0x88] sm:$0xff]
      %v2630 = vunpack.c.l.s4 1966171168
      %v2631 = vunpack.c.0.s8 %v2630
      %v2632 = vlaneseq
      %v2633 = vshrl.u32 %v2632, 7
      %v2634 = vsub.s32 %v2631, %v2633
      %v2635 = vrot.slane %v2609, %v2634
      %v2636 = vcombine.high %v2635, %v2635
      %v2638 = vunpack.c.l.s4 1966171168
      %v2639 = vunpack.c.0.s8 %v2638
      %v2640 = vlaneseq
      %v2641 = vshrl.u32 %v2640, 7
      %v2642 = vsub.s32 %v2639, %v2641
      %v2643 = vrot.slane %v2635, %v2642
      %v2645 = vunpack.c.l.s4 1966171168
      %v2646 = vunpack.c.0.s8 %v2645
      %v2647 = vlaneseq
      %v2648 = vshrl.u32 %v2647, 7
      %v2649 = vsub.s32 %v2646, %v2648
      %v2650 = vrot.slane %v2636, %v2649
      %v2653 = vsel %vm664, %v2650, 0
      %2655 = vmatprep.subr.bf16.mxu0 %v2611
      %2656 = vmatpush1.bf16.msra.mxu0 %v2610
      %2657 = vmatprep.subr.bf16.mxu0 %v2613
      %2658 = vmatpush1.bf16.msra.mxu0 %v2612
      %2659 = vmatprep.subr.bf16.mxu0 %v2615
      %2660 = vmatpush1.bf16.msra.mxu0 %v2614
      %2661 = vmatprep.subr.bf16.mxu0 %v2617
      %2662 = vmatpush1.bf16.msra.mxu0 %v2616
      %2663 = vmatprep.subr.bf16.mxu0 %v2619
      %2664 = vmatpush1.bf16.msra.mxu0 %v2618
      %2665 = vmatprep.subr.bf16.mxu0 %v2621
      %2666 = vmatpush1.bf16.msra.mxu0 %v2620
      %2667 = vmatprep.subr.bf16.mxu0 %v2623
      %2668 = vmatpush1.bf16.msra.mxu0 %v2622
      %2669 = vmatprep.subr.bf16.mxu0 %v2625
      %2670 = vmatpush1.bf16.msra.mxu0 %v2624
      %2671 = vmatprep.subr.bf16.mxu0 %v2627
      %2672 = vmatpush1.bf16.msra.mxu0 %v2626
      %2673 = vmatprep.subr.bf16.mxu0 0
      %2674 = vmatpush1.bf16.msra.mxu0 0
      %2675 = vmatprep.subr.bf16.mxu0 0
      %2676 = vmatpush1.bf16.msra.mxu0 0
      %2677 = vmatprep.subr.bf16.mxu0 0
      %2678 = vmatpush1.bf16.msra.mxu0 0
      %2679 = vmatprep.subr.bf16.mxu0 0
      %2680 = vmatpush1.bf16.msra.mxu0 0
      %2681 = vmatprep.subr.bf16.mxu0 0
      %2682 = vmatpush1.bf16.msra.mxu0 0
      %2683 = vmatprep.subr.bf16.mxu0 0
      %2684 = vmatpush1.bf16.msra.mxu0 0
      %2685 = vmatprep.subr.bf16.mxu0 0
      %2686 = vmatpush1.bf16.msra.mxu0 0
      %2687 = vmatprep.mubr.bf16.mxu0 %v2653
      %2688 = vmatmul.mubr.bf16.gmra.mrb[0].mxu0 %v2643
      %v2689 = vpop.f32.mrb[0].mxu0
      %v2690 = vadd.f32 0.0, %v2689
      %v2691 = vpop.f32.mrb[0].mxu0
      %v2692 = vadd.f32 0.0, %v2691
      %v2693 = vpop.f32.mrb[0].mxu0
      %v2694 = vpop.f32.mrb[0].mxu0
      %2695 = vdwg.mxu0
      %v2696 = vxor.u32 %v2690, 2147483648
      %v2697 = vxor.u32 %v2692, 2147483648
      %v2698 = vmul.f32 %v2696, 1.442695
      %v2699 = vpow.pop %v2698
      %v2700 = vmul.f32 %v2697, 1.442695
      %v2701 = vpow.pop %v2700
      %v2702 = vadd.f32 %v2699, 1.0
      %v2703 = vadd.f32 %v2701, 1.0
      %v2704 = vrcp.pop %v2702
      %v2705 = vmul.f32 1.0, %v2704
      %v2706 = vrcp.pop %v2703
      %v2707 = vmul.f32 1.0, %v2706
      %2708 = vrot.lane.b32.xlu0 %v2705, 17
      %v2709 = vpop.permute.xlu0 %2708
      %2710 = vrot.lane.b32.xlu0 %v2707, 17
      %v2711 = vpop.permute.xlu0 %2710
      %v2712 = vsel %vm383, %v2709, %v2711
      %v2713 = vsel %vm383, %v2711, %v2709
      %v2714 = vld [vmem:[#allocation6] sm:$0xf]
      %v2715 = vld [vmem:[#allocation6 + $0x8] sm:$0xf]
      %v2716 = vunpack.c.l.bf16 %v2714
      %v2717 = vunpack.c.l.bf16 %v2715
      %v2718 = vlaneseq
      %v2719 = vshrl.u32 %v2718, 7
      %v2720 = vsub.s32 0, %v2719
      %v2721 = vrot.slane %v2713, %v2720
      %v2722 = vlaneseq
      %v2723 = vshrl.u32 %v2722, 7
      %v2724 = vsub.s32 0, %v2723
      %v2725 = vrot.slane %v2712, %v2724
      %v2726 = vmul.f32 %v2716, %v2721
      %v2727 = vmul.f32 %v2717, %v2725
      %v2728 = vpack.c.bf16 %v2726, %v2726
      %v2729 = vpack.c.bf16 %v2727, %v2727
      %2730 = vst [vmem:[#allocation6] sm:$0xf] %v2728
      %2731 = vst [vmem:[#allocation6 + $0x8] sm:$0xf] %v2729
      %2732 = vrot.lane.b32.xlu0 %v2705, 16
      %v2733 = vpop.permute.xlu0 %2732
      %2734 = vrot.lane.b32.xlu0 %v2707, 16
      %v2735 = vpop.permute.xlu0 %2734
      %v2736 = vsel %vm415, %v2733, %v2735
      %v2737 = vsel %vm415, %v2735, %v2733
      %v2738 = vld [vmem:[#allocation6 + $0x10] sm:$0xf]
      %v2739 = vld [vmem:[#allocation6 + $0x18] sm:$0xf]
      %v2740 = vunpack.c.l.bf16 %v2738
      %v2741 = vunpack.c.l.bf16 %v2739
      %v2742 = vlaneseq
      %v2743 = vshrl.u32 %v2742, 7
      %v2744 = vsub.s32 0, %v2743
      %v2745 = vrot.slane %v2737, %v2744
      %v2746 = vlaneseq
      %v2747 = vshrl.u32 %v2746, 7
      %v2748 = vsub.s32 0, %v2747
      %v2749 = vrot.slane %v2736, %v2748
      %v2750 = vmul.f32 %v2740, %v2745
      %v2751 = vmul.f32 %v2741, %v2749
      %v2752 = vpack.c.bf16 %v2750, %v2750
      %v2753 = vpack.c.bf16 %v2751, %v2751
      %2754 = vst [vmem:[#allocation6 + $0x10] sm:$0xf] %v2752
      %2755 = vst [vmem:[#allocation6 + $0x18] sm:$0xf] %v2753
      %2756 = vrot.lane.b32.xlu0 %v2705, 15
      %v2757 = vpop.permute.xlu0 %2756
      %2758 = vrot.lane.b32.xlu0 %v2707, 15
      %v2759 = vpop.permute.xlu0 %2758
      %v2760 = vsel %vm447, %v2757, %v2759
      %v2761 = vsel %vm447, %v2759, %v2757
      %v2762 = vld [vmem:[#allocation6 + $0x20] sm:$0xf]
      %v2763 = vld [vmem:[#allocation6 + $0x28] sm:$0xf]
      %v2764 = vunpack.c.l.bf16 %v2762
      %v2765 = vunpack.c.l.bf16 %v2763
      %v2766 = vlaneseq
      %v2767 = vshrl.u32 %v2766, 7
      %v2768 = vsub.s32 0, %v2767
      %v2769 = vrot.slane %v2761, %v2768
      %v2770 = vlaneseq
      %v2771 = vshrl.u32 %v2770, 7
      %v2772 = vsub.s32 0, %v2771
      %v2773 = vrot.slane %v2760, %v2772
      %v2774 = vmul.f32 %v2764, %v2769
      %v2775 = vmul.f32 %v2765, %v2773
      %v2776 = vpack.c.bf16 %v2774, %v2774
      %v2777 = vpack.c.bf16 %v2775, %v2775
      %2778 = vst [vmem:[#allocation6 + $0x20] sm:$0xf] %v2776
      %2779 = vst [vmem:[#allocation6 + $0x28] sm:$0xf] %v2777
      %2780 = vrot.lane.b32.xlu0 %v2705, 1
      %v2781 = vpop.permute.xlu0 %2780
      %2782 = vrot.lane.b32.xlu0 %v2707, 1
      %v2783 = vpop.permute.xlu0 %2782
      %v2784 = vsel %vm479, %v2781, %v2783
      %v2785 = vsel %vm479, %v2783, %v2781
      %v2786 = vld [vmem:[#allocation6 + $0x30] sm:$0xf]
      %v2787 = vld [vmem:[#allocation6 + $0x38] sm:$0xf]
      %v2788 = vunpack.c.l.bf16 %v2786
      %v2789 = vunpack.c.l.bf16 %v2787
      %v2790 = vlaneseq
      %v2791 = vshrl.u32 %v2790, 7
      %v2792 = vsub.s32 0, %v2791
      %v2793 = vrot.slane %v2785, %v2792
      %v2794 = vlaneseq
      %v2795 = vshrl.u32 %v2794, 7
      %v2796 = vsub.s32 0, %v2795
      %v2797 = vrot.slane %v2784, %v2796
      %v2798 = vmul.f32 %v2788, %v2793
      %v2799 = vmul.f32 %v2789, %v2797
      %v2800 = vpack.c.bf16 %v2798, %v2798
      %v2801 = vpack.c.bf16 %v2799, %v2799
      %2802 = vst [vmem:[#allocation6 + $0x30] sm:$0xf] %v2800
      %2803 = vst [vmem:[#allocation6 + $0x38] sm:$0xf] %v2801
      %v2804 = vld [vmem:[#allocation6 + $0x40] sm:$0xf]
      %v2805 = vld [vmem:[#allocation6 + $0x48] sm:$0xf]
      %v2806 = vunpack.c.l.bf16 %v2804
      %v2807 = vunpack.c.l.bf16 %v2805
      %v2808 = vlaneseq
      %v2809 = vshrl.u32 %v2808, 7
      %v2810 = vsub.s32 0, %v2809
      %v2811 = vrot.slane %v2705, %v2810
      %v2812 = vlaneseq
      %v2813 = vshrl.u32 %v2812, 7
      %v2814 = vsub.s32 0, %v2813
      %v2815 = vrot.slane %v2707, %v2814
      %v2816 = vmul.f32 %v2806, %v2811
      %v2817 = vmul.f32 %v2807, %v2815
      %v2818 = vpack.c.bf16 %v2816, %v2816
      %v2819 = vpack.c.bf16 %v2817, %v2817
      %2820 = vst [vmem:[#allocation6 + $0x40] sm:$0xf] %v2818
      %2821 = vst [vmem:[#allocation6 + $0x48] sm:$0xf] %v2819
      %2822 = vrot.lane.b32.xlu0 %v2705, 127
      %v2823 = vpop.permute.xlu0 %2822
      %2824 = vrot.lane.b32.xlu0 %v2707, 127
      %v2825 = vpop.permute.xlu0 %2824
      %v2826 = vsel %vm515, %v2823, %v2825
      %v2827 = vsel %vm515, %v2825, %v2823
      %v2828 = vld [vmem:[#allocation6 + $0x50] sm:$0xf]
      %v2829 = vld [vmem:[#allocation6 + $0x58] sm:$0xf]
      %v2830 = vunpack.c.l.bf16 %v2828
      %v2831 = vunpack.c.l.bf16 %v2829
      %v2832 = vlaneseq
      %v2833 = vshrl.u32 %v2832, 7
      %v2834 = vsub.s32 0, %v2833
      %v2835 = vrot.slane %v2826, %v2834
      %v2836 = vlaneseq
      %v2837 = vshrl.u32 %v2836, 7
      %v2838 = vsub.s32 0, %v2837
      %v2839 = vrot.slane %v2827, %v2838
      %v2840 = vmul.f32 %v2830, %v2835
      %v2841 = vmul.f32 %v2831, %v2839
      %v2842 = vpack.c.bf16 %v2840, %v2840
      %v2843 = vpack.c.bf16 %v2841, %v2841
      %2844 = vst [vmem:[#allocation6 + $0x50] sm:$0xf] %v2842
      %2845 = vst [vmem:[#allocation6 + $0x58] sm:$0xf] %v2843
      %2846 = vrot.lane.b32.xlu0 %v2705, 113
      %v2847 = vpop.permute.xlu0 %2846
      %2848 = vrot.lane.b32.xlu0 %v2707, 113
      %v2849 = vpop.permute.xlu0 %2848
      %v2850 = vsel %vm547, %v2847, %v2849
      %v2851 = vsel %vm547, %v2849, %v2847
      %v2852 = vld [vmem:[#allocation6 + $0x60] sm:$0xf]
      %v2853 = vld [vmem:[#allocation6 + $0x68] sm:$0xf]
      %v2854 = vunpack.c.l.bf16 %v2852
      %v2855 = vunpack.c.l.bf16 %v2853
      %v2856 = vlaneseq
      %v2857 = vshrl.u32 %v2856, 7
      %v2858 = vsub.s32 0, %v2857
      %v2859 = vrot.slane %v2850, %v2858
      %v2860 = vlaneseq
      %v2861 = vshrl.u32 %v2860, 7
      %v2862 = vsub.s32 0, %v2861
      %v2863 = vrot.slane %v2851, %v2862
      %v2864 = vmul.f32 %v2854, %v2859
      %v2865 = vmul.f32 %v2855, %v2863
      %v2866 = vpack.c.bf16 %v2864, %v2864
      %v2867 = vpack.c.bf16 %v2865, %v2865
      %2868 = vst [vmem:[#allocation6 + $0x60] sm:$0xf] %v2866
      %2869 = vst [vmem:[#allocation6 + $0x68] sm:$0xf] %v2867
      %2870 = vrot.lane.b32.xlu0 %v2705, 112
      %v2871 = vpop.permute.xlu0 %2870
      %2872 = vrot.lane.b32.xlu0 %v2707, 112
      %v2873 = vpop.permute.xlu0 %2872
      %v2874 = vsel %vm579, %v2871, %v2873
      %v2875 = vsel %vm579, %v2873, %v2871
      %v2876 = vld [vmem:[#allocation6 + $0x70] sm:$0xf]
      %v2877 = vld [vmem:[#allocation6 + $0x78] sm:$0xf]
      %v2878 = vunpack.c.l.bf16 %v2876
      %v2879 = vunpack.c.l.bf16 %v2877
      %v2880 = vlaneseq
      %v2881 = vshrl.u32 %v2880, 7
      %v2882 = vsub.s32 0, %v2881
      %v2883 = vrot.slane %v2874, %v2882
      %v2884 = vlaneseq
      %v2885 = vshrl.u32 %v2884, 7
      %v2886 = vsub.s32 0, %v2885
      %v2887 = vrot.slane %v2875, %v2886
      %v2888 = vmul.f32 %v2878, %v2883
      %v2889 = vmul.f32 %v2879, %v2887
      %v2890 = vpack.c.bf16 %v2888, %v2888
      %v2891 = vpack.c.bf16 %v2889, %v2889
      %2892 = vst [vmem:[#allocation6 + $0x70] sm:$0xf] %v2890
      %2893 = vst [vmem:[#allocation6 + $0x78] sm:$0xf] %v2891
      %2894 = vrot.lane.b32.xlu0 %v2705, 111
      %v2895 = vpop.permute.xlu0 %2894
      %2896 = vrot.lane.b32.xlu0 %v2707, 111
      %v2897 = vpop.permute.xlu0 %2896
      %v2898 = vsel %vm611, %v2895, %v2897
      %v2899 = vsel %vm611, %v2897, %v2895
      %v2900 = vld [vmem:[#allocation6 + $0x80] sm:$0xf]
      %v2901 = vld [vmem:[#allocation6 + $0x88] sm:$0xf]
      %v2902 = vunpack.c.l.bf16 %v2900
      %v2903 = vunpack.c.l.bf16 %v2901
      %v2904 = vlaneseq
      %v2905 = vshrl.u32 %v2904, 7
      %v2906 = vsub.s32 0, %v2905
      %v2907 = vrot.slane %v2898, %v2906
      %v2908 = vlaneseq
      %v2909 = vshrl.u32 %v2908, 7
      %v2910 = vsub.s32 0, %v2909
      %v2911 = vrot.slane %v2899, %v2910
      %v2912 = vmul.f32 %v2902, %v2907
      %v2913 = vmul.f32 %v2903, %v2911
      %v2914 = vpack.c.bf16 %v2912, %v2912
      %v2915 = vpack.c.bf16 %v2913, %v2913
      %2916 = vst [vmem:[#allocation6 + $0x80] sm:$0xf] %v2914
      %2917 = vst [vmem:[#allocation6 + $0x88] sm:$0xf] %v2915
      %v2918 = vld [vmem:[%s5] sm:$0xff]
      %v2919 = vld [vmem:[%s5 + $0x8] sm:$0xff]
      %v2920 = vld [vmem:[%s5 + $0x10] sm:$0xff]
      %v2921 = vld [vmem:[%s5 + $0x18] sm:$0xff]
      %v2922 = vld [vmem:[#allocation6] sm:$0xff]
      %v2923 = vld [vmem:[#allocation6 + $0x8] sm:$0xff]
      %v2924 = vld [vmem:[#allocation6 + $0x10] sm:$0xff]
      %v2925 = vld [vmem:[#allocation6 + $0x18] sm:$0xff]
      %v2926 = vld [vmem:[#allocation6 + $0x20] sm:$0xff]
      %v2927 = vld [vmem:[#allocation6 + $0x28] sm:$0xff]
      %v2928 = vld [vmem:[#allocation6 + $0x30] sm:$0xff]
      %v2929 = vld [vmem:[#allocation6 + $0x38] sm:$0xff]
      %v2930 = vld [vmem:[#allocation6 + $0x40] sm:$0xff]
      %v2931 = vld [vmem:[#allocation6 + $0x48] sm:$0xff]
      %v2932 = vld [vmem:[#allocation6 + $0x50] sm:$0xff]
      %v2933 = vld [vmem:[#allocation6 + $0x58] sm:$0xff]
      %v2934 = vld [vmem:[#allocation6 + $0x60] sm:$0xff]
      %v2935 = vld [vmem:[#allocation6 + $0x68] sm:$0xff]
      %v2936 = vld [vmem:[#allocation6 + $0x70] sm:$0xff]
      %v2937 = vld [vmem:[#allocation6 + $0x78] sm:$0xff]
      %v2938 = vld [vmem:[#allocation6 + $0x80] sm:$0xff]
      %v2939 = vld [vmem:[#allocation6 + $0x88] sm:$0xff]
      %v2940 = vld [vmem:[%s6] sm:$0xff]
      %v2941 = vld [vmem:[%s6 + $0x8] sm:$0xff]
      %v2942 = vld [vmem:[%s6 + $0x10] sm:$0xff]
      %v2943 = vld [vmem:[%s6 + $0x18] sm:$0xff]
      %2945 = vset.pattern.permute.xlu0 0
      %2946 = vperm.xlu0 %2945, %v2940
      %v2947 = vpop.permute.xlu0 %2946
      %2950 = vset.pattern.permute.xlu0 0
      %2951 = vperm.xlu0 %2950, %v2941
      %v2952 = vpop.permute.xlu0 %2951
      %2955 = vset.pattern.permute.xlu0 0
      %2956 = vperm.xlu0 %2955, %v2942
      %v2957 = vpop.permute.xlu0 %2956
      %2960 = vset.pattern.permute.xlu0 0
      %2961 = vperm.xlu0 %2960, %v2943
      %v2962 = vpop.permute.xlu0 %2961
      %v2968 = vunpack.c.l.b16 %v2918
      %v2969 = vunpack.c.h.b16 %v2918
      %v2970 = vunpack.c.l.b16 %v2919
      %v2971 = vunpack.c.h.b16 %v2919
      %v2972 = vunpack.c.l.b16 %v2920
      %v2973 = vunpack.c.h.b16 %v2920
      %v2974 = vunpack.c.l.b16 %v2921
      %v2975 = vunpack.c.h.b16 %v2921
      %v2976 = vpack.c.b16 %v2970, %v2968
      %v2977 = vpack.c.b16 %v2971, %v2969
      %v2978 = vpack.c.b16 %v2974, %v2972
      %v2979 = vpack.c.b16 %v2975, %v2973
      %v2983 = vsel %vm664, %v2977, 0
      %v2986 = vsel %vm664, %v2979, 0
      %2988 = vmatprep.subr.bf16.mxu0 %v2923
      %2989 = vmatpush1.bf16.msra.mxu0 %v2922
      %2990 = vmatprep.subr.bf16.mxu0 %v2925
      %2991 = vmatpush1.bf16.msra.mxu0 %v2924
      %2992 = vmatprep.subr.bf16.mxu0 %v2927
      %2993 = vmatpush1.bf16.msra.mxu0 %v2926
      %2994 = vmatprep.subr.bf16.mxu0 %v2929
      %2995 = vmatpush1.bf16.msra.mxu0 %v2928
      %2996 = vmatprep.subr.bf16.mxu0 %v2931
      %2997 = vmatpush1.bf16.msra.mxu0 %v2930
      %2998 = vmatprep.subr.bf16.mxu0 %v2933
      %2999 = vmatpush1.bf16.msra.mxu0 %v2932
      %3000 = vmatprep.subr.bf16.mxu0 %v2935
      %3001 = vmatpush1.bf16.msra.mxu0 %v2934
      %3002 = vmatprep.subr.bf16.mxu0 %v2937
      %3003 = vmatpush1.bf16.msra.mxu0 %v2936
      %3004 = vmatprep.subr.bf16.mxu0 %v2939
      %3005 = vmatpush1.bf16.msra.mxu0 %v2938
      %3006 = vmatprep.subr.bf16.mxu0 0
      %3007 = vmatpush1.bf16.msra.mxu0 0
      %3008 = vmatprep.subr.bf16.mxu0 0
      %3009 = vmatpush1.bf16.msra.mxu0 0
      %3010 = vmatprep.subr.bf16.mxu0 0
      %3011 = vmatpush1.bf16.msra.mxu0 0
      %3012 = vmatprep.subr.bf16.mxu0 0
      %3013 = vmatpush1.bf16.msra.mxu0 0
      %3014 = vmatprep.subr.bf16.mxu0 0
      %3015 = vmatpush1.bf16.msra.mxu0 0
      %3016 = vmatprep.subr.bf16.mxu0 0
      %3017 = vmatpush1.bf16.msra.mxu0 0
      %3018 = vmatprep.subr.bf16.mxu0 0
      %3019 = vmatpush1.bf16.msra.mxu0 0
      %3020 = vmatprep.mubr.bf16.mxu0 %v2983
      %3021 = vmatmul.mubr.bf16.gmra.mrb[0].mxu0 %v2976
      %v3022 = vpop.f32.mrb[0].mxu0
      %v3023 = vadd.f32 %v2947, %v3022
      %v3024 = vpop.f32.mrb[0].mxu0
      %v3025 = vadd.f32 %v2947, %v3024
      %v3026 = vpop.f32.mrb[0].mxu0
      %v3027 = vadd.f32 %v2952, %v3026
      %v3028 = vpop.f32.mrb[0].mxu0
      %v3029 = vadd.f32 %v2952, %v3028
      %3030 = vmatprep.mubr.bf16.mxu0 %v2986
      %3031 = vmatmul.mubr.bf16.gmra.mrb[0].mxu0 %v2978
      %v3032 = vpop.f32.mrb[0].mxu0
      %v3033 = vadd.f32 %v2957, %v3032
      %v3034 = vpop.f32.mrb[0].mxu0
      %v3035 = vadd.f32 %v2957, %v3034
      %v3036 = vpop.f32.mrb[0].mxu0
      %v3037 = vadd.f32 %v2962, %v3036
      %v3038 = vpop.f32.mrb[0].mxu0
      %v3039 = vadd.f32 %v2962, %v3038
      %3040 = vdwg.mxu0
      %v3041 = vld [vmem:[#allocation3] sm:$0xff]
      %v3042 = vld [vmem:[#allocation3 + $0x8] sm:$0xff]
      %v3043 = vxor.u32 %v3023, 2147483648
      %v3044 = vxor.u32 %v3025, 2147483648
      %v3045 = vmul.f32 %v3043, 1.442695
      %v3046 = vpow.pop %v3045
      %v3047 = vmul.f32 %v3044, 1.442695
      %v3048 = vpow.pop %v3047
      %v3049 = vadd.f32 %v3046, 1.0
      %v3050 = vadd.f32 %v3048, 1.0
      %v3051 = vrcp.pop %v3049
      %v3052 = vmul.f32 1.0, %v3051
      %v3053 = vrcp.pop %v3050
      %v3054 = vmul.f32 1.0, %v3053
      %v3055 = vxor.u32 %v3027, 2147483648
      %v3056 = vxor.u32 %v3029, 2147483648
      %v3057 = vmul.f32 %v3055, 1.442695
      %v3058 = vpow.pop %v3057
      %v3059 = vmul.f32 %v3056, 1.442695
      %v3060 = vpow.pop %v3059
      %v3061 = vadd.f32 %v3058, 1.0
      %v3062 = vadd.f32 %v3060, 1.0
      %v3063 = vrcp.pop %v3061
      %v3064 = vmul.f32 1.0, %v3063
      %v3065 = vrcp.pop %v3062
      %v3066 = vmul.f32 1.0, %v3065
      %v3067 = vmul.f32 %v3064, %v3041
      %v3068 = vmul.f32 %v3066, %v3042
      %v3069 = vtanh.pop %v3033
      %v3070 = vtanh.pop %v3035
      %v3071 = vmul.f32 %v3052, %v3069
      %v3072 = vmul.f32 %v3054, %v3070
      %v3073 = vadd.f32 %v3067, %v3071
      %v3074 = vadd.f32 %v3068, %v3072
      %v3075 = vxor.u32 %v3037, 2147483648
      %v3076 = vxor.u32 %v3039, 2147483648
      %v3077 = vmul.f32 %v3075, 1.442695
      %v3078 = vpow.pop %v3077
      %v3079 = vmul.f32 %v3076, 1.442695
      %v3080 = vpow.pop %v3079
      %v3081 = vadd.f32 %v3078, 1.0
      %v3082 = vadd.f32 %v3080, 1.0
      %v3083 = vrcp.pop %v3081
      %v3084 = vmul.f32 1.0, %v3083
      %v3085 = vrcp.pop %v3082
      %v3086 = vmul.f32 1.0, %v3085
      %v3087 = vtanh.pop %v3073
      %v3088 = vtanh.pop %v3074
      %v3089 = vmul.f32 %v3084, %v3087
      %v3090 = vmul.f32 %v3086, %v3088
      %3091 = vst [vmem:[#allocation3] sm:$0xff] %v3073
      %3092 = vst [vmem:[#allocation3 + $0x8] sm:$0xff] %v3074
      %3093 = vst [vmem:[#allocation2 + $0x10] sm:$0xff] %v3089
      %3094 = vst [vmem:[#allocation2 + $0x18] sm:$0xff] %v3090
      %3095 = vst [vmem:[#allocation4] sm:$0xff] %v3089
      %3096 = vst [vmem:[#allocation4 + $0x8] sm:$0xff] %v3090
      %v3097 = vld [vmem:[#allocation4] sm:$0xff]
      %v3098 = vld [vmem:[#allocation4 + $0x8] sm:$0xff]
      %v3099 = vld [vmem:[#allocation4 + $0x10] sm:$0xff]
      %v3100 = vld [vmem:[#allocation4 + $0x18] sm:$0xff]
      %3101 = vrot.lane.b32.xlu0 %v3097, 17
      %v3102 = vpop.permute.xlu0 %3101
      %3103 = vrot.lane.b32.xlu0 %v3099, 17
      %v3104 = vpop.permute.xlu0 %3103
      %3105 = vrot.lane.b32.xlu0 %v3098, 17
      %v3106 = vpop.permute.xlu0 %3105
      %3107 = vrot.lane.b32.xlu0 %v3100, 17
      %v3108 = vpop.permute.xlu0 %3107
      %v3109 = vsel %vm383, %v3102, %v3106
      %v3110 = vsel %vm383, %v3104, %v3108
      %v3111 = vsel %vm383, %v3106, %v3102
      %v3112 = vsel %vm383, %v3108, %v3104
      %v3113 = vmul.f32 %v3111, %v392
      %v3114 = vmul.f32 %v3109, %v396
      %v3115 = vmul.f32 %v3112, %v392
      %v3116 = vmul.f32 %v3110, %v396
      %v3117 = vpack.c.bf16 %v3115, %v3113
      %v3118 = vpack.c.bf16 %v3116, %v3114
      %3119 = vst [vmem:[#allocation7] sm:$0xff] %v3117
      %3120 = vst [vmem:[#allocation7 + $0x8] sm:$0xff] %v3118
      %3121 = vrot.lane.b32.xlu0 %v3097, 16
      %v3122 = vpop.permute.xlu0 %3121
      %3123 = vrot.lane.b32.xlu0 %v3099, 16
      %v3124 = vpop.permute.xlu0 %3123
      %3125 = vrot.lane.b32.xlu0 %v3098, 16
      %v3126 = vpop.permute.xlu0 %3125
      %3127 = vrot.lane.b32.xlu0 %v3100, 16
      %v3128 = vpop.permute.xlu0 %3127
      %v3129 = vsel %vm415, %v3122, %v3126
      %v3130 = vsel %vm415, %v3124, %v3128
      %v3131 = vsel %vm415, %v3126, %v3122
      %v3132 = vsel %vm415, %v3128, %v3124
      %v3133 = vmul.f32 %v3131, %v424
      %v3134 = vmul.f32 %v3129, %v428
      %v3135 = vmul.f32 %v3132, %v424
      %v3136 = vmul.f32 %v3130, %v428
      %v3137 = vpack.c.bf16 %v3135, %v3133
      %v3138 = vpack.c.bf16 %v3136, %v3134
      %3139 = vst [vmem:[#allocation7 + $0x10] sm:$0xff] %v3137
      %3140 = vst [vmem:[#allocation7 + $0x18] sm:$0xff] %v3138
      %3141 = vrot.lane.b32.xlu0 %v3097, 15
      %v3142 = vpop.permute.xlu0 %3141
      %3143 = vrot.lane.b32.xlu0 %v3099, 15
      %v3144 = vpop.permute.xlu0 %3143
      %3145 = vrot.lane.b32.xlu0 %v3098, 15
      %v3146 = vpop.permute.xlu0 %3145
      %3147 = vrot.lane.b32.xlu0 %v3100, 15
      %v3148 = vpop.permute.xlu0 %3147
      %v3149 = vsel %vm447, %v3142, %v3146
      %v3150 = vsel %vm447, %v3144, %v3148
      %v3151 = vsel %vm447, %v3146, %v3142
      %v3152 = vsel %vm447, %v3148, %v3144
      %v3153 = vmul.f32 %v3151, %v456
      %v3154 = vmul.f32 %v3149, %v460
      %v3155 = vmul.f32 %v3152, %v456
      %v3156 = vmul.f32 %v3150, %v460
      %v3157 = vpack.c.bf16 %v3155, %v3153
      %v3158 = vpack.c.bf16 %v3156, %v3154
      %3159 = vst [vmem:[#allocation7 + $0x20] sm:$0xff] %v3157
      %3160 = vst [vmem:[#allocation7 + $0x28] sm:$0xff] %v3158
      %3161 = vrot.lane.b32.xlu0 %v3097, 1
      %v3162 = vpop.permute.xlu0 %3161
      %3163 = vrot.lane.b32.xlu0 %v3099, 1
      %v3164 = vpop.permute.xlu0 %3163
      %3165 = vrot.lane.b32.xlu0 %v3098, 1
      %v3166 = vpop.permute.xlu0 %3165
      %3167 = vrot.lane.b32.xlu0 %v3100, 1
      %v3168 = vpop.permute.xlu0 %3167
      %v3169 = vsel %vm479, %v3162, %v3166
      %v3170 = vsel %vm479, %v3164, %v3168
      %v3171 = vsel %vm479, %v3166, %v3162
      %v3172 = vsel %vm479, %v3168, %v3164
      %v3173 = vmul.f32 %v3171, %v488
      %v3174 = vmul.f32 %v3169, %v492
      %v3175 = vmul.f32 %v3172, %v488
      %v3176 = vmul.f32 %v3170, %v492
      %v3177 = vpack.c.bf16 %v3175, %v3173
      %v3178 = vpack.c.bf16 %v3176, %v3174
      %3179 = vst [vmem:[#allocation7 + $0x30] sm:$0xff] %v3177
      %3180 = vst [vmem:[#allocation7 + $0x38] sm:$0xff] %v3178
      %v3181 = vpack.c.bf16 %v3099, %v3097
      %v3182 = vpack.c.bf16 %v3100, %v3098
      %3183 = vst [vmem:[#allocation7 + $0x40] sm:$0xff] %v3181
      %3184 = vst [vmem:[#allocation7 + $0x48] sm:$0xff] %v3182
      %3185 = vrot.lane.b32.xlu0 %v3097, 127
      %v3186 = vpop.permute.xlu0 %3185
      %3187 = vrot.lane.b32.xlu0 %v3099, 127
      %v3188 = vpop.permute.xlu0 %3187
      %3189 = vrot.lane.b32.xlu0 %v3098, 127
      %v3190 = vpop.permute.xlu0 %3189
      %3191 = vrot.lane.b32.xlu0 %v3100, 127
      %v3192 = vpop.permute.xlu0 %3191
      %v3193 = vsel %vm515, %v3186, %v3190
      %v3194 = vsel %vm515, %v3188, %v3192
      %v3195 = vsel %vm515, %v3190, %v3186
      %v3196 = vsel %vm515, %v3192, %v3188
      %v3197 = vmul.f32 %v3193, %v524
      %v3198 = vmul.f32 %v3195, %v528
      %v3199 = vmul.f32 %v3194, %v524
      %v3200 = vmul.f32 %v3196, %v528
      %v3201 = vpack.c.bf16 %v3199, %v3197
      %v3202 = vpack.c.bf16 %v3200, %v3198
      %3203 = vst [vmem:[#allocation7 + $0x50] sm:$0xff] %v3201
      %3204 = vst [vmem:[#allocation7 + $0x58] sm:$0xff] %v3202
      %3205 = vrot.lane.b32.xlu0 %v3097, 113
      %v3206 = vpop.permute.xlu0 %3205
      %3207 = vrot.lane.b32.xlu0 %v3099, 113
      %v3208 = vpop.permute.xlu0 %3207
      %3209 = vrot.lane.b32.xlu0 %v3098, 113
      %v3210 = vpop.permute.xlu0 %3209
      %3211 = vrot.lane.b32.xlu0 %v3100, 113
      %v3212 = vpop.permute.xlu0 %3211
      %v3213 = vsel %vm547, %v3206, %v3210
      %v3214 = vsel %vm547, %v3208, %v3212
      %v3215 = vsel %vm547, %v3210, %v3206
      %v3216 = vsel %vm547, %v3212, %v3208
      %v3217 = vmul.f32 %v3213, %v556
      %v3218 = vmul.f32 %v3215, %v560
      %v3219 = vmul.f32 %v3214, %v556
      %v3220 = vmul.f32 %v3216, %v560
      %v3221 = vpack.c.bf16 %v3219, %v3217
      %v3222 = vpack.c.bf16 %v3220, %v3218
      %3223 = vst [vmem:[#allocation7 + $0x60] sm:$0xff] %v3221
      %3224 = vst [vmem:[#allocation7 + $0x68] sm:$0xff] %v3222
      %3225 = vrot.lane.b32.xlu0 %v3097, 112
      %v3226 = vpop.permute.xlu0 %3225
      %3227 = vrot.lane.b32.xlu0 %v3099, 112
      %v3228 = vpop.permute.xlu0 %3227
      %3229 = vrot.lane.b32.xlu0 %v3098, 112
      %v3230 = vpop.permute.xlu0 %3229
      %3231 = vrot.lane.b32.xlu0 %v3100, 112
      %v3232 = vpop.permute.xlu0 %3231
      %v3233 = vsel %vm579, %v3226, %v3230
      %v3234 = vsel %vm579, %v3228, %v3232
      %v3235 = vsel %vm579, %v3230, %v3226
      %v3236 = vsel %vm579, %v3232, %v3228
      %v3237 = vmul.f32 %v3233, %v588
      %v3238 = vmul.f32 %v3235, %v592
      %v3239 = vmul.f32 %v3234, %v588
      %v3240 = vmul.f32 %v3236, %v592
      %v3241 = vpack.c.bf16 %v3239, %v3237
      %v3242 = vpack.c.bf16 %v3240, %v3238
      %3243 = vst [vmem:[#allocation7 + $0x70] sm:$0xff] %v3241
      %3244 = vst [vmem:[#allocation7 + $0x78] sm:$0xff] %v3242
      %3245 = vrot.lane.b32.xlu0 %v3097, 111
      %v3246 = vpop.permute.xlu0 %3245
      %3247 = vrot.lane.b32.xlu0 %v3099, 111
      %v3248 = vpop.permute.xlu0 %3247
      %3249 = vrot.lane.b32.xlu0 %v3098, 111
      %v3250 = vpop.permute.xlu0 %3249
      %3251 = vrot.lane.b32.xlu0 %v3100, 111
      %v3252 = vpop.permute.xlu0 %3251
      %v3253 = vsel %vm611, %v3246, %v3250
      %v3254 = vsel %vm611, %v3248, %v3252
      %v3255 = vsel %vm611, %v3250, %v3246
      %v3256 = vsel %vm611, %v3252, %v3248
      %v3257 = vmul.f32 %v3253, %v620
      %v3258 = vmul.f32 %v3255, %v624
      %v3259 = vmul.f32 %v3254, %v620
      %v3260 = vmul.f32 %v3256, %v624
      %v3261 = vpack.c.bf16 %v3259, %v3257
      %v3262 = vpack.c.bf16 %v3260, %v3258
      %3263 = vst [vmem:[#allocation7 + $0x80] sm:$0xff] %v3261
      %3264 = vst [vmem:[#allocation7 + $0x88] sm:$0xff] %v3262
      %v3265 = vld [vmem:[%s7] sm:$0xff]
      %v3266 = vld [vmem:[%s7 + $0x8] sm:$0xff]
      %v3267 = vld [vmem:[%s7 + $0x10] sm:$0xff]
      %v3268 = vld [vmem:[%s7 + $0x18] sm:$0xff]
      %v3269 = vld [vmem:[#allocation7] sm:$0xff]
      %v3270 = vld [vmem:[#allocation7 + $0x8] sm:$0xff]
      %v3271 = vld [vmem:[#allocation7 + $0x10] sm:$0xff]
      %v3272 = vld [vmem:[#allocation7 + $0x18] sm:$0xff]
      %v3273 = vld [vmem:[#allocation7 + $0x20] sm:$0xff]
      %v3274 = vld [vmem:[#allocation7 + $0x28] sm:$0xff]
      %v3275 = vld [vmem:[#allocation7 + $0x30] sm:$0xff]
      %v3276 = vld [vmem:[#allocation7 + $0x38] sm:$0xff]
      %v3277 = vld [vmem:[#allocation7 + $0x40] sm:$0xff]
      %v3278 = vld [vmem:[#allocation7 + $0x48] sm:$0xff]
      %v3279 = vld [vmem:[#allocation7 + $0x50] sm:$0xff]
      %v3280 = vld [vmem:[#allocation7 + $0x58] sm:$0xff]
      %v3281 = vld [vmem:[#allocation7 + $0x60] sm:$0xff]
      %v3282 = vld [vmem:[#allocation7 + $0x68] sm:$0xff]
      %v3283 = vld [vmem:[#allocation7 + $0x70] sm:$0xff]
      %v3284 = vld [vmem:[#allocation7 + $0x78] sm:$0xff]
      %v3285 = vld [vmem:[#allocation7 + $0x80] sm:$0xff]
      %v3286 = vld [vmem:[#allocation7 + $0x88] sm:$0xff]
      %v3287 = vld [vmem:[%s8] sm:$0xff]
      %v3288 = vld [vmem:[%s8 + $0x8] sm:$0xff]
      %v3289 = vld [vmem:[%s8 + $0x10] sm:$0xff]
      %v3290 = vld [vmem:[%s8 + $0x18] sm:$0xff]
      %3292 = vset.pattern.permute.xlu0 0
      %3293 = vperm.xlu0 %3292, %v3287
      %v3294 = vpop.permute.xlu0 %3293
      %3297 = vset.pattern.permute.xlu0 0
      %3298 = vperm.xlu0 %3297, %v3288
      %v3299 = vpop.permute.xlu0 %3298
      %3302 = vset.pattern.permute.xlu0 0
      %3303 = vperm.xlu0 %3302, %v3289
      %v3304 = vpop.permute.xlu0 %3303
      %3307 = vset.pattern.permute.xlu0 0
      %3308 = vperm.xlu0 %3307, %v3290
      %v3309 = vpop.permute.xlu0 %3308
      %v3315 = vunpack.c.l.b16 %v3265
      %v3316 = vunpack.c.h.b16 %v3265
      %v3317 = vunpack.c.l.b16 %v3266
      %v3318 = vunpack.c.h.b16 %v3266
      %v3319 = vunpack.c.l.b16 %v3267
      %v3320 = vunpack.c.h.b16 %v3267
      %v3321 = vunpack.c.l.b16 %v3268
      %v3322 = vunpack.c.h.b16 %v3268
      %v3323 = vpack.c.b16 %v3317, %v3315
      %v3324 = vpack.c.b16 %v3318, %v3316
      %v3325 = vpack.c.b16 %v3321, %v3319
      %v3326 = vpack.c.b16 %v3322, %v3320
      %v3330 = vsel %vm664, %v3324, 0
      %v3333 = vsel %vm664, %v3326, 0
      %3335 = vmatprep.subr.bf16.mxu0 %v3270
      %3336 = vmatpush1.bf16.msra.mxu0 %v3269
      %3337 = vmatprep.subr.bf16.mxu0 %v3272
      %3338 = vmatpush1.bf16.msra.mxu0 %v3271
      %3339 = vmatprep.subr.bf16.mxu0 %v3274
      %3340 = vmatpush1.bf16.msra.mxu0 %v3273
      %3341 = vmatprep.subr.bf16.mxu0 %v3276
      %3342 = vmatpush1.bf16.msra.mxu0 %v3275
      %3343 = vmatprep.subr.bf16.mxu0 %v3278
      %3344 = vmatpush1.bf16.msra.mxu0 %v3277
      %3345 = vmatprep.subr.bf16.mxu0 %v3280
      %3346 = vmatpush1.bf16.msra.mxu0 %v3279
      %3347 = vmatprep.subr.bf16.mxu0 %v3282
      %3348 = vmatpush1.bf16.msra.mxu0 %v3281
      %3349 = vmatprep.subr.bf16.mxu0 %v3284
      %3350 = vmatpush1.bf16.msra.mxu0 %v3283
      %3351 = vmatprep.subr.bf16.mxu0 %v3286
      %3352 = vmatpush1.bf16.msra.mxu0 %v3285
      %3353 = vmatprep.subr.bf16.mxu0 0
      %3354 = vmatpush1.bf16.msra.mxu0 0
      %3355 = vmatprep.subr.bf16.mxu0 0
      %3356 = vmatpush1.bf16.msra.mxu0 0
      %3357 = vmatprep.subr.bf16.mxu0 0
      %3358 = vmatpush1.bf16.msra.mxu0 0
      %3359 = vmatprep.subr.bf16.mxu0 0
      %3360 = vmatpush1.bf16.msra.mxu0 0
      %3361 = vmatprep.subr.bf16.mxu0 0
      %3362 = vmatpush1.bf16.msra.mxu0 0
      %3363 = vmatprep.subr.bf16.mxu0 0
      %3364 = vmatpush1.bf16.msra.mxu0 0
      %3365 = vmatprep.subr.bf16.mxu0 0
      %3366 = vmatpush1.bf16.msra.mxu0 0
      %3367 = vmatprep.mubr.bf16.mxu0 %v3330
      %3368 = vmatmul.mubr.bf16.gmra.mrb[0].mxu0 %v3323
      %v3369 = vpop.f32.mrb[0].mxu0
      %v3370 = vadd.f32 %v3294, %v3369
      %v3371 = vpop.f32.mrb[0].mxu0
      %v3372 = vadd.f32 %v3294, %v3371
      %v3373 = vpop.f32.mrb[0].mxu0
      %v3374 = vadd.f32 %v3299, %v3373
      %v3375 = vpop.f32.mrb[0].mxu0
      %v3376 = vadd.f32 %v3299, %v3375
      %3377 = vmatprep.mubr.bf16.mxu0 %v3333
      %3378 = vmatmul.mubr.bf16.gmra.mrb[0].mxu0 %v3325
      %v3379 = vpop.f32.mrb[0].mxu0
      %v3380 = vadd.f32 %v3304, %v3379
      %v3381 = vpop.f32.mrb[0].mxu0
      %v3382 = vadd.f32 %v3304, %v3381
      %v3383 = vpop.f32.mrb[0].mxu0
      %v3384 = vadd.f32 %v3309, %v3383
      %v3385 = vpop.f32.mrb[0].mxu0
      %v3386 = vadd.f32 %v3309, %v3385
      %3387 = vdwg.mxu0
      %v3388 = vld [vmem:[#allocation5] sm:$0xff]
      %v3389 = vld [vmem:[#allocation5 + $0x8] sm:$0xff]
      %v3390 = vxor.u32 %v3370, 2147483648
      %v3391 = vxor.u32 %v3372, 2147483648
      %v3392 = vmul.f32 %v3390, 1.442695
      %v3393 = vpow.pop %v3392
      %v3394 = vmul.f32 %v3391, 1.442695
      %v3395 = vpow.pop %v3394
      %v3396 = vadd.f32 %v3393, 1.0
      %v3397 = vadd.f32 %v3395, 1.0
      %v3398 = vrcp.pop %v3396
      %v3399 = vmul.f32 1.0, %v3398
      %v3400 = vrcp.pop %v3397
      %v3401 = vmul.f32 1.0, %v3400
      %v3402 = vxor.u32 %v3374, 2147483648
      %v3403 = vxor.u32 %v3376, 2147483648
      %v3404 = vmul.f32 %v3402, 1.442695
      %v3405 = vpow.pop %v3404
      %v3406 = vmul.f32 %v3403, 1.442695
      %v3407 = vpow.pop %v3406
      %v3408 = vadd.f32 %v3405, 1.0
      %v3409 = vadd.f32 %v3407, 1.0
      %v3410 = vrcp.pop %v3408
      %v3411 = vmul.f32 1.0, %v3410
      %v3412 = vrcp.pop %v3409
      %v3413 = vmul.f32 1.0, %v3412
      %v3414 = vmul.f32 %v3411, %v3388
      %v3415 = vmul.f32 %v3413, %v3389
      %v3416 = vtanh.pop %v3380
      %v3417 = vtanh.pop %v3382
      %v3418 = vmul.f32 %v3399, %v3416
      %v3419 = vmul.f32 %v3401, %v3417
      %v3420 = vadd.f32 %v3414, %v3418
      %v3421 = vadd.f32 %v3415, %v3419
      %v3422 = vxor.u32 %v3384, 2147483648
      %v3423 = vxor.u32 %v3386, 2147483648
      %v3424 = vmul.f32 %v3422, 1.442695
      %v3425 = vpow.pop %v3424
      %v3426 = vmul.f32 %v3423, 1.442695
      %v3427 = vpow.pop %v3426
      %v3428 = vadd.f32 %v3425, 1.0
      %v3429 = vadd.f32 %v3427, 1.0
      %v3430 = vrcp.pop %v3428
      %v3431 = vmul.f32 1.0, %v3430
      %v3432 = vrcp.pop %v3429
      %v3433 = vmul.f32 1.0, %v3432
      %v3434 = vtanh.pop %v3420
      %v3435 = vtanh.pop %v3421
      %v3436 = vmul.f32 %v3431, %v3434
      %v3437 = vmul.f32 %v3433, %v3435
      %3438 = vst [vmem:[#allocation5] sm:$0xff] %v3420
      %3439 = vst [vmem:[#allocation5 + $0x8] sm:$0xff] %v3421
      %3440 = vst [vmem:[#allocation4 + $0x10] sm:$0xff] %v3436
      %3441 = vst [vmem:[#allocation4 + $0x18] sm:$0xff] %v3437
      %v3442 = vld [vmem:[#allocation2] sm:$0xff]
      %v3443 = vld [vmem:[#allocation2 + $0x8] sm:$0xff]
      %v3444 = vld [vmem:[#allocation2 + $0x10] sm:$0xff]
      %v3445 = vld [vmem:[#allocation2 + $0x18] sm:$0xff]
      %3446 = vrot.lane.b32.xlu0 %v3442, 17
      %v3447 = vpop.permute.xlu0 %3446
      %3448 = vrot.lane.b32.xlu0 %v3444, 17
      %v3449 = vpop.permute.xlu0 %3448
      %3450 = vrot.lane.b32.xlu0 %v3443, 17
      %v3451 = vpop.permute.xlu0 %3450
      %3452 = vrot.lane.b32.xlu0 %v3445, 17
      %v3453 = vpop.permute.xlu0 %3452
      %v3454 = vsel %vm383, %v3447, %v3451
      %v3455 = vsel %vm383, %v3449, %v3453
      %v3456 = vsel %vm383, %v3451, %v3447
      %v3457 = vsel %vm383, %v3453, %v3449
      %v3458 = vmul.f32 %v3456, %v392
      %v3459 = vmul.f32 %v3454, %v396
      %v3460 = vmul.f32 %v3457, %v392
      %v3461 = vmul.f32 %v3455, %v396
      %v3462 = vpack.c.bf16 %v3460, %v3458
      %v3463 = vpack.c.bf16 %v3461, %v3459
      %3464 = vst [vmem:[#allocation6] sm:$0xff] %v3462
      %3465 = vst [vmem:[#allocation6 + $0x8] sm:$0xff] %v3463
      %3466 = vrot.lane.b32.xlu0 %v3442, 16
      %v3467 = vpop.permute.xlu0 %3466
      %3468 = vrot.lane.b32.xlu0 %v3444, 16
      %v3469 = vpop.permute.xlu0 %3468
      %3470 = vrot.lane.b32.xlu0 %v3443, 16
      %v3471 = vpop.permute.xlu0 %3470
      %3472 = vrot.lane.b32.xlu0 %v3445, 16
      %v3473 = vpop.permute.xlu0 %3472
      %v3474 = vsel %vm415, %v3467, %v3471
      %v3475 = vsel %vm415, %v3469, %v3473
      %v3476 = vsel %vm415, %v3471, %v3467
      %v3477 = vsel %vm415, %v3473, %v3469
      %v3478 = vmul.f32 %v3476, %v424
      %v3479 = vmul.f32 %v3474, %v428
      %v3480 = vmul.f32 %v3477, %v424
      %v3481 = vmul.f32 %v3475, %v428
      %v3482 = vpack.c.bf16 %v3480, %v3478
      %v3483 = vpack.c.bf16 %v3481, %v3479
      %3484 = vst [vmem:[#allocation6 + $0x10] sm:$0xff] %v3482
      %3485 = vst [vmem:[#allocation6 + $0x18] sm:$0xff] %v3483
      %3486 = vrot.lane.b32.xlu0 %v3442, 15
      %v3487 = vpop.permute.xlu0 %3486
      %3488 = vrot.lane.b32.xlu0 %v3444, 15
      %v3489 = vpop.permute.xlu0 %3488
      %3490 = vrot.lane.b32.xlu0 %v3443, 15
      %v3491 = vpop.permute.xlu0 %3490
      %3492 = vrot.lane.b32.xlu0 %v3445, 15
      %v3493 = vpop.permute.xlu0 %3492
      %v3494 = vsel %vm447, %v3487, %v3491
      %v3495 = vsel %vm447, %v3489, %v3493
      %v3496 = vsel %vm447, %v3491, %v3487
      %v3497 = vsel %vm447, %v3493, %v3489
      %v3498 = vmul.f32 %v3496, %v456
      %v3499 = vmul.f32 %v3494, %v460
      %v3500 = vmul.f32 %v3497, %v456
      %v3501 = vmul.f32 %v3495, %v460
      %v3502 = vpack.c.bf16 %v3500, %v3498
      %v3503 = vpack.c.bf16 %v3501, %v3499
      %3504 = vst [vmem:[#allocation6 + $0x20] sm:$0xff] %v3502
      %3505 = vst [vmem:[#allocation6 + $0x28] sm:$0xff] %v3503
      %3506 = vrot.lane.b32.xlu0 %v3442, 1
      %v3507 = vpop.permute.xlu0 %3506
      %3508 = vrot.lane.b32.xlu0 %v3444, 1
      %v3509 = vpop.permute.xlu0 %3508
      %3510 = vrot.lane.b32.xlu0 %v3443, 1
      %v3511 = vpop.permute.xlu0 %3510
      %3512 = vrot.lane.b32.xlu0 %v3445, 1
      %v3513 = vpop.permute.xlu0 %3512
      %v3514 = vsel %vm479, %v3507, %v3511
      %v3515 = vsel %vm479, %v3509, %v3513
      %v3516 = vsel %vm479, %v3511, %v3507
      %v3517 = vsel %vm479, %v3513, %v3509
      %v3518 = vmul.f32 %v3516, %v488
      %v3519 = vmul.f32 %v3514, %v492
      %v3520 = vmul.f32 %v3517, %v488
      %v3521 = vmul.f32 %v3515, %v492
      %v3522 = vpack.c.bf16 %v3520, %v3518
      %v3523 = vpack.c.bf16 %v3521, %v3519
      %3524 = vst [vmem:[#allocation6 + $0x30] sm:$0xff] %v3522
      %3525 = vst [vmem:[#allocation6 + $0x38] sm:$0xff] %v3523
      %v3526 = vpack.c.bf16 %v3444, %v3442
      %v3527 = vpack.c.bf16 %v3445, %v3443
      %3528 = vst [vmem:[#allocation6 + $0x40] sm:$0xff] %v3526
      %3529 = vst [vmem:[#allocation6 + $0x48] sm:$0xff] %v3527
      %3530 = vrot.lane.b32.xlu0 %v3442, 127
      %v3531 = vpop.permute.xlu0 %3530
      %3532 = vrot.lane.b32.xlu0 %v3444, 127
      %v3533 = vpop.permute.xlu0 %3532
      %3534 = vrot.lane.b32.xlu0 %v3443, 127
      %v3535 = vpop.permute.xlu0 %3534
      %3536 = vrot.lane.b32.xlu0 %v3445, 127
      %v3537 = vpop.permute.xlu0 %3536
      %v3538 = vsel %vm515, %v3531, %v3535
      %v3539 = vsel %vm515, %v3533, %v3537
      %v3540 = vsel %vm515, %v3535, %v3531
      %v3541 = vsel %vm515, %v3537, %v3533
      %v3542 = vmul.f32 %v3538, %v524
      %v3543 = vmul.f32 %v3540, %v528
      %v3544 = vmul.f32 %v3539, %v524
      %v3545 = vmul.f32 %v3541, %v528
      %v3546 = vpack.c.bf16 %v3544, %v3542
      %v3547 = vpack.c.bf16 %v3545, %v3543
      %3548 = vst [vmem:[#allocation6 + $0x50] sm:$0xff] %v3546
      %3549 = vst [vmem:[#allocation6 + $0x58] sm:$0xff] %v3547
      %3550 = vrot.lane.b32.xlu0 %v3442, 113
      %v3551 = vpop.permute.xlu0 %3550
      %3552 = vrot.lane.b32.xlu0 %v3444, 113
      %v3553 = vpop.permute.xlu0 %3552
      %3554 = vrot.lane.b32.xlu0 %v3443, 113
      %v3555 = vpop.permute.xlu0 %3554
      %3556 = vrot.lane.b32.xlu0 %v3445, 113
      %v3557 = vpop.permute.xlu0 %3556
      %v3558 = vsel %vm547, %v3551, %v3555
      %v3559 = vsel %vm547, %v3553, %v3557
      %v3560 = vsel %vm547, %v3555, %v3551
      %v3561 = vsel %vm547, %v3557, %v3553
      %v3562 = vmul.f32 %v3558, %v556
      %v3563 = vmul.f32 %v3560, %v560
      %v3564 = vmul.f32 %v3559, %v556
      %v3565 = vmul.f32 %v3561, %v560
      %v3566 = vpack.c.bf16 %v3564, %v3562
      %v3567 = vpack.c.bf16 %v3565, %v3563
      %3568 = vst [vmem:[#allocation6 + $0x60] sm:$0xff] %v3566
      %3569 = vst [vmem:[#allocation6 + $0x68] sm:$0xff] %v3567
      %3570 = vrot.lane.b32.xlu0 %v3442, 112
      %v3571 = vpop.permute.xlu0 %3570
      %3572 = vrot.lane.b32.xlu0 %v3444, 112
      %v3573 = vpop.permute.xlu0 %3572
      %3574 = vrot.lane.b32.xlu0 %v3443, 112
      %v3575 = vpop.permute.xlu0 %3574
      %3576 = vrot.lane.b32.xlu0 %v3445, 112
      %v3577 = vpop.permute.xlu0 %3576
      %v3578 = vsel %vm579, %v3571, %v3575
      %v3579 = vsel %vm579, %v3573, %v3577
      %v3580 = vsel %vm579, %v3575, %v3571
      %v3581 = vsel %vm579, %v3577, %v3573
      %v3582 = vmul.f32 %v3578, %v588
      %v3583 = vmul.f32 %v3580, %v592
      %v3584 = vmul.f32 %v3579, %v588
      %v3585 = vmul.f32 %v3581, %v592
      %v3586 = vpack.c.bf16 %v3584, %v3582
      %v3587 = vpack.c.bf16 %v3585, %v3583
      %3588 = vst [vmem:[#allocation6 + $0x70] sm:$0xff] %v3586
      %3589 = vst [vmem:[#allocation6 + $0x78] sm:$0xff] %v3587
      %3590 = vrot.lane.b32.xlu0 %v3442, 111
      %v3591 = vpop.permute.xlu0 %3590
      %3592 = vrot.lane.b32.xlu0 %v3444, 111
      %v3593 = vpop.permute.xlu0 %3592
      %3594 = vrot.lane.b32.xlu0 %v3443, 111
      %v3595 = vpop.permute.xlu0 %3594
      %3596 = vrot.lane.b32.xlu0 %v3445, 111
      %v3597 = vpop.permute.xlu0 %3596
      %v3598 = vsel %vm611, %v3591, %v3595
      %v3599 = vsel %vm611, %v3593, %v3597
      %v3600 = vsel %vm611, %v3595, %v3591
      %v3601 = vsel %vm611, %v3597, %v3593
      %v3602 = vmul.f32 %v3598, %v620
      %v3603 = vmul.f32 %v3600, %v624
      %v3604 = vmul.f32 %v3599, %v620
      %v3605 = vmul.f32 %v3601, %v624
      %v3606 = vpack.c.bf16 %v3604, %v3602
      %v3607 = vpack.c.bf16 %v3605, %v3603
      %3608 = vst [vmem:[#allocation6 + $0x80] sm:$0xff] %v3606
      %3609 = vst [vmem:[#allocation6 + $0x88] sm:$0xff] %v3607
      %v3610 = vld [vmem:[%s2] sm:$0xff]
      %v3611 = vld [vmem:[%s2 + $0x8] sm:$0xff]
      %v3612 = vld [vmem:[#allocation6] sm:$0xff]
      %v3613 = vld [vmem:[#allocation6 + $0x8] sm:$0xff]
      %v3614 = vld [vmem:[#allocation6 + $0x10] sm:$0xff]
      %v3615 = vld [vmem:[#allocation6 + $0x18] sm:$0xff]
      %v3616 = vld [vmem:[#allocation6 + $0x20] sm:$0xff]
      %v3617 = vld [vmem:[#allocation6 + $0x28] sm:$0xff]
      %v3618 = vld [vmem:[#allocation6 + $0x30] sm:$0xff]
      %v3619 = vld [vmem:[#allocation6 + $0x38] sm:$0xff]
      %v3620 = vld [vmem:[#allocation6 + $0x40] sm:$0xff]
      %v3621 = vld [vmem:[#allocation6 + $0x48] sm:$0xff]
      %v3622 = vld [vmem:[#allocation6 + $0x50] sm:$0xff]
      %v3623 = vld [vmem:[#allocation6 + $0x58] sm:$0xff]
      %v3624 = vld [vmem:[#allocation6 + $0x60] sm:$0xff]
      %v3625 = vld [vmem:[#allocation6 + $0x68] sm:$0xff]
      %v3626 = vld [vmem:[#allocation6 + $0x70] sm:$0xff]
      %v3627 = vld [vmem:[#allocation6 + $0x78] sm:$0xff]
      %v3628 = vld [vmem:[#allocation6 + $0x80] sm:$0xff]
      %v3629 = vld [vmem:[#allocation6 + $0x88] sm:$0xff]
      %v3632 = vunpack.c.l.b16 %v3610
      %v3633 = vunpack.c.h.b16 %v3610
      %v3634 = vunpack.c.l.b16 %v3611
      %v3635 = vunpack.c.h.b16 %v3611
      %v3636 = vpack.c.b16 %v3634, %v3632
      %v3637 = vpack.c.b16 %v3635, %v3633
      %v3640 = vsel %vm664, %v3637, 0
      %3642 = vmatprep.subr.bf16.mxu0 %v3613
      %3643 = vmatpush1.bf16.msra.mxu0 %v3612
      %3644 = vmatprep.subr.bf16.mxu0 %v3615
      %3645 = vmatpush1.bf16.msra.mxu0 %v3614
      %3646 = vmatprep.subr.bf16.mxu0 %v3617
      %3647 = vmatpush1.bf16.msra.mxu0 %v3616
      %3648 = vmatprep.subr.bf16.mxu0 %v3619
      %3649 = vmatpush1.bf16.msra.mxu0 %v3618
      %3650 = vmatprep.subr.bf16.mxu0 %v3621
      %3651 = vmatpush1.bf16.msra.mxu0 %v3620
      %3652 = vmatprep.subr.bf16.mxu0 %v3623
      %3653 = vmatpush1.bf16.msra.mxu0 %v3622
      %3654 = vmatprep.subr.bf16.mxu0 %v3625
      %3655 = vmatpush1.bf16.msra.mxu0 %v3624
      %3656 = vmatprep.subr.bf16.mxu0 %v3627
      %3657 = vmatpush1.bf16.msra.mxu0 %v3626
      %3658 = vmatprep.subr.bf16.mxu0 %v3629
      %3659 = vmatpush1.bf16.msra.mxu0 %v3628
      %3660 = vmatprep.subr.bf16.mxu0 0
      %3661 = vmatpush1.bf16.msra.mxu0 0
      %3662 = vmatprep.subr.bf16.mxu0 0
      %3663 = vmatpush1.bf16.msra.mxu0 0
      %3664 = vmatprep.subr.bf16.mxu0 0
      %3665 = vmatpush1.bf16.msra.mxu0 0
      %3666 = vmatprep.subr.bf16.mxu0 0
      %3667 = vmatpush1.bf16.msra.mxu0 0
      %3668 = vmatprep.subr.bf16.mxu0 0
      %3669 = vmatpush1.bf16.msra.mxu0 0
      %3670 = vmatprep.subr.bf16.mxu0 0
      %3671 = vmatpush1.bf16.msra.mxu0 0
      %3672 = vmatprep.subr.bf16.mxu0 0
      %3673 = vmatpush1.bf16.msra.mxu0 0
      %3674 = vmatprep.mubr.bf16.mxu0 %v3640
      %3675 = vmatmul.mubr.bf16.gmra.mrb[0].mxu0 %v3636
      %v3676 = vpop.f32.mrb[0].mxu0
      %v3677 = vadd.f32 0.0, %v3676
      %v3678 = vpop.f32.mrb[0].mxu0
      %v3679 = vadd.f32 0.0, %v3678
      %v3680 = vpop.f32.mrb[0].mxu0
      %v3681 = vadd.f32 0.0, %v3680
      %v3682 = vpop.f32.mrb[0].mxu0
      %v3683 = vadd.f32 0.0, %v3682
      %3684 = vdwg.mxu0
      %v3685 = vmax.f32 %v3677, 0.0
      %v3686 = vmax.f32 %v3679, 0.0
      %v3687 = vmax.f32 %v3681, 0.0
      %v3688 = vmax.f32 %v3683, 0.0
      %3689 = vrot.lane.b32.xlu0 %v3685, 17
      %v3690 = vpop.permute.xlu0 %3689
      %3691 = vrot.lane.b32.xlu0 %v3687, 17
      %v3692 = vpop.permute.xlu0 %3691
      %3693 = vrot.lane.b32.xlu0 %v3686, 17
      %v3694 = vpop.permute.xlu0 %3693
      %3695 = vrot.lane.b32.xlu0 %v3688, 17
      %v3696 = vpop.permute.xlu0 %3695
      %v3697 = vsel %vm383, %v3690, %v3694
      %v3698 = vsel %vm383, %v3692, %v3696
      %v3699 = vsel %vm383, %v3694, %v3690
      %v3700 = vsel %vm383, %v3696, %v3692
      %v3701 = vmul.f32 %v3699, %v392
      %v3702 = vmul.f32 %v3697, %v396
      %v3703 = vmul.f32 %v3700, %v392
      %v3704 = vmul.f32 %v3698, %v396
      %v3705 = vpack.c.bf16 %v3703, %v3701
      %v3706 = vpack.c.bf16 %v3704, %v3702
      %3707 = vst [vmem:[#allocation7] sm:$0xff] %v3705
      %3708 = vst [vmem:[#allocation7 + $0x8] sm:$0xff] %v3706
      %3709 = vrot.lane.b32.xlu0 %v3685, 16
      %v3710 = vpop.permute.xlu0 %3709
      %3711 = vrot.lane.b32.xlu0 %v3687, 16
      %v3712 = vpop.permute.xlu0 %3711
      %3713 = vrot.lane.b32.xlu0 %v3686, 16
      %v3714 = vpop.permute.xlu0 %3713
      %3715 = vrot.lane.b32.xlu0 %v3688, 16
      %v3716 = vpop.permute.xlu0 %3715
      %v3717 = vsel %vm415, %v3710, %v3714
      %v3718 = vsel %vm415, %v3712, %v3716
      %v3719 = vsel %vm415, %v3714, %v3710
      %v3720 = vsel %vm415, %v3716, %v3712
      %v3721 = vmul.f32 %v3719, %v424
      %v3722 = vmul.f32 %v3717, %v428
      %v3723 = vmul.f32 %v3720, %v424
      %v3724 = vmul.f32 %v3718, %v428
      %v3725 = vpack.c.bf16 %v3723, %v3721
      %v3726 = vpack.c.bf16 %v3724, %v3722
      %3727 = vst [vmem:[#allocation7 + $0x10] sm:$0xff] %v3725
      %3728 = vst [vmem:[#allocation7 + $0x18] sm:$0xff] %v3726
      %3729 = vrot.lane.b32.xlu0 %v3685, 15
      %v3730 = vpop.permute.xlu0 %3729
      %3731 = vrot.lane.b32.xlu0 %v3687, 15
      %v3732 = vpop.permute.xlu0 %3731
      %3733 = vrot.lane.b32.xlu0 %v3686, 15
      %v3734 = vpop.permute.xlu0 %3733
      %3735 = vrot.lane.b32.xlu0 %v3688, 15
      %v3736 = vpop.permute.xlu0 %3735
      %v3737 = vsel %vm447, %v3730, %v3734
      %v3738 = vsel %vm447, %v3732, %v3736
      %v3739 = vsel %vm447, %v3734, %v3730
      %v3740 = vsel %vm447, %v3736, %v3732
      %v3741 = vmul.f32 %v3739, %v456
      %v3742 = vmul.f32 %v3737, %v460
      %v3743 = vmul.f32 %v3740, %v456
      %v3744 = vmul.f32 %v3738, %v460
      %v3745 = vpack.c.bf16 %v3743, %v3741
      %v3746 = vpack.c.bf16 %v3744, %v3742
      %3747 = vst [vmem:[#allocation7 + $0x20] sm:$0xff] %v3745
      %3748 = vst [vmem:[#allocation7 + $0x28] sm:$0xff] %v3746
      %3749 = vrot.lane.b32.xlu0 %v3685, 1
      %v3750 = vpop.permute.xlu0 %3749
      %3751 = vrot.lane.b32.xlu0 %v3687, 1
      %v3752 = vpop.permute.xlu0 %3751
      %3753 = vrot.lane.b32.xlu0 %v3686, 1
      %v3754 = vpop.permute.xlu0 %3753
      %3755 = vrot.lane.b32.xlu0 %v3688, 1
      %v3756 = vpop.permute.xlu0 %3755
      %v3757 = vsel %vm479, %v3750, %v3754
      %v3758 = vsel %vm479, %v3752, %v3756
      %v3759 = vsel %vm479, %v3754, %v3750
      %v3760 = vsel %vm479, %v3756, %v3752
      %v3761 = vmul.f32 %v3759, %v488
      %v3762 = vmul.f32 %v3757, %v492
      %v3763 = vmul.f32 %v3760, %v488
      %v3764 = vmul.f32 %v3758, %v492
      %v3765 = vpack.c.bf16 %v3763, %v3761
      %v3766 = vpack.c.bf16 %v3764, %v3762
      %3767 = vst [vmem:[#allocation7 + $0x30] sm:$0xff] %v3765
      %3768 = vst [vmem:[#allocation7 + $0x38] sm:$0xff] %v3766
      %v3769 = vpack.c.bf16 %v3687, %v3685
      %v3770 = vpack.c.bf16 %v3688, %v3686
      %3771 = vst [vmem:[#allocation7 + $0x40] sm:$0xff] %v3769
      %3772 = vst [vmem:[#allocation7 + $0x48] sm:$0xff] %v3770
      %3773 = vrot.lane.b32.xlu0 %v3685, 127
      %v3774 = vpop.permute.xlu0 %3773
      %3775 = vrot.lane.b32.xlu0 %v3687, 127
      %v3776 = vpop.permute.xlu0 %3775
      %3777 = vrot.lane.b32.xlu0 %v3686, 127
      %v3778 = vpop.permute.xlu0 %3777
      %3779 = vrot.lane.b32.xlu0 %v3688, 127
      %v3780 = vpop.permute.xlu0 %3779
      %v3781 = vsel %vm515, %v3774, %v3778
      %v3782 = vsel %vm515, %v3776, %v3780
      %v3783 = vsel %vm515, %v3778, %v3774
      %v3784 = vsel %vm515, %v3780, %v3776
      %v3785 = vmul.f32 %v3781, %v524
      %v3786 = vmul.f32 %v3783, %v528
      %v3787 = vmul.f32 %v3782, %v524
      %v3788 = vmul.f32 %v3784, %v528
      %v3789 = vpack.c.bf16 %v3787, %v3785
      %v3790 = vpack.c.bf16 %v3788, %v3786
      %3791 = vst [vmem:[#allocation7 + $0x50] sm:$0xff] %v3789
      %3792 = vst [vmem:[#allocation7 + $0x58] sm:$0xff] %v3790
      %3793 = vrot.lane.b32.xlu0 %v3685, 113
      %v3794 = vpop.permute.xlu0 %3793
      %3795 = vrot.lane.b32.xlu0 %v3687, 113
      %v3796 = vpop.permute.xlu0 %3795
      %3797 = vrot.lane.b32.xlu0 %v3686, 113
      %v3798 = vpop.permute.xlu0 %3797
      %3799 = vrot.lane.b32.xlu0 %v3688, 113
      %v3800 = vpop.permute.xlu0 %3799
      %v3801 = vsel %vm547, %v3794, %v3798
      %v3802 = vsel %vm547, %v3796, %v3800
      %v3803 = vsel %vm547, %v3798, %v3794
      %v3804 = vsel %vm547, %v3800, %v3796
      %v3805 = vmul.f32 %v3801, %v556
      %v3806 = vmul.f32 %v3803, %v560
      %v3807 = vmul.f32 %v3802, %v556
      %v3808 = vmul.f32 %v3804, %v560
      %v3809 = vpack.c.bf16 %v3807, %v3805
      %v3810 = vpack.c.bf16 %v3808, %v3806
      %3811 = vst [vmem:[#allocation7 + $0x60] sm:$0xff] %v3809
      %3812 = vst [vmem:[#allocation7 + $0x68] sm:$0xff] %v3810
      %3813 = vrot.lane.b32.xlu0 %v3685, 112
      %v3814 = vpop.permute.xlu0 %3813
      %3815 = vrot.lane.b32.xlu0 %v3687, 112
      %v3816 = vpop.permute.xlu0 %3815
      %3817 = vrot.lane.b32.xlu0 %v3686, 112
      %v3818 = vpop.permute.xlu0 %3817
      %3819 = vrot.lane.b32.xlu0 %v3688, 112
      %v3820 = vpop.permute.xlu0 %3819
      %v3821 = vsel %vm579, %v3814, %v3818
      %v3822 = vsel %vm579, %v3816, %v3820
      %v3823 = vsel %vm579, %v3818, %v3814
      %v3824 = vsel %vm579, %v3820, %v3816
      %v3825 = vmul.f32 %v3821, %v588
      %v3826 = vmul.f32 %v3823, %v592
      %v3827 = vmul.f32 %v3822, %v588
      %v3828 = vmul.f32 %v3824, %v592
      %v3829 = vpack.c.bf16 %v3827, %v3825
      %v3830 = vpack.c.bf16 %v3828, %v3826
      %3831 = vst [vmem:[#allocation7 + $0x70] sm:$0xff] %v3829
      %3832 = vst [vmem:[#allocation7 + $0x78] sm:$0xff] %v3830
      %3833 = vrot.lane.b32.xlu0 %v3685, 111
      %v3834 = vpop.permute.xlu0 %3833
      %3835 = vrot.lane.b32.xlu0 %v3687, 111
      %v3836 = vpop.permute.xlu0 %3835
      %3837 = vrot.lane.b32.xlu0 %v3686, 111
      %v3838 = vpop.permute.xlu0 %3837
      %3839 = vrot.lane.b32.xlu0 %v3688, 111
      %v3840 = vpop.permute.xlu0 %3839
      %v3841 = vsel %vm611, %v3834, %v3838
      %v3842 = vsel %vm611, %v3836, %v3840
      %v3843 = vsel %vm611, %v3838, %v3834
      %v3844 = vsel %vm611, %v3840, %v3836
      %v3845 = vmul.f32 %v3841, %v620
      %v3846 = vmul.f32 %v3843, %v624
      %v3847 = vmul.f32 %v3842, %v620
      %v3848 = vmul.f32 %v3844, %v624
      %v3849 = vpack.c.bf16 %v3847, %v3845
      %v3850 = vpack.c.bf16 %v3848, %v3846
      %3851 = vst [vmem:[#allocation7 + $0x80] sm:$0xff] %v3849
      %3852 = vst [vmem:[#allocation7 + $0x88] sm:$0xff] %v3850
      %v3853 = vld [vmem:[%s3] sm:$0xff]
      %v3854 = vld [vmem:[%s3 + $0x8] sm:$0xff]
      %v3855 = vld [vmem:[#allocation7] sm:$0xff]
      %v3856 = vld [vmem:[#allocation7 + $0x8] sm:$0xff]
      %v3857 = vld [vmem:[#allocation7 + $0x10] sm:$0xff]
      %v3858 = vld [vmem:[#allocation7 + $0x18] sm:$0xff]
      %v3859 = vld [vmem:[#allocation7 + $0x20] sm:$0xff]
      %v3860 = vld [vmem:[#allocation7 + $0x28] sm:$0xff]
      %v3861 = vld [vmem:[#allocation7 + $0x30] sm:$0xff]
      %v3862 = vld [vmem:[#allocation7 + $0x38] sm:$0xff]
      %v3863 = vld [vmem:[#allocation7 + $0x40] sm:$0xff]
      %v3864 = vld [vmem:[#allocation7 + $0x48] sm:$0xff]
      %v3865 = vld [vmem:[#allocation7 + $0x50] sm:$0xff]
      %v3866 = vld [vmem:[#allocation7 + $0x58] sm:$0xff]
      %v3867 = vld [vmem:[#allocation7 + $0x60] sm:$0xff]
      %v3868 = vld [vmem:[#allocation7 + $0x68] sm:$0xff]
      %v3869 = vld [vmem:[#allocation7 + $0x70] sm:$0xff]
      %v3870 = vld [vmem:[#allocation7 + $0x78] sm:$0xff]
      %v3871 = vld [vmem:[#allocation7 + $0x80] sm:$0xff]
      %v3872 = vld [vmem:[#allocation7 + $0x88] sm:$0xff]
      %v3875 = vunpack.c.l.b16 %v3853
      %v3876 = vunpack.c.h.b16 %v3853
      %v3877 = vunpack.c.l.b16 %v3854
      %v3878 = vunpack.c.h.b16 %v3854
      %v3879 = vpack.c.b16 %v3877, %v3875
      %v3880 = vpack.c.b16 %v3878, %v3876
      %v3883 = vsel %vm664, %v3880, 0
      %3885 = vmatprep.subr.bf16.mxu0 %v3856
      %3886 = vmatpush1.bf16.msra.mxu0 %v3855
      %3887 = vmatprep.subr.bf16.mxu0 %v3858
      %3888 = vmatpush1.bf16.msra.mxu0 %v3857
      %3889 = vmatprep.subr.bf16.mxu0 %v3860
      %3890 = vmatpush1.bf16.msra.mxu0 %v3859
      %3891 = vmatprep.subr.bf16.mxu0 %v3862
      %3892 = vmatpush1.bf16.msra.mxu0 %v3861
      %3893 = vmatprep.subr.bf16.mxu0 %v3864
      %3894 = vmatpush1.bf16.msra.mxu0 %v3863
      %3895 = vmatprep.subr.bf16.mxu0 %v3866
      %3896 = vmatpush1.bf16.msra.mxu0 %v3865
      %3897 = vmatprep.subr.bf16.mxu0 %v3868
      %3898 = vmatpush1.bf16.msra.mxu0 %v3867
      %3899 = vmatprep.subr.bf16.mxu0 %v3870
      %3900 = vmatpush1.bf16.msra.mxu0 %v3869
      %3901 = vmatprep.subr.bf16.mxu0 %v3872
      %3902 = vmatpush1.bf16.msra.mxu0 %v3871
      %3903 = vmatprep.subr.bf16.mxu0 0
      %3904 = vmatpush1.bf16.msra.mxu0 0
      %3905 = vmatprep.subr.bf16.mxu0 0
      %3906 = vmatpush1.bf16.msra.mxu0 0
      %3907 = vmatprep.subr.bf16.mxu0 0
      %3908 = vmatpush1.bf16.msra.mxu0 0
      %3909 = vmatprep.subr.bf16.mxu0 0
      %3910 = vmatpush1.bf16.msra.mxu0 0
      %3911 = vmatprep.subr.bf16.mxu0 0
      %3912 = vmatpush1.bf16.msra.mxu0 0
      %3913 = vmatprep.subr.bf16.mxu0 0
      %3914 = vmatpush1.bf16.msra.mxu0 0
      %3915 = vmatprep.subr.bf16.mxu0 0
      %3916 = vmatpush1.bf16.msra.mxu0 0
      %3917 = vmatprep.mubr.bf16.mxu0 %v3883
      %3918 = vmatmul.mubr.bf16.gmra.mrb[0].mxu0 %v3879
      %v3919 = vpop.f32.mrb[0].mxu0
      %v3920 = vadd.f32 0.0, %v3919
      %v3921 = vpop.f32.mrb[0].mxu0
      %v3922 = vadd.f32 0.0, %v3921
      %v3923 = vpop.f32.mrb[0].mxu0
      %v3924 = vadd.f32 0.0, %v3923
      %v3925 = vpop.f32.mrb[0].mxu0
      %v3926 = vadd.f32 0.0, %v3925
      %3927 = vdwg.mxu0
      %v3928 = vmax.f32 %v3920, 0.0
      %v3929 = vmax.f32 %v3922, 0.0
      %v3930 = vmax.f32 %v3924, 0.0
      %v3931 = vmax.f32 %v3926, 0.0
      %3932 = vrot.lane.b32.xlu0 %v3928, 17
      %v3933 = vpop.permute.xlu0 %3932
      %3934 = vrot.lane.b32.xlu0 %v3930, 17
      %v3935 = vpop.permute.xlu0 %3934
      %3936 = vrot.lane.b32.xlu0 %v3929, 17
      %v3937 = vpop.permute.xlu0 %3936
      %3938 = vrot.lane.b32.xlu0 %v3931, 17
      %v3939 = vpop.permute.xlu0 %3938
      %v3940 = vsel %vm383, %v3933, %v3937
      %v3941 = vsel %vm383, %v3935, %v3939
      %v3942 = vsel %vm383, %v3937, %v3933
      %v3943 = vsel %vm383, %v3939, %v3935
      %v3944 = vmul.f32 %v3942, %v392
      %v3945 = vmul.f32 %v3940, %v396
      %v3946 = vmul.f32 %v3943, %v392
      %v3947 = vmul.f32 %v3941, %v396
      %v3948 = vpack.c.bf16 %v3946, %v3944
      %v3949 = vpack.c.bf16 %v3947, %v3945
      %3950 = vst [vmem:[#allocation7] sm:$0xff] %v3948
      %3951 = vst [vmem:[#allocation7 + $0x8] sm:$0xff] %v3949
      %3952 = vrot.lane.b32.xlu0 %v3928, 16
      %v3953 = vpop.permute.xlu0 %3952
      %3954 = vrot.lane.b32.xlu0 %v3930, 16
      %v3955 = vpop.permute.xlu0 %3954
      %3956 = vrot.lane.b32.xlu0 %v3929, 16
      %v3957 = vpop.permute.xlu0 %3956
      %3958 = vrot.lane.b32.xlu0 %v3931, 16
      %v3959 = vpop.permute.xlu0 %3958
      %v3960 = vsel %vm415, %v3953, %v3957
      %v3961 = vsel %vm415, %v3955, %v3959
      %v3962 = vsel %vm415, %v3957, %v3953
      %v3963 = vsel %vm415, %v3959, %v3955
      %v3964 = vmul.f32 %v3962, %v424
      %v3965 = vmul.f32 %v3960, %v428
      %v3966 = vmul.f32 %v3963, %v424
      %v3967 = vmul.f32 %v3961, %v428
      %v3968 = vpack.c.bf16 %v3966, %v3964
      %v3969 = vpack.c.bf16 %v3967, %v3965
      %3970 = vst [vmem:[#allocation7 + $0x10] sm:$0xff] %v3968
      %3971 = vst [vmem:[#allocation7 + $0x18] sm:$0xff] %v3969
      %3972 = vrot.lane.b32.xlu0 %v3928, 15
      %v3973 = vpop.permute.xlu0 %3972
      %3974 = vrot.lane.b32.xlu0 %v3930, 15
      %v3975 = vpop.permute.xlu0 %3974
      %3976 = vrot.lane.b32.xlu0 %v3929, 15
      %v3977 = vpop.permute.xlu0 %3976
      %3978 = vrot.lane.b32.xlu0 %v3931, 15
      %v3979 = vpop.permute.xlu0 %3978
      %v3980 = vsel %vm447, %v3973, %v3977
      %v3981 = vsel %vm447, %v3975, %v3979
      %v3982 = vsel %vm447, %v3977, %v3973
      %v3983 = vsel %vm447, %v3979, %v3975
      %v3984 = vmul.f32 %v3982, %v456
      %v3985 = vmul.f32 %v3980, %v460
      %v3986 = vmul.f32 %v3983, %v456
      %v3987 = vmul.f32 %v3981, %v460
      %v3988 = vpack.c.bf16 %v3986, %v3984
      %v3989 = vpack.c.bf16 %v3987, %v3985
      %3990 = vst [vmem:[#allocation7 + $0x20] sm:$0xff] %v3988
      %3991 = vst [vmem:[#allocation7 + $0x28] sm:$0xff] %v3989
      %3992 = vrot.lane.b32.xlu0 %v3928, 1
      %v3993 = vpop.permute.xlu0 %3992
      %3994 = vrot.lane.b32.xlu0 %v3930, 1
      %v3995 = vpop.permute.xlu0 %3994
      %3996 = vrot.lane.b32.xlu0 %v3929, 1
      %v3997 = vpop.permute.xlu0 %3996
      %3998 = vrot.lane.b32.xlu0 %v3931, 1
      %v3999 = vpop.permute.xlu0 %3998
      %v4000 = vsel %vm479, %v3993, %v3997
      %v4001 = vsel %vm479, %v3995, %v3999
      %v4002 = vsel %vm479, %v3997, %v3993
      %v4003 = vsel %vm479, %v3999, %v3995
      %v4004 = vmul.f32 %v4002, %v488
      %v4005 = vmul.f32 %v4000, %v492
      %v4006 = vmul.f32 %v4003, %v488
      %v4007 = vmul.f32 %v4001, %v492
      %v4008 = vpack.c.bf16 %v4006, %v4004
      %v4009 = vpack.c.bf16 %v4007, %v4005
      %4010 = vst [vmem:[#allocation7 + $0x30] sm:$0xff] %v4008
      %4011 = vst [vmem:[#allocation7 + $0x38] sm:$0xff] %v4009
      %v4012 = vpack.c.bf16 %v3930, %v3928
      %v4013 = vpack.c.bf16 %v3931, %v3929
      %4014 = vst [vmem:[#allocation7 + $0x40] sm:$0xff] %v4012
      %4015 = vst [vmem:[#allocation7 + $0x48] sm:$0xff] %v4013
      %4016 = vrot.lane.b32.xlu0 %v3928, 127
      %v4017 = vpop.permute.xlu0 %4016
      %4018 = vrot.lane.b32.xlu0 %v3930, 127
      %v4019 = vpop.permute.xlu0 %4018
      %4020 = vrot.lane.b32.xlu0 %v3929, 127
      %v4021 = vpop.permute.xlu0 %4020
      %4022 = vrot.lane.b32.xlu0 %v3931, 127
      %v4023 = vpop.permute.xlu0 %4022
      %v4024 = vsel %vm515, %v4017, %v4021
      %v4025 = vsel %vm515, %v4019, %v4023
      %v4026 = vsel %vm515, %v4021, %v4017
      %v4027 = vsel %vm515, %v4023, %v4019
      %v4028 = vmul.f32 %v4024, %v524
      %v4029 = vmul.f32 %v4026, %v528
      %v4030 = vmul.f32 %v4025, %v524
      %v4031 = vmul.f32 %v4027, %v528
      %v4032 = vpack.c.bf16 %v4030, %v4028
      %v4033 = vpack.c.bf16 %v4031, %v4029
      %4034 = vst [vmem:[#allocation7 + $0x50] sm:$0xff] %v4032
      %4035 = vst [vmem:[#allocation7 + $0x58] sm:$0xff] %v4033
      %4036 = vrot.lane.b32.xlu0 %v3928, 113
      %v4037 = vpop.permute.xlu0 %4036
      %4038 = vrot.lane.b32.xlu0 %v3930, 113
      %v4039 = vpop.permute.xlu0 %4038
      %4040 = vrot.lane.b32.xlu0 %v3929, 113
      %v4041 = vpop.permute.xlu0 %4040
      %4042 = vrot.lane.b32.xlu0 %v3931, 113
      %v4043 = vpop.permute.xlu0 %4042
      %v4044 = vsel %vm547, %v4037, %v4041
      %v4045 = vsel %vm547, %v4039, %v4043
      %v4046 = vsel %vm547, %v4041, %v4037
      %v4047 = vsel %vm547, %v4043, %v4039
      %v4048 = vmul.f32 %v4044, %v556
      %v4049 = vmul.f32 %v4046, %v560
      %v4050 = vmul.f32 %v4045, %v556
      %v4051 = vmul.f32 %v4047, %v560
      %v4052 = vpack.c.bf16 %v4050, %v4048
      %v4053 = vpack.c.bf16 %v4051, %v4049
      %4054 = vst [vmem:[#allocation7 + $0x60] sm:$0xff] %v4052
      %4055 = vst [vmem:[#allocation7 + $0x68] sm:$0xff] %v4053
      %4056 = vrot.lane.b32.xlu0 %v3928, 112
      %v4057 = vpop.permute.xlu0 %4056
      %4058 = vrot.lane.b32.xlu0 %v3930, 112
      %v4059 = vpop.permute.xlu0 %4058
      %4060 = vrot.lane.b32.xlu0 %v3929, 112
      %v4061 = vpop.permute.xlu0 %4060
      %4062 = vrot.lane.b32.xlu0 %v3931, 112
      %v4063 = vpop.permute.xlu0 %4062
      %v4064 = vsel %vm579, %v4057, %v4061
      %v4065 = vsel %vm579, %v4059, %v4063
      %v4066 = vsel %vm579, %v4061, %v4057
      %v4067 = vsel %vm579, %v4063, %v4059
      %v4068 = vmul.f32 %v4064, %v588
      %v4069 = vmul.f32 %v4066, %v592
      %v4070 = vmul.f32 %v4065, %v588
      %v4071 = vmul.f32 %v4067, %v592
      %v4072 = vpack.c.bf16 %v4070, %v4068
      %v4073 = vpack.c.bf16 %v4071, %v4069
      %4074 = vst [vmem:[#allocation7 + $0x70] sm:$0xff] %v4072
      %4075 = vst [vmem:[#allocation7 + $0x78] sm:$0xff] %v4073
      %4076 = vrot.lane.b32.xlu0 %v3928, 111
      %v4077 = vpop.permute.xlu0 %4076
      %4078 = vrot.lane.b32.xlu0 %v3930, 111
      %v4079 = vpop.permute.xlu0 %4078
      %4080 = vrot.lane.b32.xlu0 %v3929, 111
      %v4081 = vpop.permute.xlu0 %4080
      %4082 = vrot.lane.b32.xlu0 %v3931, 111
      %v4083 = vpop.permute.xlu0 %4082
      %v4084 = vsel %vm611, %v4077, %v4081
      %v4085 = vsel %vm611, %v4079, %v4083
      %v4086 = vsel %vm611, %v4081, %v4077
      %v4087 = vsel %vm611, %v4083, %v4079
      %v4088 = vmul.f32 %v4084, %v620
      %v4089 = vmul.f32 %v4086, %v624
      %v4090 = vmul.f32 %v4085, %v620
      %v4091 = vmul.f32 %v4087, %v624
      %v4092 = vpack.c.bf16 %v4090, %v4088
      %v4093 = vpack.c.bf16 %v4091, %v4089
      %4094 = vst [vmem:[#allocation7 + $0x80] sm:$0xff] %v4092
      %4095 = vst [vmem:[#allocation7 + $0x88] sm:$0xff] %v4093
      %v4096 = vld [vmem:[%s4] sm:$0x3]
      %v4097 = vld [vmem:[#allocation7] sm:$0xff]
      %v4098 = vld [vmem:[#allocation7 + $0x8] sm:$0xff]
      %v4099 = vld [vmem:[#allocation7 + $0x10] sm:$0xff]
      %v4100 = vld [vmem:[#allocation7 + $0x18] sm:$0xff]
      %v4101 = vld [vmem:[#allocation7 + $0x20] sm:$0xff]
      %v4102 = vld [vmem:[#allocation7 + $0x28] sm:$0xff]
      %v4103 = vld [vmem:[#allocation7 + $0x30] sm:$0xff]
      %v4104 = vld [vmem:[#allocation7 + $0x38] sm:$0xff]
      %v4105 = vld [vmem:[#allocation7 + $0x40] sm:$0xff]
      %v4106 = vld [vmem:[#allocation7 + $0x48] sm:$0xff]
      %v4107 = vld [vmem:[#allocation7 + $0x50] sm:$0xff]
      %v4108 = vld [vmem:[#allocation7 + $0x58] sm:$0xff]
      %v4109 = vld [vmem:[#allocation7 + $0x60] sm:$0xff]
      %v4110 = vld [vmem:[#allocation7 + $0x68] sm:$0xff]
      %v4111 = vld [vmem:[#allocation7 + $0x70] sm:$0xff]
      %v4112 = vld [vmem:[#allocation7 + $0x78] sm:$0xff]
      %v4113 = vld [vmem:[#allocation7 + $0x80] sm:$0xff]
      %v4114 = vld [vmem:[#allocation7 + $0x88] sm:$0xff]
      %v4117 = vunpack.c.l.s4 1966171168
      %v4118 = vunpack.c.0.s8 %v4117
      %v4119 = vlaneseq
      %v4120 = vshrl.u32 %v4119, 7
      %v4121 = vsub.s32 %v4118, %v4120
      %v4122 = vrot.slane %v4096, %v4121
      %v4123 = vcombine.high %v4122, %v4122
      %v4125 = vunpack.c.l.s4 1966171168
      %v4126 = vunpack.c.0.s8 %v4125
      %v4127 = vlaneseq
      %v4128 = vshrl.u32 %v4127, 7
      %v4129 = vsub.s32 %v4126, %v4128
      %v4130 = vrot.slane %v4122, %v4129
      %v4132 = vunpack.c.l.s4 1966171168
      %v4133 = vunpack.c.0.s8 %v4132
      %v4134 = vlaneseq
      %v4135 = vshrl.u32 %v4134, 7
      %v4136 = vsub.s32 %v4133, %v4135
      %v4137 = vrot.slane %v4123, %v4136
      %v4140 = vsel %vm664, %v4137, 0
      %4142 = vmatprep.subr.bf16.mxu0 %v4098
      %4143 = vmatpush1.bf16.msra.mxu0 %v4097
      %4144 = vmatprep.subr.bf16.mxu0 %v4100
      %4145 = vmatpush1.bf16.msra.mxu0 %v4099
      %4146 = vmatprep.subr.bf16.mxu0 %v4102
      %4147 = vmatpush1.bf16.msra.mxu0 %v4101
      %4148 = vmatprep.subr.bf16.mxu0 %v4104
      %4149 = vmatpush1.bf16.msra.mxu0 %v4103
      %4150 = vmatprep.subr.bf16.mxu0 %v4106
      %4151 = vmatpush1.bf16.msra.mxu0 %v4105
      %4152 = vmatprep.subr.bf16.mxu0 %v4108
      %4153 = vmatpush1.bf16.msra.mxu0 %v4107
      %4154 = vmatprep.subr.bf16.mxu0 %v4110
      %4155 = vmatpush1.bf16.msra.mxu0 %v4109
      %4156 = vmatprep.subr.bf16.mxu0 %v4112
      %4157 = vmatpush1.bf16.msra.mxu0 %v4111
      %4158 = vmatprep.subr.bf16.mxu0 %v4114
      %4159 = vmatpush1.bf16.msra.mxu0 %v4113
      %4160 = vmatprep.subr.bf16.mxu0 0
      %4161 = vmatpush1.bf16.msra.mxu0 0
      %4162 = vmatprep.subr.bf16.mxu0 0
      %4163 = vmatpush1.bf16.msra.mxu0 0
      %4164 = vmatprep.subr.bf16.mxu0 0
      %4165 = vmatpush1.bf16.msra.mxu0 0
      %4166 = vmatprep.subr.bf16.mxu0 0
      %4167 = vmatpush1.bf16.msra.mxu0 0
      %4168 = vmatprep.subr.bf16.mxu0 0
      %4169 = vmatpush1.bf16.msra.mxu0 0
      %4170 = vmatprep.subr.bf16.mxu0 0
      %4171 = vmatpush1.bf16.msra.mxu0 0
      %4172 = vmatprep.subr.bf16.mxu0 0
      %4173 = vmatpush1.bf16.msra.mxu0 0
      %4174 = vmatprep.mubr.bf16.mxu0 %v4140
      %4175 = vmatmul.mubr.bf16.gmra.mrb[0].mxu0 %v4130
      %v4176 = vpop.f32.mrb[0].mxu0
      %v4177 = vadd.f32 0.0, %v4176
      %v4178 = vpop.f32.mrb[0].mxu0
      %v4179 = vadd.f32 0.0, %v4178
      %v4180 = vpop.f32.mrb[0].mxu0
      %v4181 = vpop.f32.mrb[0].mxu0
      %4182 = vdwg.mxu0
      %v4183 = vxor.u32 %v4177, 2147483648
      %v4184 = vxor.u32 %v4179, 2147483648
      %v4185 = vmul.f32 %v4183, 1.442695
      %v4186 = vpow.pop %v4185
      %v4187 = vmul.f32 %v4184, 1.442695
      %v4188 = vpow.pop %v4187
      %v4189 = vadd.f32 %v4186, 1.0
      %v4190 = vadd.f32 %v4188, 1.0
      %v4191 = vrcp.pop %v4189
      %v4192 = vmul.f32 1.0, %v4191
      %v4193 = vrcp.pop %v4190
      %v4194 = vmul.f32 1.0, %v4193
      %4195 = vrot.lane.b32.xlu0 %v4192, 17
      %v4196 = vpop.permute.xlu0 %4195
      %4197 = vrot.lane.b32.xlu0 %v4194, 17
      %v4198 = vpop.permute.xlu0 %4197
      %v4199 = vsel %vm383, %v4196, %v4198
      %v4200 = vsel %vm383, %v4198, %v4196
      %v4201 = vld [vmem:[#allocation6] sm:$0xf]
      %v4202 = vld [vmem:[#allocation6 + $0x8] sm:$0xf]
      %v4203 = vunpack.c.l.bf16 %v4201
      %v4204 = vunpack.c.l.bf16 %v4202
      %v4205 = vlaneseq
      %v4206 = vshrl.u32 %v4205, 7
      %v4207 = vsub.s32 0, %v4206
      %v4208 = vrot.slane %v4200, %v4207
      %v4209 = vlaneseq
      %v4210 = vshrl.u32 %v4209, 7
      %v4211 = vsub.s32 0, %v4210
      %v4212 = vrot.slane %v4199, %v4211
      %v4213 = vmul.f32 %v4203, %v4208
      %v4214 = vmul.f32 %v4204, %v4212
      %v4215 = vpack.c.bf16 %v4213, %v4213
      %v4216 = vpack.c.bf16 %v4214, %v4214
      %4217 = vst [vmem:[#allocation6] sm:$0xf] %v4215
      %4218 = vst [vmem:[#allocation6 + $0x8] sm:$0xf] %v4216
      %4219 = vrot.lane.b32.xlu0 %v4192, 16
      %v4220 = vpop.permute.xlu0 %4219
      %4221 = vrot.lane.b32.xlu0 %v4194, 16
      %v4222 = vpop.permute.xlu0 %4221
      %v4223 = vsel %vm415, %v4220, %v4222
      %v4224 = vsel %vm415, %v4222, %v4220
      %v4225 = vld [vmem:[#allocation6 + $0x10] sm:$0xf]
      %v4226 = vld [vmem:[#allocation6 + $0x18] sm:$0xf]
      %v4227 = vunpack.c.l.bf16 %v4225
      %v4228 = vunpack.c.l.bf16 %v4226
      %v4229 = vlaneseq
      %v4230 = vshrl.u32 %v4229, 7
      %v4231 = vsub.s32 0, %v4230
      %v4232 = vrot.slane %v4224, %v4231
      %v4233 = vlaneseq
      %v4234 = vshrl.u32 %v4233, 7
      %v4235 = vsub.s32 0, %v4234
      %v4236 = vrot.slane %v4223, %v4235
      %v4237 = vmul.f32 %v4227, %v4232
      %v4238 = vmul.f32 %v4228, %v4236
      %v4239 = vpack.c.bf16 %v4237, %v4237
      %v4240 = vpack.c.bf16 %v4238, %v4238
      %4241 = vst [vmem:[#allocation6 + $0x10] sm:$0xf] %v4239
      %4242 = vst [vmem:[#allocation6 + $0x18] sm:$0xf] %v4240
      %4243 = vrot.lane.b32.xlu0 %v4192, 15
      %v4244 = vpop.permute.xlu0 %4243
      %4245 = vrot.lane.b32.xlu0 %v4194, 15
      %v4246 = vpop.permute.xlu0 %4245
      %v4247 = vsel %vm447, %v4244, %v4246
      %v4248 = vsel %vm447, %v4246, %v4244
      %v4249 = vld [vmem:[#allocation6 + $0x20] sm:$0xf]
      %v4250 = vld [vmem:[#allocation6 + $0x28] sm:$0xf]
      %v4251 = vunpack.c.l.bf16 %v4249
      %v4252 = vunpack.c.l.bf16 %v4250
      %v4253 = vlaneseq
      %v4254 = vshrl.u32 %v4253, 7
      %v4255 = vsub.s32 0, %v4254
      %v4256 = vrot.slane %v4248, %v4255
      %v4257 = vlaneseq
      %v4258 = vshrl.u32 %v4257, 7
      %v4259 = vsub.s32 0, %v4258
      %v4260 = vrot.slane %v4247, %v4259
      %v4261 = vmul.f32 %v4251, %v4256
      %v4262 = vmul.f32 %v4252, %v4260
      %v4263 = vpack.c.bf16 %v4261, %v4261
      %v4264 = vpack.c.bf16 %v4262, %v4262
      %4265 = vst [vmem:[#allocation6 + $0x20] sm:$0xf] %v4263
      %4266 = vst [vmem:[#allocation6 + $0x28] sm:$0xf] %v4264
      %4267 = vrot.lane.b32.xlu0 %v4192, 1
      %v4268 = vpop.permute.xlu0 %4267
      %4269 = vrot.lane.b32.xlu0 %v4194, 1
      %v4270 = vpop.permute.xlu0 %4269
      %v4271 = vsel %vm479, %v4268, %v4270
      %v4272 = vsel %vm479, %v4270, %v4268
      %v4273 = vld [vmem:[#allocation6 + $0x30] sm:$0xf]
      %v4274 = vld [vmem:[#allocation6 + $0x38] sm:$0xf]
      %v4275 = vunpack.c.l.bf16 %v4273
      %v4276 = vunpack.c.l.bf16 %v4274
      %v4277 = vlaneseq
      %v4278 = vshrl.u32 %v4277, 7
      %v4279 = vsub.s32 0, %v4278
      %v4280 = vrot.slane %v4272, %v4279
      %v4281 = vlaneseq
      %v4282 = vshrl.u32 %v4281, 7
      %v4283 = vsub.s32 0, %v4282
      %v4284 = vrot.slane %v4271, %v4283
      %v4285 = vmul.f32 %v4275, %v4280
      %v4286 = vmul.f32 %v4276, %v4284
      %v4287 = vpack.c.bf16 %v4285, %v4285
      %v4288 = vpack.c.bf16 %v4286, %v4286
      %4289 = vst [vmem:[#allocation6 + $0x30] sm:$0xf] %v4287
      %4290 = vst [vmem:[#allocation6 + $0x38] sm:$0xf] %v4288
      %v4291 = vld [vmem:[#allocation6 + $0x40] sm:$0xf]
      %v4292 = vld [vmem:[#allocation6 + $0x48] sm:$0xf]
      %v4293 = vunpack.c.l.bf16 %v4291
      %v4294 = vunpack.c.l.bf16 %v4292
      %v4295 = vlaneseq
      %v4296 = vshrl.u32 %v4295, 7
      %v4297 = vsub.s32 0, %v4296
      %v4298 = vrot.slane %v4192, %v4297
      %v4299 = vlaneseq
      %v4300 = vshrl.u32 %v4299, 7
      %v4301 = vsub.s32 0, %v4300
      %v4302 = vrot.slane %v4194, %v4301
      %v4303 = vmul.f32 %v4293, %v4298
      %v4304 = vmul.f32 %v4294, %v4302
      %v4305 = vpack.c.bf16 %v4303, %v4303
      %v4306 = vpack.c.bf16 %v4304, %v4304
      %4307 = vst [vmem:[#allocation6 + $0x40] sm:$0xf] %v4305
      %4308 = vst [vmem:[#allocation6 + $0x48] sm:$0xf] %v4306
      %4309 = vrot.lane.b32.xlu0 %v4192, 127
      %v4310 = vpop.permute.xlu0 %4309
      %4311 = vrot.lane.b32.xlu0 %v4194, 127
      %v4312 = vpop.permute.xlu0 %4311
      %v4313 = vsel %vm515, %v4310, %v4312
      %v4314 = vsel %vm515, %v4312, %v4310
      %v4315 = vld [vmem:[#allocation6 + $0x50] sm:$0xf]
      %v4316 = vld [vmem:[#allocation6 + $0x58] sm:$0xf]
      %v4317 = vunpack.c.l.bf16 %v4315
      %v4318 = vunpack.c.l.bf16 %v4316
      %v4319 = vlaneseq
      %v4320 = vshrl.u32 %v4319, 7
      %v4321 = vsub.s32 0, %v4320
      %v4322 = vrot.slane %v4313, %v4321
      %v4323 = vlaneseq
      %v4324 = vshrl.u32 %v4323, 7
      %v4325 = vsub.s32 0, %v4324
      %v4326 = vrot.slane %v4314, %v4325
      %v4327 = vmul.f32 %v4317, %v4322
      %v4328 = vmul.f32 %v4318, %v4326
      %v4329 = vpack.c.bf16 %v4327, %v4327
      %v4330 = vpack.c.bf16 %v4328, %v4328
      %4331 = vst [vmem:[#allocation6 + $0x50] sm:$0xf] %v4329
      %4332 = vst [vmem:[#allocation6 + $0x58] sm:$0xf] %v4330
      %4333 = vrot.lane.b32.xlu0 %v4192, 113
      %v4334 = vpop.permute.xlu0 %4333
      %4335 = vrot.lane.b32.xlu0 %v4194, 113
      %v4336 = vpop.permute.xlu0 %4335
      %v4337 = vsel %vm547, %v4334, %v4336
      %v4338 = vsel %vm547, %v4336, %v4334
      %v4339 = vld [vmem:[#allocation6 + $0x60] sm:$0xf]
      %v4340 = vld [vmem:[#allocation6 + $0x68] sm:$0xf]
      %v4341 = vunpack.c.l.bf16 %v4339
      %v4342 = vunpack.c.l.bf16 %v4340
      %v4343 = vlaneseq
      %v4344 = vshrl.u32 %v4343, 7
      %v4345 = vsub.s32 0, %v4344
      %v4346 = vrot.slane %v4337, %v4345
      %v4347 = vlaneseq
      %v4348 = vshrl.u32 %v4347, 7
      %v4349 = vsub.s32 0, %v4348
      %v4350 = vrot.slane %v4338, %v4349
      %v4351 = vmul.f32 %v4341, %v4346
      %v4352 = vmul.f32 %v4342, %v4350
      %v4353 = vpack.c.bf16 %v4351, %v4351
      %v4354 = vpack.c.bf16 %v4352, %v4352
      %4355 = vst [vmem:[#allocation6 + $0x60] sm:$0xf] %v4353
      %4356 = vst [vmem:[#allocation6 + $0x68] sm:$0xf] %v4354
      %4357 = vrot.lane.b32.xlu0 %v4192, 112
      %v4358 = vpop.permute.xlu0 %4357
      %4359 = vrot.lane.b32.xlu0 %v4194, 112
      %v4360 = vpop.permute.xlu0 %4359
      %v4361 = vsel %vm579, %v4358, %v4360
      %v4362 = vsel %vm579, %v4360, %v4358
      %v4363 = vld [vmem:[#allocation6 + $0x70] sm:$0xf]
      %v4364 = vld [vmem:[#allocation6 + $0x78] sm:$0xf]
      %v4365 = vunpack.c.l.bf16 %v4363
      %v4366 = vunpack.c.l.bf16 %v4364
      %v4367 = vlaneseq
      %v4368 = vshrl.u32 %v4367, 7
      %v4369 = vsub.s32 0, %v4368
      %v4370 = vrot.slane %v4361, %v4369
      %v4371 = vlaneseq
      %v4372 = vshrl.u32 %v4371, 7
      %v4373 = vsub.s32 0, %v4372
      %v4374 = vrot.slane %v4362, %v4373
      %v4375 = vmul.f32 %v4365, %v4370
      %v4376 = vmul.f32 %v4366, %v4374
      %v4377 = vpack.c.bf16 %v4375, %v4375
      %v4378 = vpack.c.bf16 %v4376, %v4376
      %4379 = vst [vmem:[#allocation6 + $0x70] sm:$0xf] %v4377
      %4380 = vst [vmem:[#allocation6 + $0x78] sm:$0xf] %v4378
      %4381 = vrot.lane.b32.xlu0 %v4192, 111
      %v4382 = vpop.permute.xlu0 %4381
      %4383 = vrot.lane.b32.xlu0 %v4194, 111
      %v4384 = vpop.permute.xlu0 %4383
      %v4385 = vsel %vm611, %v4382, %v4384
      %v4386 = vsel %vm611, %v4384, %v4382
      %v4387 = vld [vmem:[#allocation6 + $0x80] sm:$0xf]
      %v4388 = vld [vmem:[#allocation6 + $0x88] sm:$0xf]
      %v4389 = vunpack.c.l.bf16 %v4387
      %v4390 = vunpack.c.l.bf16 %v4388
      %v4391 = vlaneseq
      %v4392 = vshrl.u32 %v4391, 7
      %v4393 = vsub.s32 0, %v4392
      %v4394 = vrot.slane %v4385, %v4393
      %v4395 = vlaneseq
      %v4396 = vshrl.u32 %v4395, 7
      %v4397 = vsub.s32 0, %v4396
      %v4398 = vrot.slane %v4386, %v4397
      %v4399 = vmul.f32 %v4389, %v4394
      %v4400 = vmul.f32 %v4390, %v4398
      %v4401 = vpack.c.bf16 %v4399, %v4399
      %v4402 = vpack.c.bf16 %v4400, %v4400
      %4403 = vst [vmem:[#allocation6 + $0x80] sm:$0xf] %v4401
      %4404 = vst [vmem:[#allocation6 + $0x88] sm:$0xf] %v4402
      %v4405 = vld [vmem:[%s5] sm:$0xff]
      %v4406 = vld [vmem:[%s5 + $0x8] sm:$0xff]
      %v4407 = vld [vmem:[%s5 + $0x10] sm:$0xff]
      %v4408 = vld [vmem:[%s5 + $0x18] sm:$0xff]
      %v4409 = vld [vmem:[#allocation6] sm:$0xff]
      %v4410 = vld [vmem:[#allocation6 + $0x8] sm:$0xff]
      %v4411 = vld [vmem:[#allocation6 + $0x10] sm:$0xff]
      %v4412 = vld [vmem:[#allocation6 + $0x18] sm:$0xff]
      %v4413 = vld [vmem:[#allocation6 + $0x20] sm:$0xff]
      %v4414 = vld [vmem:[#allocation6 + $0x28] sm:$0xff]
      %v4415 = vld [vmem:[#allocation6 + $0x30] sm:$0xff]
      %v4416 = vld [vmem:[#allocation6 + $0x38] sm:$0xff]
      %v4417 = vld [vmem:[#allocation6 + $0x40] sm:$0xff]
      %v4418 = vld [vmem:[#allocation6 + $0x48] sm:$0xff]
      %v4419 = vld [vmem:[#allocation6 + $0x50] sm:$0xff]
      %v4420 = vld [vmem:[#allocation6 + $0x58] sm:$0xff]
      %v4421 = vld [vmem:[#allocation6 + $0x60] sm:$0xff]
      %v4422 = vld [vmem:[#allocation6 + $0x68] sm:$0xff]
      %v4423 = vld [vmem:[#allocation6 + $0x70] sm:$0xff]
      %v4424 = vld [vmem:[#allocation6 + $0x78] sm:$0xff]
      %v4425 = vld [vmem:[#allocation6 + $0x80] sm:$0xff]
      %v4426 = vld [vmem:[#allocation6 + $0x88] sm:$0xff]
      %v4427 = vld [vmem:[%s6] sm:$0xff]
      %v4428 = vld [vmem:[%s6 + $0x8] sm:$0xff]
      %v4429 = vld [vmem:[%s6 + $0x10] sm:$0xff]
      %v4430 = vld [vmem:[%s6 + $0x18] sm:$0xff]
      %4432 = vset.pattern.permute.xlu0 0
      %4433 = vperm.xlu0 %4432, %v4427
      %v4434 = vpop.permute.xlu0 %4433
      %4437 = vset.pattern.permute.xlu0 0
      %4438 = vperm.xlu0 %4437, %v4428
      %v4439 = vpop.permute.xlu0 %4438
      %4442 = vset.pattern.permute.xlu0 0
      %4443 = vperm.xlu0 %4442, %v4429
      %v4444 = vpop.permute.xlu0 %4443
      %4447 = vset.pattern.permute.xlu0 0
      %4448 = vperm.xlu0 %4447, %v4430
      %v4449 = vpop.permute.xlu0 %4448
      %v4455 = vunpack.c.l.b16 %v4405
      %v4456 = vunpack.c.h.b16 %v4405
      %v4457 = vunpack.c.l.b16 %v4406
      %v4458 = vunpack.c.h.b16 %v4406
      %v4459 = vunpack.c.l.b16 %v4407
      %v4460 = vunpack.c.h.b16 %v4407
      %v4461 = vunpack.c.l.b16 %v4408
      %v4462 = vunpack.c.h.b16 %v4408
      %v4463 = vpack.c.b16 %v4457, %v4455
      %v4464 = vpack.c.b16 %v4458, %v4456
      %v4465 = vpack.c.b16 %v4461, %v4459
      %v4466 = vpack.c.b16 %v4462, %v4460
      %v4470 = vsel %vm664, %v4464, 0
      %v4473 = vsel %vm664, %v4466, 0
      %4475 = vmatprep.subr.bf16.mxu0 %v4410
      %4476 = vmatpush1.bf16.msra.mxu0 %v4409
      %4477 = vmatprep.subr.bf16.mxu0 %v4412
      %4478 = vmatpush1.bf16.msra.mxu0 %v4411
      %4479 = vmatprep.subr.bf16.mxu0 %v4414
      %4480 = vmatpush1.bf16.msra.mxu0 %v4413
      %4481 = vmatprep.subr.bf16.mxu0 %v4416
      %4482 = vmatpush1.bf16.msra.mxu0 %v4415
      %4483 = vmatprep.subr.bf16.mxu0 %v4418
      %4484 = vmatpush1.bf16.msra.mxu0 %v4417
      %4485 = vmatprep.subr.bf16.mxu0 %v4420
      %4486 = vmatpush1.bf16.msra.mxu0 %v4419
      %4487 = vmatprep.subr.bf16.mxu0 %v4422
      %4488 = vmatpush1.bf16.msra.mxu0 %v4421
      %4489 = vmatprep.subr.bf16.mxu0 %v4424
      %4490 = vmatpush1.bf16.msra.mxu0 %v4423
      %4491 = vmatprep.subr.bf16.mxu0 %v4426
      %4492 = vmatpush1.bf16.msra.mxu0 %v4425
      %4493 = vmatprep.subr.bf16.mxu0 0
      %4494 = vmatpush1.bf16.msra.mxu0 0
      %4495 = vmatprep.subr.bf16.mxu0 0
      %4496 = vmatpush1.bf16.msra.mxu0 0
      %4497 = vmatprep.subr.bf16.mxu0 0
      %4498 = vmatpush1.bf16.msra.mxu0 0
      %4499 = vmatprep.subr.bf16.mxu0 0
      %4500 = vmatpush1.bf16.msra.mxu0 0
      %4501 = vmatprep.subr.bf16.mxu0 0
      %4502 = vmatpush1.bf16.msra.mxu0 0
      %4503 = vmatprep.subr.bf16.mxu0 0
      %4504 = vmatpush1.bf16.msra.mxu0 0
      %4505 = vmatprep.subr.bf16.mxu0 0
      %4506 = vmatpush1.bf16.msra.mxu0 0
      %4507 = vmatprep.mubr.bf16.mxu0 %v4470
      %4508 = vmatmul.mubr.bf16.gmra.mrb[0].mxu0 %v4463
      %v4509 = vpop.f32.mrb[0].mxu0
      %v4510 = vadd.f32 %v4434, %v4509
      %v4511 = vpop.f32.mrb[0].mxu0
      %v4512 = vadd.f32 %v4434, %v4511
      %v4513 = vpop.f32.mrb[0].mxu0
      %v4514 = vadd.f32 %v4439, %v4513
      %v4515 = vpop.f32.mrb[0].mxu0
      %v4516 = vadd.f32 %v4439, %v4515
      %4517 = vmatprep.mubr.bf16.mxu0 %v4473
      %4518 = vmatmul.mubr.bf16.gmra.mrb[0].mxu0 %v4465
      %v4519 = vpop.f32.mrb[0].mxu0
      %v4520 = vadd.f32 %v4444, %v4519
      %v4521 = vpop.f32.mrb[0].mxu0
      %v4522 = vadd.f32 %v4444, %v4521
      %v4523 = vpop.f32.mrb[0].mxu0
      %v4524 = vadd.f32 %v4449, %v4523
      %v4525 = vpop.f32.mrb[0].mxu0
      %v4526 = vadd.f32 %v4449, %v4525
      %4527 = vdwg.mxu0
      %v4528 = vld [vmem:[#allocation3] sm:$0xff]
      %v4529 = vld [vmem:[#allocation3 + $0x8] sm:$0xff]
      %v4530 = vxor.u32 %v4510, 2147483648
      %v4531 = vxor.u32 %v4512, 2147483648
      %v4532 = vmul.f32 %v4530, 1.442695
      %v4533 = vpow.pop %v4532
      %v4534 = vmul.f32 %v4531, 1.442695
      %v4535 = vpow.pop %v4534
      %v4536 = vadd.f32 %v4533, 1.0
      %v4537 = vadd.f32 %v4535, 1.0
      %v4538 = vrcp.pop %v4536
      %v4539 = vmul.f32 1.0, %v4538
      %v4540 = vrcp.pop %v4537
      %v4541 = vmul.f32 1.0, %v4540
      %v4542 = vxor.u32 %v4514, 2147483648
      %v4543 = vxor.u32 %v4516, 2147483648
      %v4544 = vmul.f32 %v4542, 1.442695
      %v4545 = vpow.pop %v4544
      %v4546 = vmul.f32 %v4543, 1.442695
      %v4547 = vpow.pop %v4546
      %v4548 = vadd.f32 %v4545, 1.0
      %v4549 = vadd.f32 %v4547, 1.0
      %v4550 = vrcp.pop %v4548
      %v4551 = vmul.f32 1.0, %v4550
      %v4552 = vrcp.pop %v4549
      %v4553 = vmul.f32 1.0, %v4552
      %v4554 = vmul.f32 %v4551, %v4528
      %v4555 = vmul.f32 %v4553, %v4529
      %v4556 = vtanh.pop %v4520
      %v4557 = vtanh.pop %v4522
      %v4558 = vmul.f32 %v4539, %v4556
      %v4559 = vmul.f32 %v4541, %v4557
      %v4560 = vadd.f32 %v4554, %v4558
      %v4561 = vadd.f32 %v4555, %v4559
      %v4562 = vxor.u32 %v4524, 2147483648
      %v4563 = vxor.u32 %v4526, 2147483648
      %v4564 = vmul.f32 %v4562, 1.442695
      %v4565 = vpow.pop %v4564
      %v4566 = vmul.f32 %v4563, 1.442695
      %v4567 = vpow.pop %v4566
      %v4568 = vadd.f32 %v4565, 1.0
      %v4569 = vadd.f32 %v4567, 1.0
      %v4570 = vrcp.pop %v4568
      %v4571 = vmul.f32 1.0, %v4570
      %v4572 = vrcp.pop %v4569
      %v4573 = vmul.f32 1.0, %v4572
      %v4574 = vtanh.pop %v4560
      %v4575 = vtanh.pop %v4561
      %v4576 = vmul.f32 %v4571, %v4574
      %v4577 = vmul.f32 %v4573, %v4575
      %4578 = vst [vmem:[#allocation3] sm:$0xff] %v4560
      %4579 = vst [vmem:[#allocation3 + $0x8] sm:$0xff] %v4561
      %4580 = vst [vmem:[#allocation2 + $0x10] sm:$0xff] %v4576
      %4581 = vst [vmem:[#allocation2 + $0x18] sm:$0xff] %v4577
      %4582 = vst [vmem:[#allocation4] sm:$0xff] %v4576
      %4583 = vst [vmem:[#allocation4 + $0x8] sm:$0xff] %v4577
      %v4584 = vld [vmem:[#allocation4] sm:$0xff]
      %v4585 = vld [vmem:[#allocation4 + $0x8] sm:$0xff]
      %v4586 = vld [vmem:[#allocation4 + $0x10] sm:$0xff]
      %v4587 = vld [vmem:[#allocation4 + $0x18] sm:$0xff]
      %4588 = vrot.lane.b32.xlu0 %v4584, 17
      %v4589 = vpop.permute.xlu0 %4588
      %4590 = vrot.lane.b32.xlu0 %v4586, 17
      %v4591 = vpop.permute.xlu0 %4590
      %4592 = vrot.lane.b32.xlu0 %v4585, 17
      %v4593 = vpop.permute.xlu0 %4592
      %4594 = vrot.lane.b32.xlu0 %v4587, 17
      %v4595 = vpop.permute.xlu0 %4594
      %v4596 = vsel %vm383, %v4589, %v4593
      %v4597 = vsel %vm383, %v4591, %v4595
      %v4598 = vsel %vm383, %v4593, %v4589
      %v4599 = vsel %vm383, %v4595, %v4591
      %v4600 = vmul.f32 %v4598, %v392
      %v4601 = vmul.f32 %v4596, %v396
      %v4602 = vmul.f32 %v4599, %v392
      %v4603 = vmul.f32 %v4597, %v396
      %v4604 = vpack.c.bf16 %v4602, %v4600
      %v4605 = vpack.c.bf16 %v4603, %v4601
      %4606 = vst [vmem:[#allocation7] sm:$0xff] %v4604
      %4607 = vst [vmem:[#allocation7 + $0x8] sm:$0xff] %v4605
      %4608 = vrot.lane.b32.xlu0 %v4584, 16
      %v4609 = vpop.permute.xlu0 %4608
      %4610 = vrot.lane.b32.xlu0 %v4586, 16
      %v4611 = vpop.permute.xlu0 %4610
      %4612 = vrot.lane.b32.xlu0 %v4585, 16
      %v4613 = vpop.permute.xlu0 %4612
      %4614 = vrot.lane.b32.xlu0 %v4587, 16
      %v4615 = vpop.permute.xlu0 %4614
      %v4616 = vsel %vm415, %v4609, %v4613
      %v4617 = vsel %vm415, %v4611, %v4615
      %v4618 = vsel %vm415, %v4613, %v4609
      %v4619 = vsel %vm415, %v4615, %v4611
      %v4620 = vmul.f32 %v4618, %v424
      %v4621 = vmul.f32 %v4616, %v428
      %v4622 = vmul.f32 %v4619, %v424
      %v4623 = vmul.f32 %v4617, %v428
      %v4624 = vpack.c.bf16 %v4622, %v4620
      %v4625 = vpack.c.bf16 %v4623, %v4621
      %4626 = vst [vmem:[#allocation7 + $0x10] sm:$0xff] %v4624
      %4627 = vst [vmem:[#allocation7 + $0x18] sm:$0xff] %v4625
      %4628 = vrot.lane.b32.xlu0 %v4584, 15
      %v4629 = vpop.permute.xlu0 %4628
      %4630 = vrot.lane.b32.xlu0 %v4586, 15
      %v4631 = vpop.permute.xlu0 %4630
      %4632 = vrot.lane.b32.xlu0 %v4585, 15
      %v4633 = vpop.permute.xlu0 %4632
      %4634 = vrot.lane.b32.xlu0 %v4587, 15
      %v4635 = vpop.permute.xlu0 %4634
      %v4636 = vsel %vm447, %v4629, %v4633
      %v4637 = vsel %vm447, %v4631, %v4635
      %v4638 = vsel %vm447, %v4633, %v4629
      %v4639 = vsel %vm447, %v4635, %v4631
      %v4640 = vmul.f32 %v4638, %v456
      %v4641 = vmul.f32 %v4636, %v460
      %v4642 = vmul.f32 %v4639, %v456
      %v4643 = vmul.f32 %v4637, %v460
      %v4644 = vpack.c.bf16 %v4642, %v4640
      %v4645 = vpack.c.bf16 %v4643, %v4641
      %4646 = vst [vmem:[#allocation7 + $0x20] sm:$0xff] %v4644
      %4647 = vst [vmem:[#allocation7 + $0x28] sm:$0xff] %v4645
      %4648 = vrot.lane.b32.xlu0 %v4584, 1
      %v4649 = vpop.permute.xlu0 %4648
      %4650 = vrot.lane.b32.xlu0 %v4586, 1
      %v4651 = vpop.permute.xlu0 %4650
      %4652 = vrot.lane.b32.xlu0 %v4585, 1
      %v4653 = vpop.permute.xlu0 %4652
      %4654 = vrot.lane.b32.xlu0 %v4587, 1
      %v4655 = vpop.permute.xlu0 %4654
      %v4656 = vsel %vm479, %v4649, %v4653
      %v4657 = vsel %vm479, %v4651, %v4655
      %v4658 = vsel %vm479, %v4653, %v4649
      %v4659 = vsel %vm479, %v4655, %v4651
      %v4660 = vmul.f32 %v4658, %v488
      %v4661 = vmul.f32 %v4656, %v492
      %v4662 = vmul.f32 %v4659, %v488
      %v4663 = vmul.f32 %v4657, %v492
      %v4664 = vpack.c.bf16 %v4662, %v4660
      %v4665 = vpack.c.bf16 %v4663, %v4661
      %4666 = vst [vmem:[#allocation7 + $0x30] sm:$0xff] %v4664
      %4667 = vst [vmem:[#allocation7 + $0x38] sm:$0xff] %v4665
      %v4668 = vpack.c.bf16 %v4586, %v4584
      %v4669 = vpack.c.bf16 %v4587, %v4585
      %4670 = vst [vmem:[#allocation7 + $0x40] sm:$0xff] %v4668
      %4671 = vst [vmem:[#allocation7 + $0x48] sm:$0xff] %v4669
      %4672 = vrot.lane.b32.xlu0 %v4584, 127
      %v4673 = vpop.permute.xlu0 %4672
      %4674 = vrot.lane.b32.xlu0 %v4586, 127
      %v4675 = vpop.permute.xlu0 %4674
      %4676 = vrot.lane.b32.xlu0 %v4585, 127
      %v4677 = vpop.permute.xlu0 %4676
      %4678 = vrot.lane.b32.xlu0 %v4587, 127
      %v4679 = vpop.permute.xlu0 %4678
      %v4680 = vsel %vm515, %v4673, %v4677
      %v4681 = vsel %vm515, %v4675, %v4679
      %v4682 = vsel %vm515, %v4677, %v4673
      %v4683 = vsel %vm515, %v4679, %v4675
      %v4684 = vmul.f32 %v4680, %v524
      %v4685 = vmul.f32 %v4682, %v528
      %v4686 = vmul.f32 %v4681, %v524
      %v4687 = vmul.f32 %v4683, %v528
      %v4688 = vpack.c.bf16 %v4686, %v4684
      %v4689 = vpack.c.bf16 %v4687, %v4685
      %4690 = vst [vmem:[#allocation7 + $0x50] sm:$0xff] %v4688
      %4691 = vst [vmem:[#allocation7 + $0x58] sm:$0xff] %v4689
      %4692 = vrot.lane.b32.xlu0 %v4584, 113
      %v4693 = vpop.permute.xlu0 %4692
      %4694 = vrot.lane.b32.xlu0 %v4586, 113
      %v4695 = vpop.permute.xlu0 %4694
      %4696 = vrot.lane.b32.xlu0 %v4585, 113
      %v4697 = vpop.permute.xlu0 %4696
      %4698 = vrot.lane.b32.xlu0 %v4587, 113
      %v4699 = vpop.permute.xlu0 %4698
      %v4700 = vsel %vm547, %v4693, %v4697
      %v4701 = vsel %vm547, %v4695, %v4699
      %v4702 = vsel %vm547, %v4697, %v4693
      %v4703 = vsel %vm547, %v4699, %v4695
      %v4704 = vmul.f32 %v4700, %v556
      %v4705 = vmul.f32 %v4702, %v560
      %v4706 = vmul.f32 %v4701, %v556
      %v4707 = vmul.f32 %v4703, %v560
      %v4708 = vpack.c.bf16 %v4706, %v4704
      %v4709 = vpack.c.bf16 %v4707, %v4705
      %4710 = vst [vmem:[#allocation7 + $0x60] sm:$0xff] %v4708
      %4711 = vst [vmem:[#allocation7 + $0x68] sm:$0xff] %v4709
      %4712 = vrot.lane.b32.xlu0 %v4584, 112
      %v4713 = vpop.permute.xlu0 %4712
      %4714 = vrot.lane.b32.xlu0 %v4586, 112
      %v4715 = vpop.permute.xlu0 %4714
      %4716 = vrot.lane.b32.xlu0 %v4585, 112
      %v4717 = vpop.permute.xlu0 %4716
      %4718 = vrot.lane.b32.xlu0 %v4587, 112
      %v4719 = vpop.permute.xlu0 %4718
      %v4720 = vsel %vm579, %v4713, %v4717
      %v4721 = vsel %vm579, %v4715, %v4719
      %v4722 = vsel %vm579, %v4717, %v4713
      %v4723 = vsel %vm579, %v4719, %v4715
      %v4724 = vmul.f32 %v4720, %v588
      %v4725 = vmul.f32 %v4722, %v592
      %v4726 = vmul.f32 %v4721, %v588
      %v4727 = vmul.f32 %v4723, %v592
      %v4728 = vpack.c.bf16 %v4726, %v4724
      %v4729 = vpack.c.bf16 %v4727, %v4725
      %4730 = vst [vmem:[#allocation7 + $0x70] sm:$0xff] %v4728
      %4731 = vst [vmem:[#allocation7 + $0x78] sm:$0xff] %v4729
      %4732 = vrot.lane.b32.xlu0 %v4584, 111
      %v4733 = vpop.permute.xlu0 %4732
      %4734 = vrot.lane.b32.xlu0 %v4586, 111
      %v4735 = vpop.permute.xlu0 %4734
      %4736 = vrot.lane.b32.xlu0 %v4585, 111
      %v4737 = vpop.permute.xlu0 %4736
      %4738 = vrot.lane.b32.xlu0 %v4587, 111
      %v4739 = vpop.permute.xlu0 %4738
      %v4740 = vsel %vm611, %v4733, %v4737
      %v4741 = vsel %vm611, %v4735, %v4739
      %v4742 = vsel %vm611, %v4737, %v4733
      %v4743 = vsel %vm611, %v4739, %v4735
      %v4744 = vmul.f32 %v4740, %v620
      %v4745 = vmul.f32 %v4742, %v624
      %v4746 = vmul.f32 %v4741, %v620
      %v4747 = vmul.f32 %v4743, %v624
      %v4748 = vpack.c.bf16 %v4746, %v4744
      %v4749 = vpack.c.bf16 %v4747, %v4745
      %4750 = vst [vmem:[#allocation7 + $0x80] sm:$0xff] %v4748
      %4751 = vst [vmem:[#allocation7 + $0x88] sm:$0xff] %v4749
      %v4752 = vld [vmem:[%s7] sm:$0xff]
      %v4753 = vld [vmem:[%s7 + $0x8] sm:$0xff]
      %v4754 = vld [vmem:[%s7 + $0x10] sm:$0xff]
      %v4755 = vld [vmem:[%s7 + $0x18] sm:$0xff]
      %v4756 = vld [vmem:[#allocation7] sm:$0xff]
      %v4757 = vld [vmem:[#allocation7 + $0x8] sm:$0xff]
      %v4758 = vld [vmem:[#allocation7 + $0x10] sm:$0xff]
      %v4759 = vld [vmem:[#allocation7 + $0x18] sm:$0xff]
      %v4760 = vld [vmem:[#allocation7 + $0x20] sm:$0xff]
      %v4761 = vld [vmem:[#allocation7 + $0x28] sm:$0xff]
      %v4762 = vld [vmem:[#allocation7 + $0x30] sm:$0xff]
      %v4763 = vld [vmem:[#allocation7 + $0x38] sm:$0xff]
      %v4764 = vld [vmem:[#allocation7 + $0x40] sm:$0xff]
      %v4765 = vld [vmem:[#allocation7 + $0x48] sm:$0xff]
      %v4766 = vld [vmem:[#allocation7 + $0x50] sm:$0xff]
      %v4767 = vld [vmem:[#allocation7 + $0x58] sm:$0xff]
      %v4768 = vld [vmem:[#allocation7 + $0x60] sm:$0xff]
      %v4769 = vld [vmem:[#allocation7 + $0x68] sm:$0xff]
      %v4770 = vld [vmem:[#allocation7 + $0x70] sm:$0xff]
      %v4771 = vld [vmem:[#allocation7 + $0x78] sm:$0xff]
      %v4772 = vld [vmem:[#allocation7 + $0x80] sm:$0xff]
      %v4773 = vld [vmem:[#allocation7 + $0x88] sm:$0xff]
      %v4774 = vld [vmem:[%s8] sm:$0xff]
      %v4775 = vld [vmem:[%s8 + $0x8] sm:$0xff]
      %v4776 = vld [vmem:[%s8 + $0x10] sm:$0xff]
      %v4777 = vld [vmem:[%s8 + $0x18] sm:$0xff]
      %4779 = vset.pattern.permute.xlu0 0
      %4780 = vperm.xlu0 %4779, %v4774
      %v4781 = vpop.permute.xlu0 %4780
      %4784 = vset.pattern.permute.xlu0 0
      %4785 = vperm.xlu0 %4784, %v4775
      %v4786 = vpop.permute.xlu0 %4785
      %4789 = vset.pattern.permute.xlu0 0
      %4790 = vperm.xlu0 %4789, %v4776
      %v4791 = vpop.permute.xlu0 %4790
      %4794 = vset.pattern.permute.xlu0 0
      %4795 = vperm.xlu0 %4794, %v4777
      %v4796 = vpop.permute.xlu0 %4795
      %v4802 = vunpack.c.l.b16 %v4752
      %v4803 = vunpack.c.h.b16 %v4752
      %v4804 = vunpack.c.l.b16 %v4753
      %v4805 = vunpack.c.h.b16 %v4753
      %v4806 = vunpack.c.l.b16 %v4754
      %v4807 = vunpack.c.h.b16 %v4754
      %v4808 = vunpack.c.l.b16 %v4755
      %v4809 = vunpack.c.h.b16 %v4755
      %v4810 = vpack.c.b16 %v4804, %v4802
      %v4811 = vpack.c.b16 %v4805, %v4803
      %v4812 = vpack.c.b16 %v4808, %v4806
      %v4813 = vpack.c.b16 %v4809, %v4807
      %v4817 = vsel %vm664, %v4811, 0
      %v4820 = vsel %vm664, %v4813, 0
      %4822 = vmatprep.subr.bf16.mxu0 %v4757
      %4823 = vmatpush1.bf16.msra.mxu0 %v4756
      %4824 = vmatprep.subr.bf16.mxu0 %v4759
      %4825 = vmatpush1.bf16.msra.mxu0 %v4758
      %4826 = vmatprep.subr.bf16.mxu0 %v4761
      %4827 = vmatpush1.bf16.msra.mxu0 %v4760
      %4828 = vmatprep.subr.bf16.mxu0 %v4763
      %4829 = vmatpush1.bf16.msra.mxu0 %v4762
      %4830 = vmatprep.subr.bf16.mxu0 %v4765
      %4831 = vmatpush1.bf16.msra.mxu0 %v4764
      %4832 = vmatprep.subr.bf16.mxu0 %v4767
      %4833 = vmatpush1.bf16.msra.mxu0 %v4766
      %4834 = vmatprep.subr.bf16.mxu0 %v4769
      %4835 = vmatpush1.bf16.msra.mxu0 %v4768
      %4836 = vmatprep.subr.bf16.mxu0 %v4771
      %4837 = vmatpush1.bf16.msra.mxu0 %v4770
      %4838 = vmatprep.subr.bf16.mxu0 %v4773
      %4839 = vmatpush1.bf16.msra.mxu0 %v4772
      %4840 = vmatprep.subr.bf16.mxu0 0
      %4841 = vmatpush1.bf16.msra.mxu0 0
      %4842 = vmatprep.subr.bf16.mxu0 0
      %4843 = vmatpush1.bf16.msra.mxu0 0
      %4844 = vmatprep.subr.bf16.mxu0 0
      %4845 = vmatpush1.bf16.msra.mxu0 0
      %4846 = vmatprep.subr.bf16.mxu0 0
      %4847 = vmatpush1.bf16.msra.mxu0 0
      %4848 = vmatprep.subr.bf16.mxu0 0
      %4849 = vmatpush1.bf16.msra.mxu0 0
      %4850 = vmatprep.subr.bf16.mxu0 0
      %4851 = vmatpush1.bf16.msra.mxu0 0
      %4852 = vmatprep.subr.bf16.mxu0 0
      %4853 = vmatpush1.bf16.msra.mxu0 0
      %4854 = vmatprep.mubr.bf16.mxu0 %v4817
      %4855 = vmatmul.mubr.bf16.gmra.mrb[0].mxu0 %v4810
      %v4856 = vpop.f32.mrb[0].mxu0
      %v4857 = vadd.f32 %v4781, %v4856
      %v4858 = vpop.f32.mrb[0].mxu0
      %v4859 = vadd.f32 %v4781, %v4858
      %v4860 = vpop.f32.mrb[0].mxu0
      %v4861 = vadd.f32 %v4786, %v4860
      %v4862 = vpop.f32.mrb[0].mxu0
      %v4863 = vadd.f32 %v4786, %v4862
      %4864 = vmatprep.mubr.bf16.mxu0 %v4820
      %4865 = vmatmul.mubr.bf16.gmra.mrb[0].mxu0 %v4812
      %v4866 = vpop.f32.mrb[0].mxu0
      %v4867 = vadd.f32 %v4791, %v4866
      %v4868 = vpop.f32.mrb[0].mxu0
      %v4869 = vadd.f32 %v4791, %v4868
      %v4870 = vpop.f32.mrb[0].mxu0
      %v4871 = vadd.f32 %v4796, %v4870
      %v4872 = vpop.f32.mrb[0].mxu0
      %v4873 = vadd.f32 %v4796, %v4872
      %4874 = vdwg.mxu0
      %v4875 = vld [vmem:[#allocation5] sm:$0xff]
      %v4876 = vld [vmem:[#allocation5 + $0x8] sm:$0xff]
      %v4877 = vxor.u32 %v4857, 2147483648
      %v4878 = vxor.u32 %v4859, 2147483648
      %v4879 = vmul.f32 %v4877, 1.442695
      %v4880 = vpow.pop %v4879
      %v4881 = vmul.f32 %v4878, 1.442695
      %v4882 = vpow.pop %v4881
      %v4883 = vadd.f32 %v4880, 1.0
      %v4884 = vadd.f32 %v4882, 1.0
      %v4885 = vrcp.pop %v4883
      %v4886 = vmul.f32 1.0, %v4885
      %v4887 = vrcp.pop %v4884
      %v4888 = vmul.f32 1.0, %v4887
      %v4889 = vxor.u32 %v4861, 2147483648
      %v4890 = vxor.u32 %v4863, 2147483648
      %v4891 = vmul.f32 %v4889, 1.442695
      %v4892 = vpow.pop %v4891
      %v4893 = vmul.f32 %v4890, 1.442695
      %v4894 = vpow.pop %v4893
      %v4895 = vadd.f32 %v4892, 1.0
      %v4896 = vadd.f32 %v4894, 1.0
      %v4897 = vrcp.pop %v4895
      %v4898 = vmul.f32 1.0, %v4897
      %v4899 = vrcp.pop %v4896
      %v4900 = vmul.f32 1.0, %v4899
      %v4901 = vmul.f32 %v4898, %v4875
      %v4902 = vmul.f32 %v4900, %v4876
      %v4903 = vtanh.pop %v4867
      %v4904 = vtanh.pop %v4869
      %v4905 = vmul.f32 %v4886, %v4903
      %v4906 = vmul.f32 %v4888, %v4904
      %v4907 = vadd.f32 %v4901, %v4905
      %v4908 = vadd.f32 %v4902, %v4906
      %v4909 = vxor.u32 %v4871, 2147483648
      %v4910 = vxor.u32 %v4873, 2147483648
      %v4911 = vmul.f32 %v4909, 1.442695
      %v4912 = vpow.pop %v4911
      %v4913 = vmul.f32 %v4910, 1.442695
      %v4914 = vpow.pop %v4913
      %v4915 = vadd.f32 %v4912, 1.0
      %v4916 = vadd.f32 %v4914, 1.0
      %v4917 = vrcp.pop %v4915
      %v4918 = vmul.f32 1.0, %v4917
      %v4919 = vrcp.pop %v4916
      %v4920 = vmul.f32 1.0, %v4919
      %v4921 = vtanh.pop %v4907
      %v4922 = vtanh.pop %v4908
      %v4923 = vmul.f32 %v4918, %v4921
      %v4924 = vmul.f32 %v4920, %v4922
      %4925 = vst [vmem:[#allocation5] sm:$0xff] %v4907
      %4926 = vst [vmem:[#allocation5 + $0x8] sm:$0xff] %v4908
      %4927 = vst [vmem:[#allocation4 + $0x10] sm:$0xff] %v4923
      %4928 = vst [vmem:[#allocation4 + $0x18] sm:$0xff] %v4924
      %v4929 = vld [vmem:[#allocation2] sm:$0xff]
      %v4930 = vld [vmem:[#allocation2 + $0x8] sm:$0xff]
      %v4931 = vld [vmem:[#allocation2 + $0x10] sm:$0xff]
      %v4932 = vld [vmem:[#allocation2 + $0x18] sm:$0xff]
      %4933 = vrot.lane.b32.xlu0 %v4929, 17
      %v4934 = vpop.permute.xlu0 %4933
      %4935 = vrot.lane.b32.xlu0 %v4931, 17
      %v4936 = vpop.permute.xlu0 %4935
      %4937 = vrot.lane.b32.xlu0 %v4930, 17
      %v4938 = vpop.permute.xlu0 %4937
      %4939 = vrot.lane.b32.xlu0 %v4932, 17
      %v4940 = vpop.permute.xlu0 %4939
      %v4941 = vsel %vm383, %v4934, %v4938
      %v4942 = vsel %vm383, %v4936, %v4940
      %v4943 = vsel %vm383, %v4938, %v4934
      %v4944 = vsel %vm383, %v4940, %v4936
      %v4945 = vmul.f32 %v4943, %v392
      %v4946 = vmul.f32 %v4941, %v396
      %v4947 = vmul.f32 %v4944, %v392
      %v4948 = vmul.f32 %v4942, %v396
      %v4949 = vpack.c.bf16 %v4947, %v4945
      %v4950 = vpack.c.bf16 %v4948, %v4946
      %4951 = vst [vmem:[#allocation6] sm:$0xff] %v4949
      %4952 = vst [vmem:[#allocation6 + $0x8] sm:$0xff] %v4950
      %4953 = vrot.lane.b32.xlu0 %v4929, 16
      %v4954 = vpop.permute.xlu0 %4953
      %4955 = vrot.lane.b32.xlu0 %v4931, 16
      %v4956 = vpop.permute.xlu0 %4955
      %4957 = vrot.lane.b32.xlu0 %v4930, 16
      %v4958 = vpop.permute.xlu0 %4957
      %4959 = vrot.lane.b32.xlu0 %v4932, 16
      %v4960 = vpop.permute.xlu0 %4959
      %v4961 = vsel %vm415, %v4954, %v4958
      %v4962 = vsel %vm415, %v4956, %v4960
      %v4963 = vsel %vm415, %v4958, %v4954
      %v4964 = vsel %vm415, %v4960, %v4956
      %v4965 = vmul.f32 %v4963, %v424
      %v4966 = vmul.f32 %v4961, %v428
      %v4967 = vmul.f32 %v4964, %v424
      %v4968 = vmul.f32 %v4962, %v428
      %v4969 = vpack.c.bf16 %v4967, %v4965
      %v4970 = vpack.c.bf16 %v4968, %v4966
      %4971 = vst [vmem:[#allocation6 + $0x10] sm:$0xff] %v4969
      %4972 = vst [vmem:[#allocation6 + $0x18] sm:$0xff] %v4970
      %4973 = vrot.lane.b32.xlu0 %v4929, 15
      %v4974 = vpop.permute.xlu0 %4973
      %4975 = vrot.lane.b32.xlu0 %v4931, 15
      %v4976 = vpop.permute.xlu0 %4975
      %4977 = vrot.lane.b32.xlu0 %v4930, 15
      %v4978 = vpop.permute.xlu0 %4977
      %4979 = vrot.lane.b32.xlu0 %v4932, 15
      %v4980 = vpop.permute.xlu0 %4979
      %v4981 = vsel %vm447, %v4974, %v4978
      %v4982 = vsel %vm447, %v4976, %v4980
      %v4983 = vsel %vm447, %v4978, %v4974
      %v4984 = vsel %vm447, %v4980, %v4976
      %v4985 = vmul.f32 %v4983, %v456
      %v4986 = vmul.f32 %v4981, %v460
      %v4987 = vmul.f32 %v4984, %v456
      %v4988 = vmul.f32 %v4982, %v460
      %v4989 = vpack.c.bf16 %v4987, %v4985
      %v4990 = vpack.c.bf16 %v4988, %v4986
      %4991 = vst [vmem:[#allocation6 + $0x20] sm:$0xff] %v4989
      %4992 = vst [vmem:[#allocation6 + $0x28] sm:$0xff] %v4990
      %4993 = vrot.lane.b32.xlu0 %v4929, 1
      %v4994 = vpop.permute.xlu0 %4993
      %4995 = vrot.lane.b32.xlu0 %v4931, 1
      %v4996 = vpop.permute.xlu0 %4995
      %4997 = vrot.lane.b32.xlu0 %v4930, 1
      %v4998 = vpop.permute.xlu0 %4997
      %4999 = vrot.lane.b32.xlu0 %v4932, 1
      %v5000 = vpop.permute.xlu0 %4999
      %v5001 = vsel %vm479, %v4994, %v4998
      %v5002 = vsel %vm479, %v4996, %v5000
      %v5003 = vsel %vm479, %v4998, %v4994
      %v5004 = vsel %vm479, %v5000, %v4996
      %v5005 = vmul.f32 %v5003, %v488
      %v5006 = vmul.f32 %v5001, %v492
      %v5007 = vmul.f32 %v5004, %v488
      %v5008 = vmul.f32 %v5002, %v492
      %v5009 = vpack.c.bf16 %v5007, %v5005
      %v5010 = vpack.c.bf16 %v5008, %v5006
      %5011 = vst [vmem:[#allocation6 + $0x30] sm:$0xff] %v5009
      %5012 = vst [vmem:[#allocation6 + $0x38] sm:$0xff] %v5010
      %v5013 = vpack.c.bf16 %v4931, %v4929
      %v5014 = vpack.c.bf16 %v4932, %v4930
      %5015 = vst [vmem:[#allocation6 + $0x40] sm:$0xff] %v5013
      %5016 = vst [vmem:[#allocation6 + $0x48] sm:$0xff] %v5014
      %5017 = vrot.lane.b32.xlu0 %v4929, 127
      %v5018 = vpop.permute.xlu0 %5017
      %5019 = vrot.lane.b32.xlu0 %v4931, 127
      %v5020 = vpop.permute.xlu0 %5019
      %5021 = vrot.lane.b32.xlu0 %v4930, 127
      %v5022 = vpop.permute.xlu0 %5021
      %5023 = vrot.lane.b32.xlu0 %v4932, 127
      %v5024 = vpop.permute.xlu0 %5023
      %v5025 = vsel %vm515, %v5018, %v5022
      %v5026 = vsel %vm515, %v5020, %v5024
      %v5027 = vsel %vm515, %v5022, %v5018
      %v5028 = vsel %vm515, %v5024, %v5020
      %v5029 = vmul.f32 %v5025, %v524
      %v5030 = vmul.f32 %v5027, %v528
      %v5031 = vmul.f32 %v5026, %v524
      %v5032 = vmul.f32 %v5028, %v528
      %v5033 = vpack.c.bf16 %v5031, %v5029
      %v5034 = vpack.c.bf16 %v5032, %v5030
      %5035 = vst [vmem:[#allocation6 + $0x50] sm:$0xff] %v5033
      %5036 = vst [vmem:[#allocation6 + $0x58] sm:$0xff] %v5034
      %5037 = vrot.lane.b32.xlu0 %v4929, 113
      %v5038 = vpop.permute.xlu0 %5037
      %5039 = vrot.lane.b32.xlu0 %v4931, 113
      %v5040 = vpop.permute.xlu0 %5039
      %5041 = vrot.lane.b32.xlu0 %v4930, 113
      %v5042 = vpop.permute.xlu0 %5041
      %5043 = vrot.lane.b32.xlu0 %v4932, 113
      %v5044 = vpop.permute.xlu0 %5043
      %v5045 = vsel %vm547, %v5038, %v5042
      %v5046 = vsel %vm547, %v5040, %v5044
      %v5047 = vsel %vm547, %v5042, %v5038
      %v5048 = vsel %vm547, %v5044, %v5040
      %v5049 = vmul.f32 %v5045, %v556
      %v5050 = vmul.f32 %v5047, %v560
      %v5051 = vmul.f32 %v5046, %v556
      %v5052 = vmul.f32 %v5048, %v560
      %v5053 = vpack.c.bf16 %v5051, %v5049
      %v5054 = vpack.c.bf16 %v5052, %v5050
      %5055 = vst [vmem:[#allocation6 + $0x60] sm:$0xff] %v5053
      %5056 = vst [vmem:[#allocation6 + $0x68] sm:$0xff] %v5054
      %5057 = vrot.lane.b32.xlu0 %v4929, 112
      %v5058 = vpop.permute.xlu0 %5057
      %5059 = vrot.lane.b32.xlu0 %v4931, 112
      %v5060 = vpop.permute.xlu0 %5059
      %5061 = vrot.lane.b32.xlu0 %v4930, 112
      %v5062 = vpop.permute.xlu0 %5061
      %5063 = vrot.lane.b32.xlu0 %v4932, 112
      %v5064 = vpop.permute.xlu0 %5063
      %v5065 = vsel %vm579, %v5058, %v5062
      %v5066 = vsel %vm579, %v5060, %v5064
      %v5067 = vsel %vm579, %v5062, %v5058
      %v5068 = vsel %vm579, %v5064, %v5060
      %v5069 = vmul.f32 %v5065, %v588
      %v5070 = vmul.f32 %v5067, %v592
      %v5071 = vmul.f32 %v5066, %v588
      %v5072 = vmul.f32 %v5068, %v592
      %v5073 = vpack.c.bf16 %v5071, %v5069
      %v5074 = vpack.c.bf16 %v5072, %v5070
      %5075 = vst [vmem:[#allocation6 + $0x70] sm:$0xff] %v5073
      %5076 = vst [vmem:[#allocation6 + $0x78] sm:$0xff] %v5074
      %5077 = vrot.lane.b32.xlu0 %v4929, 111
      %v5078 = vpop.permute.xlu0 %5077
      %5079 = vrot.lane.b32.xlu0 %v4931, 111
      %v5080 = vpop.permute.xlu0 %5079
      %5081 = vrot.lane.b32.xlu0 %v4930, 111
      %v5082 = vpop.permute.xlu0 %5081
      %5083 = vrot.lane.b32.xlu0 %v4932, 111
      %v5084 = vpop.permute.xlu0 %5083
      %v5085 = vsel %vm611, %v5078, %v5082
      %v5086 = vsel %vm611, %v5080, %v5084
      %v5087 = vsel %vm611, %v5082, %v5078
      %v5088 = vsel %vm611, %v5084, %v5080
      %v5089 = vmul.f32 %v5085, %v620
      %v5090 = vmul.f32 %v5087, %v624
      %v5091 = vmul.f32 %v5086, %v620
      %v5092 = vmul.f32 %v5088, %v624
      %v5093 = vpack.c.bf16 %v5091, %v5089
      %v5094 = vpack.c.bf16 %v5092, %v5090
      %5095 = vst [vmem:[#allocation6 + $0x80] sm:$0xff] %v5093
      %5096 = vst [vmem:[#allocation6 + $0x88] sm:$0xff] %v5094
      %v5097 = vld [vmem:[%s2] sm:$0xff]
      %v5098 = vld [vmem:[%s2 + $0x8] sm:$0xff]
      %v5099 = vld [vmem:[#allocation6] sm:$0xff]
      %v5100 = vld [vmem:[#allocation6 + $0x8] sm:$0xff]
      %v5101 = vld [vmem:[#allocation6 + $0x10] sm:$0xff]
      %v5102 = vld [vmem:[#allocation6 + $0x18] sm:$0xff]
      %v5103 = vld [vmem:[#allocation6 + $0x20] sm:$0xff]
      %v5104 = vld [vmem:[#allocation6 + $0x28] sm:$0xff]
      %v5105 = vld [vmem:[#allocation6 + $0x30] sm:$0xff]
      %v5106 = vld [vmem:[#allocation6 + $0x38] sm:$0xff]
      %v5107 = vld [vmem:[#allocation6 + $0x40] sm:$0xff]
      %v5108 = vld [vmem:[#allocation6 + $0x48] sm:$0xff]
      %v5109 = vld [vmem:[#allocation6 + $0x50] sm:$0xff]
      %v5110 = vld [vmem:[#allocation6 + $0x58] sm:$0xff]
      %v5111 = vld [vmem:[#allocation6 + $0x60] sm:$0xff]
      %v5112 = vld [vmem:[#allocation6 + $0x68] sm:$0xff]
      %v5113 = vld [vmem:[#allocation6 + $0x70] sm:$0xff]
      %v5114 = vld [vmem:[#allocation6 + $0x78] sm:$0xff]
      %v5115 = vld [vmem:[#allocation6 + $0x80] sm:$0xff]
      %v5116 = vld [vmem:[#allocation6 + $0x88] sm:$0xff]
      %v5119 = vunpack.c.l.b16 %v5097
      %v5120 = vunpack.c.h.b16 %v5097
      %v5121 = vunpack.c.l.b16 %v5098
      %v5122 = vunpack.c.h.b16 %v5098
      %v5123 = vpack.c.b16 %v5121, %v5119
      %v5124 = vpack.c.b16 %v5122, %v5120
      %v5127 = vsel %vm664, %v5124, 0
      %5129 = vmatprep.subr.bf16.mxu0 %v5100
      %5130 = vmatpush1.bf16.msra.mxu0 %v5099
      %5131 = vmatprep.subr.bf16.mxu0 %v5102
      %5132 = vmatpush1.bf16.msra.mxu0 %v5101
      %5133 = vmatprep.subr.bf16.mxu0 %v5104
      %5134 = vmatpush1.bf16.msra.mxu0 %v5103
      %5135 = vmatprep.subr.bf16.mxu0 %v5106
      %5136 = vmatpush1.bf16.msra.mxu0 %v5105
      %5137 = vmatprep.subr.bf16.mxu0 %v5108
      %5138 = vmatpush1.bf16.msra.mxu0 %v5107
      %5139 = vmatprep.subr.bf16.mxu0 %v5110
      %5140 = vmatpush1.bf16.msra.mxu0 %v5109
      %5141 = vmatprep.subr.bf16.mxu0 %v5112
      %5142 = vmatpush1.bf16.msra.mxu0 %v5111
      %5143 = vmatprep.subr.bf16.mxu0 %v5114
      %5144 = vmatpush1.bf16.msra.mxu0 %v5113
      %5145 = vmatprep.subr.bf16.mxu0 %v5116
      %5146 = vmatpush1.bf16.msra.mxu0 %v5115
      %5147 = vmatprep.subr.bf16.mxu0 0
      %5148 = vmatpush1.bf16.msra.mxu0 0
      %5149 = vmatprep.subr.bf16.mxu0 0
      %5150 = vmatpush1.bf16.msra.mxu0 0
      %5151 = vmatprep.subr.bf16.mxu0 0
      %5152 = vmatpush1.bf16.msra.mxu0 0
      %5153 = vmatprep.subr.bf16.mxu0 0
      %5154 = vmatpush1.bf16.msra.mxu0 0
      %5155 = vmatprep.subr.bf16.mxu0 0
      %5156 = vmatpush1.bf16.msra.mxu0 0
      %5157 = vmatprep.subr.bf16.mxu0 0
      %5158 = vmatpush1.bf16.msra.mxu0 0
      %5159 = vmatprep.subr.bf16.mxu0 0
      %5160 = vmatpush1.bf16.msra.mxu0 0
      %5161 = vmatprep.mubr.bf16.mxu0 %v5127
      %5162 = vmatmul.mubr.bf16.gmra.mrb[0].mxu0 %v5123
      %v5163 = vpop.f32.mrb[0].mxu0
      %v5164 = vadd.f32 0.0, %v5163
      %v5165 = vpop.f32.mrb[0].mxu0
      %v5166 = vadd.f32 0.0, %v5165
      %v5167 = vpop.f32.mrb[0].mxu0
      %v5168 = vadd.f32 0.0, %v5167
      %v5169 = vpop.f32.mrb[0].mxu0
      %v5170 = vadd.f32 0.0, %v5169
      %5171 = vdwg.mxu0
      %v5172 = vmax.f32 %v5164, 0.0
      %v5173 = vmax.f32 %v5166, 0.0
      %v5174 = vmax.f32 %v5168, 0.0
      %v5175 = vmax.f32 %v5170, 0.0
      %5176 = vrot.lane.b32.xlu0 %v5172, 17
      %v5177 = vpop.permute.xlu0 %5176
      %5178 = vrot.lane.b32.xlu0 %v5174, 17
      %v5179 = vpop.permute.xlu0 %5178
      %5180 = vrot.lane.b32.xlu0 %v5173, 17
      %v5181 = vpop.permute.xlu0 %5180
      %5182 = vrot.lane.b32.xlu0 %v5175, 17
      %v5183 = vpop.permute.xlu0 %5182
      %v5184 = vsel %vm383, %v5177, %v5181
      %v5185 = vsel %vm383, %v5179, %v5183
      %v5186 = vsel %vm383, %v5181, %v5177
      %v5187 = vsel %vm383, %v5183, %v5179
      %v5188 = vmul.f32 %v5186, %v392
      %v5189 = vmul.f32 %v5184, %v396
      %v5190 = vmul.f32 %v5187, %v392
      %v5191 = vmul.f32 %v5185, %v396
      %v5192 = vpack.c.bf16 %v5190, %v5188
      %v5193 = vpack.c.bf16 %v5191, %v5189
      %5194 = vst [vmem:[#allocation7] sm:$0xff] %v5192
      %5195 = vst [vmem:[#allocation7 + $0x8] sm:$0xff] %v5193
      %5196 = vrot.lane.b32.xlu0 %v5172, 16
      %v5197 = vpop.permute.xlu0 %5196
      %5198 = vrot.lane.b32.xlu0 %v5174, 16
      %v5199 = vpop.permute.xlu0 %5198
      %5200 = vrot.lane.b32.xlu0 %v5173, 16
      %v5201 = vpop.permute.xlu0 %5200
      %5202 = vrot.lane.b32.xlu0 %v5175, 16
      %v5203 = vpop.permute.xlu0 %5202
      %v5204 = vsel %vm415, %v5197, %v5201
      %v5205 = vsel %vm415, %v5199, %v5203
      %v5206 = vsel %vm415, %v5201, %v5197
      %v5207 = vsel %vm415, %v5203, %v5199
      %v5208 = vmul.f32 %v5206, %v424
      %v5209 = vmul.f32 %v5204, %v428
      %v5210 = vmul.f32 %v5207, %v424
      %v5211 = vmul.f32 %v5205, %v428
      %v5212 = vpack.c.bf16 %v5210, %v5208
      %v5213 = vpack.c.bf16 %v5211, %v5209
      %5214 = vst [vmem:[#allocation7 + $0x10] sm:$0xff] %v5212
      %5215 = vst [vmem:[#allocation7 + $0x18] sm:$0xff] %v5213
      %5216 = vrot.lane.b32.xlu0 %v5172, 15
      %v5217 = vpop.permute.xlu0 %5216
      %5218 = vrot.lane.b32.xlu0 %v5174, 15
      %v5219 = vpop.permute.xlu0 %5218
      %5220 = vrot.lane.b32.xlu0 %v5173, 15
      %v5221 = vpop.permute.xlu0 %5220
      %5222 = vrot.lane.b32.xlu0 %v5175, 15
      %v5223 = vpop.permute.xlu0 %5222
      %v5224 = vsel %vm447, %v5217, %v5221
      %v5225 = vsel %vm447, %v5219, %v5223
      %v5226 = vsel %vm447, %v5221, %v5217
      %v5227 = vsel %vm447, %v5223, %v5219
      %v5228 = vmul.f32 %v5226, %v456
      %v5229 = vmul.f32 %v5224, %v460
      %v5230 = vmul.f32 %v5227, %v456
      %v5231 = vmul.f32 %v5225, %v460
      %v5232 = vpack.c.bf16 %v5230, %v5228
      %v5233 = vpack.c.bf16 %v5231, %v5229
      %5234 = vst [vmem:[#allocation7 + $0x20] sm:$0xff] %v5232
      %5235 = vst [vmem:[#allocation7 + $0x28] sm:$0xff] %v5233
      %5236 = vrot.lane.b32.xlu0 %v5172, 1
      %v5237 = vpop.permute.xlu0 %5236
      %5238 = vrot.lane.b32.xlu0 %v5174, 1
      %v5239 = vpop.permute.xlu0 %5238
      %5240 = vrot.lane.b32.xlu0 %v5173, 1
      %v5241 = vpop.permute.xlu0 %5240
      %5242 = vrot.lane.b32.xlu0 %v5175, 1
      %v5243 = vpop.permute.xlu0 %5242
      %v5244 = vsel %vm479, %v5237, %v5241
      %v5245 = vsel %vm479, %v5239, %v5243
      %v5246 = vsel %vm479, %v5241, %v5237
      %v5247 = vsel %vm479, %v5243, %v5239
      %v5248 = vmul.f32 %v5246, %v488
      %v5249 = vmul.f32 %v5244, %v492
      %v5250 = vmul.f32 %v5247, %v488
      %v5251 = vmul.f32 %v5245, %v492
      %v5252 = vpack.c.bf16 %v5250, %v5248
      %v5253 = vpack.c.bf16 %v5251, %v5249
      %5254 = vst [vmem:[#allocation7 + $0x30] sm:$0xff] %v5252
      %5255 = vst [vmem:[#allocation7 + $0x38] sm:$0xff] %v5253
      %v5256 = vpack.c.bf16 %v5174, %v5172
      %v5257 = vpack.c.bf16 %v5175, %v5173
      %5258 = vst [vmem:[#allocation7 + $0x40] sm:$0xff] %v5256
      %5259 = vst [vmem:[#allocation7 + $0x48] sm:$0xff] %v5257
      %5260 = vrot.lane.b32.xlu0 %v5172, 127
      %v5261 = vpop.permute.xlu0 %5260
      %5262 = vrot.lane.b32.xlu0 %v5174, 127
      %v5263 = vpop.permute.xlu0 %5262
      %5264 = vrot.lane.b32.xlu0 %v5173, 127
      %v5265 = vpop.permute.xlu0 %5264
      %5266 = vrot.lane.b32.xlu0 %v5175, 127
      %v5267 = vpop.permute.xlu0 %5266
      %v5268 = vsel %vm515, %v5261, %v5265
      %v5269 = vsel %vm515, %v5263, %v5267
      %v5270 = vsel %vm515, %v5265, %v5261
      %v5271 = vsel %vm515, %v5267, %v5263
      %v5272 = vmul.f32 %v5268, %v524
      %v5273 = vmul.f32 %v5270, %v528
      %v5274 = vmul.f32 %v5269, %v524
      %v5275 = vmul.f32 %v5271, %v528
      %v5276 = vpack.c.bf16 %v5274, %v5272
      %v5277 = vpack.c.bf16 %v5275, %v5273
      %5278 = vst [vmem:[#allocation7 + $0x50] sm:$0xff] %v5276
      %5279 = vst [vmem:[#allocation7 + $0x58] sm:$0xff] %v5277
      %5280 = vrot.lane.b32.xlu0 %v5172, 113
      %v5281 = vpop.permute.xlu0 %5280
      %5282 = vrot.lane.b32.xlu0 %v5174, 113
      %v5283 = vpop.permute.xlu0 %5282
      %5284 = vrot.lane.b32.xlu0 %v5173, 113
      %v5285 = vpop.permute.xlu0 %5284
      %5286 = vrot.lane.b32.xlu0 %v5175, 113
      %v5287 = vpop.permute.xlu0 %5286
      %v5288 = vsel %vm547, %v5281, %v5285
      %v5289 = vsel %vm547, %v5283, %v5287
      %v5290 = vsel %vm547, %v5285, %v5281
      %v5291 = vsel %vm547, %v5287, %v5283
      %v5292 = vmul.f32 %v5288, %v556
      %v5293 = vmul.f32 %v5290, %v560
      %v5294 = vmul.f32 %v5289, %v556
      %v5295 = vmul.f32 %v5291, %v560
      %v5296 = vpack.c.bf16 %v5294, %v5292
      %v5297 = vpack.c.bf16 %v5295, %v5293
      %5298 = vst [vmem:[#allocation7 + $0x60] sm:$0xff] %v5296
      %5299 = vst [vmem:[#allocation7 + $0x68] sm:$0xff] %v5297
      %5300 = vrot.lane.b32.xlu0 %v5172, 112
      %v5301 = vpop.permute.xlu0 %5300
      %5302 = vrot.lane.b32.xlu0 %v5174, 112
      %v5303 = vpop.permute.xlu0 %5302
      %5304 = vrot.lane.b32.xlu0 %v5173, 112
      %v5305 = vpop.permute.xlu0 %5304
      %5306 = vrot.lane.b32.xlu0 %v5175, 112
      %v5307 = vpop.permute.xlu0 %5306
      %v5308 = vsel %vm579, %v5301, %v5305
      %v5309 = vsel %vm579, %v5303, %v5307
      %v5310 = vsel %vm579, %v5305, %v5301
      %v5311 = vsel %vm579, %v5307, %v5303
      %v5312 = vmul.f32 %v5308, %v588
      %v5313 = vmul.f32 %v5310, %v592
      %v5314 = vmul.f32 %v5309, %v588
      %v5315 = vmul.f32 %v5311, %v592
      %v5316 = vpack.c.bf16 %v5314, %v5312
      %v5317 = vpack.c.bf16 %v5315, %v5313
      %5318 = vst [vmem:[#allocation7 + $0x70] sm:$0xff] %v5316
      %5319 = vst [vmem:[#allocation7 + $0x78] sm:$0xff] %v5317
      %5320 = vrot.lane.b32.xlu0 %v5172, 111
      %v5321 = vpop.permute.xlu0 %5320
      %5322 = vrot.lane.b32.xlu0 %v5174, 111
      %v5323 = vpop.permute.xlu0 %5322
      %5324 = vrot.lane.b32.xlu0 %v5173, 111
      %v5325 = vpop.permute.xlu0 %5324
      %5326 = vrot.lane.b32.xlu0 %v5175, 111
      %v5327 = vpop.permute.xlu0 %5326
      %v5328 = vsel %vm611, %v5321, %v5325
      %v5329 = vsel %vm611, %v5323, %v5327
      %v5330 = vsel %vm611, %v5325, %v5321
      %v5331 = vsel %vm611, %v5327, %v5323
      %v5332 = vmul.f32 %v5328, %v620
      %v5333 = vmul.f32 %v5330, %v624
      %v5334 = vmul.f32 %v5329, %v620
      %v5335 = vmul.f32 %v5331, %v624
      %v5336 = vpack.c.bf16 %v5334, %v5332
      %v5337 = vpack.c.bf16 %v5335, %v5333
      %5338 = vst [vmem:[#allocation7 + $0x80] sm:$0xff] %v5336
      %5339 = vst [vmem:[#allocation7 + $0x88] sm:$0xff] %v5337
      %v5340 = vld [vmem:[%s3] sm:$0xff]
      %v5341 = vld [vmem:[%s3 + $0x8] sm:$0xff]
      %v5342 = vld [vmem:[#allocation7] sm:$0xff]
      %v5343 = vld [vmem:[#allocation7 + $0x8] sm:$0xff]
      %v5344 = vld [vmem:[#allocation7 + $0x10] sm:$0xff]
      %v5345 = vld [vmem:[#allocation7 + $0x18] sm:$0xff]
      %v5346 = vld [vmem:[#allocation7 + $0x20] sm:$0xff]
      %v5347 = vld [vmem:[#allocation7 + $0x28] sm:$0xff]
      %v5348 = vld [vmem:[#allocation7 + $0x30] sm:$0xff]
      %v5349 = vld [vmem:[#allocation7 + $0x38] sm:$0xff]
      %v5350 = vld [vmem:[#allocation7 + $0x40] sm:$0xff]
      %v5351 = vld [vmem:[#allocation7 + $0x48] sm:$0xff]
      %v5352 = vld [vmem:[#allocation7 + $0x50] sm:$0xff]
      %v5353 = vld [vmem:[#allocation7 + $0x58] sm:$0xff]
      %v5354 = vld [vmem:[#allocation7 + $0x60] sm:$0xff]
      %v5355 = vld [vmem:[#allocation7 + $0x68] sm:$0xff]
      %v5356 = vld [vmem:[#allocation7 + $0x70] sm:$0xff]
      %v5357 = vld [vmem:[#allocation7 + $0x78] sm:$0xff]
      %v5358 = vld [vmem:[#allocation7 + $0x80] sm:$0xff]
      %v5359 = vld [vmem:[#allocation7 + $0x88] sm:$0xff]
      %v5362 = vunpack.c.l.b16 %v5340
      %v5363 = vunpack.c.h.b16 %v5340
      %v5364 = vunpack.c.l.b16 %v5341
      %v5365 = vunpack.c.h.b16 %v5341
      %v5366 = vpack.c.b16 %v5364, %v5362
      %v5367 = vpack.c.b16 %v5365, %v5363
      %v5370 = vsel %vm664, %v5367, 0
      %5372 = vmatprep.subr.bf16.mxu0 %v5343
      %5373 = vmatpush1.bf16.msra.mxu0 %v5342
      %5374 = vmatprep.subr.bf16.mxu0 %v5345
      %5375 = vmatpush1.bf16.msra.mxu0 %v5344
      %5376 = vmatprep.subr.bf16.mxu0 %v5347
      %5377 = vmatpush1.bf16.msra.mxu0 %v5346
      %5378 = vmatprep.subr.bf16.mxu0 %v5349
      %5379 = vmatpush1.bf16.msra.mxu0 %v5348
      %5380 = vmatprep.subr.bf16.mxu0 %v5351
      %5381 = vmatpush1.bf16.msra.mxu0 %v5350
      %5382 = vmatprep.subr.bf16.mxu0 %v5353
      %5383 = vmatpush1.bf16.msra.mxu0 %v5352
      %5384 = vmatprep.subr.bf16.mxu0 %v5355
      %5385 = vmatpush1.bf16.msra.mxu0 %v5354
      %5386 = vmatprep.subr.bf16.mxu0 %v5357
      %5387 = vmatpush1.bf16.msra.mxu0 %v5356
      %5388 = vmatprep.subr.bf16.mxu0 %v5359
      %5389 = vmatpush1.bf16.msra.mxu0 %v5358
      %5390 = vmatprep.subr.bf16.mxu0 0
      %5391 = vmatpush1.bf16.msra.mxu0 0
      %5392 = vmatprep.subr.bf16.mxu0 0
      %5393 = vmatpush1.bf16.msra.mxu0 0
      %5394 = vmatprep.subr.bf16.mxu0 0
      %5395 = vmatpush1.bf16.msra.mxu0 0
      %5396 = vmatprep.subr.bf16.mxu0 0
      %5397 = vmatpush1.bf16.msra.mxu0 0
      %5398 = vmatprep.subr.bf16.mxu0 0
      %5399 = vmatpush1.bf16.msra.mxu0 0
      %5400 = vmatprep.subr.bf16.mxu0 0
      %5401 = vmatpush1.bf16.msra.mxu0 0
      %5402 = vmatprep.subr.bf16.mxu0 0
      %5403 = vmatpush1.bf16.msra.mxu0 0
      %5404 = vmatprep.mubr.bf16.mxu0 %v5370
      %5405 = vmatmul.mubr.bf16.gmra.mrb[0].mxu0 %v5366
      %v5406 = vpop.f32.mrb[0].mxu0
      %v5407 = vadd.f32 0.0, %v5406
      %v5408 = vpop.f32.mrb[0].mxu0
      %v5409 = vadd.f32 0.0, %v5408
      %v5410 = vpop.f32.mrb[0].mxu0
      %v5411 = vadd.f32 0.0, %v5410
      %v5412 = vpop.f32.mrb[0].mxu0
      %v5413 = vadd.f32 0.0, %v5412
      %5414 = vdwg.mxu0
      %v5415 = vmax.f32 %v5407, 0.0
      %v5416 = vmax.f32 %v5409, 0.0
      %v5417 = vmax.f32 %v5411, 0.0
      %v5418 = vmax.f32 %v5413, 0.0
      %5419 = vrot.lane.b32.xlu0 %v5415, 17
      %v5420 = vpop.permute.xlu0 %5419
      %5421 = vrot.lane.b32.xlu0 %v5417, 17
      %v5422 = vpop.permute.xlu0 %5421
      %5423 = vrot.lane.b32.xlu0 %v5416, 17
      %v5424 = vpop.permute.xlu0 %5423
      %5425 = vrot.lane.b32.xlu0 %v5418, 17
      %v5426 = vpop.permute.xlu0 %5425
      %v5427 = vsel %vm383, %v5420, %v5424
      %v5428 = vsel %vm383, %v5422, %v5426
      %v5429 = vsel %vm383, %v5424, %v5420
      %v5430 = vsel %vm383, %v5426, %v5422
      %v5431 = vmul.f32 %v5429, %v392
      %v5432 = vmul.f32 %v5427, %v396
      %v5433 = vmul.f32 %v5430, %v392
      %v5434 = vmul.f32 %v5428, %v396
      %v5435 = vpack.c.bf16 %v5433, %v5431
      %v5436 = vpack.c.bf16 %v5434, %v5432
      %5437 = vst [vmem:[#allocation7] sm:$0xff] %v5435
      %5438 = vst [vmem:[#allocation7 + $0x8] sm:$0xff] %v5436
      %5439 = vrot.lane.b32.xlu0 %v5415, 16
      %v5440 = vpop.permute.xlu0 %5439
      %5441 = vrot.lane.b32.xlu0 %v5417, 16
      %v5442 = vpop.permute.xlu0 %5441
      %5443 = vrot.lane.b32.xlu0 %v5416, 16
      %v5444 = vpop.permute.xlu0 %5443
      %5445 = vrot.lane.b32.xlu0 %v5418, 16
      %v5446 = vpop.permute.xlu0 %5445
      %v5447 = vsel %vm415, %v5440, %v5444
      %v5448 = vsel %vm415, %v5442, %v5446
      %v5449 = vsel %vm415, %v5444, %v5440
      %v5450 = vsel %vm415, %v5446, %v5442
      %v5451 = vmul.f32 %v5449, %v424
      %v5452 = vmul.f32 %v5447, %v428
      %v5453 = vmul.f32 %v5450, %v424
      %v5454 = vmul.f32 %v5448, %v428
      %v5455 = vpack.c.bf16 %v5453, %v5451
      %v5456 = vpack.c.bf16 %v5454, %v5452
      %5457 = vst [vmem:[#allocation7 + $0x10] sm:$0xff] %v5455
      %5458 = vst [vmem:[#allocation7 + $0x18] sm:$0xff] %v5456
      %5459 = vrot.lane.b32.xlu0 %v5415, 15
      %v5460 = vpop.permute.xlu0 %5459
      %5461 = vrot.lane.b32.xlu0 %v5417, 15
      %v5462 = vpop.permute.xlu0 %5461
      %5463 = vrot.lane.b32.xlu0 %v5416, 15
      %v5464 = vpop.permute.xlu0 %5463
      %5465 = vrot.lane.b32.xlu0 %v5418, 15
      %v5466 = vpop.permute.xlu0 %5465
      %v5467 = vsel %vm447, %v5460, %v5464
      %v5468 = vsel %vm447, %v5462, %v5466
      %v5469 = vsel %vm447, %v5464, %v5460
      %v5470 = vsel %vm447, %v5466, %v5462
      %v5471 = vmul.f32 %v5469, %v456
      %v5472 = vmul.f32 %v5467, %v460
      %v5473 = vmul.f32 %v5470, %v456
      %v5474 = vmul.f32 %v5468, %v460
      %v5475 = vpack.c.bf16 %v5473, %v5471
      %v5476 = vpack.c.bf16 %v5474, %v5472
      %5477 = vst [vmem:[#allocation7 + $0x20] sm:$0xff] %v5475
      %5478 = vst [vmem:[#allocation7 + $0x28] sm:$0xff] %v5476
      %5479 = vrot.lane.b32.xlu0 %v5415, 1
      %v5480 = vpop.permute.xlu0 %5479
      %5481 = vrot.lane.b32.xlu0 %v5417, 1
      %v5482 = vpop.permute.xlu0 %5481
      %5483 = vrot.lane.b32.xlu0 %v5416, 1
      %v5484 = vpop.permute.xlu0 %5483
      %5485 = vrot.lane.b32.xlu0 %v5418, 1
      %v5486 = vpop.permute.xlu0 %5485
      %v5487 = vsel %vm479, %v5480, %v5484
      %v5488 = vsel %vm479, %v5482, %v5486
      %v5489 = vsel %vm479, %v5484, %v5480
      %v5490 = vsel %vm479, %v5486, %v5482
      %v5491 = vmul.f32 %v5489, %v488
      %v5492 = vmul.f32 %v5487, %v492
      %v5493 = vmul.f32 %v5490, %v488
      %v5494 = vmul.f32 %v5488, %v492
      %v5495 = vpack.c.bf16 %v5493, %v5491
      %v5496 = vpack.c.bf16 %v5494, %v5492
      %5497 = vst [vmem:[#allocation7 + $0x30] sm:$0xff] %v5495
      %5498 = vst [vmem:[#allocation7 + $0x38] sm:$0xff] %v5496
      %v5499 = vpack.c.bf16 %v5417, %v5415
      %v5500 = vpack.c.bf16 %v5418, %v5416
      %5501 = vst [vmem:[#allocation7 + $0x40] sm:$0xff] %v5499
      %5502 = vst [vmem:[#allocation7 + $0x48] sm:$0xff] %v5500
      %5503 = vrot.lane.b32.xlu0 %v5415, 127
      %v5504 = vpop.permute.xlu0 %5503
      %5505 = vrot.lane.b32.xlu0 %v5417, 127
      %v5506 = vpop.permute.xlu0 %5505
      %5507 = vrot.lane.b32.xlu0 %v5416, 127
      %v5508 = vpop.permute.xlu0 %5507
      %5509 = vrot.lane.b32.xlu0 %v5418, 127
      %v5510 = vpop.permute.xlu0 %5509
      %v5511 = vsel %vm515, %v5504, %v5508
      %v5512 = vsel %vm515, %v5506, %v5510
      %v5513 = vsel %vm515, %v5508, %v5504
      %v5514 = vsel %vm515, %v5510, %v5506
      %v5515 = vmul.f32 %v5511, %v524
      %v5516 = vmul.f32 %v5513, %v528
      %v5517 = vmul.f32 %v5512, %v524
      %v5518 = vmul.f32 %v5514, %v528
      %v5519 = vpack.c.bf16 %v5517, %v5515
      %v5520 = vpack.c.bf16 %v5518, %v5516
      %5521 = vst [vmem:[#allocation7 + $0x50] sm:$0xff] %v5519
      %5522 = vst [vmem:[#allocation7 + $0x58] sm:$0xff] %v5520
      %5523 = vrot.lane.b32.xlu0 %v5415, 113
      %v5524 = vpop.permute.xlu0 %5523
      %5525 = vrot.lane.b32.xlu0 %v5417, 113
      %v5526 = vpop.permute.xlu0 %5525
      %5527 = vrot.lane.b32.xlu0 %v5416, 113
      %v5528 = vpop.permute.xlu0 %5527
      %5529 = vrot.lane.b32.xlu0 %v5418, 113
      %v5530 = vpop.permute.xlu0 %5529
      %v5531 = vsel %vm547, %v5524, %v5528
      %v5532 = vsel %vm547, %v5526, %v5530
      %v5533 = vsel %vm547, %v5528, %v5524
      %v5534 = vsel %vm547, %v5530, %v5526
      %v5535 = vmul.f32 %v5531, %v556
      %v5536 = vmul.f32 %v5533, %v560
      %v5537 = vmul.f32 %v5532, %v556
      %v5538 = vmul.f32 %v5534, %v560
      %v5539 = vpack.c.bf16 %v5537, %v5535
      %v5540 = vpack.c.bf16 %v5538, %v5536
      %5541 = vst [vmem:[#allocation7 + $0x60] sm:$0xff] %v5539
      %5542 = vst [vmem:[#allocation7 + $0x68] sm:$0xff] %v5540
      %5543 = vrot.lane.b32.xlu0 %v5415, 112
      %v5544 = vpop.permute.xlu0 %5543
      %5545 = vrot.lane.b32.xlu0 %v5417, 112
      %v5546 = vpop.permute.xlu0 %5545
      %5547 = vrot.lane.b32.xlu0 %v5416, 112
      %v5548 = vpop.permute.xlu0 %5547
      %5549 = vrot.lane.b32.xlu0 %v5418, 112
      %v5550 = vpop.permute.xlu0 %5549
      %v5551 = vsel %vm579, %v5544, %v5548
      %v5552 = vsel %vm579, %v5546, %v5550
      %v5553 = vsel %vm579, %v5548, %v5544
      %v5554 = vsel %vm579, %v5550, %v5546
      %v5555 = vmul.f32 %v5551, %v588
      %v5556 = vmul.f32 %v5553, %v592
      %v5557 = vmul.f32 %v5552, %v588
      %v5558 = vmul.f32 %v5554, %v592
      %v5559 = vpack.c.bf16 %v5557, %v5555
      %v5560 = vpack.c.bf16 %v5558, %v5556
      %5561 = vst [vmem:[#allocation7 + $0x70] sm:$0xff] %v5559
      %5562 = vst [vmem:[#allocation7 + $0x78] sm:$0xff] %v5560
      %5563 = vrot.lane.b32.xlu0 %v5415, 111
      %v5564 = vpop.permute.xlu0 %5563
      %5565 = vrot.lane.b32.xlu0 %v5417, 111
      %v5566 = vpop.permute.xlu0 %5565
      %5567 = vrot.lane.b32.xlu0 %v5416, 111
      %v5568 = vpop.permute.xlu0 %5567
      %5569 = vrot.lane.b32.xlu0 %v5418, 111
      %v5570 = vpop.permute.xlu0 %5569
      %v5571 = vsel %vm611, %v5564, %v5568
      %v5572 = vsel %vm611, %v5566, %v5570
      %v5573 = vsel %vm611, %v5568, %v5564
      %v5574 = vsel %vm611, %v5570, %v5566
      %v5575 = vmul.f32 %v5571, %v620
      %v5576 = vmul.f32 %v5573, %v624
      %v5577 = vmul.f32 %v5572, %v620
      %v5578 = vmul.f32 %v5574, %v624
      %v5579 = vpack.c.bf16 %v5577, %v5575
      %v5580 = vpack.c.bf16 %v5578, %v5576
      %5581 = vst [vmem:[#allocation7 + $0x80] sm:$0xff] %v5579
      %5582 = vst [vmem:[#allocation7 + $0x88] sm:$0xff] %v5580
      %v5583 = vld [vmem:[%s4] sm:$0x3]
      %v5584 = vld [vmem:[#allocation7] sm:$0xff]
      %v5585 = vld [vmem:[#allocation7 + $0x8] sm:$0xff]
      %v5586 = vld [vmem:[#allocation7 + $0x10] sm:$0xff]
      %v5587 = vld [vmem:[#allocation7 + $0x18] sm:$0xff]
      %v5588 = vld [vmem:[#allocation7 + $0x20] sm:$0xff]
      %v5589 = vld [vmem:[#allocation7 + $0x28] sm:$0xff]
      %v5590 = vld [vmem:[#allocation7 + $0x30] sm:$0xff]
      %v5591 = vld [vmem:[#allocation7 + $0x38] sm:$0xff]
      %v5592 = vld [vmem:[#allocation7 + $0x40] sm:$0xff]
      %v5593 = vld [vmem:[#allocation7 + $0x48] sm:$0xff]
      %v5594 = vld [vmem:[#allocation7 + $0x50] sm:$0xff]
      %v5595 = vld [vmem:[#allocation7 + $0x58] sm:$0xff]
      %v5596 = vld [vmem:[#allocation7 + $0x60] sm:$0xff]
      %v5597 = vld [vmem:[#allocation7 + $0x68] sm:$0xff]
      %v5598 = vld [vmem:[#allocation7 + $0x70] sm:$0xff]
      %v5599 = vld [vmem:[#allocation7 + $0x78] sm:$0xff]
      %v5600 = vld [vmem:[#allocation7 + $0x80] sm:$0xff]
      %v5601 = vld [vmem:[#allocation7 + $0x88] sm:$0xff]
      %v5604 = vunpack.c.l.s4 1966171168
      %v5605 = vunpack.c.0.s8 %v5604
      %v5606 = vlaneseq
      %v5607 = vshrl.u32 %v5606, 7
      %v5608 = vsub.s32 %v5605, %v5607
      %v5609 = vrot.slane %v5583, %v5608
      %v5610 = vcombine.high %v5609, %v5609
      %v5612 = vunpack.c.l.s4 1966171168
      %v5613 = vunpack.c.0.s8 %v5612
      %v5614 = vlaneseq
      %v5615 = vshrl.u32 %v5614, 7
      %v5616 = vsub.s32 %v5613, %v5615
      %v5617 = vrot.slane %v5609, %v5616
      %v5619 = vunpack.c.l.s4 1966171168
      %v5620 = vunpack.c.0.s8 %v5619
      %v5621 = vlaneseq
      %v5622 = vshrl.u32 %v5621, 7
      %v5623 = vsub.s32 %v5620, %v5622
      %v5624 = vrot.slane %v5610, %v5623
      %v5627 = vsel %vm664, %v5624, 0
      %5629 = vmatprep.subr.bf16.mxu0 %v5585
      %5630 = vmatpush1.bf16.msra.mxu0 %v5584
      %5631 = vmatprep.subr.bf16.mxu0 %v5587
      %5632 = vmatpush1.bf16.msra.mxu0 %v5586
      %5633 = vmatprep.subr.bf16.mxu0 %v5589
      %5634 = vmatpush1.bf16.msra.mxu0 %v5588
      %5635 = vmatprep.subr.bf16.mxu0 %v5591
      %5636 = vmatpush1.bf16.msra.mxu0 %v5590
      %5637 = vmatprep.subr.bf16.mxu0 %v5593
      %5638 = vmatpush1.bf16.msra.mxu0 %v5592
      %5639 = vmatprep.subr.bf16.mxu0 %v5595
      %5640 = vmatpush1.bf16.msra.mxu0 %v5594
      %5641 = vmatprep.subr.bf16.mxu0 %v5597
      %5642 = vmatpush1.bf16.msra.mxu0 %v5596
      %5643 = vmatprep.subr.bf16.mxu0 %v5599
      %5644 = vmatpush1.bf16.msra.mxu0 %v5598
      %5645 = vmatprep.subr.bf16.mxu0 %v5601
      %5646 = vmatpush1.bf16.msra.mxu0 %v5600
      %5647 = vmatprep.subr.bf16.mxu0 0
      %5648 = vmatpush1.bf16.msra.mxu0 0
      %5649 = vmatprep.subr.bf16.mxu0 0
      %5650 = vmatpush1.bf16.msra.mxu0 0
      %5651 = vmatprep.subr.bf16.mxu0 0
      %5652 = vmatpush1.bf16.msra.mxu0 0
      %5653 = vmatprep.subr.bf16.mxu0 0
      %5654 = vmatpush1.bf16.msra.mxu0 0
      %5655 = vmatprep.subr.bf16.mxu0 0
      %5656 = vmatpush1.bf16.msra.mxu0 0
      %5657 = vmatprep.subr.bf16.mxu0 0
      %5658 = vmatpush1.bf16.msra.mxu0 0
      %5659 = vmatprep.subr.bf16.mxu0 0
      %5660 = vmatpush1.bf16.msra.mxu0 0
      %5661 = vmatprep.mubr.bf16.mxu0 %v5627
      %5662 = vmatmul.mubr.bf16.gmra.mrb[0].mxu0 %v5617
      %v5663 = vpop.f32.mrb[0].mxu0
      %v5664 = vadd.f32 0.0, %v5663
      %v5665 = vpop.f32.mrb[0].mxu0
      %v5666 = vadd.f32 0.0, %v5665
      %v5667 = vpop.f32.mrb[0].mxu0
      %v5668 = vpop.f32.mrb[0].mxu0
      %5669 = vdwg.mxu0
      %v5670 = vxor.u32 %v5664, 2147483648
      %v5671 = vxor.u32 %v5666, 2147483648
      %v5672 = vmul.f32 %v5670, 1.442695
      %v5673 = vpow.pop %v5672
      %v5674 = vmul.f32 %v5671, 1.442695
      %v5675 = vpow.pop %v5674
      %v5676 = vadd.f32 %v5673, 1.0
      %v5677 = vadd.f32 %v5675, 1.0
      %v5678 = vrcp.pop %v5676
      %v5679 = vmul.f32 1.0, %v5678
      %v5680 = vrcp.pop %v5677
      %v5681 = vmul.f32 1.0, %v5680
      %5682 = vrot.lane.b32.xlu0 %v5679, 17
      %v5683 = vpop.permute.xlu0 %5682
      %5684 = vrot.lane.b32.xlu0 %v5681, 17
      %v5685 = vpop.permute.xlu0 %5684
      %v5686 = vsel %vm383, %v5683, %v5685
      %v5687 = vsel %vm383, %v5685, %v5683
      %v5688 = vld [vmem:[#allocation6] sm:$0xf]
      %v5689 = vld [vmem:[#allocation6 + $0x8] sm:$0xf]
      %v5690 = vunpack.c.l.bf16 %v5688
      %v5691 = vunpack.c.l.bf16 %v5689
      %v5692 = vlaneseq
      %v5693 = vshrl.u32 %v5692, 7
      %v5694 = vsub.s32 0, %v5693
      %v5695 = vrot.slane %v5687, %v5694
      %v5696 = vlaneseq
      %v5697 = vshrl.u32 %v5696, 7
      %v5698 = vsub.s32 0, %v5697
      %v5699 = vrot.slane %v5686, %v5698
      %v5700 = vmul.f32 %v5690, %v5695
      %v5701 = vmul.f32 %v5691, %v5699
      %v5702 = vpack.c.bf16 %v5700, %v5700
      %v5703 = vpack.c.bf16 %v5701, %v5701
      %5704 = vst [vmem:[#allocation6] sm:$0xf] %v5702
      %5705 = vst [vmem:[#allocation6 + $0x8] sm:$0xf] %v5703
      %5706 = vrot.lane.b32.xlu0 %v5679, 16
      %v5707 = vpop.permute.xlu0 %5706
      %5708 = vrot.lane.b32.xlu0 %v5681, 16
      %v5709 = vpop.permute.xlu0 %5708
      %v5710 = vsel %vm415, %v5707, %v5709
      %v5711 = vsel %vm415, %v5709, %v5707
      %v5712 = vld [vmem:[#allocation6 + $0x10] sm:$0xf]
      %v5713 = vld [vmem:[#allocation6 + $0x18] sm:$0xf]
      %v5714 = vunpack.c.l.bf16 %v5712
      %v5715 = vunpack.c.l.bf16 %v5713
      %v5716 = vlaneseq
      %v5717 = vshrl.u32 %v5716, 7
      %v5718 = vsub.s32 0, %v5717
      %v5719 = vrot.slane %v5711, %v5718
      %v5720 = vlaneseq
      %v5721 = vshrl.u32 %v5720, 7
      %v5722 = vsub.s32 0, %v5721
      %v5723 = vrot.slane %v5710, %v5722
      %v5724 = vmul.f32 %v5714, %v5719
      %v5725 = vmul.f32 %v5715, %v5723
      %v5726 = vpack.c.bf16 %v5724, %v5724
      %v5727 = vpack.c.bf16 %v5725, %v5725
      %5728 = vst [vmem:[#allocation6 + $0x10] sm:$0xf] %v5726
      %5729 = vst [vmem:[#allocation6 + $0x18] sm:$0xf] %v5727
      %5730 = vrot.lane.b32.xlu0 %v5679, 15
      %v5731 = vpop.permute.xlu0 %5730
      %5732 = vrot.lane.b32.xlu0 %v5681, 15
      %v5733 = vpop.permute.xlu0 %5732
      %v5734 = vsel %vm447, %v5731, %v5733
      %v5735 = vsel %vm447, %v5733, %v5731
      %v5736 = vld [vmem:[#allocation6 + $0x20] sm:$0xf]
      %v5737 = vld [vmem:[#allocation6 + $0x28] sm:$0xf]
      %v5738 = vunpack.c.l.bf16 %v5736
      %v5739 = vunpack.c.l.bf16 %v5737
      %v5740 = vlaneseq
      %v5741 = vshrl.u32 %v5740, 7
      %v5742 = vsub.s32 0, %v5741
      %v5743 = vrot.slane %v5735, %v5742
      %v5744 = vlaneseq
      %v5745 = vshrl.u32 %v5744, 7
      %v5746 = vsub.s32 0, %v5745
      %v5747 = vrot.slane %v5734, %v5746
      %v5748 = vmul.f32 %v5738, %v5743
      %v5749 = vmul.f32 %v5739, %v5747
      %v5750 = vpack.c.bf16 %v5748, %v5748
      %v5751 = vpack.c.bf16 %v5749, %v5749
      %5752 = vst [vmem:[#allocation6 + $0x20] sm:$0xf] %v5750
      %5753 = vst [vmem:[#allocation6 + $0x28] sm:$0xf] %v5751
      %5754 = vrot.lane.b32.xlu0 %v5679, 1
      %v5755 = vpop.permute.xlu0 %5754
      %5756 = vrot.lane.b32.xlu0 %v5681, 1
      %v5757 = vpop.permute.xlu0 %5756
      %v5758 = vsel %vm479, %v5755, %v5757
      %v5759 = vsel %vm479, %v5757, %v5755
      %v5760 = vld [vmem:[#allocation6 + $0x30] sm:$0xf]
      %v5761 = vld [vmem:[#allocation6 + $0x38] sm:$0xf]
      %v5762 = vunpack.c.l.bf16 %v5760
      %v5763 = vunpack.c.l.bf16 %v5761
      %v5764 = vlaneseq
      %v5765 = vshrl.u32 %v5764, 7
      %v5766 = vsub.s32 0, %v5765
      %v5767 = vrot.slane %v5759, %v5766
      %v5768 = vlaneseq
      %v5769 = vshrl.u32 %v5768, 7
      %v5770 = vsub.s32 0, %v5769
      %v5771 = vrot.slane %v5758, %v5770
      %v5772 = vmul.f32 %v5762, %v5767
      %v5773 = vmul.f32 %v5763, %v5771
      %v5774 = vpack.c.bf16 %v5772, %v5772
      %v5775 = vpack.c.bf16 %v5773, %v5773
      %5776 = vst [vmem:[#allocation6 + $0x30] sm:$0xf] %v5774
      %5777 = vst [vmem:[#allocation6 + $0x38] sm:$0xf] %v5775
      %v5778 = vld [vmem:[#allocation6 + $0x40] sm:$0xf]
      %v5779 = vld [vmem:[#allocation6 + $0x48] sm:$0xf]
      %v5780 = vunpack.c.l.bf16 %v5778
      %v5781 = vunpack.c.l.bf16 %v5779
      %v5782 = vlaneseq
      %v5783 = vshrl.u32 %v5782, 7
      %v5784 = vsub.s32 0, %v5783
      %v5785 = vrot.slane %v5679, %v5784
      %v5786 = vlaneseq
      %v5787 = vshrl.u32 %v5786, 7
      %v5788 = vsub.s32 0, %v5787
      %v5789 = vrot.slane %v5681, %v5788
      %v5790 = vmul.f32 %v5780, %v5785
      %v5791 = vmul.f32 %v5781, %v5789
      %v5792 = vpack.c.bf16 %v5790, %v5790
      %v5793 = vpack.c.bf16 %v5791, %v5791
      %5794 = vst [vmem:[#allocation6 + $0x40] sm:$0xf] %v5792
      %5795 = vst [vmem:[#allocation6 + $0x48] sm:$0xf] %v5793
      %5796 = vrot.lane.b32.xlu0 %v5679, 127
      %v5797 = vpop.permute.xlu0 %5796
      %5798 = vrot.lane.b32.xlu0 %v5681, 127
      %v5799 = vpop.permute.xlu0 %5798
      %v5800 = vsel %vm515, %v5797, %v5799
      %v5801 = vsel %vm515, %v5799, %v5797
      %v5802 = vld [vmem:[#allocation6 + $0x50] sm:$0xf]
      %v5803 = vld [vmem:[#allocation6 + $0x58] sm:$0xf]
      %v5804 = vunpack.c.l.bf16 %v5802
      %v5805 = vunpack.c.l.bf16 %v5803
      %v5806 = vlaneseq
      %v5807 = vshrl.u32 %v5806, 7
      %v5808 = vsub.s32 0, %v5807
      %v5809 = vrot.slane %v5800, %v5808
      %v5810 = vlaneseq
      %v5811 = vshrl.u32 %v5810, 7
      %v5812 = vsub.s32 0, %v5811
      %v5813 = vrot.slane %v5801, %v5812
      %v5814 = vmul.f32 %v5804, %v5809
      %v5815 = vmul.f32 %v5805, %v5813
      %v5816 = vpack.c.bf16 %v5814, %v5814
      %v5817 = vpack.c.bf16 %v5815, %v5815
      %5818 = vst [vmem:[#allocation6 + $0x50] sm:$0xf] %v5816
      %5819 = vst [vmem:[#allocation6 + $0x58] sm:$0xf] %v5817
      %5820 = vrot.lane.b32.xlu0 %v5679, 113
      %v5821 = vpop.permute.xlu0 %5820
      %5822 = vrot.lane.b32.xlu0 %v5681, 113
      %v5823 = vpop.permute.xlu0 %5822
      %v5824 = vsel %vm547, %v5821, %v5823
      %v5825 = vsel %vm547, %v5823, %v5821
      %v5826 = vld [vmem:[#allocation6 + $0x60] sm:$0xf]
      %v5827 = vld [vmem:[#allocation6 + $0x68] sm:$0xf]
      %v5828 = vunpack.c.l.bf16 %v5826
      %v5829 = vunpack.c.l.bf16 %v5827
      %v5830 = vlaneseq
      %v5831 = vshrl.u32 %v5830, 7
      %v5832 = vsub.s32 0, %v5831
      %v5833 = vrot.slane %v5824, %v5832
      %v5834 = vlaneseq
      %v5835 = vshrl.u32 %v5834, 7
      %v5836 = vsub.s32 0, %v5835
      %v5837 = vrot.slane %v5825, %v5836
      %v5838 = vmul.f32 %v5828, %v5833
      %v5839 = vmul.f32 %v5829, %v5837
      %v5840 = vpack.c.bf16 %v5838, %v5838
      %v5841 = vpack.c.bf16 %v5839, %v5839
      %5842 = vst [vmem:[#allocation6 + $0x60] sm:$0xf] %v5840
      %5843 = vst [vmem:[#allocation6 + $0x68] sm:$0xf] %v5841
      %5844 = vrot.lane.b32.xlu0 %v5679, 112
      %v5845 = vpop.permute.xlu0 %5844
      %5846 = vrot.lane.b32.xlu0 %v5681, 112
      %v5847 = vpop.permute.xlu0 %5846
      %v5848 = vsel %vm579, %v5845, %v5847
      %v5849 = vsel %vm579, %v5847, %v5845
      %v5850 = vld [vmem:[#allocation6 + $0x70] sm:$0xf]
      %v5851 = vld [vmem:[#allocation6 + $0x78] sm:$0xf]
      %v5852 = vunpack.c.l.bf16 %v5850
      %v5853 = vunpack.c.l.bf16 %v5851
      %v5854 = vlaneseq
      %v5855 = vshrl.u32 %v5854, 7
      %v5856 = vsub.s32 0, %v5855
      %v5857 = vrot.slane %v5848, %v5856
      %v5858 = vlaneseq
      %v5859 = vshrl.u32 %v5858, 7
      %v5860 = vsub.s32 0, %v5859
      %v5861 = vrot.slane %v5849, %v5860
      %v5862 = vmul.f32 %v5852, %v5857
      %v5863 = vmul.f32 %v5853, %v5861
      %v5864 = vpack.c.bf16 %v5862, %v5862
      %v5865 = vpack.c.bf16 %v5863, %v5863
      %5866 = vst [vmem:[#allocation6 + $0x70] sm:$0xf] %v5864
      %5867 = vst [vmem:[#allocation6 + $0x78] sm:$0xf] %v5865
      %5868 = vrot.lane.b32.xlu0 %v5679, 111
      %v5869 = vpop.permute.xlu0 %5868
      %5870 = vrot.lane.b32.xlu0 %v5681, 111
      %v5871 = vpop.permute.xlu0 %5870
      %v5872 = vsel %vm611, %v5869, %v5871
      %v5873 = vsel %vm611, %v5871, %v5869
      %v5874 = vld [vmem:[#allocation6 + $0x80] sm:$0xf]
      %v5875 = vld [vmem:[#allocation6 + $0x88] sm:$0xf]
      %v5876 = vunpack.c.l.bf16 %v5874
      %v5877 = vunpack.c.l.bf16 %v5875
      %v5878 = vlaneseq
      %v5879 = vshrl.u32 %v5878, 7
      %v5880 = vsub.s32 0, %v5879
      %v5881 = vrot.slane %v5872, %v5880
      %v5882 = vlaneseq
      %v5883 = vshrl.u32 %v5882, 7
      %v5884 = vsub.s32 0, %v5883
      %v5885 = vrot.slane %v5873, %v5884
      %v5886 = vmul.f32 %v5876, %v5881
      %v5887 = vmul.f32 %v5877, %v5885
      %v5888 = vpack.c.bf16 %v5886, %v5886
      %v5889 = vpack.c.bf16 %v5887, %v5887
      %5890 = vst [vmem:[#allocation6 + $0x80] sm:$0xf] %v5888
      %5891 = vst [vmem:[#allocation6 + $0x88] sm:$0xf] %v5889
      %v5892 = vld [vmem:[%s5] sm:$0xff]
      %v5893 = vld [vmem:[%s5 + $0x8] sm:$0xff]
      %v5894 = vld [vmem:[%s5 + $0x10] sm:$0xff]
      %v5895 = vld [vmem:[%s5 + $0x18] sm:$0xff]
      %v5896 = vld [vmem:[#allocation6] sm:$0xff]
      %v5897 = vld [vmem:[#allocation6 + $0x8] sm:$0xff]
      %v5898 = vld [vmem:[#allocation6 + $0x10] sm:$0xff]
      %v5899 = vld [vmem:[#allocation6 + $0x18] sm:$0xff]
      %v5900 = vld [vmem:[#allocation6 + $0x20] sm:$0xff]
      %v5901 = vld [vmem:[#allocation6 + $0x28] sm:$0xff]
      %v5902 = vld [vmem:[#allocation6 + $0x30] sm:$0xff]
      %v5903 = vld [vmem:[#allocation6 + $0x38] sm:$0xff]
      %v5904 = vld [vmem:[#allocation6 + $0x40] sm:$0xff]
      %v5905 = vld [vmem:[#allocation6 + $0x48] sm:$0xff]
      %v5906 = vld [vmem:[#allocation6 + $0x50] sm:$0xff]
      %v5907 = vld [vmem:[#allocation6 + $0x58] sm:$0xff]
      %v5908 = vld [vmem:[#allocation6 + $0x60] sm:$0xff]
      %v5909 = vld [vmem:[#allocation6 + $0x68] sm:$0xff]
      %v5910 = vld [vmem:[#allocation6 + $0x70] sm:$0xff]
      %v5911 = vld [vmem:[#allocation6 + $0x78] sm:$0xff]
      %v5912 = vld [vmem:[#allocation6 + $0x80] sm:$0xff]
      %v5913 = vld [vmem:[#allocation6 + $0x88] sm:$0xff]
      %v5914 = vld [vmem:[%s6] sm:$0xff]
      %v5915 = vld [vmem:[%s6 + $0x8] sm:$0xff]
      %v5916 = vld [vmem:[%s6 + $0x10] sm:$0xff]
      %v5917 = vld [vmem:[%s6 + $0x18] sm:$0xff]
      %5919 = vset.pattern.permute.xlu0 0
      %5920 = vperm.xlu0 %5919, %v5914
      %v5921 = vpop.permute.xlu0 %5920
      %5924 = vset.pattern.permute.xlu0 0
      %5925 = vperm.xlu0 %5924, %v5915
      %v5926 = vpop.permute.xlu0 %5925
      %5929 = vset.pattern.permute.xlu0 0
      %5930 = vperm.xlu0 %5929, %v5916
      %v5931 = vpop.permute.xlu0 %5930
      %5934 = vset.pattern.permute.xlu0 0
      %5935 = vperm.xlu0 %5934, %v5917
      %v5936 = vpop.permute.xlu0 %5935
      %v5942 = vunpack.c.l.b16 %v5892
      %v5943 = vunpack.c.h.b16 %v5892
      %v5944 = vunpack.c.l.b16 %v5893
      %v5945 = vunpack.c.h.b16 %v5893
      %v5946 = vunpack.c.l.b16 %v5894
      %v5947 = vunpack.c.h.b16 %v5894
      %v5948 = vunpack.c.l.b16 %v5895
      %v5949 = vunpack.c.h.b16 %v5895
      %v5950 = vpack.c.b16 %v5944, %v5942
      %v5951 = vpack.c.b16 %v5945, %v5943
      %v5952 = vpack.c.b16 %v5948, %v5946
      %v5953 = vpack.c.b16 %v5949, %v5947
      %v5957 = vsel %vm664, %v5951, 0
      %v5960 = vsel %vm664, %v5953, 0
      %5962 = vmatprep.subr.bf16.mxu0 %v5897
      %5963 = vmatpush1.bf16.msra.mxu0 %v5896
      %5964 = vmatprep.subr.bf16.mxu0 %v5899
      %5965 = vmatpush1.bf16.msra.mxu0 %v5898
      %5966 = vmatprep.subr.bf16.mxu0 %v5901
      %5967 = vmatpush1.bf16.msra.mxu0 %v5900
      %5968 = vmatprep.subr.bf16.mxu0 %v5903
      %5969 = vmatpush1.bf16.msra.mxu0 %v5902
      %5970 = vmatprep.subr.bf16.mxu0 %v5905
      %5971 = vmatpush1.bf16.msra.mxu0 %v5904
      %5972 = vmatprep.subr.bf16.mxu0 %v5907
      %5973 = vmatpush1.bf16.msra.mxu0 %v5906
      %5974 = vmatprep.subr.bf16.mxu0 %v5909
      %5975 = vmatpush1.bf16.msra.mxu0 %v5908
      %5976 = vmatprep.subr.bf16.mxu0 %v5911
      %5977 = vmatpush1.bf16.msra.mxu0 %v5910
      %5978 = vmatprep.subr.bf16.mxu0 %v5913
      %5979 = vmatpush1.bf16.msra.mxu0 %v5912
      %5980 = vmatprep.subr.bf16.mxu0 0
      %5981 = vmatpush1.bf16.msra.mxu0 0
      %5982 = vmatprep.subr.bf16.mxu0 0
      %5983 = vmatpush1.bf16.msra.mxu0 0
      %5984 = vmatprep.subr.bf16.mxu0 0
      %5985 = vmatpush1.bf16.msra.mxu0 0
      %5986 = vmatprep.subr.bf16.mxu0 0
      %5987 = vmatpush1.bf16.msra.mxu0 0
      %5988 = vmatprep.subr.bf16.mxu0 0
      %5989 = vmatpush1.bf16.msra.mxu0 0
      %5990 = vmatprep.subr.bf16.mxu0 0
      %5991 = vmatpush1.bf16.msra.mxu0 0
      %5992 = vmatprep.subr.bf16.mxu0 0
      %5993 = vmatpush1.bf16.msra.mxu0 0
      %5994 = vmatprep.mubr.bf16.mxu0 %v5957
      %5995 = vmatmul.mubr.bf16.gmra.mrb[0].mxu0 %v5950
      %v5996 = vpop.f32.mrb[0].mxu0
      %v5997 = vadd.f32 %v5921, %v5996
      %v5998 = vpop.f32.mrb[0].mxu0
      %v5999 = vadd.f32 %v5921, %v5998
      %v6000 = vpop.f32.mrb[0].mxu0
      %v6001 = vadd.f32 %v5926, %v6000
      %v6002 = vpop.f32.mrb[0].mxu0
      %v6003 = vadd.f32 %v5926, %v6002
      %6004 = vmatprep.mubr.bf16.mxu0 %v5960
      %6005 = vmatmul.mubr.bf16.gmra.mrb[0].mxu0 %v5952
      %v6006 = vpop.f32.mrb[0].mxu0
      %v6007 = vadd.f32 %v5931, %v6006
      %v6008 = vpop.f32.mrb[0].mxu0
      %v6009 = vadd.f32 %v5931, %v6008
      %v6010 = vpop.f32.mrb[0].mxu0
      %v6011 = vadd.f32 %v5936, %v6010
      %v6012 = vpop.f32.mrb[0].mxu0
      %v6013 = vadd.f32 %v5936, %v6012
      %6014 = vdwg.mxu0
      %v6015 = vld [vmem:[#allocation3] sm:$0xff]
      %v6016 = vld [vmem:[#allocation3 + $0x8] sm:$0xff]
      %v6017 = vxor.u32 %v5997, 2147483648
      %v6018 = vxor.u32 %v5999, 2147483648
      %v6019 = vmul.f32 %v6017, 1.442695
      %v6020 = vpow.pop %v6019
      %v6021 = vmul.f32 %v6018, 1.442695
      %v6022 = vpow.pop %v6021
      %v6023 = vadd.f32 %v6020, 1.0
      %v6024 = vadd.f32 %v6022, 1.0
      %v6025 = vrcp.pop %v6023
      %v6026 = vmul.f32 1.0, %v6025
      %v6027 = vrcp.pop %v6024
      %v6028 = vmul.f32 1.0, %v6027
      %v6029 = vxor.u32 %v6001, 2147483648
      %v6030 = vxor.u32 %v6003, 2147483648
      %v6031 = vmul.f32 %v6029, 1.442695
      %v6032 = vpow.pop %v6031
      %v6033 = vmul.f32 %v6030, 1.442695
      %v6034 = vpow.pop %v6033
      %v6035 = vadd.f32 %v6032, 1.0
      %v6036 = vadd.f32 %v6034, 1.0
      %v6037 = vrcp.pop %v6035
      %v6038 = vmul.f32 1.0, %v6037
      %v6039 = vrcp.pop %v6036
      %v6040 = vmul.f32 1.0, %v6039
      %v6041 = vmul.f32 %v6038, %v6015
      %v6042 = vmul.f32 %v6040, %v6016
      %v6043 = vtanh.pop %v6007
      %v6044 = vtanh.pop %v6009
      %v6045 = vmul.f32 %v6026, %v6043
      %v6046 = vmul.f32 %v6028, %v6044
      %v6047 = vadd.f32 %v6041, %v6045
      %v6048 = vadd.f32 %v6042, %v6046
      %v6049 = vxor.u32 %v6011, 2147483648
      %v6050 = vxor.u32 %v6013, 2147483648
      %v6051 = vmul.f32 %v6049, 1.442695
      %v6052 = vpow.pop %v6051
      %v6053 = vmul.f32 %v6050, 1.442695
      %v6054 = vpow.pop %v6053
      %v6055 = vadd.f32 %v6052, 1.0
      %v6056 = vadd.f32 %v6054, 1.0
      %v6057 = vrcp.pop %v6055
      %v6058 = vmul.f32 1.0, %v6057
      %v6059 = vrcp.pop %v6056
      %v6060 = vmul.f32 1.0, %v6059
      %v6061 = vtanh.pop %v6047
      %v6062 = vtanh.pop %v6048
      %v6063 = vmul.f32 %v6058, %v6061
      %v6064 = vmul.f32 %v6060, %v6062
      %6065 = vst [vmem:[#allocation3] sm:$0xff] %v6047
      %6066 = vst [vmem:[#allocation3 + $0x8] sm:$0xff] %v6048
      %6067 = vst [vmem:[#allocation2 + $0x10] sm:$0xff] %v6063
      %6068 = vst [vmem:[#allocation2 + $0x18] sm:$0xff] %v6064
      %6069 = vst [vmem:[#allocation4] sm:$0xff] %v6063
      %6070 = vst [vmem:[#allocation4 + $0x8] sm:$0xff] %v6064
      %v6071 = vld [vmem:[#allocation4] sm:$0xff]
      %v6072 = vld [vmem:[#allocation4 + $0x8] sm:$0xff]
      %v6073 = vld [vmem:[#allocation4 + $0x10] sm:$0xff]
      %v6074 = vld [vmem:[#allocation4 + $0x18] sm:$0xff]
      %6075 = vrot.lane.b32.xlu0 %v6071, 17
      %v6076 = vpop.permute.xlu0 %6075
      %6077 = vrot.lane.b32.xlu0 %v6073, 17
      %v6078 = vpop.permute.xlu0 %6077
      %6079 = vrot.lane.b32.xlu0 %v6072, 17
      %v6080 = vpop.permute.xlu0 %6079
      %6081 = vrot.lane.b32.xlu0 %v6074, 17
      %v6082 = vpop.permute.xlu0 %6081
      %v6083 = vsel %vm383, %v6076, %v6080
      %v6084 = vsel %vm383, %v6078, %v6082
      %v6085 = vsel %vm383, %v6080, %v6076
      %v6086 = vsel %vm383, %v6082, %v6078
      %v6087 = vmul.f32 %v6085, %v392
      %v6088 = vmul.f32 %v6083, %v396
      %v6089 = vmul.f32 %v6086, %v392
      %v6090 = vmul.f32 %v6084, %v396
      %v6091 = vpack.c.bf16 %v6089, %v6087
      %v6092 = vpack.c.bf16 %v6090, %v6088
      %6093 = vst [vmem:[#allocation7] sm:$0xff] %v6091
      %6094 = vst [vmem:[#allocation7 + $0x8] sm:$0xff] %v6092
      %6095 = vrot.lane.b32.xlu0 %v6071, 16
      %v6096 = vpop.permute.xlu0 %6095
      %6097 = vrot.lane.b32.xlu0 %v6073, 16
      %v6098 = vpop.permute.xlu0 %6097
      %6099 = vrot.lane.b32.xlu0 %v6072, 16
      %v6100 = vpop.permute.xlu0 %6099
      %6101 = vrot.lane.b32.xlu0 %v6074, 16
      %v6102 = vpop.permute.xlu0 %6101
      %v6103 = vsel %vm415, %v6096, %v6100
      %v6104 = vsel %vm415, %v6098, %v6102
      %v6105 = vsel %vm415, %v6100, %v6096
      %v6106 = vsel %vm415, %v6102, %v6098
      %v6107 = vmul.f32 %v6105, %v424
      %v6108 = vmul.f32 %v6103, %v428
      %v6109 = vmul.f32 %v6106, %v424
      %v6110 = vmul.f32 %v6104, %v428
      %v6111 = vpack.c.bf16 %v6109, %v6107
      %v6112 = vpack.c.bf16 %v6110, %v6108
      %6113 = vst [vmem:[#allocation7 + $0x10] sm:$0xff] %v6111
      %6114 = vst [vmem:[#allocation7 + $0x18] sm:$0xff] %v6112
      %6115 = vrot.lane.b32.xlu0 %v6071, 15
      %v6116 = vpop.permute.xlu0 %6115
      %6117 = vrot.lane.b32.xlu0 %v6073, 15
      %v6118 = vpop.permute.xlu0 %6117
      %6119 = vrot.lane.b32.xlu0 %v6072, 15
      %v6120 = vpop.permute.xlu0 %6119
      %6121 = vrot.lane.b32.xlu0 %v6074, 15
      %v6122 = vpop.permute.xlu0 %6121
      %v6123 = vsel %vm447, %v6116, %v6120
      %v6124 = vsel %vm447, %v6118, %v6122
      %v6125 = vsel %vm447, %v6120, %v6116
      %v6126 = vsel %vm447, %v6122, %v6118
      %v6127 = vmul.f32 %v6125, %v456
      %v6128 = vmul.f32 %v6123, %v460
      %v6129 = vmul.f32 %v6126, %v456
      %v6130 = vmul.f32 %v6124, %v460
      %v6131 = vpack.c.bf16 %v6129, %v6127
      %v6132 = vpack.c.bf16 %v6130, %v6128
      %6133 = vst [vmem:[#allocation7 + $0x20] sm:$0xff] %v6131
      %6134 = vst [vmem:[#allocation7 + $0x28] sm:$0xff] %v6132
      %6135 = vrot.lane.b32.xlu0 %v6071, 1
      %v6136 = vpop.permute.xlu0 %6135
      %6137 = vrot.lane.b32.xlu0 %v6073, 1
      %v6138 = vpop.permute.xlu0 %6137
      %6139 = vrot.lane.b32.xlu0 %v6072, 1
      %v6140 = vpop.permute.xlu0 %6139
      %6141 = vrot.lane.b32.xlu0 %v6074, 1
      %v6142 = vpop.permute.xlu0 %6141
      %v6143 = vsel %vm479, %v6136, %v6140
      %v6144 = vsel %vm479, %v6138, %v6142
      %v6145 = vsel %vm479, %v6140, %v6136
      %v6146 = vsel %vm479, %v6142, %v6138
      %v6147 = vmul.f32 %v6145, %v488
      %v6148 = vmul.f32 %v6143, %v492
      %v6149 = vmul.f32 %v6146, %v488
      %v6150 = vmul.f32 %v6144, %v492
      %v6151 = vpack.c.bf16 %v6149, %v6147
      %v6152 = vpack.c.bf16 %v6150, %v6148
      %6153 = vst [vmem:[#allocation7 + $0x30] sm:$0xff] %v6151
      %6154 = vst [vmem:[#allocation7 + $0x38] sm:$0xff] %v6152
      %v6155 = vpack.c.bf16 %v6073, %v6071
      %v6156 = vpack.c.bf16 %v6074, %v6072
      %6157 = vst [vmem:[#allocation7 + $0x40] sm:$0xff] %v6155
      %6158 = vst [vmem:[#allocation7 + $0x48] sm:$0xff] %v6156
      %6159 = vrot.lane.b32.xlu0 %v6071, 127
      %v6160 = vpop.permute.xlu0 %6159
      %6161 = vrot.lane.b32.xlu0 %v6073, 127
      %v6162 = vpop.permute.xlu0 %6161
      %6163 = vrot.lane.b32.xlu0 %v6072, 127
      %v6164 = vpop.permute.xlu0 %6163
      %6165 = vrot.lane.b32.xlu0 %v6074, 127
      %v6166 = vpop.permute.xlu0 %6165
      %v6167 = vsel %vm515, %v6160, %v6164
      %v6168 = vsel %vm515, %v6162, %v6166
      %v6169 = vsel %vm515, %v6164, %v6160
      %v6170 = vsel %vm515, %v6166, %v6162
      %v6171 = vmul.f32 %v6167, %v524
      %v6172 = vmul.f32 %v6169, %v528
      %v6173 = vmul.f32 %v6168, %v524
      %v6174 = vmul.f32 %v6170, %v528
      %v6175 = vpack.c.bf16 %v6173, %v6171
      %v6176 = vpack.c.bf16 %v6174, %v6172
      %6177 = vst [vmem:[#allocation7 + $0x50] sm:$0xff] %v6175
      %6178 = vst [vmem:[#allocation7 + $0x58] sm:$0xff] %v6176
      %6179 = vrot.lane.b32.xlu0 %v6071, 113
      %v6180 = vpop.permute.xlu0 %6179
      %6181 = vrot.lane.b32.xlu0 %v6073, 113
      %v6182 = vpop.permute.xlu0 %6181
      %6183 = vrot.lane.b32.xlu0 %v6072, 113
      %v6184 = vpop.permute.xlu0 %6183
      %6185 = vrot.lane.b32.xlu0 %v6074, 113
      %v6186 = vpop.permute.xlu0 %6185
      %v6187 = vsel %vm547, %v6180, %v6184
      %v6188 = vsel %vm547, %v6182, %v6186
      %v6189 = vsel %vm547, %v6184, %v6180
      %v6190 = vsel %vm547, %v6186, %v6182
      %v6191 = vmul.f32 %v6187, %v556
      %v6192 = vmul.f32 %v6189, %v560
      %v6193 = vmul.f32 %v6188, %v556
      %v6194 = vmul.f32 %v6190, %v560
      %v6195 = vpack.c.bf16 %v6193, %v6191
      %v6196 = vpack.c.bf16 %v6194, %v6192
      %6197 = vst [vmem:[#allocation7 + $0x60] sm:$0xff] %v6195
      %6198 = vst [vmem:[#allocation7 + $0x68] sm:$0xff] %v6196
      %6199 = vrot.lane.b32.xlu0 %v6071, 112
      %v6200 = vpop.permute.xlu0 %6199
      %6201 = vrot.lane.b32.xlu0 %v6073, 112
      %v6202 = vpop.permute.xlu0 %6201
      %6203 = vrot.lane.b32.xlu0 %v6072, 112
      %v6204 = vpop.permute.xlu0 %6203
      %6205 = vrot.lane.b32.xlu0 %v6074, 112
      %v6206 = vpop.permute.xlu0 %6205
      %v6207 = vsel %vm579, %v6200, %v6204
      %v6208 = vsel %vm579, %v6202, %v6206
      %v6209 = vsel %vm579, %v6204, %v6200
      %v6210 = vsel %vm579, %v6206, %v6202
      %v6211 = vmul.f32 %v6207, %v588
      %v6212 = vmul.f32 %v6209, %v592
      %v6213 = vmul.f32 %v6208, %v588
      %v6214 = vmul.f32 %v6210, %v592
      %v6215 = vpack.c.bf16 %v6213, %v6211
      %v6216 = vpack.c.bf16 %v6214, %v6212
      %6217 = vst [vmem:[#allocation7 + $0x70] sm:$0xff] %v6215
      %6218 = vst [vmem:[#allocation7 + $0x78] sm:$0xff] %v6216
      %6219 = vrot.lane.b32.xlu0 %v6071, 111
      %v6220 = vpop.permute.xlu0 %6219
      %6221 = vrot.lane.b32.xlu0 %v6073, 111
      %v6222 = vpop.permute.xlu0 %6221
      %6223 = vrot.lane.b32.xlu0 %v6072, 111
      %v6224 = vpop.permute.xlu0 %6223
      %6225 = vrot.lane.b32.xlu0 %v6074, 111
      %v6226 = vpop.permute.xlu0 %6225
      %v6227 = vsel %vm611, %v6220, %v6224
      %v6228 = vsel %vm611, %v6222, %v6226
      %v6229 = vsel %vm611, %v6224, %v6220
      %v6230 = vsel %vm611, %v6226, %v6222
      %v6231 = vmul.f32 %v6227, %v620
      %v6232 = vmul.f32 %v6229, %v624
      %v6233 = vmul.f32 %v6228, %v620
      %v6234 = vmul.f32 %v6230, %v624
      %v6235 = vpack.c.bf16 %v6233, %v6231
      %v6236 = vpack.c.bf16 %v6234, %v6232
      %6237 = vst [vmem:[#allocation7 + $0x80] sm:$0xff] %v6235
      %6238 = vst [vmem:[#allocation7 + $0x88] sm:$0xff] %v6236
      %v6239 = vld [vmem:[%s7] sm:$0xff]
      %v6240 = vld [vmem:[%s7 + $0x8] sm:$0xff]
      %v6241 = vld [vmem:[%s7 + $0x10] sm:$0xff]
      %v6242 = vld [vmem:[%s7 + $0x18] sm:$0xff]
      %v6243 = vld [vmem:[#allocation7] sm:$0xff]
      %v6244 = vld [vmem:[#allocation7 + $0x8] sm:$0xff]
      %v6245 = vld [vmem:[#allocation7 + $0x10] sm:$0xff]
      %v6246 = vld [vmem:[#allocation7 + $0x18] sm:$0xff]
      %v6247 = vld [vmem:[#allocation7 + $0x20] sm:$0xff]
      %v6248 = vld [vmem:[#allocation7 + $0x28] sm:$0xff]
      %v6249 = vld [vmem:[#allocation7 + $0x30] sm:$0xff]
      %v6250 = vld [vmem:[#allocation7 + $0x38] sm:$0xff]
      %v6251 = vld [vmem:[#allocation7 + $0x40] sm:$0xff]
      %v6252 = vld [vmem:[#allocation7 + $0x48] sm:$0xff]
      %v6253 = vld [vmem:[#allocation7 + $0x50] sm:$0xff]
      %v6254 = vld [vmem:[#allocation7 + $0x58] sm:$0xff]
      %v6255 = vld [vmem:[#allocation7 + $0x60] sm:$0xff]
      %v6256 = vld [vmem:[#allocation7 + $0x68] sm:$0xff]
      %v6257 = vld [vmem:[#allocation7 + $0x70] sm:$0xff]
      %v6258 = vld [vmem:[#allocation7 + $0x78] sm:$0xff]
      %v6259 = vld [vmem:[#allocation7 + $0x80] sm:$0xff]
      %v6260 = vld [vmem:[#allocation7 + $0x88] sm:$0xff]
      %v6261 = vld [vmem:[%s8] sm:$0xff]
      %v6262 = vld [vmem:[%s8 + $0x8] sm:$0xff]
      %v6263 = vld [vmem:[%s8 + $0x10] sm:$0xff]
      %v6264 = vld [vmem:[%s8 + $0x18] sm:$0xff]
      %6266 = vset.pattern.permute.xlu0 0
      %6267 = vperm.xlu0 %6266, %v6261
      %v6268 = vpop.permute.xlu0 %6267
      %6271 = vset.pattern.permute.xlu0 0
      %6272 = vperm.xlu0 %6271, %v6262
      %v6273 = vpop.permute.xlu0 %6272
      %6276 = vset.pattern.permute.xlu0 0
      %6277 = vperm.xlu0 %6276, %v6263
      %v6278 = vpop.permute.xlu0 %6277
      %6281 = vset.pattern.permute.xlu0 0
      %6282 = vperm.xlu0 %6281, %v6264
      %v6283 = vpop.permute.xlu0 %6282
      %v6289 = vunpack.c.l.b16 %v6239
      %v6290 = vunpack.c.h.b16 %v6239
      %v6291 = vunpack.c.l.b16 %v6240
      %v6292 = vunpack.c.h.b16 %v6240
      %v6293 = vunpack.c.l.b16 %v6241
      %v6294 = vunpack.c.h.b16 %v6241
      %v6295 = vunpack.c.l.b16 %v6242
      %v6296 = vunpack.c.h.b16 %v6242
      %v6297 = vpack.c.b16 %v6291, %v6289
      %v6298 = vpack.c.b16 %v6292, %v6290
      %v6299 = vpack.c.b16 %v6295, %v6293
      %v6300 = vpack.c.b16 %v6296, %v6294
      %v6304 = vsel %vm664, %v6298, 0
      %v6307 = vsel %vm664, %v6300, 0
      %6309 = vmatprep.subr.bf16.mxu0 %v6244
      %6310 = vmatpush1.bf16.msra.mxu0 %v6243
      %6311 = vmatprep.subr.bf16.mxu0 %v6246
      %6312 = vmatpush1.bf16.msra.mxu0 %v6245
      %6313 = vmatprep.subr.bf16.mxu0 %v6248
      %6314 = vmatpush1.bf16.msra.mxu0 %v6247
      %6315 = vmatprep.subr.bf16.mxu0 %v6250
      %6316 = vmatpush1.bf16.msra.mxu0 %v6249
      %6317 = vmatprep.subr.bf16.mxu0 %v6252
      %6318 = vmatpush1.bf16.msra.mxu0 %v6251
      %6319 = vmatprep.subr.bf16.mxu0 %v6254
      %6320 = vmatpush1.bf16.msra.mxu0 %v6253
      %6321 = vmatprep.subr.bf16.mxu0 %v6256
      %6322 = vmatpush1.bf16.msra.mxu0 %v6255
      %6323 = vmatprep.subr.bf16.mxu0 %v6258
      %6324 = vmatpush1.bf16.msra.mxu0 %v6257
      %6325 = vmatprep.subr.bf16.mxu0 %v6260
      %6326 = vmatpush1.bf16.msra.mxu0 %v6259
      %6327 = vmatprep.subr.bf16.mxu0 0
      %6328 = vmatpush1.bf16.msra.mxu0 0
      %6329 = vmatprep.subr.bf16.mxu0 0
      %6330 = vmatpush1.bf16.msra.mxu0 0
      %6331 = vmatprep.subr.bf16.mxu0 0
      %6332 = vmatpush1.bf16.msra.mxu0 0
      %6333 = vmatprep.subr.bf16.mxu0 0
      %6334 = vmatpush1.bf16.msra.mxu0 0
      %6335 = vmatprep.subr.bf16.mxu0 0
      %6336 = vmatpush1.bf16.msra.mxu0 0
      %6337 = vmatprep.subr.bf16.mxu0 0
      %6338 = vmatpush1.bf16.msra.mxu0 0
      %6339 = vmatprep.subr.bf16.mxu0 0
      %6340 = vmatpush1.bf16.msra.mxu0 0
      %6341 = vmatprep.mubr.bf16.mxu0 %v6304
      %6342 = vmatmul.mubr.bf16.gmra.mrb[0].mxu0 %v6297
      %v6343 = vpop.f32.mrb[0].mxu0
      %v6344 = vadd.f32 %v6268, %v6343
      %v6345 = vpop.f32.mrb[0].mxu0
      %v6346 = vadd.f32 %v6268, %v6345
      %v6347 = vpop.f32.mrb[0].mxu0
      %v6348 = vadd.f32 %v6273, %v6347
      %v6349 = vpop.f32.mrb[0].mxu0
      %v6350 = vadd.f32 %v6273, %v6349
      %6351 = vmatprep.mubr.bf16.mxu0 %v6307
      %6352 = vmatmul.mubr.bf16.gmra.mrb[0].mxu0 %v6299
      %v6353 = vpop.f32.mrb[0].mxu0
      %v6354 = vadd.f32 %v6278, %v6353
      %v6355 = vpop.f32.mrb[0].mxu0
      %v6356 = vadd.f32 %v6278, %v6355
      %v6357 = vpop.f32.mrb[0].mxu0
      %v6358 = vadd.f32 %v6283, %v6357
      %v6359 = vpop.f32.mrb[0].mxu0
      %v6360 = vadd.f32 %v6283, %v6359
      %6361 = vdwg.mxu0
      %v6362 = vld [vmem:[#allocation5] sm:$0xff]
      %v6363 = vld [vmem:[#allocation5 + $0x8] sm:$0xff]
      %v6364 = vxor.u32 %v6344, 2147483648
      %v6365 = vxor.u32 %v6346, 2147483648
      %v6366 = vmul.f32 %v6364, 1.442695
      %v6367 = vpow.pop %v6366
      %v6368 = vmul.f32 %v6365, 1.442695
      %v6369 = vpow.pop %v6368
      %v6370 = vadd.f32 %v6367, 1.0
      %v6371 = vadd.f32 %v6369, 1.0
      %v6372 = vrcp.pop %v6370
      %v6373 = vmul.f32 1.0, %v6372
      %v6374 = vrcp.pop %v6371
      %v6375 = vmul.f32 1.0, %v6374
      %v6376 = vxor.u32 %v6348, 2147483648
      %v6377 = vxor.u32 %v6350, 2147483648
      %v6378 = vmul.f32 %v6376, 1.442695
      %v6379 = vpow.pop %v6378
      %v6380 = vmul.f32 %v6377, 1.442695
      %v6381 = vpow.pop %v6380
      %v6382 = vadd.f32 %v6379, 1.0
      %v6383 = vadd.f32 %v6381, 1.0
      %v6384 = vrcp.pop %v6382
      %v6385 = vmul.f32 1.0, %v6384
      %v6386 = vrcp.pop %v6383
      %v6387 = vmul.f32 1.0, %v6386
      %v6388 = vmul.f32 %v6385, %v6362
      %v6389 = vmul.f32 %v6387, %v6363
      %v6390 = vtanh.pop %v6354
      %v6391 = vtanh.pop %v6356
      %v6392 = vmul.f32 %v6373, %v6390
      %v6393 = vmul.f32 %v6375, %v6391
      %v6394 = vadd.f32 %v6388, %v6392
      %v6395 = vadd.f32 %v6389, %v6393
      %v6396 = vxor.u32 %v6358, 2147483648
      %v6397 = vxor.u32 %v6360, 2147483648
      %v6398 = vmul.f32 %v6396, 1.442695
      %v6399 = vpow.pop %v6398
      %v6400 = vmul.f32 %v6397, 1.442695
      %v6401 = vpow.pop %v6400
      %v6402 = vadd.f32 %v6399, 1.0
      %v6403 = vadd.f32 %v6401, 1.0
      %v6404 = vrcp.pop %v6402
      %v6405 = vmul.f32 1.0, %v6404
      %v6406 = vrcp.pop %v6403
      %v6407 = vmul.f32 1.0, %v6406
      %v6408 = vtanh.pop %v6394
      %v6409 = vtanh.pop %v6395
      %v6410 = vmul.f32 %v6405, %v6408
      %v6411 = vmul.f32 %v6407, %v6409
      %6412 = vst [vmem:[#allocation5] sm:$0xff] %v6394
      %6413 = vst [vmem:[#allocation5 + $0x8] sm:$0xff] %v6395
      %6414 = vst [vmem:[#allocation4 + $0x10] sm:$0xff] %v6410
      %6415 = vst [vmem:[#allocation4 + $0x18] sm:$0xff] %v6411
      %6416 = vst [vmem:[%s332] sm:$0xff] %v6410
      %6417 = vst [vmem:[%s332 + $0x8] sm:$0xff] %v6411
      %p6418 = scmp.lt.s32.totalorder %s20, 1
      %s6419 = scalar_select %p6418, %s20, 1
      %s6420 = smul.addr %s6419, 2
      %s6421 = smul.addr %s6420, 8
      %s6422 = scalar_lea.vmem %s9, %s6421
      // Predicated region
      $region61: #{convlstm_forward.1} parent=55 // pred_check
        %p6423 = pneg %p232
      $region62: #{convlstm_forward.1} parent=55 // pred_check_branch
        %6425 = sbr.rel (%p6423) target = $region64
      $region63: #{convlstm_forward.1} parent=55 // pred_region
        _
      $region64: #{convlstm_forward.1} parent=55 // pred_fallthru
        _
    $region56: #{convlstm_forward.1} parent=5 // pred_fallthru
      _
    %p6426 = scmp.le.s32.totalorder 2, %s15
    // Predicated region
    $region65: #{convlstm_forward.1} parent=5 // pred_check
      %p6427 = pneg %p6426
    $region66: #{convlstm_forward.1} parent=5 // pred_check_branch
      %6429 = sbr.rel (%p6427) target = $region68
    $region67: #{convlstm_forward.1} parent=5 // pred_region
      %s6430 = ssub.s32 %s15, 2
      // Predicated region
      $region69: #{convlstm_forward.1} parent=67 // pred_check
        %p6431 = pneg %p238
      $region70: #{convlstm_forward.1} parent=67 // pred_check_branch
        %6433 = sbr.rel (%p6431) target = $region72
      $region71: #{convlstm_forward.1} parent=67 // pred_region
        %p6434 = scmp.lt.s32.totalorder %s21, 1
        %s6435 = scalar_select %p6434, %s21, 1
        %s6436 = smul.addr %s6435, 2
        %s6437 = smul.addr %s6436, 8
        %s6438 = scalar_lea.vmem %s9, %s6437
      $region72: #{convlstm_forward.1} parent=67 // pred_fallthru
        _
    $region68: #{convlstm_forward.1} parent=5 // pred_fallthru
      _
  $region6: #{convlstm_forward.1} parent=0 // loop_footer
    %s19 = sadd.s32 1, %s15
  $region7: #{convlstm_forward.1} parent=0 // loop_footer_branch
    %14 = sbr.rel target = $region3
  $region8: #{convlstm_forward.1} parent=0 // loop_exit
    _

</llo_original>
